<compile_context>
chip_gen: v7x
topology: tpu7x:2x2x1
jax: 0.10.0
libtpu: 0.0.40
codegen_flags: <defaults>
</compile_context>

<pallas_src>
import functools

import jax
import jax.numpy as jnp
import numpy as np
from jax.experimental import pallas as pl
from jax.experimental.pallas import tpu as pltpu


def _round_up(x, m):
    return ((x + m - 1) // m) * m


def _gru_stack_kernel(x_ref, w_ih_ref, w_hh_ref, bc_ref, bn_ref, out_ref,
                      act_ref, gi_ref, *, seq_len, b_blk, h_pad, num_layers):
    """Fused multi-layer GRU for one batch block.  All tensors padded & gate-blocked:

      x_ref    : (S*Bb, Hp)      time-major input rows (row = t*Bb + b), batch block
      w_ih_ref : (L, Hp, 3*Hp)   transposed, per-gate lane-aligned blocks [r | z | n]
      w_hh_ref : (L, Hp, 3*Hp)
      bc_ref   : (L, 1, 3*Hp)    [b_ih_r+b_hh_r | b_ih_z+b_hh_z | b_ih_n]
      bn_ref   : (L, 1, Hp)      b_hh_n (must stay inside the r*(...) term)
      out_ref  : (S*Bb, Hp)      last layer's hidden states for all timesteps
      act_ref  : (S*Bb, Hp)      single in-place inter-layer activation buffer
      gi_ref   : (S*Bb, 3*Hp)    hoisted input projections for the current layer
    """
    Bb, Hp = b_blk, h_pad

    for layer in range(num_layers):
        src_ref = x_ref if layer == 0 else act_ref
        # Last layer writes its per-step h straight into out_ref (no final slab copy);
        # middle layers overwrite act_ref in place (its content is fully consumed by
        # the hoisted gi matmul below before the time loop stores anything).
        dst_ref = out_ref if layer == num_layers - 1 else act_ref

        # Input projection for ALL timesteps at once (no h dependence) + folded
        # r/z biases.  One MXU matmul per layer, off the serial critical path.
        gi_ref[...] = (
            jnp.dot(src_ref[...], w_ih_ref[layer],
                    preferred_element_type=jnp.float32)
            + bc_ref[layer]
        )

        # Hoist the (1,Hp)->(Bb,Hp) broadcast of b_hh_n out of the unrolled time loop
        # (JAX does not CSE broadcast_in_dim).
        bn_b = jnp.broadcast_to(bn_ref[layer], (Bb, Hp))

        def step(t, h, _layer=layer, _dst=dst_ref, _bn=bn_b):
            start = pl.multiple_of(t * Bb, Bb)
            gi = gi_ref[pl.ds(start, Bb), :]                         # (Bb, 3Hp)
            gh = jnp.dot(h, w_hh_ref[_layer],
                         preferred_element_type=jnp.float32)         # (Bb, 3Hp)
            # Gates live in lane-aligned 128-wide blocks -> pure VPU slicing.
            # sigmoid via tanh: one EUP push per gate (vs exp + add + div).
            r = 0.5 * jnp.tanh(0.5 * (gi[:, 0:Hp] + gh[:, 0:Hp])) + 0.5
            z = 0.5 * jnp.tanh(0.5 * (gi[:, Hp:2 * Hp] + gh[:, Hp:2 * Hp])) + 0.5
            n = jnp.tanh(gi[:, 2 * Hp:] + r * (gh[:, 2 * Hp:] + _bn))
            h_new = n + z * (h - n)                                   # 3 VALU ops
            _dst[pl.ds(start, Bb), :] = h_new                         # dense (8,128) store
            return h_new

        jax.lax.fori_loop(0, seq_len, step,
                          jnp.zeros((Bb, Hp), jnp.float32),
                          unroll=min(seq_len, 8))


def prepare_gru_params(params, hidden_size):
    """Transpose, gate-block and pad PyTorch-layout GRU params once.

    params[l] = (w_ih (3H, in), w_hh (3H, H), b_ih (3H,), b_hh (3H,)), gate order r,z,n.
    Returns stacked arrays: w_ih (L,Hp,3Hp), w_hh (L,Hp,3Hp), b_comb (L,1,3Hp),
    b_hhn (L,1,Hp).  Padding is zero-filled: this keeps padded hidden lanes exactly 0
    in the kernel (correctness invariant).
    """
    H = hidden_size
    Hp = _round_up(max(H, 128), 128)
    w_ih_l, w_hh_l, bc_l, bn_l = [], [], [], []
    for (w_ih, w_hh, b_ih, b_hh) in params:
        in_dim = w_ih.shape[1]
        wi = jnp.zeros((Hp, 3 * Hp), jnp.float32)
        wh = jnp.zeros((Hp, 3 * Hp), jnp.float32)
        bc = jnp.zeros((1, 3 * Hp), jnp.float32)
        bn = jnp.zeros((1, Hp), jnp.float32)
        for g in range(3):                                  # PyTorch gate order: r, z, n
            wi = wi.at[:in_dim, g * Hp:g * Hp + H].set(w_ih[g * H:(g + 1) * H, :].T)
            wh = wh.at[:H,      g * Hp:g * Hp + H].set(w_hh[g * H:(g + 1) * H, :].T)
        bc = bc.at[0, 0 * Hp:0 * Hp + H].set(b_ih[0:H] + b_hh[0:H])            # r
        bc = bc.at[0, 1 * Hp:1 * Hp + H].set(b_ih[H:2 * H] + b_hh[H:2 * H])    # z
        bc = bc.at[0, 2 * Hp:2 * Hp + H].set(b_ih[2 * H:3 * H])                # n (ih only)
        bn = bn.at[0, :H].set(b_hh[2 * H:3 * H])                               # n (hh part)
        w_ih_l.append(wi); w_hh_l.append(wh); bc_l.append(bc); bn_l.append(bn)
    return (jnp.stack(w_ih_l), jnp.stack(w_hh_l), jnp.stack(bc_l), jnp.stack(bn_l))


def make_rnn_decoder_forward(params, hidden_size):
    """Builds a jitted forward for the fused Pallas GRU stack."""
    packed = prepare_gru_params(params, hidden_size)
    num_layers = len(params)
    Hp = int(packed[0].shape[1])
    H = hidden_size
    B_BLK = 8                                     # one sublane tile of batch per grid step

    @jax.jit
    def forward(x_bsf):
        """x_bsf: (batch, seq, feat), batch_first.  Returns rnn_out (batch, seq, hidden).

        NOTE: the original PyTorch forward discards rnn_out and returns None; we return
        it so the kernel result is observable/verifiable.
        """
        B, S, F = x_bsf.shape
        Bp = _round_up(max(B, B_BLK), B_BLK)
        nb = Bp // B_BLK                           # batch blocks -> "parallel" grid axis

        # Pad batch/features, then lay out as (nb, S*B_BLK, Hp): per batch block,
        # time-major rows (row = t*B_BLK + b), lane/sublane dense.  At nb == 1 the
        # transpose below is a no-op reshape.
        x_p = jnp.zeros((Bp, S, Hp), jnp.float32).at[:B, :, :F].set(
            x_bsf.astype(jnp.float32))
        x_p = x_p.reshape(nb, B_BLK, S, Hp).transpose(0, 2, 1, 3)   # (nb, S, B_BLK, Hp)
        x_p = x_p.reshape(nb, S * B_BLK, Hp)

        kernel = functools.partial(
            _gru_stack_kernel, seq_len=S, b_blk=B_BLK, h_pad=Hp, num_layers=num_layers)

        out_p = pl.pallas_call(
            kernel,
            out_shape=jax.ShapeDtypeStruct((nb, S * B_BLK, Hp), jnp.float32),
            grid_spec=pltpu.PrefetchScalarGridSpec(
                num_scalar_prefetch=0,
                grid=(nb,),                                   # batch blocks (v7x: 2 TCs)
                in_specs=[
                    pl.BlockSpec((None, S * B_BLK, Hp), lambda i: (i, 0, 0)),     # x
                    pl.BlockSpec((num_layers, Hp, 3 * Hp), lambda i: (0, 0, 0)),  # W_ih
                    pl.BlockSpec((num_layers, Hp, 3 * Hp), lambda i: (0, 0, 0)),  # W_hh
                    pl.BlockSpec((num_layers, 1, 3 * Hp), lambda i: (0, 0, 0)),   # folded b
                    pl.BlockSpec((num_layers, 1, Hp), lambda i: (0, 0, 0)),       # b_hh_n
                ],
                out_specs=pl.BlockSpec((None, S * B_BLK, Hp), lambda i: (i, 0, 0)),
                scratch_shapes=[
                    pltpu.VMEM((S * B_BLK, Hp), jnp.float32),       # inter-layer acts
                    pltpu.VMEM((S * B_BLK, 3 * Hp), jnp.float32),   # hoisted input proj
                ],
            ),
            compiler_params=pltpu.CompilerParams(
                dimension_semantics=("parallel",),
                # Explicit VMEM budget; re-derive for production S/H (esp. v7x 64 MiB).
                vmem_limit_bytes=32 * 1024 * 1024),
        )(x_p, *packed)

        out = out_p.reshape(nb, S, B_BLK, Hp).transpose(0, 2, 1, 3)  # (nb, B_BLK, S, Hp)
        out = out.reshape(Bp, S, Hp)[:B, :, :H]                      # strip padding
        return out                                                   # (B, S, H) batch_first

    return forward


def init_gru_params(key, input_size, hidden_size, num_layers):
    """PyTorch-style uniform(-1/sqrt(H), 1/sqrt(H)) init, deterministic."""
    bound = 1.0 / np.sqrt(hidden_size)
    params = []
    for layer in range(num_layers):
        in_dim = input_size if layer == 0 else hidden_size
        key, k1, k2, k3, k4 = jax.random.split(key, 5)
        w_ih = jax.random.uniform(k1, (3 * hidden_size, in_dim),
                                  minval=-bound, maxval=bound, dtype=jnp.float32)
        w_hh = jax.random.uniform(k2, (3 * hidden_size, hidden_size),
                                  minval=-bound, maxval=bound, dtype=jnp.float32)
        b_ih = jax.random.uniform(k3, (3 * hidden_size,),
                                  minval=-bound, maxval=bound, dtype=jnp.float32)
        b_hh = jax.random.uniform(k4, (3 * hidden_size,),
                                  minval=-bound, maxval=bound, dtype=jnp.float32)
        params.append((w_ih, w_hh, b_ih, b_hh))
    return params


def rnn_decoder_reference(x_bsf, params):
    """Pure-JAX GRU reference (PyTorch semantics) for correctness check."""
    x = jnp.transpose(x_bsf, (1, 0, 2))  # (S, B, F)
    for (w_ih, w_hh, b_ih, b_hh) in params:
        H = w_hh.shape[1]
        B = x.shape[1]
        h0 = jnp.zeros((B, H), jnp.float32)

        def step(h, x_t, w_ih=w_ih, w_hh=w_hh, b_ih=b_ih, b_hh=b_hh, H=H):
            gi = x_t @ w_ih.T + b_ih
            gh = h @ w_hh.T + b_hh
            i_r, i_z, i_n = gi[:, :H], gi[:, H:2 * H], gi[:, 2 * H:]
            h_r, h_z, h_n = gh[:, :H], gh[:, H:2 * H], gh[:, 2 * H:]
            r = jax.nn.sigmoid(i_r + h_r)
            z = jax.nn.sigmoid(i_z + h_z)
            n = jnp.tanh(i_n + r * h_n)
            h_new = (1.0 - z) * n + z * h
            return h_new, h_new

        _, ys = jax.lax.scan(step, h0, x)
        x = ys
    return jnp.transpose(x, (1, 0, 2))


if __name__ == "__main__":
    # Small shapes consistent with the module: batch=2, seq=8, cnn_out_dim=24,
    # hidden=32 (scaled down from 256), num_layers=3.
    B, S, F, H, L = 2, 8, 24, 32, 3

    key = jax.random.PRNGKey(0)
    key, kx, kp = jax.random.split(key, 3)
    x = jax.random.normal(kx, (B, S, F), dtype=jnp.float32)
    params = init_gru_params(kp, F, H, L)

    forward = make_rnn_decoder_forward(params, H)
    out = forward(x)
    out = jax.block_until_ready(out)

    ref = rnn_decoder_reference(x, params)
    np.testing.assert_allclose(np.asarray(out), np.asarray(ref), rtol=1e-5, atol=1e-5)

    # TODO(synk): the original PyTorch forward returns None (rnn_out discarded);
    # we return rnn_out so the kernel result is observable/verifiable.
    print("KERNEL_OK")
</pallas_src>

<mosaic_0001>
module attributes {stable_mosaic.version = 11 : i64} {
  func.func @_gru_stack_kernel(%arg0: i32, %arg1: memref<1x64x128xf32, #tpu.memory_space<vmem>>, %arg2: memref<3x128x384xf32, #tpu.memory_space<vmem>>, %arg3: memref<3x128x384xf32, #tpu.memory_space<vmem>>, %arg4: memref<3x1x384xf32, #tpu.memory_space<vmem>>, %arg5: memref<3x1x128xf32, #tpu.memory_space<vmem>>, %arg6: memref<1x64x128xf32, #tpu.memory_space<vmem>>, %arg7: memref<64x128xf32, #tpu.memory_space<vmem>>, %arg8: memref<64x384xf32, #tpu.memory_space<vmem>>) attributes {dimension_semantics = [#tpu.dimension_semantics<parallel>], iteration_bounds = array<i64: 1>, scalar_prefetch = 0 : i64, scratch_operands = 2 : i64, tpu.core_type = #tpu.core_type<tc>, window_params = [{transform_indices = @transform_0, window_bounds = array<i64: 1, 64, 128>}, {pipeline_mode = #tpu.pipeline_mode<synchronous>, transform_indices = @transform_1, window_bounds = array<i64: 3, 128, 384>}, {pipeline_mode = #tpu.pipeline_mode<synchronous>, transform_indices = @transform_2, window_bounds = array<i64: 3, 128, 384>}, {pipeline_mode = #tpu.pipeline_mode<synchronous>, transform_indices = @transform_3, window_bounds = array<i64: 3, 1, 384>}, {pipeline_mode = #tpu.pipeline_mode<synchronous>, transform_indices = @transform_4, window_bounds = array<i64: 3, 1, 128>}, {transform_indices = @transform_5, window_bounds = array<i64: 1, 64, 128>}]} {
    %c0 = arith.constant 0 : index
    %c0_0 = arith.constant 0 : index
    %c0_1 = arith.constant 0 : index
    %0 = vector.load %arg1[%c0, %c0_0, %c0_1] : memref<1x64x128xf32, #tpu.memory_space<vmem>>, vector<1x64x128xf32>
    %1 = vector.shape_cast %0 : vector<1x64x128xf32> to vector<64x128xf32>
    %c0_2 = arith.constant 0 : index
    %c0_3 = arith.constant 0 : index
    %c0_4 = arith.constant 0 : index
    %2 = vector.load %arg2[%c0_2, %c0_3, %c0_4] : memref<3x128x384xf32, #tpu.memory_space<vmem>>, vector<1x128x384xf32>
    %3 = vector.shape_cast %2 : vector<1x128x384xf32> to vector<128x384xf32>
    %cst = arith.constant dense<0.000000e+00> : vector<64x384xf32>
    %4 = tpu.matmul %1, %3, %cst {dimension_numbers = #tpu.dot_dimension_numbers<[1], [0], [0], [1], [0, 0, 1, 1], [], []>} : vector<64x128xf32>, vector<128x384xf32>, vector<64x384xf32> -> vector<64x384xf32>
    %c0_5 = arith.constant 0 : index
    %c0_6 = arith.constant 0 : index
    %c0_7 = arith.constant 0 : index
    %5 = vector.load %arg4[%c0_5, %c0_6, %c0_7] : memref<3x1x384xf32, #tpu.memory_space<vmem>>, vector<1x1x384xf32>
    %6 = vector.shape_cast %5 : vector<1x1x384xf32> to vector<1x384xf32>
    %7 = vector.broadcast %6 : vector<1x384xf32> to vector<64x384xf32>
    %8 = arith.addf %4, %7 : vector<64x384xf32>
    %c0_8 = arith.constant 0 : index
    %c0_9 = arith.constant 0 : index
    %9 = vector.load %arg8[%c0_8, %c0_9] : memref<64x384xf32, #tpu.memory_space<vmem>>, vector<64x384xf32>
    tpu.vector_store %arg8[%c0_8, %c0_9], %8 {strides = array<i32>} : memref<64x384xf32, #tpu.memory_space<vmem>>, vector<64x384xf32>,
    %c0_10 = arith.constant 0 : index
    %c0_11 = arith.constant 0 : index
    %c0_12 = arith.constant 0 : index
    %10 = vector.load %arg5[%c0_10, %c0_11, %c0_12] : memref<3x1x128xf32, #tpu.memory_space<vmem>>, vector<1x1x128xf32>
    %11 = vector.shape_cast %10 : vector<1x1x128xf32> to vector<1x128xf32>
    %12 = vector.shape_cast %11 : vector<1x128xf32> to vector<1x128xf32>
    %13 = vector.broadcast %12 : vector<1x128xf32> to vector<8x128xf32>
    %cst_13 = arith.constant 0.000000e+00 : f32
    %14 = vector.broadcast %cst_13 : f32 to vector<8x128xf32>
    %c0_i32 = arith.constant 0 : i32
    %c8_i32 = arith.constant 8 : i32
    %15 = arith.muli %c0_i32, %c8_i32 : i32
    %16 = tpu.assume_multiple %15, 8 : i32
    %17 = arith.index_cast %16 : i32 to index
    %c0_14 = arith.constant 0 : index
    %18 = vector.load %arg8[%17, %c0_14] : memref<64x384xf32, #tpu.memory_space<vmem>>, vector<8x384xf32>
    %c0_15 = arith.constant 0 : index
    %c0_16 = arith.constant 0 : index
    %c0_17 = arith.constant 0 : index
    %19 = vector.load %arg3[%c0_15, %c0_16, %c0_17] : memref<3x128x384xf32, #tpu.memory_space<vmem>>, vector<1x128x384xf32>
    %20 = vector.shape_cast %19 : vector<1x128x384xf32> to vector<128x384xf32>
    %cst_18 = arith.constant dense<0.000000e+00> : vector<8x384xf32>
    %21 = tpu.matmul %14, %20, %cst_18 {dimension_numbers = #tpu.dot_dimension_numbers<[1], [0], [0], [1], [0, 0, 1, 1], [], []>} : vector<8x128xf32>, vector<128x384xf32>, vector<8x384xf32> -> vector<8x384xf32>
    %22 = vector.extract_strided_slice %18 {offsets = [0, 0], sizes = [8, 128], strides = [1, 1]} : vector<8x384xf32> to vector<8x128xf32>
    %23 = vector.extract_strided_slice %21 {offsets = [0, 0], sizes = [8, 128], strides = [1, 1]} : vector<8x384xf32> to vector<8x128xf32>
    %24 = arith.addf %22, %23 : vector<8x128xf32>
    %cst_19 = arith.constant 5.000000e-01 : f32
    %25 = vector.broadcast %cst_19 : f32 to vector<8x128xf32>
    %26 = arith.mulf %25, %24 : vector<8x128xf32>
    %27 = math.tanh %26 : vector<8x128xf32>
    %cst_20 = arith.constant 5.000000e-01 : f32
    %28 = vector.broadcast %cst_20 : f32 to vector<8x128xf32>
    %29 = arith.mulf %28, %27 : vector<8x128xf32>
    %cst_21 = arith.constant 5.000000e-01 : f32
    %30 = vector.broadcast %cst_21 : f32 to vector<8x128xf32>
    %31 = arith.addf %29, %30 : vector<8x128xf32>
    %32 = vector.extract_strided_slice %18 {offsets = [0, 128], sizes = [8, 128], strides = [1, 1]} : vector<8x384xf32> to vector<8x128xf32>
    %33 = vector.extract_strided_slice %21 {offsets = [0, 128], sizes = [8, 128], strides = [1, 1]} : vector<8x384xf32> to vector<8x128xf32>
    %34 = arith.addf %32, %33 : vector<8x128xf32>
    %cst_22 = arith.constant 5.000000e-01 : f32
    %35 = vector.broadcast %cst_22 : f32 to vector<8x128xf32>
    %36 = arith.mulf %35, %34 : vector<8x128xf32>
    %37 = math.tanh %36 : vector<8x128xf32>
    %cst_23 = arith.constant 5.000000e-01 : f32
    %38 = vector.broadcast %cst_23 : f32 to vector<8x128xf32>
    %39 = arith.mulf %38, %37 : vector<8x128xf32>
    %cst_24 = arith.constant 5.000000e-01 : f32
    %40 = vector.broadcast %cst_24 : f32 to vector<8x128xf32>
    %41 = arith.addf %39, %40 : vector<8x128xf32>
    %42 = vector.extract_strided_slice %18 {offsets = [0, 256], sizes = [8, 128], strides = [1, 1]} : vector<8x384xf32> to vector<8x128xf32>
    %43 = vector.extract_strided_slice %21 {offsets = [0, 256], sizes = [8, 128], strides = [1, 1]} : vector<8x384xf32> to vector<8x128xf32>
    %44 = arith.addf %43, %13 : vector<8x128xf32>
    %45 = arith.mulf %31, %44 : vector<8x128xf32>
    %46 = arith.addf %42, %45 : vector<8x128xf32>
    %47 = math.tanh %46 : vector<8x128xf32>
    %48 = arith.subf %14, %47 : vector<8x128xf32>
    %49 = arith.mulf %41, %48 : vector<8x128xf32>
    %50 = arith.addf %47, %49 : vector<8x128xf32>
    %51 = arith.index_cast %16 : i32 to index
    %c0_25 = arith.constant 0 : index
    %52 = vector.load %arg7[%51, %c0_25] : memref<64x128xf32, #tpu.memory_space<vmem>>, vector<8x128xf32>
    tpu.vector_store %arg7[%51, %c0_25], %50 {strides = array<i32>} : memref<64x128xf32, #tpu.memory_space<vmem>>, vector<8x128xf32>,
    %c1_i32 = arith.constant 1 : i32
    %c8_i32_26 = arith.constant 8 : i32
    %53 = arith.muli %c1_i32, %c8_i32_26 : i32
    %54 = tpu.assume_multiple %53, 8 : i32
    %55 = arith.index_cast %54 : i32 to index
    %c0_27 = arith.constant 0 : index
    %56 = vector.load %arg8[%55, %c0_27] : memref<64x384xf32, #tpu.memory_space<vmem>>, vector<8x384xf32>
    %c0_28 = arith.constant 0 : index
    %c0_29 = arith.constant 0 : index
    %c0_30 = arith.constant 0 : index
    %57 = vector.load %arg3[%c0_28, %c0_29, %c0_30] : memref<3x128x384xf32, #tpu.memory_space<vmem>>, vector<1x128x384xf32>
    %58 = vector.shape_cast %57 : vector<1x128x384xf32> to vector<128x384xf32>
    %cst_31 = arith.constant dense<0.000000e+00> : vector<8x384xf32>
    %59 = tpu.matmul %50, %58, %cst_31 {dimension_numbers = #tpu.dot_dimension_numbers<[1], [0], [0], [1], [0, 0, 1, 1], [], []>} : vector<8x128xf32>, vector<128x384xf32>, vector<8x384xf32> -> vector<8x384xf32>
    %60 = vector.extract_strided_slice %56 {offsets = [0, 0], sizes = [8, 128], strides = [1, 1]} : vector<8x384xf32> to vector<8x128xf32>
    %61 = vector.extract_strided_slice %59 {offsets = [0, 0], sizes = [8, 128], strides = [1, 1]} : vector<8x384xf32> to vector<8x128xf32>
    %62 = arith.addf %60, %61 : vector<8x128xf32>
    %cst_32 = arith.constant 5.000000e-01 : f32
    %63 = vector.broadcast %cst_32 : f32 to vector<8x128xf32>
    %64 = arith.mulf %63, %62 : vector<8x128xf32>
    %65 = math.tanh %64 : vector<8x128xf32>
    %cst_33 = arith.constant 5.000000e-01 : f32
    %66 = vector.broadcast %cst_33 : f32 to vector<8x128xf32>
    %67 = arith.mulf %66, %65 : vector<8x128xf32>
    %cst_34 = arith.constant 5.000000e-01 : f32
    %68 = vector.broadcast %cst_34 : f32 to vector<8x128xf32>
    %69 = arith.addf %67, %68 : vector<8x128xf32>
    %70 = vector.extract_strided_slice %56 {offsets = [0, 128], sizes = [8, 128], strides = [1, 1]} : vector<8x384xf32> to vector<8x128xf32>
    %71 = vector.extract_strided_slice %59 {offsets = [0, 128], sizes = [8, 128], strides = [1, 1]} : vector<8x384xf32> to vector<8x128xf32>
    %72 = arith.addf %70, %71 : vector<8x128xf32>
    %cst_35 = arith.constant 5.000000e-01 : f32
    %73 = vector.broadcast %cst_35 : f32 to vector<8x128xf32>
    %74 = arith.mulf %73, %72 : vector<8x128xf32>
    %75 = math.tanh %74 : vector<8x128xf32>
    %cst_36 = arith.constant 5.000000e-01 : f32
    %76 = vector.broadcast %cst_36 : f32 to vector<8x128xf32>
    %77 = arith.mulf %76, %75 : vector<8x128xf32>
    %cst_37 = arith.constant 5.000000e-01 : f32
    %78 = vector.broadcast %cst_37 : f32 to vector<8x128xf32>
    %79 = arith.addf %77, %78 : vector<8x128xf32>
    %80 = vector.extract_strided_slice %56 {offsets = [0, 256], sizes = [8, 128], strides = [1, 1]} : vector<8x384xf32> to vector<8x128xf32>
    %81 = vector.extract_strided_slice %59 {offsets = [0, 256], sizes = [8, 128], strides = [1, 1]} : vector<8x384xf32> to vector<8x128xf32>
    %82 = arith.addf %81, %13 : vector<8x128xf32>
    %83 = arith.mulf %69, %82 : vector<8x128xf32>
    %84 = arith.addf %80, %83 : vector<8x128xf32>
    %85 = math.tanh %84 : vector<8x128xf32>
    %86 = arith.subf %50, %85 : vector<8x128xf32>
    %87 = arith.mulf %79, %86 : vector<8x128xf32>
    %88 = arith.addf %85, %87 : vector<8x128xf32>
    %89 = arith.index_cast %54 : i32 to index
    %c0_38 = arith.constant 0 : index
    %90 = vector.load %arg7[%89, %c0_38] : memref<64x128xf32, #tpu.memory_space<vmem>>, vector<8x128xf32>
    tpu.vector_store %arg7[%89, %c0_38], %88 {strides = array<i32>} : memref<64x128xf32, #tpu.memory_space<vmem>>, vector<8x128xf32>,
    %c2_i32 = arith.constant 2 : i32
    %c8_i32_39 = arith.constant 8 : i32
    %91 = arith.muli %c2_i32, %c8_i32_39 : i32
    %92 = tpu.assume_multiple %91, 8 : i32
    %93 = arith.index_cast %92 : i32 to index
    %c0_40 = arith.constant 0 : index
    %94 = vector.load %arg8[%93, %c0_40] : memref<64x384xf32, #tpu.memory_space<vmem>>, vector<8x384xf32>
    %c0_41 = arith.constant 0 : index
    %c0_42 = arith.constant 0 : index
    %c0_43 = arith.constant 0 : index
    %95 = vector.load %arg3[%c0_41, %c0_42, %c0_43] : memref<3x128x384xf32, #tpu.memory_space<vmem>>, vector<1x128x384xf32>
    %96 = vector.shape_cast %95 : vector<1x128x384xf32> to vector<128x384xf32>
    %cst_44 = arith.constant dense<0.000000e+00> : vector<8x384xf32>
    %97 = tpu.matmul %88, %96, %cst_44 {dimension_numbers = #tpu.dot_dimension_numbers<[1], [0], [0], [1], [0, 0, 1, 1], [], []>} : vector<8x128xf32>, vector<128x384xf32>, vector<8x384xf32> -> vector<8x384xf32>
    %98 = vector.extract_strided_slice %94 {offsets = [0, 0], sizes = [8, 128], strides = [1, 1]} : vector<8x384xf32> to vector<8x128xf32>
    %99 = vector.extract_strided_slice %97 {offsets = [0, 0], sizes = [8, 128], strides = [1, 1]} : vector<8x384xf32> to vector<8x128xf32>
    %100 = arith.addf %98, %99 : vector<8x128xf32>
    %cst_45 = arith.constant 5.000000e-01 : f32
    %101 = vector.broadcast %cst_45 : f32 to vector<8x128xf32>
    %102 = arith.mulf %101, %100 : vector<8x128xf32>
    %103 = math.tanh %102 : vector<8x128xf32>
    %cst_46 = arith.constant 5.000000e-01 : f32
    %104 = vector.broadcast %cst_46 : f32 to vector<8x128xf32>
    %105 = arith.mulf %104, %103 : vector<8x128xf32>
    %cst_47 = arith.constant 5.000000e-01 : f32
    %106 = vector.broadcast %cst_47 : f32 to vector<8x128xf32>
    %107 = arith.addf %105, %106 : vector<8x128xf32>
    %108 = vector.extract_strided_slice %94 {offsets = [0, 128], sizes = [8, 128], strides = [1, 1]} : vector<8x384xf32> to vector<8x128xf32>
    %109 = vector.extract_strided_slice %97 {offsets = [0, 128], sizes = [8, 128], strides = [1, 1]} : vector<8x384xf32> to vector<8x128xf32>
    %110 = arith.addf %108, %109 : vector<8x128xf32>
    %cst_48 = arith.constant 5.000000e-01 : f32
    %111 = vector.broadcast %cst_48 : f32 to vector<8x128xf32>
    %112 = arith.mulf %111, %110 : vector<8x128xf32>
    %113 = math.tanh %112 : vector<8x128xf32>
    %cst_49 = arith.constant 5.000000e-01 : f32
    %114 = vector.broadcast %cst_49 : f32 to vector<8x128xf32>
    %115 = arith.mulf %114, %113 : vector<8x128xf32>
    %cst_50 = arith.constant 5.000000e-01 : f32
    %116 = vector.broadcast %cst_50 : f32 to vector<8x128xf32>
    %117 = arith.addf %115, %116 : vector<8x128xf32>
    %118 = vector.extract_strided_slice %94 {offsets = [0, 256], sizes = [8, 128], strides = [1, 1]} : vector<8x384xf32> to vector<8x128xf32>
    %119 = vector.extract_strided_slice %97 {offsets = [0, 256], sizes = [8, 128], strides = [1, 1]} : vector<8x384xf32> to vector<8x128xf32>
    %120 = arith.addf %119, %13 : vector<8x128xf32>
    %121 = arith.mulf %107, %120 : vector<8x128xf32>
    %122 = arith.addf %118, %121 : vector<8x128xf32>
    %123 = math.tanh %122 : vector<8x128xf32>
    %124 = arith.subf %88, %123 : vector<8x128xf32>
    %125 = arith.mulf %117, %124 : vector<8x128xf32>
    %126 = arith.addf %123, %125 : vector<8x128xf32>
    %127 = arith.index_cast %92 : i32 to index
    %c0_51 = arith.constant 0 : index
    %128 = vector.load %arg7[%127, %c0_51] : memref<64x128xf32, #tpu.memory_space<vmem>>, vector<8x128xf32>
    tpu.vector_store %arg7[%127, %c0_51], %126 {strides = array<i32>} : memref<64x128xf32, #tpu.memory_space<vmem>>, vector<8x128xf32>,
    %c3_i32 = arith.constant 3 : i32
    %c8_i32_52 = arith.constant 8 : i32
    %129 = arith.muli %c3_i32, %c8_i32_52 : i32
    %130 = tpu.assume_multiple %129, 8 : i32
    %131 = arith.index_cast %130 : i32 to index
    %c0_53 = arith.constant 0 : index
    %132 = vector.load %arg8[%131, %c0_53] : memref<64x384xf32, #tpu.memory_space<vmem>>, vector<8x384xf32>
    %c0_54 = arith.constant 0 : index
    %c0_55 = arith.constant 0 : index
    %c0_56 = arith.constant 0 : index
    %133 = vector.load %arg3[%c0_54, %c0_55, %c0_56] : memref<3x128x384xf32, #tpu.memory_space<vmem>>, vector<1x128x384xf32>
    %134 = vector.shape_cast %133 : vector<1x128x384xf32> to vector<128x384xf32>
    %cst_57 = arith.constant dense<0.000000e+00> : vector<8x384xf32>
    %135 = tpu.matmul %126, %134, %cst_57 {dimension_numbers = #tpu.dot_dimension_numbers<[1], [0], [0], [1], [0, 0, 1, 1], [], []>} : vector<8x128xf32>, vector<128x384xf32>, vector<8x384xf32> -> vector<8x384xf32>
    %136 = vector.extract_strided_slice %132 {offsets = [0, 0], sizes = [8, 128], strides = [1, 1]} : vector<8x384xf32> to vector<8x128xf32>
    %137 = vector.extract_strided_slice %135 {offsets = [0, 0], sizes = [8, 128], strides = [1, 1]} : vector<8x384xf32> to vector<8x128xf32>
    %138 = arith.addf %136, %137 : vector<8x128xf32>
    %cst_58 = arith.constant 5.000000e-01 : f32
    %139 = vector.broadcast %cst_58 : f32 to vector<8x128xf32>
    %140 = arith.mulf %139, %138 : vector<8x128xf32>
    %141 = math.tanh %140 : vector<8x128xf32>
    %cst_59 = arith.constant 5.000000e-01 : f32
    %142 = vector.broadcast %cst_59 : f32 to vector<8x128xf32>
    %143 = arith.mulf %142, %141 : vector<8x128xf32>
    %cst_60 = arith.constant 5.000000e-01 : f32
    %144 = vector.broadcast %cst_60 : f32 to vector<8x128xf32>
    %145 = arith.addf %143, %144 : vector<8x128xf32>
    %146 = vector.extract_strided_slice %132 {offsets = [0, 128], sizes = [8, 128], strides = [1, 1]} : vector<8x384xf32> to vector<8x128xf32>
    %147 = vector.extract_strided_slice %135 {offsets = [0, 128], sizes = [8, 128], strides = [1, 1]} : vector<8x384xf32> to vector<8x128xf32>
    %148 = arith.addf %146, %147 : vector<8x128xf32>
    %cst_61 = arith.constant 5.000000e-01 : f32
    %149 = vector.broadcast %cst_61 : f32 to vector<8x128xf32>
    %150 = arith.mulf %149, %148 : vector<8x128xf32>
    %151 = math.tanh %150 : vector<8x128xf32>
    %cst_62 = arith.constant 5.000000e-01 : f32
    %152 = vector.broadcast %cst_62 : f32 to vector<8x128xf32>
    %153 = arith.mulf %152, %151 : vector<8x128xf32>
    %cst_63 = arith.constant 5.000000e-01 : f32
    %154 = vector.broadcast %cst_63 : f32 to vector<8x128xf32>
    %155 = arith.addf %153, %154 : vector<8x128xf32>
    %156 = vector.extract_strided_slice %132 {offsets = [0, 256], sizes = [8, 128], strides = [1, 1]} : vector<8x384xf32> to vector<8x128xf32>
    %157 = vector.extract_strided_slice %135 {offsets = [0, 256], sizes = [8, 128], strides = [1, 1]} : vector<8x384xf32> to vector<8x128xf32>
    %158 = arith.addf %157, %13 : vector<8x128xf32>
    %159 = arith.mulf %145, %158 : vector<8x128xf32>
    %160 = arith.addf %156, %159 : vector<8x128xf32>
    %161 = math.tanh %160 : vector<8x128xf32>
    %162 = arith.subf %126, %161 : vector<8x128xf32>
    %163 = arith.mulf %155, %162 : vector<8x128xf32>
    %164 = arith.addf %161, %163 : vector<8x128xf32>
    %165 = arith.index_cast %130 : i32 to index
    %c0_64 = arith.constant 0 : index
    %166 = vector.load %arg7[%165, %c0_64] : memref<64x128xf32, #tpu.memory_space<vmem>>, vector<8x128xf32>
    tpu.vector_store %arg7[%165, %c0_64], %164 {strides = array<i32>} : memref<64x128xf32, #tpu.memory_space<vmem>>, vector<8x128xf32>,
    %c4_i32 = arith.constant 4 : i32
    %c8_i32_65 = arith.constant 8 : i32
    %167 = arith.muli %c4_i32, %c8_i32_65 : i32
    %168 = tpu.assume_multiple %167, 8 : i32
    %169 = arith.index_cast %168 : i32 to index
    %c0_66 = arith.constant 0 : index
    %170 = vector.load %arg8[%169, %c0_66] : memref<64x384xf32, #tpu.memory_space<vmem>>, vector<8x384xf32>
    %c0_67 = arith.constant 0 : index
    %c0_68 = arith.constant 0 : index
    %c0_69 = arith.constant 0 : index
    %171 = vector.load %arg3[%c0_67, %c0_68, %c0_69] : memref<3x128x384xf32, #tpu.memory_space<vmem>>, vector<1x128x384xf32>
    %172 = vector.shape_cast %171 : vector<1x128x384xf32> to vector<128x384xf32>
    %cst_70 = arith.constant dense<0.000000e+00> : vector<8x384xf32>
    %173 = tpu.matmul %164, %172, %cst_70 {dimension_numbers = #tpu.dot_dimension_numbers<[1], [0], [0], [1], [0, 0, 1, 1], [], []>} : vector<8x128xf32>, vector<128x384xf32>, vector<8x384xf32> -> vector<8x384xf32>
    %174 = vector.extract_strided_slice %170 {offsets = [0, 0], sizes = [8, 128], strides = [1, 1]} : vector<8x384xf32> to vector<8x128xf32>
    %175 = vector.extract_strided_slice %173 {offsets = [0, 0], sizes = [8, 128], strides = [1, 1]} : vector<8x384xf32> to vector<8x128xf32>
    %176 = arith.addf %174, %175 : vector<8x128xf32>
    %cst_71 = arith.constant 5.000000e-01 : f32
    %177 = vector.broadcast %cst_71 : f32 to vector<8x128xf32>
    %178 = arith.mulf %177, %176 : vector<8x128xf32>
    %179 = math.tanh %178 : vector<8x128xf32>
    %cst_72 = arith.constant 5.000000e-01 : f32
    %180 = vector.broadcast %cst_72 : f32 to vector<8x128xf32>
    %181 = arith.mulf %180, %179 : vector<8x128xf32>
    %cst_73 = arith.constant 5.000000e-01 : f32
    %182 = vector.broadcast %cst_73 : f32 to vector<8x128xf32>
    %183 = arith.addf %181, %182 : vector<8x128xf32>
    %184 = vector.extract_strided_slice %170 {offsets = [0, 128], sizes = [8, 128], strides = [1, 1]} : vector<8x384xf32> to vector<8x128xf32>
    %185 = vector.extract_strided_slice %173 {offsets = [0, 128], sizes = [8, 128], strides = [1, 1]} : vector<8x384xf32> to vector<8x128xf32>
    %186 = arith.addf %184, %185 : vector<8x128xf32>
    %cst_74 = arith.constant 5.000000e-01 : f32
    %187 = vector.broadcast %cst_74 : f32 to vector<8x128xf32>
    %188 = arith.mulf %187, %186 : vector<8x128xf32>
    %189 = math.tanh %188 : vector<8x128xf32>
    %cst_75 = arith.constant 5.000000e-01 : f32
    %190 = vector.broadcast %cst_75 : f32 to vector<8x128xf32>
    %191 = arith.mulf %190, %189 : vector<8x128xf32>
    %cst_76 = arith.constant 5.000000e-01 : f32
    %192 = vector.broadcast %cst_76 : f32 to vector<8x128xf32>
    %193 = arith.addf %191, %192 : vector<8x128xf32>
    %194 = vector.extract_strided_slice %170 {offsets = [0, 256], sizes = [8, 128], strides = [1, 1]} : vector<8x384xf32> to vector<8x128xf32>
    %195 = vector.extract_strided_slice %173 {offsets = [0, 256], sizes = [8, 128], strides = [1, 1]} : vector<8x384xf32> to vector<8x128xf32>
    %196 = arith.addf %195, %13 : vector<8x128xf32>
    %197 = arith.mulf %183, %196 : vector<8x128xf32>
    %198 = arith.addf %194, %197 : vector<8x128xf32>
    %199 = math.tanh %198 : vector<8x128xf32>
    %200 = arith.subf %164, %199 : vector<8x128xf32>
    %201 = arith.mulf %193, %200 : vector<8x128xf32>
    %202 = arith.addf %199, %201 : vector<8x128xf32>
    %203 = arith.index_cast %168 : i32 to index
    %c0_77 = arith.constant 0 : index
    %204 = vector.load %arg7[%203, %c0_77] : memref<64x128xf32, #tpu.memory_space<vmem>>, vector<8x128xf32>
    tpu.vector_store %arg7[%203, %c0_77], %202 {strides = array<i32>} : memref<64x128xf32, #tpu.memory_space<vmem>>, vector<8x128xf32>,
    %c5_i32 = arith.constant 5 : i32
    %c8_i32_78 = arith.constant 8 : i32
    %205 = arith.muli %c5_i32, %c8_i32_78 : i32
    %206 = tpu.assume_multiple %205, 8 : i32
    %207 = arith.index_cast %206 : i32 to index
    %c0_79 = arith.constant 0 : index
    %208 = vector.load %arg8[%207, %c0_79] : memref<64x384xf32, #tpu.memory_space<vmem>>, vector<8x384xf32>
    %c0_80 = arith.constant 0 : index
    %c0_81 = arith.constant 0 : index
    %c0_82 = arith.constant 0 : index
    %209 = vector.load %arg3[%c0_80, %c0_81, %c0_82] : memref<3x128x384xf32, #tpu.memory_space<vmem>>, vector<1x128x384xf32>
    %210 = vector.shape_cast %209 : vector<1x128x384xf32> to vector<128x384xf32>
    %cst_83 = arith.constant dense<0.000000e+00> : vector<8x384xf32>
    %211 = tpu.matmul %202, %210, %cst_83 {dimension_numbers = #tpu.dot_dimension_numbers<[1], [0], [0], [1], [0, 0, 1, 1], [], []>} : vector<8x128xf32>, vector<128x384xf32>, vector<8x384xf32> -> vector<8x384xf32>
    %212 = vector.extract_strided_slice %208 {offsets = [0, 0], sizes = [8, 128], strides = [1, 1]} : vector<8x384xf32> to vector<8x128xf32>
    %213 = vector.extract_strided_slice %211 {offsets = [0, 0], sizes = [8, 128], strides = [1, 1]} : vector<8x384xf32> to vector<8x128xf32>
    %214 = arith.addf %212, %213 : vector<8x128xf32>
    %cst_84 = arith.constant 5.000000e-01 : f32
    %215 = vector.broadcast %cst_84 : f32 to vector<8x128xf32>
    %216 = arith.mulf %215, %214 : vector<8x128xf32>
    %217 = math.tanh %216 : vector<8x128xf32>
    %cst_85 = arith.constant 5.000000e-01 : f32
    %218 = vector.broadcast %cst_85 : f32 to vector<8x128xf32>
    %219 = arith.mulf %218, %217 : vector<8x128xf32>
    %cst_86 = arith.constant 5.000000e-01 : f32
    %220 = vector.broadcast %cst_86 : f32 to vector<8x128xf32>
    %221 = arith.addf %219, %220 : vector<8x128xf32>
    %222 = vector.extract_strided_slice %208 {offsets = [0, 128], sizes = [8, 128], strides = [1, 1]} : vector<8x384xf32> to vector<8x128xf32>
    %223 = vector.extract_strided_slice %211 {offsets = [0, 128], sizes = [8, 128], strides = [1, 1]} : vector<8x384xf32> to vector<8x128xf32>
    %224 = arith.addf %222, %223 : vector<8x128xf32>
    %cst_87 = arith.constant 5.000000e-01 : f32
    %225 = vector.broadcast %cst_87 : f32 to vector<8x128xf32>
    %226 = arith.mulf %225, %224 : vector<8x128xf32>
    %227 = math.tanh %226 : vector<8x128xf32>
    %cst_88 = arith.constant 5.000000e-01 : f32
    %228 = vector.broadcast %cst_88 : f32 to vector<8x128xf32>
    %229 = arith.mulf %228, %227 : vector<8x128xf32>
    %cst_89 = arith.constant 5.000000e-01 : f32
    %230 = vector.broadcast %cst_89 : f32 to vector<8x128xf32>
    %231 = arith.addf %229, %230 : vector<8x128xf32>
    %232 = vector.extract_strided_slice %208 {offsets = [0, 256], sizes = [8, 128], strides = [1, 1]} : vector<8x384xf32> to vector<8x128xf32>
    %233 = vector.extract_strided_slice %211 {offsets = [0, 256], sizes = [8, 128], strides = [1, 1]} : vector<8x384xf32> to vector<8x128xf32>
    %234 = arith.addf %233, %13 : vector<8x128xf32>
    %235 = arith.mulf %221, %234 : vector<8x128xf32>
    %236 = arith.addf %232, %235 : vector<8x128xf32>
    %237 = math.tanh %236 : vector<8x128xf32>
    %238 = arith.subf %202, %237 : vector<8x128xf32>
    %239 = arith.mulf %231, %238 : vector<8x128xf32>
    %240 = arith.addf %237, %239 : vector<8x128xf32>
    %241 = arith.index_cast %206 : i32 to index
    %c0_90 = arith.constant 0 : index
    %242 = vector.load %arg7[%241, %c0_90] : memref<64x128xf32, #tpu.memory_space<vmem>>, vector<8x128xf32>
    tpu.vector_store %arg7[%241, %c0_90], %240 {strides = array<i32>} : memref<64x128xf32, #tpu.memory_space<vmem>>, vector<8x128xf32>,
    %c6_i32 = arith.constant 6 : i32
    %c8_i32_91 = arith.constant 8 : i32
    %243 = arith.muli %c6_i32, %c8_i32_91 : i32
    %244 = tpu.assume_multiple %243, 8 : i32
    %245 = arith.index_cast %244 : i32 to index
    %c0_92 = arith.constant 0 : index
    %246 = vector.load %arg8[%245, %c0_92] : memref<64x384xf32, #tpu.memory_space<vmem>>, vector<8x384xf32>
    %c0_93 = arith.constant 0 : index
    %c0_94 = arith.constant 0 : index
    %c0_95 = arith.constant 0 : index
    %247 = vector.load %arg3[%c0_93, %c0_94, %c0_95] : memref<3x128x384xf32, #tpu.memory_space<vmem>>, vector<1x128x384xf32>
    %248 = vector.shape_cast %247 : vector<1x128x384xf32> to vector<128x384xf32>
    %cst_96 = arith.constant dense<0.000000e+00> : vector<8x384xf32>
    %249 = tpu.matmul %240, %248, %cst_96 {dimension_numbers = #tpu.dot_dimension_numbers<[1], [0], [0], [1], [0, 0, 1, 1], [], []>} : vector<8x128xf32>, vector<128x384xf32>, vector<8x384xf32> -> vector<8x384xf32>
    %250 = vector.extract_strided_slice %246 {offsets = [0, 0], sizes = [8, 128], strides = [1, 1]} : vector<8x384xf32> to vector<8x128xf32>
    %251 = vector.extract_strided_slice %249 {offsets = [0, 0], sizes = [8, 128], strides = [1, 1]} : vector<8x384xf32> to vector<8x128xf32>
    %252 = arith.addf %250, %251 : vector<8x128xf32>
    %cst_97 = arith.constant 5.000000e-01 : f32
    %253 = vector.broadcast %cst_97 : f32 to vector<8x128xf32>
    %254 = arith.mulf %253, %252 : vector<8x128xf32>
    %255 = math.tanh %254 : vector<8x128xf32>
    %cst_98 = arith.constant 5.000000e-01 : f32
    %256 = vector.broadcast %cst_98 : f32 to vector<8x128xf32>
    %257 = arith.mulf %256, %255 : vector<8x128xf32>
    %cst_99 = arith.constant 5.000000e-01 : f32
    %258 = vector.broadcast %cst_99 : f32 to vector<8x128xf32>
    %259 = arith.addf %257, %258 : vector<8x128xf32>
    %260 = vector.extract_strided_slice %246 {offsets = [0, 128], sizes = [8, 128], strides = [1, 1]} : vector<8x384xf32> to vector<8x128xf32>
    %261 = vector.extract_strided_slice %249 {offsets = [0, 128], sizes = [8, 128], strides = [1, 1]} : vector<8x384xf32> to vector<8x128xf32>
    %262 = arith.addf %260, %261 : vector<8x128xf32>
    %cst_100 = arith.constant 5.000000e-01 : f32
    %263 = vector.broadcast %cst_100 : f32 to vector<8x128xf32>
    %264 = arith.mulf %263, %262 : vector<8x128xf32>
    %265 = math.tanh %264 : vector<8x128xf32>
    %cst_101 = arith.constant 5.000000e-01 : f32
    %266 = vector.broadcast %cst_101 : f32 to vector<8x128xf32>
    %267 = arith.mulf %266, %265 : vector<8x128xf32>
    %cst_102 = arith.constant 5.000000e-01 : f32
    %268 = vector.broadcast %cst_102 : f32 to vector<8x128xf32>
    %269 = arith.addf %267, %268 : vector<8x128xf32>
    %270 = vector.extract_strided_slice %246 {offsets = [0, 256], sizes = [8, 128], strides = [1, 1]} : vector<8x384xf32> to vector<8x128xf32>
    %271 = vector.extract_strided_slice %249 {offsets = [0, 256], sizes = [8, 128], strides = [1, 1]} : vector<8x384xf32> to vector<8x128xf32>
    %272 = arith.addf %271, %13 : vector<8x128xf32>
    %273 = arith.mulf %259, %272 : vector<8x128xf32>
    %274 = arith.addf %270, %273 : vector<8x128xf32>
    %275 = math.tanh %274 : vector<8x128xf32>
    %276 = arith.subf %240, %275 : vector<8x128xf32>
    %277 = arith.mulf %269, %276 : vector<8x128xf32>
    %278 = arith.addf %275, %277 : vector<8x128xf32>
    %279 = arith.index_cast %244 : i32 to index
    %c0_103 = arith.constant 0 : index
    %280 = vector.load %arg7[%279, %c0_103] : memref<64x128xf32, #tpu.memory_space<vmem>>, vector<8x128xf32>
    tpu.vector_store %arg7[%279, %c0_103], %278 {strides = array<i32>} : memref<64x128xf32, #tpu.memory_space<vmem>>, vector<8x128xf32>,
    %c7_i32 = arith.constant 7 : i32
    %c8_i32_104 = arith.constant 8 : i32
    %281 = arith.muli %c7_i32, %c8_i32_104 : i32
    %282 = tpu.assume_multiple %281, 8 : i32
    %283 = arith.index_cast %282 : i32 to index
    %c0_105 = arith.constant 0 : index
    %284 = vector.load %arg8[%283, %c0_105] : memref<64x384xf32, #tpu.memory_space<vmem>>, vector<8x384xf32>
    %c0_106 = arith.constant 0 : index
    %c0_107 = arith.constant 0 : index
    %c0_108 = arith.constant 0 : index
    %285 = vector.load %arg3[%c0_106, %c0_107, %c0_108] : memref<3x128x384xf32, #tpu.memory_space<vmem>>, vector<1x128x384xf32>
    %286 = vector.shape_cast %285 : vector<1x128x384xf32> to vector<128x384xf32>
    %cst_109 = arith.constant dense<0.000000e+00> : vector<8x384xf32>
    %287 = tpu.matmul %278, %286, %cst_109 {dimension_numbers = #tpu.dot_dimension_numbers<[1], [0], [0], [1], [0, 0, 1, 1], [], []>} : vector<8x128xf32>, vector<128x384xf32>, vector<8x384xf32> -> vector<8x384xf32>
    %288 = vector.extract_strided_slice %284 {offsets = [0, 0], sizes = [8, 128], strides = [1, 1]} : vector<8x384xf32> to vector<8x128xf32>
    %289 = vector.extract_strided_slice %287 {offsets = [0, 0], sizes = [8, 128], strides = [1, 1]} : vector<8x384xf32> to vector<8x128xf32>
    %290 = arith.addf %288, %289 : vector<8x128xf32>
    %cst_110 = arith.constant 5.000000e-01 : f32
    %291 = vector.broadcast %cst_110 : f32 to vector<8x128xf32>
    %292 = arith.mulf %291, %290 : vector<8x128xf32>
    %293 = math.tanh %292 : vector<8x128xf32>
    %cst_111 = arith.constant 5.000000e-01 : f32
    %294 = vector.broadcast %cst_111 : f32 to vector<8x128xf32>
    %295 = arith.mulf %294, %293 : vector<8x128xf32>
    %cst_112 = arith.constant 5.000000e-01 : f32
    %296 = vector.broadcast %cst_112 : f32 to vector<8x128xf32>
    %297 = arith.addf %295, %296 : vector<8x128xf32>
    %298 = vector.extract_strided_slice %284 {offsets = [0, 128], sizes = [8, 128], strides = [1, 1]} : vector<8x384xf32> to vector<8x128xf32>
    %299 = vector.extract_strided_slice %287 {offsets = [0, 128], sizes = [8, 128], strides = [1, 1]} : vector<8x384xf32> to vector<8x128xf32>
    %300 = arith.addf %298, %299 : vector<8x128xf32>
    %cst_113 = arith.constant 5.000000e-01 : f32
    %301 = vector.broadcast %cst_113 : f32 to vector<8x128xf32>
    %302 = arith.mulf %301, %300 : vector<8x128xf32>
    %303 = math.tanh %302 : vector<8x128xf32>
    %cst_114 = arith.constant 5.000000e-01 : f32
    %304 = vector.broadcast %cst_114 : f32 to vector<8x128xf32>
    %305 = arith.mulf %304, %303 : vector<8x128xf32>
    %cst_115 = arith.constant 5.000000e-01 : f32
    %306 = vector.broadcast %cst_115 : f32 to vector<8x128xf32>
    %307 = arith.addf %305, %306 : vector<8x128xf32>
    %308 = vector.extract_strided_slice %284 {offsets = [0, 256], sizes = [8, 128], strides = [1, 1]} : vector<8x384xf32> to vector<8x128xf32>
    %309 = vector.extract_strided_slice %287 {offsets = [0, 256], sizes = [8, 128], strides = [1, 1]} : vector<8x384xf32> to vector<8x128xf32>
    %310 = arith.addf %309, %13 : vector<8x128xf32>
    %311 = arith.mulf %297, %310 : vector<8x128xf32>
    %312 = arith.addf %308, %311 : vector<8x128xf32>
    %313 = math.tanh %312 : vector<8x128xf32>
    %314 = arith.subf %278, %313 : vector<8x128xf32>
    %315 = arith.mulf %307, %314 : vector<8x128xf32>
    %316 = arith.addf %313, %315 : vector<8x128xf32>
    %317 = arith.index_cast %282 : i32 to index
    %c0_116 = arith.constant 0 : index
    %318 = vector.load %arg7[%317, %c0_116] : memref<64x128xf32, #tpu.memory_space<vmem>>, vector<8x128xf32>
    tpu.vector_store %arg7[%317, %c0_116], %316 {strides = array<i32>} : memref<64x128xf32, #tpu.memory_space<vmem>>, vector<8x128xf32>,
    %c8_i32_117 = arith.constant 8 : i32
    %c0_118 = arith.constant 0 : index
    %c0_119 = arith.constant 0 : index
    %319 = vector.load %arg7[%c0_118, %c0_119] : memref<64x128xf32, #tpu.memory_space<vmem>>, vector<64x128xf32>
    %c1 = arith.constant 1 : index
    %c0_120 = arith.constant 0 : index
    %c0_121 = arith.constant 0 : index
    %320 = vector.load %arg2[%c1, %c0_120, %c0_121] : memref<3x128x384xf32, #tpu.memory_space<vmem>>, vector<1x128x384xf32>
    %321 = vector.shape_cast %320 : vector<1x128x384xf32> to vector<128x384xf32>
    %cst_122 = arith.constant dense<0.000000e+00> : vector<64x384xf32>
    %322 = tpu.matmul %319, %321, %cst_122 {dimension_numbers = #tpu.dot_dimension_numbers<[1], [0], [0], [1], [0, 0, 1, 1], [], []>} : vector<64x128xf32>, vector<128x384xf32>, vector<64x384xf32> -> vector<64x384xf32>
    %c1_123 = arith.constant 1 : index
    %c0_124 = arith.constant 0 : index
    %c0_125 = arith.constant 0 : index
    %323 = vector.load %arg4[%c1_123, %c0_124, %c0_125] : memref<3x1x384xf32, #tpu.memory_space<vmem>>, vector<1x1x384xf32>
    %324 = vector.shape_cast %323 : vector<1x1x384xf32> to vector<1x384xf32>
    %325 = vector.broadcast %324 : vector<1x384xf32> to vector<64x384xf32>
    %326 = arith.addf %322, %325 : vector<64x384xf32>
    %c0_126 = arith.constant 0 : index
    %c0_127 = arith.constant 0 : index
    %327 = vector.load %arg8[%c0_126, %c0_127] : memref<64x384xf32, #tpu.memory_space<vmem>>, vector<64x384xf32>
    tpu.vector_store %arg8[%c0_126, %c0_127], %326 {strides = array<i32>} : memref<64x384xf32, #tpu.memory_space<vmem>>, vector<64x384xf32>,
    %c1_128 = arith.constant 1 : index
    %c0_129 = arith.constant 0 : index
    %c0_130 = arith.constant 0 : index
    %328 = vector.load %arg5[%c1_128, %c0_129, %c0_130] : memref<3x1x128xf32, #tpu.memory_space<vmem>>, vector<1x1x128xf32>
    %329 = vector.shape_cast %328 : vector<1x1x128xf32> to vector<1x128xf32>
    %330 = vector.shape_cast %329 : vector<1x128xf32> to vector<1x128xf32>
    %331 = vector.broadcast %330 : vector<1x128xf32> to vector<8x128xf32>
    %cst_131 = arith.constant 0.000000e+00 : f32
    %332 = vector.broadcast %cst_131 : f32 to vector<8x128xf32>
    %c0_i32_132 = arith.constant 0 : i32
    %c8_i32_133 = arith.constant 8 : i32
    %333 = arith.muli %c0_i32_132, %c8_i32_133 : i32
    %334 = tpu.assume_multiple %333, 8 : i32
    %335 = arith.index_cast %334 : i32 to index
    %c0_134 = arith.constant 0 : index
    %336 = vector.load %arg8[%335, %c0_134] : memref<64x384xf32, #tpu.memory_space<vmem>>, vector<8x384xf32>
    %c1_135 = arith.constant 1 : index
    %c0_136 = arith.constant 0 : index
    %c0_137 = arith.constant 0 : index
    %337 = vector.load %arg3[%c1_135, %c0_136, %c0_137] : memref<3x128x384xf32, #tpu.memory_space<vmem>>, vector<1x128x384xf32>
    %338 = vector.shape_cast %337 : vector<1x128x384xf32> to vector<128x384xf32>
    %cst_138 = arith.constant dense<0.000000e+00> : vector<8x384xf32>
    %339 = tpu.matmul %332, %338, %cst_138 {dimension_numbers = #tpu.dot_dimension_numbers<[1], [0], [0], [1], [0, 0, 1, 1], [], []>} : vector<8x128xf32>, vector<128x384xf32>, vector<8x384xf32> -> vector<8x384xf32>
    %340 = vector.extract_strided_slice %336 {offsets = [0, 0], sizes = [8, 128], strides = [1, 1]} : vector<8x384xf32> to vector<8x128xf32>
    %341 = vector.extract_strided_slice %339 {offsets = [0, 0], sizes = [8, 128], strides = [1, 1]} : vector<8x384xf32> to vector<8x128xf32>
    %342 = arith.addf %340, %341 : vector<8x128xf32>
    %cst_139 = arith.constant 5.000000e-01 : f32
    %343 = vector.broadcast %cst_139 : f32 to vector<8x128xf32>
    %344 = arith.mulf %343, %342 : vector<8x128xf32>
    %345 = math.tanh %344 : vector<8x128xf32>
    %cst_140 = arith.constant 5.000000e-01 : f32
    %346 = vector.broadcast %cst_140 : f32 to vector<8x128xf32>
    %347 = arith.mulf %346, %345 : vector<8x128xf32>
    %cst_141 = arith.constant 5.000000e-01 : f32
    %348 = vector.broadcast %cst_141 : f32 to vector<8x128xf32>
    %349 = arith.addf %347, %348 : vector<8x128xf32>
    %350 = vector.extract_strided_slice %336 {offsets = [0, 128], sizes = [8, 128], strides = [1, 1]} : vector<8x384xf32> to vector<8x128xf32>
    %351 = vector.extract_strided_slice %339 {offsets = [0, 128], sizes = [8, 128], strides = [1, 1]} : vector<8x384xf32> to vector<8x128xf32>
    %352 = arith.addf %350, %351 : vector<8x128xf32>
    %cst_142 = arith.constant 5.000000e-01 : f32
    %353 = vector.broadcast %cst_142 : f32 to vector<8x128xf32>
    %354 = arith.mulf %353, %352 : vector<8x128xf32>
    %355 = math.tanh %354 : vector<8x128xf32>
    %cst_143 = arith.constant 5.000000e-01 : f32
    %356 = vector.broadcast %cst_143 : f32 to vector<8x128xf32>
    %357 = arith.mulf %356, %355 : vector<8x128xf32>
    %cst_144 = arith.constant 5.000000e-01 : f32
    %358 = vector.broadcast %cst_144 : f32 to vector<8x128xf32>
    %359 = arith.addf %357, %358 : vector<8x128xf32>
    %360 = vector.extract_strided_slice %336 {offsets = [0, 256], sizes = [8, 128], strides = [1, 1]} : vector<8x384xf32> to vector<8x128xf32>
    %361 = vector.extract_strided_slice %339 {offsets = [0, 256], sizes = [8, 128], strides = [1, 1]} : vector<8x384xf32> to vector<8x128xf32>
    %362 = arith.addf %361, %331 : vector<8x128xf32>
    %363 = arith.mulf %349, %362 : vector<8x128xf32>
    %364 = arith.addf %360, %363 : vector<8x128xf32>
    %365 = math.tanh %364 : vector<8x128xf32>
    %366 = arith.subf %332, %365 : vector<8x128xf32>
    %367 = arith.mulf %359, %366 : vector<8x128xf32>
    %368 = arith.addf %365, %367 : vector<8x128xf32>
    %369 = arith.index_cast %334 : i32 to index
    %c0_145 = arith.constant 0 : index
    %370 = vector.load %arg7[%369, %c0_145] : memref<64x128xf32, #tpu.memory_space<vmem>>, vector<8x128xf32>
    tpu.vector_store %arg7[%369, %c0_145], %368 {strides = array<i32>} : memref<64x128xf32, #tpu.memory_space<vmem>>, vector<8x128xf32>,
    %c1_i32_146 = arith.constant 1 : i32
    %c8_i32_147 = arith.constant 8 : i32
    %371 = arith.muli %c1_i32_146, %c8_i32_147 : i32
    %372 = tpu.assume_multiple %371, 8 : i32
    %373 = arith.index_cast %372 : i32 to index
    %c0_148 = arith.constant 0 : index
    %374 = vector.load %arg8[%373, %c0_148] : memref<64x384xf32, #tpu.memory_space<vmem>>, vector<8x384xf32>
    %c1_149 = arith.constant 1 : index
    %c0_150 = arith.constant 0 : index
    %c0_151 = arith.constant 0 : index
    %375 = vector.load %arg3[%c1_149, %c0_150, %c0_151] : memref<3x128x384xf32, #tpu.memory_space<vmem>>, vector<1x128x384xf32>
    %376 = vector.shape_cast %375 : vector<1x128x384xf32> to vector<128x384xf32>
    %cst_152 = arith.constant dense<0.000000e+00> : vector<8x384xf32>
    %377 = tpu.matmul %368, %376, %cst_152 {dimension_numbers = #tpu.dot_dimension_numbers<[1], [0], [0], [1], [0, 0, 1, 1], [], []>} : vector<8x128xf32>, vector<128x384xf32>, vector<8x384xf32> -> vector<8x384xf32>
    %378 = vector.extract_strided_slice %374 {offsets = [0, 0], sizes = [8, 128], strides = [1, 1]} : vector<8x384xf32> to vector<8x128xf32>
    %379 = vector.extract_strided_slice %377 {offsets = [0, 0], sizes = [8, 128], strides = [1, 1]} : vector<8x384xf32> to vector<8x128xf32>
    %380 = arith.addf %378, %379 : vector<8x128xf32>
    %cst_153 = arith.constant 5.000000e-01 : f32
    %381 = vector.broadcast %cst_153 : f32 to vector<8x128xf32>
    %382 = arith.mulf %381, %380 : vector<8x128xf32>
    %383 = math.tanh %382 : vector<8x128xf32>
    %cst_154 = arith.constant 5.000000e-01 : f32
    %384 = vector.broadcast %cst_154 : f32 to vector<8x128xf32>
    %385 = arith.mulf %384, %383 : vector<8x128xf32>
    %cst_155 = arith.constant 5.000000e-01 : f32
    %386 = vector.broadcast %cst_155 : f32 to vector<8x128xf32>
    %387 = arith.addf %385, %386 : vector<8x128xf32>
    %388 = vector.extract_strided_slice %374 {offsets = [0, 128], sizes = [8, 128], strides = [1, 1]} : vector<8x384xf32> to vector<8x128xf32>
    %389 = vector.extract_strided_slice %377 {offsets = [0, 128], sizes = [8, 128], strides = [1, 1]} : vector<8x384xf32> to vector<8x128xf32>
    %390 = arith.addf %388, %389 : vector<8x128xf32>
    %cst_156 = arith.constant 5.000000e-01 : f32
    %391 = vector.broadcast %cst_156 : f32 to vector<8x128xf32>
    %392 = arith.mulf %391, %390 : vector<8x128xf32>
    %393 = math.tanh %392 : vector<8x128xf32>
    %cst_157 = arith.constant 5.000000e-01 : f32
    %394 = vector.broadcast %cst_157 : f32 to vector<8x128xf32>
    %395 = arith.mulf %394, %393 : vector<8x128xf32>
    %cst_158 = arith.constant 5.000000e-01 : f32
    %396 = vector.broadcast %cst_158 : f32 to vector<8x128xf32>
    %397 = arith.addf %395, %396 : vector<8x128xf32>
    %398 = vector.extract_strided_slice %374 {offsets = [0, 256], sizes = [8, 128], strides = [1, 1]} : vector<8x384xf32> to vector<8x128xf32>
    %399 = vector.extract_strided_slice %377 {offsets = [0, 256], sizes = [8, 128], strides = [1, 1]} : vector<8x384xf32> to vector<8x128xf32>
    %400 = arith.addf %399, %331 : vector<8x128xf32>
    %401 = arith.mulf %387, %400 : vector<8x128xf32>
    %402 = arith.addf %398, %401 : vector<8x128xf32>
    %403 = math.tanh %402 : vector<8x128xf32>
    %404 = arith.subf %368, %403 : vector<8x128xf32>
    %405 = arith.mulf %397, %404 : vector<8x128xf32>
    %406 = arith.addf %403, %405 : vector<8x128xf32>
    %407 = arith.index_cast %372 : i32 to index
    %c0_159 = arith.constant 0 : index
    %408 = vector.load %arg7[%407, %c0_159] : memref<64x128xf32, #tpu.memory_space<vmem>>, vector<8x128xf32>
    tpu.vector_store %arg7[%407, %c0_159], %406 {strides = array<i32>} : memref<64x128xf32, #tpu.memory_space<vmem>>, vector<8x128xf32>,
    %c2_i32_160 = arith.constant 2 : i32
    %c8_i32_161 = arith.constant 8 : i32
    %409 = arith.muli %c2_i32_160, %c8_i32_161 : i32
    %410 = tpu.assume_multiple %409, 8 : i32
    %411 = arith.index_cast %410 : i32 to index
    %c0_162 = arith.constant 0 : index
    %412 = vector.load %arg8[%411, %c0_162] : memref<64x384xf32, #tpu.memory_space<vmem>>, vector<8x384xf32>
    %c1_163 = arith.constant 1 : index
    %c0_164 = arith.constant 0 : index
    %c0_165 = arith.constant 0 : index
    %413 = vector.load %arg3[%c1_163, %c0_164, %c0_165] : memref<3x128x384xf32, #tpu.memory_space<vmem>>, vector<1x128x384xf32>
    %414 = vector.shape_cast %413 : vector<1x128x384xf32> to vector<128x384xf32>
    %cst_166 = arith.constant dense<0.000000e+00> : vector<8x384xf32>
    %415 = tpu.matmul %406, %414, %cst_166 {dimension_numbers = #tpu.dot_dimension_numbers<[1], [0], [0], [1], [0, 0, 1, 1], [], []>} : vector<8x128xf32>, vector<128x384xf32>, vector<8x384xf32> -> vector<8x384xf32>
    %416 = vector.extract_strided_slice %412 {offsets = [0, 0], sizes = [8, 128], strides = [1, 1]} : vector<8x384xf32> to vector<8x128xf32>
    %417 = vector.extract_strided_slice %415 {offsets = [0, 0], sizes = [8, 128], strides = [1, 1]} : vector<8x384xf32> to vector<8x128xf32>
    %418 = arith.addf %416, %417 : vector<8x128xf32>
    %cst_167 = arith.constant 5.000000e-01 : f32
    %419 = vector.broadcast %cst_167 : f32 to vector<8x128xf32>
    %420 = arith.mulf %419, %418 : vector<8x128xf32>
    %421 = math.tanh %420 : vector<8x128xf32>
    %cst_168 = arith.constant 5.000000e-01 : f32
    %422 = vector.broadcast %cst_168 : f32 to vector<8x128xf32>
    %423 = arith.mulf %422, %421 : vector<8x128xf32>
    %cst_169 = arith.constant 5.000000e-01 : f32
    %424 = vector.broadcast %cst_169 : f32 to vector<8x128xf32>
    %425 = arith.addf %423, %424 : vector<8x128xf32>
    %426 = vector.extract_strided_slice %412 {offsets = [0, 128], sizes = [8, 128], strides = [1, 1]} : vector<8x384xf32> to vector<8x128xf32>
    %427 = vector.extract_strided_slice %415 {offsets = [0, 128], sizes = [8, 128], strides = [1, 1]} : vector<8x384xf32> to vector<8x128xf32>
    %428 = arith.addf %426, %427 : vector<8x128xf32>
    %cst_170 = arith.constant 5.000000e-01 : f32
    %429 = vector.broadcast %cst_170 : f32 to vector<8x128xf32>
    %430 = arith.mulf %429, %428 : vector<8x128xf32>
    %431 = math.tanh %430 : vector<8x128xf32>
    %cst_171 = arith.constant 5.000000e-01 : f32
    %432 = vector.broadcast %cst_171 : f32 to vector<8x128xf32>
    %433 = arith.mulf %432, %431 : vector<8x128xf32>
    %cst_172 = arith.constant 5.000000e-01 : f32
    %434 = vector.broadcast %cst_172 : f32 to vector<8x128xf32>
    %435 = arith.addf %433, %434 : vector<8x128xf32>
    %436 = vector.extract_strided_slice %412 {offsets = [0, 256], sizes = [8, 128], strides = [1, 1]} : vector<8x384xf32> to vector<8x128xf32>
    %437 = vector.extract_strided_slice %415 {offsets = [0, 256], sizes = [8, 128], strides = [1, 1]} : vector<8x384xf32> to vector<8x128xf32>
    %438 = arith.addf %437, %331 : vector<8x128xf32>
    %439 = arith.mulf %425, %438 : vector<8x128xf32>
    %440 = arith.addf %436, %439 : vector<8x128xf32>
    %441 = math.tanh %440 : vector<8x128xf32>
    %442 = arith.subf %406, %441 : vector<8x128xf32>
    %443 = arith.mulf %435, %442 : vector<8x128xf32>
    %444 = arith.addf %441, %443 : vector<8x128xf32>
    %445 = arith.index_cast %410 : i32 to index
    %c0_173 = arith.constant 0 : index
    %446 = vector.load %arg7[%445, %c0_173] : memref<64x128xf32, #tpu.memory_space<vmem>>, vector<8x128xf32>
    tpu.vector_store %arg7[%445, %c0_173], %444 {strides = array<i32>} : memref<64x128xf32, #tpu.memory_space<vmem>>, vector<8x128xf32>,
    %c3_i32_174 = arith.constant 3 : i32
    %c8_i32_175 = arith.constant 8 : i32
    %447 = arith.muli %c3_i32_174, %c8_i32_175 : i32
    %448 = tpu.assume_multiple %447, 8 : i32
    %449 = arith.index_cast %448 : i32 to index
    %c0_176 = arith.constant 0 : index
    %450 = vector.load %arg8[%449, %c0_176] : memref<64x384xf32, #tpu.memory_space<vmem>>, vector<8x384xf32>
    %c1_177 = arith.constant 1 : index
    %c0_178 = arith.constant 0 : index
    %c0_179 = arith.constant 0 : index
    %451 = vector.load %arg3[%c1_177, %c0_178, %c0_179] : memref<3x128x384xf32, #tpu.memory_space<vmem>>, vector<1x128x384xf32>
    %452 = vector.shape_cast %451 : vector<1x128x384xf32> to vector<128x384xf32>
    %cst_180 = arith.constant dense<0.000000e+00> : vector<8x384xf32>
    %453 = tpu.matmul %444, %452, %cst_180 {dimension_numbers = #tpu.dot_dimension_numbers<[1], [0], [0], [1], [0, 0, 1, 1], [], []>} : vector<8x128xf32>, vector<128x384xf32>, vector<8x384xf32> -> vector<8x384xf32>
    %454 = vector.extract_strided_slice %450 {offsets = [0, 0], sizes = [8, 128], strides = [1, 1]} : vector<8x384xf32> to vector<8x128xf32>
    %455 = vector.extract_strided_slice %453 {offsets = [0, 0], sizes = [8, 128], strides = [1, 1]} : vector<8x384xf32> to vector<8x128xf32>
    %456 = arith.addf %454, %455 : vector<8x128xf32>
    %cst_181 = arith.constant 5.000000e-01 : f32
    %457 = vector.broadcast %cst_181 : f32 to vector<8x128xf32>
    %458 = arith.mulf %457, %456 : vector<8x128xf32>
    %459 = math.tanh %458 : vector<8x128xf32>
    %cst_182 = arith.constant 5.000000e-01 : f32
    %460 = vector.broadcast %cst_182 : f32 to vector<8x128xf32>
    %461 = arith.mulf %460, %459 : vector<8x128xf32>
    %cst_183 = arith.constant 5.000000e-01 : f32
    %462 = vector.broadcast %cst_183 : f32 to vector<8x128xf32>
    %463 = arith.addf %461, %462 : vector<8x128xf32>
    %464 = vector.extract_strided_slice %450 {offsets = [0, 128], sizes = [8, 128], strides = [1, 1]} : vector<8x384xf32> to vector<8x128xf32>
    %465 = vector.extract_strided_slice %453 {offsets = [0, 128], sizes = [8, 128], strides = [1, 1]} : vector<8x384xf32> to vector<8x128xf32>
    %466 = arith.addf %464, %465 : vector<8x128xf32>
    %cst_184 = arith.constant 5.000000e-01 : f32
    %467 = vector.broadcast %cst_184 : f32 to vector<8x128xf32>
    %468 = arith.mulf %467, %466 : vector<8x128xf32>
    %469 = math.tanh %468 : vector<8x128xf32>
    %cst_185 = arith.constant 5.000000e-01 : f32
    %470 = vector.broadcast %cst_185 : f32 to vector<8x128xf32>
    %471 = arith.mulf %470, %469 : vector<8x128xf32>
    %cst_186 = arith.constant 5.000000e-01 : f32
    %472 = vector.broadcast %cst_186 : f32 to vector<8x128xf32>
    %473 = arith.addf %471, %472 : vector<8x128xf32>
    %474 = vector.extract_strided_slice %450 {offsets = [0, 256], sizes = [8, 128], strides = [1, 1]} : vector<8x384xf32> to vector<8x128xf32>
    %475 = vector.extract_strided_slice %453 {offsets = [0, 256], sizes = [8, 128], strides = [1, 1]} : vector<8x384xf32> to vector<8x128xf32>
    %476 = arith.addf %475, %331 : vector<8x128xf32>
    %477 = arith.mulf %463, %476 : vector<8x128xf32>
    %478 = arith.addf %474, %477 : vector<8x128xf32>
    %479 = math.tanh %478 : vector<8x128xf32>
    %480 = arith.subf %444, %479 : vector<8x128xf32>
    %481 = arith.mulf %473, %480 : vector<8x128xf32>
    %482 = arith.addf %479, %481 : vector<8x128xf32>
    %483 = arith.index_cast %448 : i32 to index
    %c0_187 = arith.constant 0 : index
    %484 = vector.load %arg7[%483, %c0_187] : memref<64x128xf32, #tpu.memory_space<vmem>>, vector<8x128xf32>
    tpu.vector_store %arg7[%483, %c0_187], %482 {strides = array<i32>} : memref<64x128xf32, #tpu.memory_space<vmem>>, vector<8x128xf32>,
    %c4_i32_188 = arith.constant 4 : i32
    %c8_i32_189 = arith.constant 8 : i32
    %485 = arith.muli %c4_i32_188, %c8_i32_189 : i32
    %486 = tpu.assume_multiple %485, 8 : i32
    %487 = arith.index_cast %486 : i32 to index
    %c0_190 = arith.constant 0 : index
    %488 = vector.load %arg8[%487, %c0_190] : memref<64x384xf32, #tpu.memory_space<vmem>>, vector<8x384xf32>
    %c1_191 = arith.constant 1 : index
    %c0_192 = arith.constant 0 : index
    %c0_193 = arith.constant 0 : index
    %489 = vector.load %arg3[%c1_191, %c0_192, %c0_193] : memref<3x128x384xf32, #tpu.memory_space<vmem>>, vector<1x128x384xf32>
    %490 = vector.shape_cast %489 : vector<1x128x384xf32> to vector<128x384xf32>
    %cst_194 = arith.constant dense<0.000000e+00> : vector<8x384xf32>
    %491 = tpu.matmul %482, %490, %cst_194 {dimension_numbers = #tpu.dot_dimension_numbers<[1], [0], [0], [1], [0, 0, 1, 1], [], []>} : vector<8x128xf32>, vector<128x384xf32>, vector<8x384xf32> -> vector<8x384xf32>
    %492 = vector.extract_strided_slice %488 {offsets = [0, 0], sizes = [8, 128], strides = [1, 1]} : vector<8x384xf32> to vector<8x128xf32>
    %493 = vector.extract_strided_slice %491 {offsets = [0, 0], sizes = [8, 128], strides = [1, 1]} : vector<8x384xf32> to vector<8x128xf32>
    %494 = arith.addf %492, %493 : vector<8x128xf32>
    %cst_195 = arith.constant 5.000000e-01 : f32
    %495 = vector.broadcast %cst_195 : f32 to vector<8x128xf32>
    %496 = arith.mulf %495, %494 : vector<8x128xf32>
    %497 = math.tanh %496 : vector<8x128xf32>
    %cst_196 = arith.constant 5.000000e-01 : f32
    %498 = vector.broadcast %cst_196 : f32 to vector<8x128xf32>
    %499 = arith.mulf %498, %497 : vector<8x128xf32>
    %cst_197 = arith.constant 5.000000e-01 : f32
    %500 = vector.broadcast %cst_197 : f32 to vector<8x128xf32>
    %501 = arith.addf %499, %500 : vector<8x128xf32>
    %502 = vector.extract_strided_slice %488 {offsets = [0, 128], sizes = [8, 128], strides = [1, 1]} : vector<8x384xf32> to vector<8x128xf32>
    %503 = vector.extract_strided_slice %491 {offsets = [0, 128], sizes = [8, 128], strides = [1, 1]} : vector<8x384xf32> to vector<8x128xf32>
    %504 = arith.addf %502, %503 : vector<8x128xf32>
    %cst_198 = arith.constant 5.000000e-01 : f32
    %505 = vector.broadcast %cst_198 : f32 to vector<8x128xf32>
    %506 = arith.mulf %505, %504 : vector<8x128xf32>
    %507 = math.tanh %506 : vector<8x128xf32>
    %cst_199 = arith.constant 5.000000e-01 : f32
    %508 = vector.broadcast %cst_199 : f32 to vector<8x128xf32>
    %509 = arith.mulf %508, %507 : vector<8x128xf32>
    %cst_200 = arith.constant 5.000000e-01 : f32
    %510 = vector.broadcast %cst_200 : f32 to vector<8x128xf32>
    %511 = arith.addf %509, %510 : vector<8x128xf32>
    %512 = vector.extract_strided_slice %488 {offsets = [0, 256], sizes = [8, 128], strides = [1, 1]} : vector<8x384xf32> to vector<8x128xf32>
    %513 = vector.extract_strided_slice %491 {offsets = [0, 256], sizes = [8, 128], strides = [1, 1]} : vector<8x384xf32> to vector<8x128xf32>
    %514 = arith.addf %513, %331 : vector<8x128xf32>
    %515 = arith.mulf %501, %514 : vector<8x128xf32>
    %516 = arith.addf %512, %515 : vector<8x128xf32>
    %517 = math.tanh %516 : vector<8x128xf32>
    %518 = arith.subf %482, %517 : vector<8x128xf32>
    %519 = arith.mulf %511, %518 : vector<8x128xf32>
    %520 = arith.addf %517, %519 : vector<8x128xf32>
    %521 = arith.index_cast %486 : i32 to index
    %c0_201 = arith.constant 0 : index
    %522 = vector.load %arg7[%521, %c0_201] : memref<64x128xf32, #tpu.memory_space<vmem>>, vector<8x128xf32>
    tpu.vector_store %arg7[%521, %c0_201], %520 {strides = array<i32>} : memref<64x128xf32, #tpu.memory_space<vmem>>, vector<8x128xf32>,
    %c5_i32_202 = arith.constant 5 : i32
    %c8_i32_203 = arith.constant 8 : i32
    %523 = arith.muli %c5_i32_202, %c8_i32_203 : i32
    %524 = tpu.assume_multiple %523, 8 : i32
    %525 = arith.index_cast %524 : i32 to index
    %c0_204 = arith.constant 0 : index
    %526 = vector.load %arg8[%525, %c0_204] : memref<64x384xf32, #tpu.memory_space<vmem>>, vector<8x384xf32>
    %c1_205 = arith.constant 1 : index
    %c0_206 = arith.constant 0 : index
    %c0_207 = arith.constant 0 : index
    %527 = vector.load %arg3[%c1_205, %c0_206, %c0_207] : memref<3x128x384xf32, #tpu.memory_space<vmem>>, vector<1x128x384xf32>
    %528 = vector.shape_cast %527 : vector<1x128x384xf32> to vector<128x384xf32>
    %cst_208 = arith.constant dense<0.000000e+00> : vector<8x384xf32>
    %529 = tpu.matmul %520, %528, %cst_208 {dimension_numbers = #tpu.dot_dimension_numbers<[1], [0], [0], [1], [0, 0, 1, 1], [], []>} : vector<8x128xf32>, vector<128x384xf32>, vector<8x384xf32> -> vector<8x384xf32>
    %530 = vector.extract_strided_slice %526 {offsets = [0, 0], sizes = [8, 128], strides = [1, 1]} : vector<8x384xf32> to vector<8x128xf32>
    %531 = vector.extract_strided_slice %529 {offsets = [0, 0], sizes = [8, 128], strides = [1, 1]} : vector<8x384xf32> to vector<8x128xf32>
    %532 = arith.addf %530, %531 : vector<8x128xf32>
    %cst_209 = arith.constant 5.000000e-01 : f32
    %533 = vector.broadcast %cst_209 : f32 to vector<8x128xf32>
    %534 = arith.mulf %533, %532 : vector<8x128xf32>
    %535 = math.tanh %534 : vector<8x128xf32>
    %cst_210 = arith.constant 5.000000e-01 : f32
    %536 = vector.broadcast %cst_210 : f32 to vector<8x128xf32>
    %537 = arith.mulf %536, %535 : vector<8x128xf32>
    %cst_211 = arith.constant 5.000000e-01 : f32
    %538 = vector.broadcast %cst_211 : f32 to vector<8x128xf32>
    %539 = arith.addf %537, %538 : vector<8x128xf32>
    %540 = vector.extract_strided_slice %526 {offsets = [0, 128], sizes = [8, 128], strides = [1, 1]} : vector<8x384xf32> to vector<8x128xf32>
    %541 = vector.extract_strided_slice %529 {offsets = [0, 128], sizes = [8, 128], strides = [1, 1]} : vector<8x384xf32> to vector<8x128xf32>
    %542 = arith.addf %540, %541 : vector<8x128xf32>
    %cst_212 = arith.constant 5.000000e-01 : f32
    %543 = vector.broadcast %cst_212 : f32 to vector<8x128xf32>
    %544 = arith.mulf %543, %542 : vector<8x128xf32>
    %545 = math.tanh %544 : vector<8x128xf32>
    %cst_213 = arith.constant 5.000000e-01 : f32
    %546 = vector.broadcast %cst_213 : f32 to vector<8x128xf32>
    %547 = arith.mulf %546, %545 : vector<8x128xf32>
    %cst_214 = arith.constant 5.000000e-01 : f32
    %548 = vector.broadcast %cst_214 : f32 to vector<8x128xf32>
    %549 = arith.addf %547, %548 : vector<8x128xf32>
    %550 = vector.extract_strided_slice %526 {offsets = [0, 256], sizes = [8, 128], strides = [1, 1]} : vector<8x384xf32> to vector<8x128xf32>
    %551 = vector.extract_strided_slice %529 {offsets = [0, 256], sizes = [8, 128], strides = [1, 1]} : vector<8x384xf32> to vector<8x128xf32>
    %552 = arith.addf %551, %331 : vector<8x128xf32>
    %553 = arith.mulf %539, %552 : vector<8x128xf32>
    %554 = arith.addf %550, %553 : vector<8x128xf32>
    %555 = math.tanh %554 : vector<8x128xf32>
    %556 = arith.subf %520, %555 : vector<8x128xf32>
    %557 = arith.mulf %549, %556 : vector<8x128xf32>
    %558 = arith.addf %555, %557 : vector<8x128xf32>
    %559 = arith.index_cast %524 : i32 to index
    %c0_215 = arith.constant 0 : index
    %560 = vector.load %arg7[%559, %c0_215] : memref<64x128xf32, #tpu.memory_space<vmem>>, vector<8x128xf32>
    tpu.vector_store %arg7[%559, %c0_215], %558 {strides = array<i32>} : memref<64x128xf32, #tpu.memory_space<vmem>>, vector<8x128xf32>,
    %c6_i32_216 = arith.constant 6 : i32
    %c8_i32_217 = arith.constant 8 : i32
    %561 = arith.muli %c6_i32_216, %c8_i32_217 : i32
    %562 = tpu.assume_multiple %561, 8 : i32
    %563 = arith.index_cast %562 : i32 to index
    %c0_218 = arith.constant 0 : index
    %564 = vector.load %arg8[%563, %c0_218] : memref<64x384xf32, #tpu.memory_space<vmem>>, vector<8x384xf32>
    %c1_219 = arith.constant 1 : index
    %c0_220 = arith.constant 0 : index
    %c0_221 = arith.constant 0 : index
    %565 = vector.load %arg3[%c1_219, %c0_220, %c0_221] : memref<3x128x384xf32, #tpu.memory_space<vmem>>, vector<1x128x384xf32>
    %566 = vector.shape_cast %565 : vector<1x128x384xf32> to vector<128x384xf32>
    %cst_222 = arith.constant dense<0.000000e+00> : vector<8x384xf32>
    %567 = tpu.matmul %558, %566, %cst_222 {dimension_numbers = #tpu.dot_dimension_numbers<[1], [0], [0], [1], [0, 0, 1, 1], [], []>} : vector<8x128xf32>, vector<128x384xf32>, vector<8x384xf32> -> vector<8x384xf32>
    %568 = vector.extract_strided_slice %564 {offsets = [0, 0], sizes = [8, 128], strides = [1, 1]} : vector<8x384xf32> to vector<8x128xf32>
    %569 = vector.extract_strided_slice %567 {offsets = [0, 0], sizes = [8, 128], strides = [1, 1]} : vector<8x384xf32> to vector<8x128xf32>
    %570 = arith.addf %568, %569 : vector<8x128xf32>
    %cst_223 = arith.constant 5.000000e-01 : f32
    %571 = vector.broadcast %cst_223 : f32 to vector<8x128xf32>
    %572 = arith.mulf %571, %570 : vector<8x128xf32>
    %573 = math.tanh %572 : vector<8x128xf32>
    %cst_224 = arith.constant 5.000000e-01 : f32
    %574 = vector.broadcast %cst_224 : f32 to vector<8x128xf32>
    %575 = arith.mulf %574, %573 : vector<8x128xf32>
    %cst_225 = arith.constant 5.000000e-01 : f32
    %576 = vector.broadcast %cst_225 : f32 to vector<8x128xf32>
    %577 = arith.addf %575, %576 : vector<8x128xf32>
    %578 = vector.extract_strided_slice %564 {offsets = [0, 128], sizes = [8, 128], strides = [1, 1]} : vector<8x384xf32> to vector<8x128xf32>
    %579 = vector.extract_strided_slice %567 {offsets = [0, 128], sizes = [8, 128], strides = [1, 1]} : vector<8x384xf32> to vector<8x128xf32>
    %580 = arith.addf %578, %579 : vector<8x128xf32>
    %cst_226 = arith.constant 5.000000e-01 : f32
    %581 = vector.broadcast %cst_226 : f32 to vector<8x128xf32>
    %582 = arith.mulf %581, %580 : vector<8x128xf32>
    %583 = math.tanh %582 : vector<8x128xf32>
    %cst_227 = arith.constant 5.000000e-01 : f32
    %584 = vector.broadcast %cst_227 : f32 to vector<8x128xf32>
    %585 = arith.mulf %584, %583 : vector<8x128xf32>
    %cst_228 = arith.constant 5.000000e-01 : f32
    %586 = vector.broadcast %cst_228 : f32 to vector<8x128xf32>
    %587 = arith.addf %585, %586 : vector<8x128xf32>
    %588 = vector.extract_strided_slice %564 {offsets = [0, 256], sizes = [8, 128], strides = [1, 1]} : vector<8x384xf32> to vector<8x128xf32>
    %589 = vector.extract_strided_slice %567 {offsets = [0, 256], sizes = [8, 128], strides = [1, 1]} : vector<8x384xf32> to vector<8x128xf32>
    %590 = arith.addf %589, %331 : vector<8x128xf32>
    %591 = arith.mulf %577, %590 : vector<8x128xf32>
    %592 = arith.addf %588, %591 : vector<8x128xf32>
    %593 = math.tanh %592 : vector<8x128xf32>
    %594 = arith.subf %558, %593 : vector<8x128xf32>
    %595 = arith.mulf %587, %594 : vector<8x128xf32>
    %596 = arith.addf %593, %595 : vector<8x128xf32>
    %597 = arith.index_cast %562 : i32 to index
    %c0_229 = arith.constant 0 : index
    %598 = vector.load %arg7[%597, %c0_229] : memref<64x128xf32, #tpu.memory_space<vmem>>, vector<8x128xf32>
    tpu.vector_store %arg7[%597, %c0_229], %596 {strides = array<i32>} : memref<64x128xf32, #tpu.memory_space<vmem>>, vector<8x128xf32>,
    %c7_i32_230 = arith.constant 7 : i32
    %c8_i32_231 = arith.constant 8 : i32
    %599 = arith.muli %c7_i32_230, %c8_i32_231 : i32
    %600 = tpu.assume_multiple %599, 8 : i32
    %601 = arith.index_cast %600 : i32 to index
    %c0_232 = arith.constant 0 : index
    %602 = vector.load %arg8[%601, %c0_232] : memref<64x384xf32, #tpu.memory_space<vmem>>, vector<8x384xf32>
    %c1_233 = arith.constant 1 : index
    %c0_234 = arith.constant 0 : index
    %c0_235 = arith.constant 0 : index
    %603 = vector.load %arg3[%c1_233, %c0_234, %c0_235] : memref<3x128x384xf32, #tpu.memory_space<vmem>>, vector<1x128x384xf32>
    %604 = vector.shape_cast %603 : vector<1x128x384xf32> to vector<128x384xf32>
    %cst_236 = arith.constant dense<0.000000e+00> : vector<8x384xf32>
    %605 = tpu.matmul %596, %604, %cst_236 {dimension_numbers = #tpu.dot_dimension_numbers<[1], [0], [0], [1], [0, 0, 1, 1], [], []>} : vector<8x128xf32>, vector<128x384xf32>, vector<8x384xf32> -> vector<8x384xf32>
    %606 = vector.extract_strided_slice %602 {offsets = [0, 0], sizes = [8, 128], strides = [1, 1]} : vector<8x384xf32> to vector<8x128xf32>
    %607 = vector.extract_strided_slice %605 {offsets = [0, 0], sizes = [8, 128], strides = [1, 1]} : vector<8x384xf32> to vector<8x128xf32>
    %608 = arith.addf %606, %607 : vector<8x128xf32>
    %cst_237 = arith.constant 5.000000e-01 : f32
    %609 = vector.broadcast %cst_237 : f32 to vector<8x128xf32>
    %610 = arith.mulf %609, %608 : vector<8x128xf32>
    %611 = math.tanh %610 : vector<8x128xf32>
    %cst_238 = arith.constant 5.000000e-01 : f32
    %612 = vector.broadcast %cst_238 : f32 to vector<8x128xf32>
    %613 = arith.mulf %612, %611 : vector<8x128xf32>
    %cst_239 = arith.constant 5.000000e-01 : f32
    %614 = vector.broadcast %cst_239 : f32 to vector<8x128xf32>
    %615 = arith.addf %613, %614 : vector<8x128xf32>
    %616 = vector.extract_strided_slice %602 {offsets = [0, 128], sizes = [8, 128], strides = [1, 1]} : vector<8x384xf32> to vector<8x128xf32>
    %617 = vector.extract_strided_slice %605 {offsets = [0, 128], sizes = [8, 128], strides = [1, 1]} : vector<8x384xf32> to vector<8x128xf32>
    %618 = arith.addf %616, %617 : vector<8x128xf32>
    %cst_240 = arith.constant 5.000000e-01 : f32
    %619 = vector.broadcast %cst_240 : f32 to vector<8x128xf32>
    %620 = arith.mulf %619, %618 : vector<8x128xf32>
    %621 = math.tanh %620 : vector<8x128xf32>
    %cst_241 = arith.constant 5.000000e-01 : f32
    %622 = vector.broadcast %cst_241 : f32 to vector<8x128xf32>
    %623 = arith.mulf %622, %621 : vector<8x128xf32>
    %cst_242 = arith.constant 5.000000e-01 : f32
    %624 = vector.broadcast %cst_242 : f32 to vector<8x128xf32>
    %625 = arith.addf %623, %624 : vector<8x128xf32>
    %626 = vector.extract_strided_slice %602 {offsets = [0, 256], sizes = [8, 128], strides = [1, 1]} : vector<8x384xf32> to vector<8x128xf32>
    %627 = vector.extract_strided_slice %605 {offsets = [0, 256], sizes = [8, 128], strides = [1, 1]} : vector<8x384xf32> to vector<8x128xf32>
    %628 = arith.addf %627, %331 : vector<8x128xf32>
    %629 = arith.mulf %615, %628 : vector<8x128xf32>
    %630 = arith.addf %626, %629 : vector<8x128xf32>
    %631 = math.tanh %630 : vector<8x128xf32>
    %632 = arith.subf %596, %631 : vector<8x128xf32>
    %633 = arith.mulf %625, %632 : vector<8x128xf32>
    %634 = arith.addf %631, %633 : vector<8x128xf32>
    %635 = arith.index_cast %600 : i32 to index
    %c0_243 = arith.constant 0 : index
    %636 = vector.load %arg7[%635, %c0_243] : memref<64x128xf32, #tpu.memory_space<vmem>>, vector<8x128xf32>
    tpu.vector_store %arg7[%635, %c0_243], %634 {strides = array<i32>} : memref<64x128xf32, #tpu.memory_space<vmem>>, vector<8x128xf32>,
    %c8_i32_244 = arith.constant 8 : i32
    %c0_245 = arith.constant 0 : index
    %c0_246 = arith.constant 0 : index
    %637 = vector.load %arg7[%c0_245, %c0_246] : memref<64x128xf32, #tpu.memory_space<vmem>>, vector<64x128xf32>
    %c2 = arith.constant 2 : index
    %c0_247 = arith.constant 0 : index
    %c0_248 = arith.constant 0 : index
    %638 = vector.load %arg2[%c2, %c0_247, %c0_248] : memref<3x128x384xf32, #tpu.memory_space<vmem>>, vector<1x128x384xf32>
    %639 = vector.shape_cast %638 : vector<1x128x384xf32> to vector<128x384xf32>
    %cst_249 = arith.constant dense<0.000000e+00> : vector<64x384xf32>
    %640 = tpu.matmul %637, %639, %cst_249 {dimension_numbers = #tpu.dot_dimension_numbers<[1], [0], [0], [1], [0, 0, 1, 1], [], []>} : vector<64x128xf32>, vector<128x384xf32>, vector<64x384xf32> -> vector<64x384xf32>
    %c2_250 = arith.constant 2 : index
    %c0_251 = arith.constant 0 : index
    %c0_252 = arith.constant 0 : index
    %641 = vector.load %arg4[%c2_250, %c0_251, %c0_252] : memref<3x1x384xf32, #tpu.memory_space<vmem>>, vector<1x1x384xf32>
    %642 = vector.shape_cast %641 : vector<1x1x384xf32> to vector<1x384xf32>
    %643 = vector.broadcast %642 : vector<1x384xf32> to vector<64x384xf32>
    %644 = arith.addf %640, %643 : vector<64x384xf32>
    %c0_253 = arith.constant 0 : index
    %c0_254 = arith.constant 0 : index
    %645 = vector.load %arg8[%c0_253, %c0_254] : memref<64x384xf32, #tpu.memory_space<vmem>>, vector<64x384xf32>
    tpu.vector_store %arg8[%c0_253, %c0_254], %644 {strides = array<i32>} : memref<64x384xf32, #tpu.memory_space<vmem>>, vector<64x384xf32>,
    %c2_255 = arith.constant 2 : index
    %c0_256 = arith.constant 0 : index
    %c0_257 = arith.constant 0 : index
    %646 = vector.load %arg5[%c2_255, %c0_256, %c0_257] : memref<3x1x128xf32, #tpu.memory_space<vmem>>, vector<1x1x128xf32>
    %647 = vector.shape_cast %646 : vector<1x1x128xf32> to vector<1x128xf32>
    %648 = vector.shape_cast %647 : vector<1x128xf32> to vector<1x128xf32>
    %649 = vector.broadcast %648 : vector<1x128xf32> to vector<8x128xf32>
    %cst_258 = arith.constant 0.000000e+00 : f32
    %650 = vector.broadcast %cst_258 : f32 to vector<8x128xf32>
    %c0_i32_259 = arith.constant 0 : i32
    %c8_i32_260 = arith.constant 8 : i32
    %651 = arith.muli %c0_i32_259, %c8_i32_260 : i32
    %652 = tpu.assume_multiple %651, 8 : i32
    %653 = arith.index_cast %652 : i32 to index
    %c0_261 = arith.constant 0 : index
    %654 = vector.load %arg8[%653, %c0_261] : memref<64x384xf32, #tpu.memory_space<vmem>>, vector<8x384xf32>
    %c2_262 = arith.constant 2 : index
    %c0_263 = arith.constant 0 : index
    %c0_264 = arith.constant 0 : index
    %655 = vector.load %arg3[%c2_262, %c0_263, %c0_264] : memref<3x128x384xf32, #tpu.memory_space<vmem>>, vector<1x128x384xf32>
    %656 = vector.shape_cast %655 : vector<1x128x384xf32> to vector<128x384xf32>
    %cst_265 = arith.constant dense<0.000000e+00> : vector<8x384xf32>
    %657 = tpu.matmul %650, %656, %cst_265 {dimension_numbers = #tpu.dot_dimension_numbers<[1], [0], [0], [1], [0, 0, 1, 1], [], []>} : vector<8x128xf32>, vector<128x384xf32>, vector<8x384xf32> -> vector<8x384xf32>
    %658 = vector.extract_strided_slice %654 {offsets = [0, 0], sizes = [8, 128], strides = [1, 1]} : vector<8x384xf32> to vector<8x128xf32>
    %659 = vector.extract_strided_slice %657 {offsets = [0, 0], sizes = [8, 128], strides = [1, 1]} : vector<8x384xf32> to vector<8x128xf32>
    %660 = arith.addf %658, %659 : vector<8x128xf32>
    %cst_266 = arith.constant 5.000000e-01 : f32
    %661 = vector.broadcast %cst_266 : f32 to vector<8x128xf32>
    %662 = arith.mulf %661, %660 : vector<8x128xf32>
    %663 = math.tanh %662 : vector<8x128xf32>
    %cst_267 = arith.constant 5.000000e-01 : f32
    %664 = vector.broadcast %cst_267 : f32 to vector<8x128xf32>
    %665 = arith.mulf %664, %663 : vector<8x128xf32>
    %cst_268 = arith.constant 5.000000e-01 : f32
    %666 = vector.broadcast %cst_268 : f32 to vector<8x128xf32>
    %667 = arith.addf %665, %666 : vector<8x128xf32>
    %668 = vector.extract_strided_slice %654 {offsets = [0, 128], sizes = [8, 128], strides = [1, 1]} : vector<8x384xf32> to vector<8x128xf32>
    %669 = vector.extract_strided_slice %657 {offsets = [0, 128], sizes = [8, 128], strides = [1, 1]} : vector<8x384xf32> to vector<8x128xf32>
    %670 = arith.addf %668, %669 : vector<8x128xf32>
    %cst_269 = arith.constant 5.000000e-01 : f32
    %671 = vector.broadcast %cst_269 : f32 to vector<8x128xf32>
    %672 = arith.mulf %671, %670 : vector<8x128xf32>
    %673 = math.tanh %672 : vector<8x128xf32>
    %cst_270 = arith.constant 5.000000e-01 : f32
    %674 = vector.broadcast %cst_270 : f32 to vector<8x128xf32>
    %675 = arith.mulf %674, %673 : vector<8x128xf32>
    %cst_271 = arith.constant 5.000000e-01 : f32
    %676 = vector.broadcast %cst_271 : f32 to vector<8x128xf32>
    %677 = arith.addf %675, %676 : vector<8x128xf32>
    %678 = vector.extract_strided_slice %654 {offsets = [0, 256], sizes = [8, 128], strides = [1, 1]} : vector<8x384xf32> to vector<8x128xf32>
    %679 = vector.extract_strided_slice %657 {offsets = [0, 256], sizes = [8, 128], strides = [1, 1]} : vector<8x384xf32> to vector<8x128xf32>
    %680 = arith.addf %679, %649 : vector<8x128xf32>
    %681 = arith.mulf %667, %680 : vector<8x128xf32>
    %682 = arith.addf %678, %681 : vector<8x128xf32>
    %683 = math.tanh %682 : vector<8x128xf32>
    %684 = arith.subf %650, %683 : vector<8x128xf32>
    %685 = arith.mulf %677, %684 : vector<8x128xf32>
    %686 = arith.addf %683, %685 : vector<8x128xf32>
    %c0_272 = arith.constant 0 : index
    %687 = arith.index_cast %652 : i32 to index
    %c0_273 = arith.constant 0 : index
    %688 = vector.load %arg6[%c0_272, %687, %c0_273] : memref<1x64x128xf32, #tpu.memory_space<vmem>>, vector<1x8x128xf32>
    %689 = vector.shape_cast %688 : vector<1x8x128xf32> to vector<8x128xf32>
    %690 = vector.shape_cast %686 : vector<8x128xf32> to vector<1x8x128xf32>
    tpu.vector_store %arg6[%c0_272, %687, %c0_273], %690 {strides = array<i32>} : memref<1x64x128xf32, #tpu.memory_space<vmem>>, vector<1x8x128xf32>,
    %c1_i32_274 = arith.constant 1 : i32
    %c8_i32_275 = arith.constant 8 : i32
    %691 = arith.muli %c1_i32_274, %c8_i32_275 : i32
    %692 = tpu.assume_multiple %691, 8 : i32
    %693 = arith.index_cast %692 : i32 to index
    %c0_276 = arith.constant 0 : index
    %694 = vector.load %arg8[%693, %c0_276] : memref<64x384xf32, #tpu.memory_space<vmem>>, vector<8x384xf32>
    %c2_277 = arith.constant 2 : index
    %c0_278 = arith.constant 0 : index
    %c0_279 = arith.constant 0 : index
    %695 = vector.load %arg3[%c2_277, %c0_278, %c0_279] : memref<3x128x384xf32, #tpu.memory_space<vmem>>, vector<1x128x384xf32>
    %696 = vector.shape_cast %695 : vector<1x128x384xf32> to vector<128x384xf32>
    %cst_280 = arith.constant dense<0.000000e+00> : vector<8x384xf32>
    %697 = tpu.matmul %686, %696, %cst_280 {dimension_numbers = #tpu.dot_dimension_numbers<[1], [0], [0], [1], [0, 0, 1, 1], [], []>} : vector<8x128xf32>, vector<128x384xf32>, vector<8x384xf32> -> vector<8x384xf32>
    %698 = vector.extract_strided_slice %694 {offsets = [0, 0], sizes = [8, 128], strides = [1, 1]} : vector<8x384xf32> to vector<8x128xf32>
    %699 = vector.extract_strided_slice %697 {offsets = [0, 0], sizes = [8, 128], strides = [1, 1]} : vector<8x384xf32> to vector<8x128xf32>
    %700 = arith.addf %698, %699 : vector<8x128xf32>
    %cst_281 = arith.constant 5.000000e-01 : f32
    %701 = vector.broadcast %cst_281 : f32 to vector<8x128xf32>
    %702 = arith.mulf %701, %700 : vector<8x128xf32>
    %703 = math.tanh %702 : vector<8x128xf32>
    %cst_282 = arith.constant 5.000000e-01 : f32
    %704 = vector.broadcast %cst_282 : f32 to vector<8x128xf32>
    %705 = arith.mulf %704, %703 : vector<8x128xf32>
    %cst_283 = arith.constant 5.000000e-01 : f32
    %706 = vector.broadcast %cst_283 : f32 to vector<8x128xf32>
    %707 = arith.addf %705, %706 : vector<8x128xf32>
    %708 = vector.extract_strided_slice %694 {offsets = [0, 128], sizes = [8, 128], strides = [1, 1]} : vector<8x384xf32> to vector<8x128xf32>
    %709 = vector.extract_strided_slice %697 {offsets = [0, 128], sizes = [8, 128], strides = [1, 1]} : vector<8x384xf32> to vector<8x128xf32>
    %710 = arith.addf %708, %709 : vector<8x128xf32>
    %cst_284 = arith.constant 5.000000e-01 : f32
    %711 = vector.broadcast %cst_284 : f32 to vector<8x128xf32>
    %712 = arith.mulf %711, %710 : vector<8x128xf32>
    %713 = math.tanh %712 : vector<8x128xf32>
    %cst_285 = arith.constant 5.000000e-01 : f32
    %714 = vector.broadcast %cst_285 : f32 to vector<8x128xf32>
    %715 = arith.mulf %714, %713 : vector<8x128xf32>
    %cst_286 = arith.constant 5.000000e-01 : f32
    %716 = vector.broadcast %cst_286 : f32 to vector<8x128xf32>
    %717 = arith.addf %715, %716 : vector<8x128xf32>
    %718 = vector.extract_strided_slice %694 {offsets = [0, 256], sizes = [8, 128], strides = [1, 1]} : vector<8x384xf32> to vector<8x128xf32>
    %719 = vector.extract_strided_slice %697 {offsets = [0, 256], sizes = [8, 128], strides = [1, 1]} : vector<8x384xf32> to vector<8x128xf32>
    %720 = arith.addf %719, %649 : vector<8x128xf32>
    %721 = arith.mulf %707, %720 : vector<8x128xf32>
    %722 = arith.addf %718, %721 : vector<8x128xf32>
    %723 = math.tanh %722 : vector<8x128xf32>
    %724 = arith.subf %686, %723 : vector<8x128xf32>
    %725 = arith.mulf %717, %724 : vector<8x128xf32>
    %726 = arith.addf %723, %725 : vector<8x128xf32>
    %c0_287 = arith.constant 0 : index
    %727 = arith.index_cast %692 : i32 to index
    %c0_288 = arith.constant 0 : index
    %728 = vector.load %arg6[%c0_287, %727, %c0_288] : memref<1x64x128xf32, #tpu.memory_space<vmem>>, vector<1x8x128xf32>
    %729 = vector.shape_cast %728 : vector<1x8x128xf32> to vector<8x128xf32>
    %730 = vector.shape_cast %726 : vector<8x128xf32> to vector<1x8x128xf32>
    tpu.vector_store %arg6[%c0_287, %727, %c0_288], %730 {strides = array<i32>} : memref<1x64x128xf32, #tpu.memory_space<vmem>>, vector<1x8x128xf32>,
    %c2_i32_289 = arith.constant 2 : i32
    %c8_i32_290 = arith.constant 8 : i32
    %731 = arith.muli %c2_i32_289, %c8_i32_290 : i32
    %732 = tpu.assume_multiple %731, 8 : i32
    %733 = arith.index_cast %732 : i32 to index
    %c0_291 = arith.constant 0 : index
    %734 = vector.load %arg8[%733, %c0_291] : memref<64x384xf32, #tpu.memory_space<vmem>>, vector<8x384xf32>
    %c2_292 = arith.constant 2 : index
    %c0_293 = arith.constant 0 : index
    %c0_294 = arith.constant 0 : index
    %735 = vector.load %arg3[%c2_292, %c0_293, %c0_294] : memref<3x128x384xf32, #tpu.memory_space<vmem>>, vector<1x128x384xf32>
    %736 = vector.shape_cast %735 : vector<1x128x384xf32> to vector<128x384xf32>
    %cst_295 = arith.constant dense<0.000000e+00> : vector<8x384xf32>
    %737 = tpu.matmul %726, %736, %cst_295 {dimension_numbers = #tpu.dot_dimension_numbers<[1], [0], [0], [1], [0, 0, 1, 1], [], []>} : vector<8x128xf32>, vector<128x384xf32>, vector<8x384xf32> -> vector<8x384xf32>
    %738 = vector.extract_strided_slice %734 {offsets = [0, 0], sizes = [8, 128], strides = [1, 1]} : vector<8x384xf32> to vector<8x128xf32>
    %739 = vector.extract_strided_slice %737 {offsets = [0, 0], sizes = [8, 128], strides = [1, 1]} : vector<8x384xf32> to vector<8x128xf32>
    %740 = arith.addf %738, %739 : vector<8x128xf32>
    %cst_296 = arith.constant 5.000000e-01 : f32
    %741 = vector.broadcast %cst_296 : f32 to vector<8x128xf32>
    %742 = arith.mulf %741, %740 : vector<8x128xf32>
    %743 = math.tanh %742 : vector<8x128xf32>
    %cst_297 = arith.constant 5.000000e-01 : f32
    %744 = vector.broadcast %cst_297 : f32 to vector<8x128xf32>
    %745 = arith.mulf %744, %743 : vector<8x128xf32>
    %cst_298 = arith.constant 5.000000e-01 : f32
    %746 = vector.broadcast %cst_298 : f32 to vector<8x128xf32>
    %747 = arith.addf %745, %746 : vector<8x128xf32>
    %748 = vector.extract_strided_slice %734 {offsets = [0, 128], sizes = [8, 128], strides = [1, 1]} : vector<8x384xf32> to vector<8x128xf32>
    %749 = vector.extract_strided_slice %737 {offsets = [0, 128], sizes = [8, 128], strides = [1, 1]} : vector<8x384xf32> to vector<8x128xf32>
    %750 = arith.addf %748, %749 : vector<8x128xf32>
    %cst_299 = arith.constant 5.000000e-01 : f32
    %751 = vector.broadcast %cst_299 : f32 to vector<8x128xf32>
    %752 = arith.mulf %751, %750 : vector<8x128xf32>
    %753 = math.tanh %752 : vector<8x128xf32>
    %cst_300 = arith.constant 5.000000e-01 : f32
    %754 = vector.broadcast %cst_300 : f32 to vector<8x128xf32>
    %755 = arith.mulf %754, %753 : vector<8x128xf32>
    %cst_301 = arith.constant 5.000000e-01 : f32
    %756 = vector.broadcast %cst_301 : f32 to vector<8x128xf32>
    %757 = arith.addf %755, %756 : vector<8x128xf32>
    %758 = vector.extract_strided_slice %734 {offsets = [0, 256], sizes = [8, 128], strides = [1, 1]} : vector<8x384xf32> to vector<8x128xf32>
    %759 = vector.extract_strided_slice %737 {offsets = [0, 256], sizes = [8, 128], strides = [1, 1]} : vector<8x384xf32> to vector<8x128xf32>
    %760 = arith.addf %759, %649 : vector<8x128xf32>
    %761 = arith.mulf %747, %760 : vector<8x128xf32>
    %762 = arith.addf %758, %761 : vector<8x128xf32>
    %763 = math.tanh %762 : vector<8x128xf32>
    %764 = arith.subf %726, %763 : vector<8x128xf32>
    %765 = arith.mulf %757, %764 : vector<8x128xf32>
    %766 = arith.addf %763, %765 : vector<8x128xf32>
    %c0_302 = arith.constant 0 : index
    %767 = arith.index_cast %732 : i32 to index
    %c0_303 = arith.constant 0 : index
    %768 = vector.load %arg6[%c0_302, %767, %c0_303] : memref<1x64x128xf32, #tpu.memory_space<vmem>>, vector<1x8x128xf32>
    %769 = vector.shape_cast %768 : vector<1x8x128xf32> to vector<8x128xf32>
    %770 = vector.shape_cast %766 : vector<8x128xf32> to vector<1x8x128xf32>
    tpu.vector_store %arg6[%c0_302, %767, %c0_303], %770 {strides = array<i32>} : memref<1x64x128xf32, #tpu.memory_space<vmem>>, vector<1x8x128xf32>,
    %c3_i32_304 = arith.constant 3 : i32
    %c8_i32_305 = arith.constant 8 : i32
    %771 = arith.muli %c3_i32_304, %c8_i32_305 : i32
    %772 = tpu.assume_multiple %771, 8 : i32
    %773 = arith.index_cast %772 : i32 to index
    %c0_306 = arith.constant 0 : index
    %774 = vector.load %arg8[%773, %c0_306] : memref<64x384xf32, #tpu.memory_space<vmem>>, vector<8x384xf32>
    %c2_307 = arith.constant 2 : index
    %c0_308 = arith.constant 0 : index
    %c0_309 = arith.constant 0 : index
    %775 = vector.load %arg3[%c2_307, %c0_308, %c0_309] : memref<3x128x384xf32, #tpu.memory_space<vmem>>, vector<1x128x384xf32>
    %776 = vector.shape_cast %775 : vector<1x128x384xf32> to vector<128x384xf32>
    %cst_310 = arith.constant dense<0.000000e+00> : vector<8x384xf32>
    %777 = tpu.matmul %766, %776, %cst_310 {dimension_numbers = #tpu.dot_dimension_numbers<[1], [0], [0], [1], [0, 0, 1, 1], [], []>} : vector<8x128xf32>, vector<128x384xf32>, vector<8x384xf32> -> vector<8x384xf32>
    %778 = vector.extract_strided_slice %774 {offsets = [0, 0], sizes = [8, 128], strides = [1, 1]} : vector<8x384xf32> to vector<8x128xf32>
    %779 = vector.extract_strided_slice %777 {offsets = [0, 0], sizes = [8, 128], strides = [1, 1]} : vector<8x384xf32> to vector<8x128xf32>
    %780 = arith.addf %778, %779 : vector<8x128xf32>
    %cst_311 = arith.constant 5.000000e-01 : f32
    %781 = vector.broadcast %cst_311 : f32 to vector<8x128xf32>
    %782 = arith.mulf %781, %780 : vector<8x128xf32>
    %783 = math.tanh %782 : vector<8x128xf32>
    %cst_312 = arith.constant 5.000000e-01 : f32
    %784 = vector.broadcast %cst_312 : f32 to vector<8x128xf32>
    %785 = arith.mulf %784, %783 : vector<8x128xf32>
    %cst_313 = arith.constant 5.000000e-01 : f32
    %786 = vector.broadcast %cst_313 : f32 to vector<8x128xf32>
    %787 = arith.addf %785, %786 : vector<8x128xf32>
    %788 = vector.extract_strided_slice %774 {offsets = [0, 128], sizes = [8, 128], strides = [1, 1]} : vector<8x384xf32> to vector<8x128xf32>
    %789 = vector.extract_strided_slice %777 {offsets = [0, 128], sizes = [8, 128], strides = [1, 1]} : vector<8x384xf32> to vector<8x128xf32>
    %790 = arith.addf %788, %789 : vector<8x128xf32>
    %cst_314 = arith.constant 5.000000e-01 : f32
    %791 = vector.broadcast %cst_314 : f32 to vector<8x128xf32>
    %792 = arith.mulf %791, %790 : vector<8x128xf32>
    %793 = math.tanh %792 : vector<8x128xf32>
    %cst_315 = arith.constant 5.000000e-01 : f32
    %794 = vector.broadcast %cst_315 : f32 to vector<8x128xf32>
    %795 = arith.mulf %794, %793 : vector<8x128xf32>
    %cst_316 = arith.constant 5.000000e-01 : f32
    %796 = vector.broadcast %cst_316 : f32 to vector<8x128xf32>
    %797 = arith.addf %795, %796 : vector<8x128xf32>
    %798 = vector.extract_strided_slice %774 {offsets = [0, 256], sizes = [8, 128], strides = [1, 1]} : vector<8x384xf32> to vector<8x128xf32>
    %799 = vector.extract_strided_slice %777 {offsets = [0, 256], sizes = [8, 128], strides = [1, 1]} : vector<8x384xf32> to vector<8x128xf32>
    %800 = arith.addf %799, %649 : vector<8x128xf32>
    %801 = arith.mulf %787, %800 : vector<8x128xf32>
    %802 = arith.addf %798, %801 : vector<8x128xf32>
    %803 = math.tanh %802 : vector<8x128xf32>
    %804 = arith.subf %766, %803 : vector<8x128xf32>
    %805 = arith.mulf %797, %804 : vector<8x128xf32>
    %806 = arith.addf %803, %805 : vector<8x128xf32>
    %c0_317 = arith.constant 0 : index
    %807 = arith.index_cast %772 : i32 to index
    %c0_318 = arith.constant 0 : index
    %808 = vector.load %arg6[%c0_317, %807, %c0_318] : memref<1x64x128xf32, #tpu.memory_space<vmem>>, vector<1x8x128xf32>
    %809 = vector.shape_cast %808 : vector<1x8x128xf32> to vector<8x128xf32>
    %810 = vector.shape_cast %806 : vector<8x128xf32> to vector<1x8x128xf32>
    tpu.vector_store %arg6[%c0_317, %807, %c0_318], %810 {strides = array<i32>} : memref<1x64x128xf32, #tpu.memory_space<vmem>>, vector<1x8x128xf32>,
    %c4_i32_319 = arith.constant 4 : i32
    %c8_i32_320 = arith.constant 8 : i32
    %811 = arith.muli %c4_i32_319, %c8_i32_320 : i32
    %812 = tpu.assume_multiple %811, 8 : i32
    %813 = arith.index_cast %812 : i32 to index
    %c0_321 = arith.constant 0 : index
    %814 = vector.load %arg8[%813, %c0_321] : memref<64x384xf32, #tpu.memory_space<vmem>>, vector<8x384xf32>
    %c2_322 = arith.constant 2 : index
    %c0_323 = arith.constant 0 : index
    %c0_324 = arith.constant 0 : index
    %815 = vector.load %arg3[%c2_322, %c0_323, %c0_324] : memref<3x128x384xf32, #tpu.memory_space<vmem>>, vector<1x128x384xf32>
    %816 = vector.shape_cast %815 : vector<1x128x384xf32> to vector<128x384xf32>
    %cst_325 = arith.constant dense<0.000000e+00> : vector<8x384xf32>
    %817 = tpu.matmul %806, %816, %cst_325 {dimension_numbers = #tpu.dot_dimension_numbers<[1], [0], [0], [1], [0, 0, 1, 1], [], []>} : vector<8x128xf32>, vector<128x384xf32>, vector<8x384xf32> -> vector<8x384xf32>
    %818 = vector.extract_strided_slice %814 {offsets = [0, 0], sizes = [8, 128], strides = [1, 1]} : vector<8x384xf32> to vector<8x128xf32>
    %819 = vector.extract_strided_slice %817 {offsets = [0, 0], sizes = [8, 128], strides = [1, 1]} : vector<8x384xf32> to vector<8x128xf32>
    %820 = arith.addf %818, %819 : vector<8x128xf32>
    %cst_326 = arith.constant 5.000000e-01 : f32
    %821 = vector.broadcast %cst_326 : f32 to vector<8x128xf32>
    %822 = arith.mulf %821, %820 : vector<8x128xf32>
    %823 = math.tanh %822 : vector<8x128xf32>
    %cst_327 = arith.constant 5.000000e-01 : f32
    %824 = vector.broadcast %cst_327 : f32 to vector<8x128xf32>
    %825 = arith.mulf %824, %823 : vector<8x128xf32>
    %cst_328 = arith.constant 5.000000e-01 : f32
    %826 = vector.broadcast %cst_328 : f32 to vector<8x128xf32>
    %827 = arith.addf %825, %826 : vector<8x128xf32>
    %828 = vector.extract_strided_slice %814 {offsets = [0, 128], sizes = [8, 128], strides = [1, 1]} : vector<8x384xf32> to vector<8x128xf32>
    %829 = vector.extract_strided_slice %817 {offsets = [0, 128], sizes = [8, 128], strides = [1, 1]} : vector<8x384xf32> to vector<8x128xf32>
    %830 = arith.addf %828, %829 : vector<8x128xf32>
    %cst_329 = arith.constant 5.000000e-01 : f32
    %831 = vector.broadcast %cst_329 : f32 to vector<8x128xf32>
    %832 = arith.mulf %831, %830 : vector<8x128xf32>
    %833 = math.tanh %832 : vector<8x128xf32>
    %cst_330 = arith.constant 5.000000e-01 : f32
    %834 = vector.broadcast %cst_330 : f32 to vector<8x128xf32>
    %835 = arith.mulf %834, %833 : vector<8x128xf32>
    %cst_331 = arith.constant 5.000000e-01 : f32
    %836 = vector.broadcast %cst_331 : f32 to vector<8x128xf32>
    %837 = arith.addf %835, %836 : vector<8x128xf32>
    %838 = vector.extract_strided_slice %814 {offsets = [0, 256], sizes = [8, 128], strides = [1, 1]} : vector<8x384xf32> to vector<8x128xf32>
    %839 = vector.extract_strided_slice %817 {offsets = [0, 256], sizes = [8, 128], strides = [1, 1]} : vector<8x384xf32> to vector<8x128xf32>
    %840 = arith.addf %839, %649 : vector<8x128xf32>
    %841 = arith.mulf %827, %840 : vector<8x128xf32>
    %842 = arith.addf %838, %841 : vector<8x128xf32>
    %843 = math.tanh %842 : vector<8x128xf32>
    %844 = arith.subf %806, %843 : vector<8x128xf32>
    %845 = arith.mulf %837, %844 : vector<8x128xf32>
    %846 = arith.addf %843, %845 : vector<8x128xf32>
    %c0_332 = arith.constant 0 : index
    %847 = arith.index_cast %812 : i32 to index
    %c0_333 = arith.constant 0 : index
    %848 = vector.load %arg6[%c0_332, %847, %c0_333] : memref<1x64x128xf32, #tpu.memory_space<vmem>>, vector<1x8x128xf32>
    %849 = vector.shape_cast %848 : vector<1x8x128xf32> to vector<8x128xf32>
    %850 = vector.shape_cast %846 : vector<8x128xf32> to vector<1x8x128xf32>
    tpu.vector_store %arg6[%c0_332, %847, %c0_333], %850 {strides = array<i32>} : memref<1x64x128xf32, #tpu.memory_space<vmem>>, vector<1x8x128xf32>,
    %c5_i32_334 = arith.constant 5 : i32
    %c8_i32_335 = arith.constant 8 : i32
    %851 = arith.muli %c5_i32_334, %c8_i32_335 : i32
    %852 = tpu.assume_multiple %851, 8 : i32
    %853 = arith.index_cast %852 : i32 to index
    %c0_336 = arith.constant 0 : index
    %854 = vector.load %arg8[%853, %c0_336] : memref<64x384xf32, #tpu.memory_space<vmem>>, vector<8x384xf32>
    %c2_337 = arith.constant 2 : index
    %c0_338 = arith.constant 0 : index
    %c0_339 = arith.constant 0 : index
    %855 = vector.load %arg3[%c2_337, %c0_338, %c0_339] : memref<3x128x384xf32, #tpu.memory_space<vmem>>, vector<1x128x384xf32>
    %856 = vector.shape_cast %855 : vector<1x128x384xf32> to vector<128x384xf32>
    %cst_340 = arith.constant dense<0.000000e+00> : vector<8x384xf32>
    %857 = tpu.matmul %846, %856, %cst_340 {dimension_numbers = #tpu.dot_dimension_numbers<[1], [0], [0], [1], [0, 0, 1, 1], [], []>} : vector<8x128xf32>, vector<128x384xf32>, vector<8x384xf32> -> vector<8x384xf32>
    %858 = vector.extract_strided_slice %854 {offsets = [0, 0], sizes = [8, 128], strides = [1, 1]} : vector<8x384xf32> to vector<8x128xf32>
    %859 = vector.extract_strided_slice %857 {offsets = [0, 0], sizes = [8, 128], strides = [1, 1]} : vector<8x384xf32> to vector<8x128xf32>
    %860 = arith.addf %858, %859 : vector<8x128xf32>
    %cst_341 = arith.constant 5.000000e-01 : f32
    %861 = vector.broadcast %cst_341 : f32 to vector<8x128xf32>
    %862 = arith.mulf %861, %860 : vector<8x128xf32>
    %863 = math.tanh %862 : vector<8x128xf32>
    %cst_342 = arith.constant 5.000000e-01 : f32
    %864 = vector.broadcast %cst_342 : f32 to vector<8x128xf32>
    %865 = arith.mulf %864, %863 : vector<8x128xf32>
    %cst_343 = arith.constant 5.000000e-01 : f32
    %866 = vector.broadcast %cst_343 : f32 to vector<8x128xf32>
    %867 = arith.addf %865, %866 : vector<8x128xf32>
    %868 = vector.extract_strided_slice %854 {offsets = [0, 128], sizes = [8, 128], strides = [1, 1]} : vector<8x384xf32> to vector<8x128xf32>
    %869 = vector.extract_strided_slice %857 {offsets = [0, 128], sizes = [8, 128], strides = [1, 1]} : vector<8x384xf32> to vector<8x128xf32>
    %870 = arith.addf %868, %869 : vector<8x128xf32>
    %cst_344 = arith.constant 5.000000e-01 : f32
    %871 = vector.broadcast %cst_344 : f32 to vector<8x128xf32>
    %872 = arith.mulf %871, %870 : vector<8x128xf32>
    %873 = math.tanh %872 : vector<8x128xf32>
    %cst_345 = arith.constant 5.000000e-01 : f32
    %874 = vector.broadcast %cst_345 : f32 to vector<8x128xf32>
    %875 = arith.mulf %874, %873 : vector<8x128xf32>
    %cst_346 = arith.constant 5.000000e-01 : f32
    %876 = vector.broadcast %cst_346 : f32 to vector<8x128xf32>
    %877 = arith.addf %875, %876 : vector<8x128xf32>
    %878 = vector.extract_strided_slice %854 {offsets = [0, 256], sizes = [8, 128], strides = [1, 1]} : vector<8x384xf32> to vector<8x128xf32>
    %879 = vector.extract_strided_slice %857 {offsets = [0, 256], sizes = [8, 128], strides = [1, 1]} : vector<8x384xf32> to vector<8x128xf32>
    %880 = arith.addf %879, %649 : vector<8x128xf32>
    %881 = arith.mulf %867, %880 : vector<8x128xf32>
    %882 = arith.addf %878, %881 : vector<8x128xf32>
    %883 = math.tanh %882 : vector<8x128xf32>
    %884 = arith.subf %846, %883 : vector<8x128xf32>
    %885 = arith.mulf %877, %884 : vector<8x128xf32>
    %886 = arith.addf %883, %885 : vector<8x128xf32>
    %c0_347 = arith.constant 0 : index
    %887 = arith.index_cast %852 : i32 to index
    %c0_348 = arith.constant 0 : index
    %888 = vector.load %arg6[%c0_347, %887, %c0_348] : memref<1x64x128xf32, #tpu.memory_space<vmem>>, vector<1x8x128xf32>
    %889 = vector.shape_cast %888 : vector<1x8x128xf32> to vector<8x128xf32>
    %890 = vector.shape_cast %886 : vector<8x128xf32> to vector<1x8x128xf32>
    tpu.vector_store %arg6[%c0_347, %887, %c0_348], %890 {strides = array<i32>} : memref<1x64x128xf32, #tpu.memory_space<vmem>>, vector<1x8x128xf32>,
    %c6_i32_349 = arith.constant 6 : i32
    %c8_i32_350 = arith.constant 8 : i32
    %891 = arith.muli %c6_i32_349, %c8_i32_350 : i32
    %892 = tpu.assume_multiple %891, 8 : i32
    %893 = arith.index_cast %892 : i32 to index
    %c0_351 = arith.constant 0 : index
    %894 = vector.load %arg8[%893, %c0_351] : memref<64x384xf32, #tpu.memory_space<vmem>>, vector<8x384xf32>
    %c2_352 = arith.constant 2 : index
    %c0_353 = arith.constant 0 : index
    %c0_354 = arith.constant 0 : index
    %895 = vector.load %arg3[%c2_352, %c0_353, %c0_354] : memref<3x128x384xf32, #tpu.memory_space<vmem>>, vector<1x128x384xf32>
    %896 = vector.shape_cast %895 : vector<1x128x384xf32> to vector<128x384xf32>
    %cst_355 = arith.constant dense<0.000000e+00> : vector<8x384xf32>
    %897 = tpu.matmul %886, %896, %cst_355 {dimension_numbers = #tpu.dot_dimension_numbers<[1], [0], [0], [1], [0, 0, 1, 1], [], []>} : vector<8x128xf32>, vector<128x384xf32>, vector<8x384xf32> -> vector<8x384xf32>
    %898 = vector.extract_strided_slice %894 {offsets = [0, 0], sizes = [8, 128], strides = [1, 1]} : vector<8x384xf32> to vector<8x128xf32>
    %899 = vector.extract_strided_slice %897 {offsets = [0, 0], sizes = [8, 128], strides = [1, 1]} : vector<8x384xf32> to vector<8x128xf32>
    %900 = arith.addf %898, %899 : vector<8x128xf32>
    %cst_356 = arith.constant 5.000000e-01 : f32
    %901 = vector.broadcast %cst_356 : f32 to vector<8x128xf32>
    %902 = arith.mulf %901, %900 : vector<8x128xf32>
    %903 = math.tanh %902 : vector<8x128xf32>
    %cst_357 = arith.constant 5.000000e-01 : f32
    %904 = vector.broadcast %cst_357 : f32 to vector<8x128xf32>
    %905 = arith.mulf %904, %903 : vector<8x128xf32>
    %cst_358 = arith.constant 5.000000e-01 : f32
    %906 = vector.broadcast %cst_358 : f32 to vector<8x128xf32>
    %907 = arith.addf %905, %906 : vector<8x128xf32>
    %908 = vector.extract_strided_slice %894 {offsets = [0, 128], sizes = [8, 128], strides = [1, 1]} : vector<8x384xf32> to vector<8x128xf32>
    %909 = vector.extract_strided_slice %897 {offsets = [0, 128], sizes = [8, 128], strides = [1, 1]} : vector<8x384xf32> to vector<8x128xf32>
    %910 = arith.addf %908, %909 : vector<8x128xf32>
    %cst_359 = arith.constant 5.000000e-01 : f32
    %911 = vector.broadcast %cst_359 : f32 to vector<8x128xf32>
    %912 = arith.mulf %911, %910 : vector<8x128xf32>
    %913 = math.tanh %912 : vector<8x128xf32>
    %cst_360 = arith.constant 5.000000e-01 : f32
    %914 = vector.broadcast %cst_360 : f32 to vector<8x128xf32>
    %915 = arith.mulf %914, %913 : vector<8x128xf32>
    %cst_361 = arith.constant 5.000000e-01 : f32
    %916 = vector.broadcast %cst_361 : f32 to vector<8x128xf32>
    %917 = arith.addf %915, %916 : vector<8x128xf32>
    %918 = vector.extract_strided_slice %894 {offsets = [0, 256], sizes = [8, 128], strides = [1, 1]} : vector<8x384xf32> to vector<8x128xf32>
    %919 = vector.extract_strided_slice %897 {offsets = [0, 256], sizes = [8, 128], strides = [1, 1]} : vector<8x384xf32> to vector<8x128xf32>
    %920 = arith.addf %919, %649 : vector<8x128xf32>
    %921 = arith.mulf %907, %920 : vector<8x128xf32>
    %922 = arith.addf %918, %921 : vector<8x128xf32>
    %923 = math.tanh %922 : vector<8x128xf32>
    %924 = arith.subf %886, %923 : vector<8x128xf32>
    %925 = arith.mulf %917, %924 : vector<8x128xf32>
    %926 = arith.addf %923, %925 : vector<8x128xf32>
    %c0_362 = arith.constant 0 : index
    %927 = arith.index_cast %892 : i32 to index
    %c0_363 = arith.constant 0 : index
    %928 = vector.load %arg6[%c0_362, %927, %c0_363] : memref<1x64x128xf32, #tpu.memory_space<vmem>>, vector<1x8x128xf32>
    %929 = vector.shape_cast %928 : vector<1x8x128xf32> to vector<8x128xf32>
    %930 = vector.shape_cast %926 : vector<8x128xf32> to vector<1x8x128xf32>
    tpu.vector_store %arg6[%c0_362, %927, %c0_363], %930 {strides = array<i32>} : memref<1x64x128xf32, #tpu.memory_space<vmem>>, vector<1x8x128xf32>,
    %c7_i32_364 = arith.constant 7 : i32
    %c8_i32_365 = arith.constant 8 : i32
    %931 = arith.muli %c7_i32_364, %c8_i32_365 : i32
    %932 = tpu.assume_multiple %931, 8 : i32
    %933 = arith.index_cast %932 : i32 to index
    %c0_366 = arith.constant 0 : index
    %934 = vector.load %arg8[%933, %c0_366] : memref<64x384xf32, #tpu.memory_space<vmem>>, vector<8x384xf32>
    %c2_367 = arith.constant 2 : index
    %c0_368 = arith.constant 0 : index
    %c0_369 = arith.constant 0 : index
    %935 = vector.load %arg3[%c2_367, %c0_368, %c0_369] : memref<3x128x384xf32, #tpu.memory_space<vmem>>, vector<1x128x384xf32>
    %936 = vector.shape_cast %935 : vector<1x128x384xf32> to vector<128x384xf32>
    %cst_370 = arith.constant dense<0.000000e+00> : vector<8x384xf32>
    %937 = tpu.matmul %926, %936, %cst_370 {dimension_numbers = #tpu.dot_dimension_numbers<[1], [0], [0], [1], [0, 0, 1, 1], [], []>} : vector<8x128xf32>, vector<128x384xf32>, vector<8x384xf32> -> vector<8x384xf32>
    %938 = vector.extract_strided_slice %934 {offsets = [0, 0], sizes = [8, 128], strides = [1, 1]} : vector<8x384xf32> to vector<8x128xf32>
    %939 = vector.extract_strided_slice %937 {offsets = [0, 0], sizes = [8, 128], strides = [1, 1]} : vector<8x384xf32> to vector<8x128xf32>
    %940 = arith.addf %938, %939 : vector<8x128xf32>
    %cst_371 = arith.constant 5.000000e-01 : f32
    %941 = vector.broadcast %cst_371 : f32 to vector<8x128xf32>
    %942 = arith.mulf %941, %940 : vector<8x128xf32>
    %943 = math.tanh %942 : vector<8x128xf32>
    %cst_372 = arith.constant 5.000000e-01 : f32
    %944 = vector.broadcast %cst_372 : f32 to vector<8x128xf32>
    %945 = arith.mulf %944, %943 : vector<8x128xf32>
    %cst_373 = arith.constant 5.000000e-01 : f32
    %946 = vector.broadcast %cst_373 : f32 to vector<8x128xf32>
    %947 = arith.addf %945, %946 : vector<8x128xf32>
    %948 = vector.extract_strided_slice %934 {offsets = [0, 128], sizes = [8, 128], strides = [1, 1]} : vector<8x384xf32> to vector<8x128xf32>
    %949 = vector.extract_strided_slice %937 {offsets = [0, 128], sizes = [8, 128], strides = [1, 1]} : vector<8x384xf32> to vector<8x128xf32>
    %950 = arith.addf %948, %949 : vector<8x128xf32>
    %cst_374 = arith.constant 5.000000e-01 : f32
    %951 = vector.broadcast %cst_374 : f32 to vector<8x128xf32>
    %952 = arith.mulf %951, %950 : vector<8x128xf32>
    %953 = math.tanh %952 : vector<8x128xf32>
    %cst_375 = arith.constant 5.000000e-01 : f32
    %954 = vector.broadcast %cst_375 : f32 to vector<8x128xf32>
    %955 = arith.mulf %954, %953 : vector<8x128xf32>
    %cst_376 = arith.constant 5.000000e-01 : f32
    %956 = vector.broadcast %cst_376 : f32 to vector<8x128xf32>
    %957 = arith.addf %955, %956 : vector<8x128xf32>
    %958 = vector.extract_strided_slice %934 {offsets = [0, 256], sizes = [8, 128], strides = [1, 1]} : vector<8x384xf32> to vector<8x128xf32>
    %959 = vector.extract_strided_slice %937 {offsets = [0, 256], sizes = [8, 128], strides = [1, 1]} : vector<8x384xf32> to vector<8x128xf32>
    %960 = arith.addf %959, %649 : vector<8x128xf32>
    %961 = arith.mulf %947, %960 : vector<8x128xf32>
    %962 = arith.addf %958, %961 : vector<8x128xf32>
    %963 = math.tanh %962 : vector<8x128xf32>
    %964 = arith.subf %926, %963 : vector<8x128xf32>
    %965 = arith.mulf %957, %964 : vector<8x128xf32>
    %966 = arith.addf %963, %965 : vector<8x128xf32>
    %c0_377 = arith.constant 0 : index
    %967 = arith.index_cast %932 : i32 to index
    %c0_378 = arith.constant 0 : index
    %968 = vector.load %arg6[%c0_377, %967, %c0_378] : memref<1x64x128xf32, #tpu.memory_space<vmem>>, vector<1x8x128xf32>
    %969 = vector.shape_cast %968 : vector<1x8x128xf32> to vector<8x128xf32>
    %970 = vector.shape_cast %966 : vector<8x128xf32> to vector<1x8x128xf32>
    tpu.vector_store %arg6[%c0_377, %967, %c0_378], %970 {strides = array<i32>} : memref<1x64x128xf32, #tpu.memory_space<vmem>>, vector<1x8x128xf32>,
    %c8_i32_379 = arith.constant 8 : i32
    return
  }
  func.func @transform_0(%arg0: i32) -> (i32, i32, i32) {
    %c0_i32 = arith.constant 0 : i32
    %c0_i32_0 = arith.constant 0 : i32
    %c0_i32_1 = arith.constant 0 : i32
    return %arg0, %c0_i32, %c0_i32_0 : i32, i32, i32
  }
  func.func @transform_1(%arg0: i32) -> (i32, i32, i32) {
    %c0_i32 = arith.constant 0 : i32
    %c0_i32_0 = arith.constant 0 : i32
    %c0_i32_1 = arith.constant 0 : i32
    %c0_i32_2 = arith.constant 0 : i32
    return %c0_i32, %c0_i32_0, %c0_i32_1 : i32, i32, i32
  }
  func.func @transform_2(%arg0: i32) -> (i32, i32, i32) {
    %c0_i32 = arith.constant 0 : i32
    %c0_i32_0 = arith.constant 0 : i32
    %c0_i32_1 = arith.constant 0 : i32
    %c0_i32_2 = arith.constant 0 : i32
    return %c0_i32, %c0_i32_0, %c0_i32_1 : i32, i32, i32
  }
  func.func @transform_3(%arg0: i32) -> (i32, i32, i32) {
    %c0_i32 = arith.constant 0 : i32
    %c0_i32_0 = arith.constant 0 : i32
    %c0_i32_1 = arith.constant 0 : i32
    %c0_i32_2 = arith.constant 0 : i32
    return %c0_i32, %c0_i32_0, %c0_i32_1 : i32, i32, i32
  }
  func.func @transform_4(%arg0: i32) -> (i32, i32, i32) {
    %c0_i32 = arith.constant 0 : i32
    %c0_i32_0 = arith.constant 0 : i32
    %c0_i32_1 = arith.constant 0 : i32
    %c0_i32_2 = arith.constant 0 : i32
    return %c0_i32, %c0_i32_0, %c0_i32_1 : i32, i32, i32
  }
  func.func @transform_5(%arg0: i32) -> (i32, i32, i32) {
    %c0_i32 = arith.constant 0 : i32
    %c0_i32_0 = arith.constant 0 : i32
    %c0_i32_1 = arith.constant 0 : i32
    return %arg0, %c0_i32, %c0_i32_0 : i32, i32, i32
  }
}

</mosaic_0001>

<llo_original>
// kernel: forward.1
$region0: #{forward.1}
  #allocation0 [shape = 'u32[]', space=smem, size = 0x4, offset = 0x4, fixed_abs, tag = 'smem constant byte address 0x4 - core index']
  #allocation1 [shape = 'u32[144,128]{1,0:T(1,128)}', space=vmem, size = 0x12000, scoped, tag = 'internal scratch']
  #allocation2 [shape = 'f32[64,128]{1,0:T(8,128)}', space=vmem, size = 0x8000, scoped, tag = 'scratch operand']
  #allocation3 [shape = 'f32[64,384]{1,0:T(8,128)}', space=vmem, size = 0x18000, scoped, tag = 'scratch operand']
  %s0 = inlined_call_operand.vmem [shape: f32[1,64,128], index: 0, kind: input, shape index: {}]
  %s1 = inlined_call_operand.hbm [shape: f32[3,128,384], index: 1, kind: input, shape index: {}]
  %s2 = inlined_call_operand.hbm [shape: f32[3,128,384], index: 2, kind: input, shape index: {}]
  %s3 = inlined_call_operand.vmem [shape: f32[3,1,384], index: 3, kind: input, shape index: {}]
  %s4 = inlined_call_operand.vmem [shape: f32[3,1,128], index: 4, kind: input, shape index: {}]
  %s5 = inlined_call_operand.vmem [shape: f32[1,64,128], index: 5, kind: output, shape index: {}]
  %s6 = sld [smem:[#allocation0]]
  $region38: #{forward.1} parent=0
    _
  %s8 = ssub.s32 1, %s6
  %s9 = scalar_select 0, %s8, %s6
  $region1: #{forward.1} parent=0
    #allocation4 [shape = 'u8[589824]{0}', space=vmem, size = 0x90000, scoped, tag = 'input window, operand 1, single buffered']
    #allocation5 [shape = 's32[1]{0}', space=sflag, size = 0x4, scoped, tag = 'scoped memory for forward.1']
    #allocation6 [shape = 'u8[589824]{0}', space=vmem, size = 0x90000, scoped, tag = 'input window, operand 2, single buffered']
    #allocation7 [shape = 's32[1]{0}', space=sflag, size = 0x4, scoped, tag = 'scoped memory for forward.1']
    %10 = vsyncpa [#allocation5], 0
    %11 = vsyncpa [#allocation7], 0
    // Predicated region
    $region2: #{forward.1} parent=1 // pred_check
      _
    $region3: #{forward.1} parent=1 // pred_check_branch
      %13 = sbr.rel (0) target = $region5
    $region4: #{forward.1} parent=1 // pred_region
      _
    $region5: #{forward.1} parent=1 // pred_fallthru
      _
    // Predicated region
    $region6: #{forward.1} parent=1 // pred_check
      _
    $region7: #{forward.1} parent=1 // pred_check_branch
      %15 = sbr.rel (0) target = $region9
    $region8: #{forward.1} parent=1 // pred_region
      %s17 = ssub.s32 18432, 18432
      %18 = vsyncadd [#allocation5], %s17
      %s19 = sshll.u32 [#allocation4], 4
      %s20 = int_to_ptr.vmem [resolvable:$true] %s19
      %25 = dma.hbm_to_vmem [thread:$0]  %s1, 18432, %s20, [#allocation5], 384, 384, 24
    $region9: #{forward.1} parent=1 // pred_fallthru
      _
    // Predicated region
    $region10: #{forward.1} parent=1 // pred_check
      _
    $region11: #{forward.1} parent=1 // pred_check_branch
      %27 = sbr.rel (0) target = $region13
    $region12: #{forward.1} parent=1 // pred_region
      %s29 = ssub.s32 18432, 18432
      %30 = vsyncadd [#allocation7], %s29
      %s31 = sshll.u32 [#allocation6], 4
      %s32 = int_to_ptr.vmem [resolvable:$true] %s31
      %37 = dma.hbm_to_vmem [thread:$0]  %s2, 18432, %s32, [#allocation7], 384, 384, 24
    $region13: #{forward.1} parent=1 // pred_fallthru
      _
    // Predicated region
    $region14: #{forward.1} parent=1 // pred_check
      _
    $region15: #{forward.1} parent=1 // pred_check_branch
      %39 = sbr.rel (0) target = $region17
    $region16: #{forward.1} parent=1 // pred_region
      _
    $region17: #{forward.1} parent=1 // pred_fallthru
      _
    // Predicated region
    $region18: #{forward.1} parent=1 // pred_check
      _
    $region19: #{forward.1} parent=1 // pred_check_branch
      %41 = sbr.rel (0) target = $region21
    $region20: #{forward.1} parent=1 // pred_region
      _
    $region21: #{forward.1} parent=1 // pred_fallthru
      _
    // Predicated region
    $region22: #{forward.1} parent=1 // pred_check
      _
    $region23: #{forward.1} parent=1 // pred_check_branch
      %43 = sbr.rel (0) target = $region25
    $region24: #{forward.1} parent=1 // pred_region
      %44 = dma.done [#allocation5], 18432
    $region25: #{forward.1} parent=1 // pred_fallthru
      _
    // Predicated region
    $region26: #{forward.1} parent=1 // pred_check
      _
    $region27: #{forward.1} parent=1 // pred_check_branch
      %46 = sbr.rel (0) target = $region29
    $region28: #{forward.1} parent=1 // pred_region
      %47 = dma.done [#allocation7], 18432
    $region29: #{forward.1} parent=1 // pred_fallthru
      _
    %v48 = vld [vmem:[%s0] sm:$0xff]
    %v49 = vld [vmem:[%s0 + $0x8] sm:$0xff]
    %v50 = vld [vmem:[%s0 + $0x10] sm:$0xff]
    %v51 = vld [vmem:[%s0 + $0x18] sm:$0xff]
    %v52 = vld [vmem:[%s0 + $0x20] sm:$0xff]
    %v53 = vld [vmem:[%s0 + $0x28] sm:$0xff]
    %v54 = vld [vmem:[%s0 + $0x30] sm:$0xff]
    %v55 = vld [vmem:[%s0 + $0x38] sm:$0xff]
    %v56 = vld [vmem:[#allocation4] sm:$0xff]
    %v57 = vld [vmem:[#allocation4 + $0x8] sm:$0xff]
    %v58 = vld [vmem:[#allocation4 + $0x10] sm:$0xff]
    %v59 = vld [vmem:[#allocation4 + $0x18] sm:$0xff]
    %v60 = vld [vmem:[#allocation4 + $0x20] sm:$0xff]
    %v61 = vld [vmem:[#allocation4 + $0x28] sm:$0xff]
    %v62 = vld [vmem:[#allocation4 + $0x30] sm:$0xff]
    %v63 = vld [vmem:[#allocation4 + $0x38] sm:$0xff]
    %v64 = vld [vmem:[#allocation4 + $0x40] sm:$0xff]
    %v65 = vld [vmem:[#allocation4 + $0x48] sm:$0xff]
    %v66 = vld [vmem:[#allocation4 + $0x50] sm:$0xff]
    %v67 = vld [vmem:[#allocation4 + $0x58] sm:$0xff]
    %v68 = vld [vmem:[#allocation4 + $0x60] sm:$0xff]
    %v69 = vld [vmem:[#allocation4 + $0x68] sm:$0xff]
    %v70 = vld [vmem:[#allocation4 + $0x70] sm:$0xff]
    %v71 = vld [vmem:[#allocation4 + $0x78] sm:$0xff]
    %v72 = vld [vmem:[#allocation4 + $0x80] sm:$0xff]
    %v73 = vld [vmem:[#allocation4 + $0x88] sm:$0xff]
    %v74 = vld [vmem:[#allocation4 + $0x90] sm:$0xff]
    %v75 = vld [vmem:[#allocation4 + $0x98] sm:$0xff]
    %v76 = vld [vmem:[#allocation4 + $0xa0] sm:$0xff]
    %v77 = vld [vmem:[#allocation4 + $0xa8] sm:$0xff]
    %v78 = vld [vmem:[#allocation4 + $0xb0] sm:$0xff]
    %v79 = vld [vmem:[#allocation4 + $0xb8] sm:$0xff]
    %v80 = vld [vmem:[#allocation4 + $0xc0] sm:$0xff]
    %v81 = vld [vmem:[#allocation4 + $0xc8] sm:$0xff]
    %v82 = vld [vmem:[#allocation4 + $0xd0] sm:$0xff]
    %v83 = vld [vmem:[#allocation4 + $0xd8] sm:$0xff]
    %v84 = vld [vmem:[#allocation4 + $0xe0] sm:$0xff]
    %v85 = vld [vmem:[#allocation4 + $0xe8] sm:$0xff]
    %v86 = vld [vmem:[#allocation4 + $0xf0] sm:$0xff]
    %v87 = vld [vmem:[#allocation4 + $0xf8] sm:$0xff]
    %v88 = vld [vmem:[#allocation4 + $0x100] sm:$0xff]
    %v89 = vld [vmem:[#allocation4 + $0x108] sm:$0xff]
    %v90 = vld [vmem:[#allocation4 + $0x110] sm:$0xff]
    %v91 = vld [vmem:[#allocation4 + $0x118] sm:$0xff]
    %v92 = vld [vmem:[#allocation4 + $0x120] sm:$0xff]
    %v93 = vld [vmem:[#allocation4 + $0x128] sm:$0xff]
    %v94 = vld [vmem:[#allocation4 + $0x130] sm:$0xff]
    %v95 = vld [vmem:[#allocation4 + $0x138] sm:$0xff]
    %v96 = vld [vmem:[#allocation4 + $0x140] sm:$0xff]
    %v97 = vld [vmem:[#allocation4 + $0x148] sm:$0xff]
    %v98 = vld [vmem:[#allocation4 + $0x150] sm:$0xff]
    %v99 = vld [vmem:[#allocation4 + $0x158] sm:$0xff]
    %v100 = vld [vmem:[#allocation4 + $0x160] sm:$0xff]
    %v101 = vld [vmem:[#allocation4 + $0x168] sm:$0xff]
    %v102 = vld [vmem:[#allocation4 + $0x170] sm:$0xff]
    %v103 = vld [vmem:[#allocation4 + $0x178] sm:$0xff]
    %v104 = vld [vmem:[%s3] sm:$0x7]
    %v106 = vlaneseq
    %v107 = vshrl.u32 %v106, 7
    %v108 = vsub.s32 0, %v107
    %v109 = vrot.slane %v104, %v108
    %v110 = vlaneseq
    %v111 = vshrl.u32 %v110, 7
    %v112 = vsub.s32 1, %v111
    %v113 = vrot.slane %v104, %v112
    %v114 = vlaneseq
    %v115 = vshrl.u32 %v114, 7
    %v116 = vsub.s32 2, %v115
    %v117 = vrot.slane %v104, %v116
    %121 = vmatprep.subr.mxu0 %v57
    %122 = vmatpush1.msra.mxu0 %v56
    %123 = vmatprep.subr.mxu0 %v60
    %124 = vmatpush1.msra.mxu0 %v59
    %125 = vmatprep.subr.mxu0 %v63
    %126 = vmatpush1.msra.mxu0 %v62
    %127 = vmatprep.subr.mxu0 %v66
    %128 = vmatpush1.msra.mxu0 %v65
    %129 = vmatprep.subr.mxu0 %v69
    %130 = vmatpush1.msra.mxu0 %v68
    %131 = vmatprep.subr.mxu0 %v72
    %132 = vmatpush1.msra.mxu0 %v71
    %133 = vmatprep.subr.mxu0 %v75
    %134 = vmatpush1.msra.mxu0 %v74
    %135 = vmatprep.subr.mxu0 %v78
    %136 = vmatpush1.msra.mxu0 %v77
    %137 = vmatprep.subr.mxu0 %v81
    %138 = vmatpush1.msra.mxu0 %v80
    %139 = vmatprep.subr.mxu0 %v84
    %140 = vmatpush1.msra.mxu0 %v83
    %141 = vmatprep.subr.mxu0 %v87
    %142 = vmatpush1.msra.mxu0 %v86
    %143 = vmatprep.subr.mxu0 %v90
    %144 = vmatpush1.msra.mxu0 %v89
    %145 = vmatprep.subr.mxu0 %v93
    %146 = vmatpush1.msra.mxu0 %v92
    %147 = vmatprep.subr.mxu0 %v96
    %148 = vmatpush1.msra.mxu0 %v95
    %149 = vmatprep.subr.mxu0 %v99
    %150 = vmatpush1.msra.mxu0 %v98
    %151 = vmatprep.subr.mxu0 %v102
    %152 = vmatpush1.msra.mxu0 %v101
    %153 = vmatprep.subr.mxu0 0.0
    %154 = vmatpush1.msra.mxu0 0.0
    %155 = vmatprep.subr.mxu0 0.0
    %156 = vmatpush1.msra.mxu0 0.0
    %157 = vmatprep.subr.mxu0 0.0
    %158 = vmatpush1.msra.mxu0 0.0
    %159 = vmatprep.subr.mxu0 0.0
    %160 = vmatpush1.msra.mxu0 0.0
    %161 = vmatprep.subr.mxu0 0.0
    %162 = vmatpush1.msra.mxu0 0.0
    %163 = vmatprep.subr.mxu0 0.0
    %164 = vmatpush1.msra.mxu0 0.0
    %165 = vmatprep.subr.mxu0 0.0
    %166 = vmatpush1.msra.mxu0 0.0
    %167 = vmatprep.subr.mxu0 0.0
    %168 = vmatpush1.msra.mxu0 0.0
    %169 = vmatprep.subr.mxu0 0.0
    %170 = vmatpush1.msra.mxu0 0.0
    %171 = vmatprep.subr.mxu0 0.0
    %172 = vmatpush1.msra.mxu0 0.0
    %173 = vmatprep.subr.mxu0 0.0
    %174 = vmatpush1.msra.mxu0 0.0
    %175 = vmatprep.subr.mxu0 0.0
    %176 = vmatpush1.msra.mxu0 0.0
    %177 = vmatprep.subr.mxu0 0.0
    %178 = vmatpush1.msra.mxu0 0.0
    %179 = vmatprep.subr.mxu0 0.0
    %180 = vmatpush1.msra.mxu0 0.0
    %181 = vmatprep.subr.mxu0 0.0
    %182 = vmatpush1.msra.mxu0 0.0
    %183 = vmatprep.subr.mxu0 0.0
    %184 = vmatpush1.msra.mxu0 0.0
    %185 = vmatprep.mubr.f32.mxu0 0.0
    %186 = vmatmul.mubr.f32.gmra.mrb[0].mxu0 %v48
    %v187 = vpop.f32.mrb[0].mxu0
    %v188 = vadd.f32 %v109, %v187
    %v189 = vpop.f32.mrb[0].mxu0
    %v190 = vadd.f32 %v113, %v189
    %191 = vmatprep.mubr.f32.mxu0 0.0
    %192 = vmatmul.mubr.f32.gmra.mrb[0].mxu0 %v49
    %v193 = vpop.f32.mrb[0].mxu0
    %v194 = vadd.f32 %v109, %v193
    %v195 = vpop.f32.mrb[0].mxu0
    %v196 = vadd.f32 %v113, %v195
    %197 = vmatprep.mubr.f32.mxu0 0.0
    %198 = vmatmul.mubr.f32.gmra.mrb[0].mxu0 %v50
    %v199 = vpop.f32.mrb[0].mxu0
    %v200 = vadd.f32 %v109, %v199
    %v201 = vpop.f32.mrb[0].mxu0
    %v202 = vadd.f32 %v113, %v201
    %203 = vmatprep.mubr.f32.mxu0 0.0
    %204 = vmatmul.mubr.f32.gmra.mrb[0].mxu0 %v51
    %v205 = vpop.f32.mrb[0].mxu0
    %v206 = vadd.f32 %v109, %v205
    %v207 = vpop.f32.mrb[0].mxu0
    %v208 = vadd.f32 %v113, %v207
    %209 = vmatprep.mubr.f32.mxu0 0.0
    %210 = vmatmul.mubr.f32.gmra.mrb[0].mxu0 %v52
    %v211 = vpop.f32.mrb[0].mxu0
    %v212 = vadd.f32 %v109, %v211
    %v213 = vpop.f32.mrb[0].mxu0
    %v214 = vadd.f32 %v113, %v213
    %215 = vmatprep.mubr.f32.mxu0 0.0
    %216 = vmatmul.mubr.f32.gmra.mrb[0].mxu0 %v53
    %v217 = vpop.f32.mrb[0].mxu0
    %v218 = vadd.f32 %v109, %v217
    %v219 = vpop.f32.mrb[0].mxu0
    %v220 = vadd.f32 %v113, %v219
    %221 = vmatprep.mubr.f32.mxu0 0.0
    %222 = vmatmul.mubr.f32.gmra.mrb[0].mxu0 %v54
    %v223 = vpop.f32.mrb[0].mxu0
    %v224 = vadd.f32 %v109, %v223
    %v225 = vpop.f32.mrb[0].mxu0
    %v226 = vadd.f32 %v113, %v225
    %227 = vmatprep.mubr.f32.mxu0 0.0
    %228 = vmatmul.mubr.f32.gmra.mrb[0].mxu0 %v55
    %v229 = vpop.f32.mrb[0].mxu0
    %v230 = vadd.f32 %v109, %v229
    %v231 = vpop.f32.mrb[0].mxu0
    %v232 = vadd.f32 %v113, %v231
    %233 = vdwg.mxu0
    %234 = vmatprep.subr.mxu0 0.0
    %235 = vmatpush1.msra.mxu0 %v58
    %236 = vmatprep.subr.mxu0 0.0
    %237 = vmatpush1.msra.mxu0 %v61
    %238 = vmatprep.subr.mxu0 0.0
    %239 = vmatpush1.msra.mxu0 %v64
    %240 = vmatprep.subr.mxu0 0.0
    %241 = vmatpush1.msra.mxu0 %v67
    %242 = vmatprep.subr.mxu0 0.0
    %243 = vmatpush1.msra.mxu0 %v70
    %244 = vmatprep.subr.mxu0 0.0
    %245 = vmatpush1.msra.mxu0 %v73
    %246 = vmatprep.subr.mxu0 0.0
    %247 = vmatpush1.msra.mxu0 %v76
    %248 = vmatprep.subr.mxu0 0.0
    %249 = vmatpush1.msra.mxu0 %v79
    %250 = vmatprep.subr.mxu0 0.0
    %251 = vmatpush1.msra.mxu0 %v82
    %252 = vmatprep.subr.mxu0 0.0
    %253 = vmatpush1.msra.mxu0 %v85
    %254 = vmatprep.subr.mxu0 0.0
    %255 = vmatpush1.msra.mxu0 %v88
    %256 = vmatprep.subr.mxu0 0.0
    %257 = vmatpush1.msra.mxu0 %v91
    %258 = vmatprep.subr.mxu0 0.0
    %259 = vmatpush1.msra.mxu0 %v94
    %260 = vmatprep.subr.mxu0 0.0
    %261 = vmatpush1.msra.mxu0 %v97
    %262 = vmatprep.subr.mxu0 0.0
    %263 = vmatpush1.msra.mxu0 %v100
    %264 = vmatprep.subr.mxu0 0.0
    %265 = vmatpush1.msra.mxu0 %v103
    %266 = vmatprep.subr.mxu0 0.0
    %267 = vmatpush1.msra.mxu0 0.0
    %268 = vmatprep.subr.mxu0 0.0
    %269 = vmatpush1.msra.mxu0 0.0
    %270 = vmatprep.subr.mxu0 0.0
    %271 = vmatpush1.msra.mxu0 0.0
    %272 = vmatprep.subr.mxu0 0.0
    %273 = vmatpush1.msra.mxu0 0.0
    %274 = vmatprep.subr.mxu0 0.0
    %275 = vmatpush1.msra.mxu0 0.0
    %276 = vmatprep.subr.mxu0 0.0
    %277 = vmatpush1.msra.mxu0 0.0
    %278 = vmatprep.subr.mxu0 0.0
    %279 = vmatpush1.msra.mxu0 0.0
    %280 = vmatprep.subr.mxu0 0.0
    %281 = vmatpush1.msra.mxu0 0.0
    %282 = vmatprep.subr.mxu0 0.0
    %283 = vmatpush1.msra.mxu0 0.0
    %284 = vmatprep.subr.mxu0 0.0
    %285 = vmatpush1.msra.mxu0 0.0
    %286 = vmatprep.subr.mxu0 0.0
    %287 = vmatpush1.msra.mxu0 0.0
    %288 = vmatprep.subr.mxu0 0.0
    %289 = vmatpush1.msra.mxu0 0.0
    %290 = vmatprep.subr.mxu0 0.0
    %291 = vmatpush1.msra.mxu0 0.0
    %292 = vmatprep.subr.mxu0 0.0
    %293 = vmatpush1.msra.mxu0 0.0
    %294 = vmatprep.subr.mxu0 0.0
    %295 = vmatpush1.msra.mxu0 0.0
    %296 = vmatprep.subr.mxu0 0.0
    %297 = vmatpush1.msra.mxu0 0.0
    %298 = vmatprep.mubr.f32.mxu0 0.0
    %299 = vmatmul.mubr.f32.gmra.mrb[0].mxu0 %v48
    %v300 = vpop.f32.mrb[0].mxu0
    %v301 = vadd.f32 %v117, %v300
    %v302 = vpop.f32.mrb[0].mxu0
    %303 = vmatprep.mubr.f32.mxu0 0.0
    %304 = vmatmul.mubr.f32.gmra.mrb[0].mxu0 %v49
    %v305 = vpop.f32.mrb[0].mxu0
    %v306 = vadd.f32 %v117, %v305
    %v307 = vpop.f32.mrb[0].mxu0
    %308 = vmatprep.mubr.f32.mxu0 0.0
    %309 = vmatmul.mubr.f32.gmra.mrb[0].mxu0 %v50
    %v310 = vpop.f32.mrb[0].mxu0
    %v311 = vadd.f32 %v117, %v310
    %v312 = vpop.f32.mrb[0].mxu0
    %313 = vmatprep.mubr.f32.mxu0 0.0
    %314 = vmatmul.mubr.f32.gmra.mrb[0].mxu0 %v51
    %v315 = vpop.f32.mrb[0].mxu0
    %v316 = vadd.f32 %v117, %v315
    %v317 = vpop.f32.mrb[0].mxu0
    %318 = vmatprep.mubr.f32.mxu0 0.0
    %319 = vmatmul.mubr.f32.gmra.mrb[0].mxu0 %v52
    %v320 = vpop.f32.mrb[0].mxu0
    %v321 = vadd.f32 %v117, %v320
    %v322 = vpop.f32.mrb[0].mxu0
    %323 = vmatprep.mubr.f32.mxu0 0.0
    %324 = vmatmul.mubr.f32.gmra.mrb[0].mxu0 %v53
    %v325 = vpop.f32.mrb[0].mxu0
    %v326 = vadd.f32 %v117, %v325
    %v327 = vpop.f32.mrb[0].mxu0
    %328 = vmatprep.mubr.f32.mxu0 0.0
    %329 = vmatmul.mubr.f32.gmra.mrb[0].mxu0 %v54
    %v330 = vpop.f32.mrb[0].mxu0
    %v331 = vadd.f32 %v117, %v330
    %v332 = vpop.f32.mrb[0].mxu0
    %333 = vmatprep.mubr.f32.mxu0 0.0
    %334 = vmatmul.mubr.f32.gmra.mrb[0].mxu0 %v55
    %v335 = vpop.f32.mrb[0].mxu0
    %v336 = vadd.f32 %v117, %v335
    %v337 = vpop.f32.mrb[0].mxu0
    %338 = vdwg.mxu0
    %339 = vst [vmem:[#allocation3] sm:$0xff] %v188
    %340 = vst [vmem:[#allocation3 + $0x8] sm:$0xff] %v190
    %341 = vst [vmem:[#allocation3 + $0x10] sm:$0xff] %v301
    %342 = vst [vmem:[#allocation3 + $0x18] sm:$0xff] %v194
    %343 = vst [vmem:[#allocation3 + $0x20] sm:$0xff] %v196
    %344 = vst [vmem:[#allocation3 + $0x28] sm:$0xff] %v306
    %345 = vst [vmem:[#allocation3 + $0x30] sm:$0xff] %v200
    %346 = vst [vmem:[#allocation3 + $0x38] sm:$0xff] %v202
    %347 = vst [vmem:[#allocation3 + $0x40] sm:$0xff] %v311
    %348 = vst [vmem:[#allocation3 + $0x48] sm:$0xff] %v206
    %349 = vst [vmem:[#allocation3 + $0x50] sm:$0xff] %v208
    %350 = vst [vmem:[#allocation3 + $0x58] sm:$0xff] %v316
    %351 = vst [vmem:[#allocation3 + $0x60] sm:$0xff] %v212
    %352 = vst [vmem:[#allocation3 + $0x68] sm:$0xff] %v214
    %353 = vst [vmem:[#allocation3 + $0x70] sm:$0xff] %v321
    %354 = vst [vmem:[#allocation3 + $0x78] sm:$0xff] %v218
    %355 = vst [vmem:[#allocation3 + $0x80] sm:$0xff] %v220
    %356 = vst [vmem:[#allocation3 + $0x88] sm:$0xff] %v326
    %357 = vst [vmem:[#allocation3 + $0x90] sm:$0xff] %v224
    %358 = vst [vmem:[#allocation3 + $0x98] sm:$0xff] %v226
    %359 = vst [vmem:[#allocation3 + $0xa0] sm:$0xff] %v331
    %360 = vst [vmem:[#allocation3 + $0xa8] sm:$0xff] %v230
    %361 = vst [vmem:[#allocation3 + $0xb0] sm:$0xff] %v232
    %362 = vst [vmem:[#allocation3 + $0xb8] sm:$0xff] %v336
    %v363 = vld [vmem:[%s4] sm:$0x1]
    %v365 = vlaneseq
    %v366 = vshrl.u32 %v365, 7
    %v367 = vsub.s32 0, %v366
    %v368 = vrot.slane %v363, %v367
    %s370 = smul.u32 0, 3
    %s371 = smul.addr %s370, 8
    %s372 = scalar_lea.vmem [#allocation3], %s371
    %v373 = vld [vmem:[%s372] sm:$0xff]
    %v374 = vld [vmem:[%s372 + $0x8] sm:$0xff]
    %v375 = vld [vmem:[%s372 + $0x10] sm:$0xff]
    %v376 = vld [vmem:[#allocation6] sm:$0xff]
    %v377 = vld [vmem:[#allocation6 + $0x8] sm:$0xff]
    %v378 = vld [vmem:[#allocation6 + $0x10] sm:$0xff]
    %v379 = vld [vmem:[#allocation6 + $0x18] sm:$0xff]
    %v380 = vld [vmem:[#allocation6 + $0x20] sm:$0xff]
    %v381 = vld [vmem:[#allocation6 + $0x28] sm:$0xff]
    %v382 = vld [vmem:[#allocation6 + $0x30] sm:$0xff]
    %v383 = vld [vmem:[#allocation6 + $0x38] sm:$0xff]
    %v384 = vld [vmem:[#allocation6 + $0x40] sm:$0xff]
    %v385 = vld [vmem:[#allocation6 + $0x48] sm:$0xff]
    %v386 = vld [vmem:[#allocation6 + $0x50] sm:$0xff]
    %v387 = vld [vmem:[#allocation6 + $0x58] sm:$0xff]
    %v388 = vld [vmem:[#allocation6 + $0x60] sm:$0xff]
    %v389 = vld [vmem:[#allocation6 + $0x68] sm:$0xff]
    %v390 = vld [vmem:[#allocation6 + $0x70] sm:$0xff]
    %v391 = vld [vmem:[#allocation6 + $0x78] sm:$0xff]
    %v392 = vld [vmem:[#allocation6 + $0x80] sm:$0xff]
    %v393 = vld [vmem:[#allocation6 + $0x88] sm:$0xff]
    %v394 = vld [vmem:[#allocation6 + $0x90] sm:$0xff]
    %v395 = vld [vmem:[#allocation6 + $0x98] sm:$0xff]
    %v396 = vld [vmem:[#allocation6 + $0xa0] sm:$0xff]
    %v397 = vld [vmem:[#allocation6 + $0xa8] sm:$0xff]
    %v398 = vld [vmem:[#allocation6 + $0xb0] sm:$0xff]
    %v399 = vld [vmem:[#allocation6 + $0xb8] sm:$0xff]
    %v400 = vld [vmem:[#allocation6 + $0xc0] sm:$0xff]
    %v401 = vld [vmem:[#allocation6 + $0xc8] sm:$0xff]
    %v402 = vld [vmem:[#allocation6 + $0xd0] sm:$0xff]
    %v403 = vld [vmem:[#allocation6 + $0xd8] sm:$0xff]
    %v404 = vld [vmem:[#allocation6 + $0xe0] sm:$0xff]
    %v405 = vld [vmem:[#allocation6 + $0xe8] sm:$0xff]
    %v406 = vld [vmem:[#allocation6 + $0xf0] sm:$0xff]
    %v407 = vld [vmem:[#allocation6 + $0xf8] sm:$0xff]
    %v408 = vld [vmem:[#allocation6 + $0x100] sm:$0xff]
    %v409 = vld [vmem:[#allocation6 + $0x108] sm:$0xff]
    %v410 = vld [vmem:[#allocation6 + $0x110] sm:$0xff]
    %v411 = vld [vmem:[#allocation6 + $0x118] sm:$0xff]
    %v412 = vld [vmem:[#allocation6 + $0x120] sm:$0xff]
    %v413 = vld [vmem:[#allocation6 + $0x128] sm:$0xff]
    %v414 = vld [vmem:[#allocation6 + $0x130] sm:$0xff]
    %v415 = vld [vmem:[#allocation6 + $0x138] sm:$0xff]
    %v416 = vld [vmem:[#allocation6 + $0x140] sm:$0xff]
    %v417 = vld [vmem:[#allocation6 + $0x148] sm:$0xff]
    %v418 = vld [vmem:[#allocation6 + $0x150] sm:$0xff]
    %v419 = vld [vmem:[#allocation6 + $0x158] sm:$0xff]
    %v420 = vld [vmem:[#allocation6 + $0x160] sm:$0xff]
    %v421 = vld [vmem:[#allocation6 + $0x168] sm:$0xff]
    %v422 = vld [vmem:[#allocation6 + $0x170] sm:$0xff]
    %v423 = vld [vmem:[#allocation6 + $0x178] sm:$0xff]
    %424 = vmatprep.subr.mxu0 %v377
    %425 = vmatpush1.msra.mxu0 %v376
    %426 = vmatprep.subr.mxu0 %v380
    %427 = vmatpush1.msra.mxu0 %v379
    %428 = vmatprep.subr.mxu0 %v383
    %429 = vmatpush1.msra.mxu0 %v382
    %430 = vmatprep.subr.mxu0 %v386
    %431 = vmatpush1.msra.mxu0 %v385
    %432 = vmatprep.subr.mxu0 %v389
    %433 = vmatpush1.msra.mxu0 %v388
    %434 = vmatprep.subr.mxu0 %v392
    %435 = vmatpush1.msra.mxu0 %v391
    %436 = vmatprep.subr.mxu0 %v395
    %437 = vmatpush1.msra.mxu0 %v394
    %438 = vmatprep.subr.mxu0 %v398
    %439 = vmatpush1.msra.mxu0 %v397
    %440 = vmatprep.subr.mxu0 %v401
    %441 = vmatpush1.msra.mxu0 %v400
    %442 = vmatprep.subr.mxu0 %v404
    %443 = vmatpush1.msra.mxu0 %v403
    %444 = vmatprep.subr.mxu0 %v407
    %445 = vmatpush1.msra.mxu0 %v406
    %446 = vmatprep.subr.mxu0 %v410
    %447 = vmatpush1.msra.mxu0 %v409
    %448 = vmatprep.subr.mxu0 %v413
    %449 = vmatpush1.msra.mxu0 %v412
    %450 = vmatprep.subr.mxu0 %v416
    %451 = vmatpush1.msra.mxu0 %v415
    %452 = vmatprep.subr.mxu0 %v419
    %453 = vmatpush1.msra.mxu0 %v418
    %454 = vmatprep.subr.mxu0 %v422
    %455 = vmatpush1.msra.mxu0 %v421
    %456 = vmatprep.subr.mxu0 0.0
    %457 = vmatpush1.msra.mxu0 0.0
    %458 = vmatprep.subr.mxu0 0.0
    %459 = vmatpush1.msra.mxu0 0.0
    %460 = vmatprep.subr.mxu0 0.0
    %461 = vmatpush1.msra.mxu0 0.0
    %462 = vmatprep.subr.mxu0 0.0
    %463 = vmatpush1.msra.mxu0 0.0
    %464 = vmatprep.subr.mxu0 0.0
    %465 = vmatpush1.msra.mxu0 0.0
    %466 = vmatprep.subr.mxu0 0.0
    %467 = vmatpush1.msra.mxu0 0.0
    %468 = vmatprep.subr.mxu0 0.0
    %469 = vmatpush1.msra.mxu0 0.0
    %470 = vmatprep.subr.mxu0 0.0
    %471 = vmatpush1.msra.mxu0 0.0
    %472 = vmatprep.subr.mxu0 0.0
    %473 = vmatpush1.msra.mxu0 0.0
    %474 = vmatprep.subr.mxu0 0.0
    %475 = vmatpush1.msra.mxu0 0.0
    %476 = vmatprep.subr.mxu0 0.0
    %477 = vmatpush1.msra.mxu0 0.0
    %478 = vmatprep.subr.mxu0 0.0
    %479 = vmatpush1.msra.mxu0 0.0
    %480 = vmatprep.subr.mxu0 0.0
    %481 = vmatpush1.msra.mxu0 0.0
    %482 = vmatprep.subr.mxu0 0.0
    %483 = vmatpush1.msra.mxu0 0.0
    %484 = vmatprep.subr.mxu0 0.0
    %485 = vmatpush1.msra.mxu0 0.0
    %486 = vmatprep.subr.mxu0 0.0
    %487 = vmatpush1.msra.mxu0 0.0
    %488 = vmatprep.mubr.f32.mxu0 0.0
    %489 = vmatmul.mubr.f32.gmra.mrb[0].mxu0 0.0
    %v490 = vpop.f32.mrb[0].mxu0
    %v491 = vadd.f32 0.0, %v490
    %v492 = vpop.f32.mrb[0].mxu0
    %v493 = vadd.f32 0.0, %v492
    %494 = vdwg.mxu0
    %495 = vmatprep.subr.mxu0 0.0
    %496 = vmatpush1.msra.mxu0 %v378
    %497 = vmatprep.subr.mxu0 0.0
    %498 = vmatpush1.msra.mxu0 %v381
    %499 = vmatprep.subr.mxu0 0.0
    %500 = vmatpush1.msra.mxu0 %v384
    %501 = vmatprep.subr.mxu0 0.0
    %502 = vmatpush1.msra.mxu0 %v387
    %503 = vmatprep.subr.mxu0 0.0
    %504 = vmatpush1.msra.mxu0 %v390
    %505 = vmatprep.subr.mxu0 0.0
    %506 = vmatpush1.msra.mxu0 %v393
    %507 = vmatprep.subr.mxu0 0.0
    %508 = vmatpush1.msra.mxu0 %v396
    %509 = vmatprep.subr.mxu0 0.0
    %510 = vmatpush1.msra.mxu0 %v399
    %511 = vmatprep.subr.mxu0 0.0
    %512 = vmatpush1.msra.mxu0 %v402
    %513 = vmatprep.subr.mxu0 0.0
    %514 = vmatpush1.msra.mxu0 %v405
    %515 = vmatprep.subr.mxu0 0.0
    %516 = vmatpush1.msra.mxu0 %v408
    %517 = vmatprep.subr.mxu0 0.0
    %518 = vmatpush1.msra.mxu0 %v411
    %519 = vmatprep.subr.mxu0 0.0
    %520 = vmatpush1.msra.mxu0 %v414
    %521 = vmatprep.subr.mxu0 0.0
    %522 = vmatpush1.msra.mxu0 %v417
    %523 = vmatprep.subr.mxu0 0.0
    %524 = vmatpush1.msra.mxu0 %v420
    %525 = vmatprep.subr.mxu0 0.0
    %526 = vmatpush1.msra.mxu0 %v423
    %527 = vmatprep.subr.mxu0 0.0
    %528 = vmatpush1.msra.mxu0 0.0
    %529 = vmatprep.subr.mxu0 0.0
    %530 = vmatpush1.msra.mxu0 0.0
    %531 = vmatprep.subr.mxu0 0.0
    %532 = vmatpush1.msra.mxu0 0.0
    %533 = vmatprep.subr.mxu0 0.0
    %534 = vmatpush1.msra.mxu0 0.0
    %535 = vmatprep.subr.mxu0 0.0
    %536 = vmatpush1.msra.mxu0 0.0
    %537 = vmatprep.subr.mxu0 0.0
    %538 = vmatpush1.msra.mxu0 0.0
    %539 = vmatprep.subr.mxu0 0.0
    %540 = vmatpush1.msra.mxu0 0.0
    %541 = vmatprep.subr.mxu0 0.0
    %542 = vmatpush1.msra.mxu0 0.0
    %543 = vmatprep.subr.mxu0 0.0
    %544 = vmatpush1.msra.mxu0 0.0
    %545 = vmatprep.subr.mxu0 0.0
    %546 = vmatpush1.msra.mxu0 0.0
    %547 = vmatprep.subr.mxu0 0.0
    %548 = vmatpush1.msra.mxu0 0.0
    %549 = vmatprep.subr.mxu0 0.0
    %550 = vmatpush1.msra.mxu0 0.0
    %551 = vmatprep.subr.mxu0 0.0
    %552 = vmatpush1.msra.mxu0 0.0
    %553 = vmatprep.subr.mxu0 0.0
    %554 = vmatpush1.msra.mxu0 0.0
    %555 = vmatprep.subr.mxu0 0.0
    %556 = vmatpush1.msra.mxu0 0.0
    %557 = vmatprep.subr.mxu0 0.0
    %558 = vmatpush1.msra.mxu0 0.0
    %559 = vmatprep.mubr.f32.mxu0 0.0
    %560 = vmatmul.mubr.f32.gmra.mrb[0].mxu0 0.0
    %v561 = vpop.f32.mrb[0].mxu0
    %v562 = vadd.f32 0.0, %v561
    %v563 = vpop.f32.mrb[0].mxu0
    %564 = vdwg.mxu0
    %v565 = vadd.f32 %v373, %v491
    %v566 = vmul.f32 %v565, 0.5
    %v567 = vtanh.pop %v566
    %v568 = vmul.f32 %v567, 0.5
    %v569 = vadd.f32 %v568, 0.5
    %v570 = vadd.f32 %v374, %v493
    %v571 = vmul.f32 %v570, 0.5
    %v572 = vtanh.pop %v571
    %v573 = vmul.f32 %v572, 0.5
    %v574 = vadd.f32 %v573, 0.5
    %v575 = vadd.f32 %v562, %v368
    %v576 = vmul.f32 %v569, %v575
    %v577 = vadd.f32 %v375, %v576
    %v578 = vtanh.pop %v577
    %v579 = vsub.f32 0.0, %v578
    %v580 = vmul.f32 %v574, %v579
    %v581 = vadd.f32 %v578, %v580
    %582 = vst [vmem:[#allocation2] sm:$0xff] %v581
    %s583 = smul.u32 1, 3
    %s584 = smul.addr %s583, 8
    %s585 = scalar_lea.vmem [#allocation3], %s584
    %v586 = vld [vmem:[%s585] sm:$0xff]
    %v587 = vld [vmem:[%s585 + $0x8] sm:$0xff]
    %v588 = vld [vmem:[%s585 + $0x10] sm:$0xff]
    %v589 = vld [vmem:[#allocation6] sm:$0xff]
    %v590 = vld [vmem:[#allocation6 + $0x8] sm:$0xff]
    %v591 = vld [vmem:[#allocation6 + $0x10] sm:$0xff]
    %v592 = vld [vmem:[#allocation6 + $0x18] sm:$0xff]
    %v593 = vld [vmem:[#allocation6 + $0x20] sm:$0xff]
    %v594 = vld [vmem:[#allocation6 + $0x28] sm:$0xff]
    %v595 = vld [vmem:[#allocation6 + $0x30] sm:$0xff]
    %v596 = vld [vmem:[#allocation6 + $0x38] sm:$0xff]
    %v597 = vld [vmem:[#allocation6 + $0x40] sm:$0xff]
    %v598 = vld [vmem:[#allocation6 + $0x48] sm:$0xff]
    %v599 = vld [vmem:[#allocation6 + $0x50] sm:$0xff]
    %v600 = vld [vmem:[#allocation6 + $0x58] sm:$0xff]
    %v601 = vld [vmem:[#allocation6 + $0x60] sm:$0xff]
    %v602 = vld [vmem:[#allocation6 + $0x68] sm:$0xff]
    %v603 = vld [vmem:[#allocation6 + $0x70] sm:$0xff]
    %v604 = vld [vmem:[#allocation6 + $0x78] sm:$0xff]
    %v605 = vld [vmem:[#allocation6 + $0x80] sm:$0xff]
    %v606 = vld [vmem:[#allocation6 + $0x88] sm:$0xff]
    %v607 = vld [vmem:[#allocation6 + $0x90] sm:$0xff]
    %v608 = vld [vmem:[#allocation6 + $0x98] sm:$0xff]
    %v609 = vld [vmem:[#allocation6 + $0xa0] sm:$0xff]
    %v610 = vld [vmem:[#allocation6 + $0xa8] sm:$0xff]
    %v611 = vld [vmem:[#allocation6 + $0xb0] sm:$0xff]
    %v612 = vld [vmem:[#allocation6 + $0xb8] sm:$0xff]
    %v613 = vld [vmem:[#allocation6 + $0xc0] sm:$0xff]
    %v614 = vld [vmem:[#allocation6 + $0xc8] sm:$0xff]
    %v615 = vld [vmem:[#allocation6 + $0xd0] sm:$0xff]
    %v616 = vld [vmem:[#allocation6 + $0xd8] sm:$0xff]
    %v617 = vld [vmem:[#allocation6 + $0xe0] sm:$0xff]
    %v618 = vld [vmem:[#allocation6 + $0xe8] sm:$0xff]
    %v619 = vld [vmem:[#allocation6 + $0xf0] sm:$0xff]
    %v620 = vld [vmem:[#allocation6 + $0xf8] sm:$0xff]
    %v621 = vld [vmem:[#allocation6 + $0x100] sm:$0xff]
    %v622 = vld [vmem:[#allocation6 + $0x108] sm:$0xff]
    %v623 = vld [vmem:[#allocation6 + $0x110] sm:$0xff]
    %v624 = vld [vmem:[#allocation6 + $0x118] sm:$0xff]
    %v625 = vld [vmem:[#allocation6 + $0x120] sm:$0xff]
    %v626 = vld [vmem:[#allocation6 + $0x128] sm:$0xff]
    %v627 = vld [vmem:[#allocation6 + $0x130] sm:$0xff]
    %v628 = vld [vmem:[#allocation6 + $0x138] sm:$0xff]
    %v629 = vld [vmem:[#allocation6 + $0x140] sm:$0xff]
    %v630 = vld [vmem:[#allocation6 + $0x148] sm:$0xff]
    %v631 = vld [vmem:[#allocation6 + $0x150] sm:$0xff]
    %v632 = vld [vmem:[#allocation6 + $0x158] sm:$0xff]
    %v633 = vld [vmem:[#allocation6 + $0x160] sm:$0xff]
    %v634 = vld [vmem:[#allocation6 + $0x168] sm:$0xff]
    %v635 = vld [vmem:[#allocation6 + $0x170] sm:$0xff]
    %v636 = vld [vmem:[#allocation6 + $0x178] sm:$0xff]
    %637 = vmatprep.subr.mxu0 %v590
    %638 = vmatpush1.msra.mxu0 %v589
    %639 = vmatprep.subr.mxu0 %v593
    %640 = vmatpush1.msra.mxu0 %v592
    %641 = vmatprep.subr.mxu0 %v596
    %642 = vmatpush1.msra.mxu0 %v595
    %643 = vmatprep.subr.mxu0 %v599
    %644 = vmatpush1.msra.mxu0 %v598
    %645 = vmatprep.subr.mxu0 %v602
    %646 = vmatpush1.msra.mxu0 %v601
    %647 = vmatprep.subr.mxu0 %v605
    %648 = vmatpush1.msra.mxu0 %v604
    %649 = vmatprep.subr.mxu0 %v608
    %650 = vmatpush1.msra.mxu0 %v607
    %651 = vmatprep.subr.mxu0 %v611
    %652 = vmatpush1.msra.mxu0 %v610
    %653 = vmatprep.subr.mxu0 %v614
    %654 = vmatpush1.msra.mxu0 %v613
    %655 = vmatprep.subr.mxu0 %v617
    %656 = vmatpush1.msra.mxu0 %v616
    %657 = vmatprep.subr.mxu0 %v620
    %658 = vmatpush1.msra.mxu0 %v619
    %659 = vmatprep.subr.mxu0 %v623
    %660 = vmatpush1.msra.mxu0 %v622
    %661 = vmatprep.subr.mxu0 %v626
    %662 = vmatpush1.msra.mxu0 %v625
    %663 = vmatprep.subr.mxu0 %v629
    %664 = vmatpush1.msra.mxu0 %v628
    %665 = vmatprep.subr.mxu0 %v632
    %666 = vmatpush1.msra.mxu0 %v631
    %667 = vmatprep.subr.mxu0 %v635
    %668 = vmatpush1.msra.mxu0 %v634
    %669 = vmatprep.subr.mxu0 0.0
    %670 = vmatpush1.msra.mxu0 0.0
    %671 = vmatprep.subr.mxu0 0.0
    %672 = vmatpush1.msra.mxu0 0.0
    %673 = vmatprep.subr.mxu0 0.0
    %674 = vmatpush1.msra.mxu0 0.0
    %675 = vmatprep.subr.mxu0 0.0
    %676 = vmatpush1.msra.mxu0 0.0
    %677 = vmatprep.subr.mxu0 0.0
    %678 = vmatpush1.msra.mxu0 0.0
    %679 = vmatprep.subr.mxu0 0.0
    %680 = vmatpush1.msra.mxu0 0.0
    %681 = vmatprep.subr.mxu0 0.0
    %682 = vmatpush1.msra.mxu0 0.0
    %683 = vmatprep.subr.mxu0 0.0
    %684 = vmatpush1.msra.mxu0 0.0
    %685 = vmatprep.subr.mxu0 0.0
    %686 = vmatpush1.msra.mxu0 0.0
    %687 = vmatprep.subr.mxu0 0.0
    %688 = vmatpush1.msra.mxu0 0.0
    %689 = vmatprep.subr.mxu0 0.0
    %690 = vmatpush1.msra.mxu0 0.0
    %691 = vmatprep.subr.mxu0 0.0
    %692 = vmatpush1.msra.mxu0 0.0
    %693 = vmatprep.subr.mxu0 0.0
    %694 = vmatpush1.msra.mxu0 0.0
    %695 = vmatprep.subr.mxu0 0.0
    %696 = vmatpush1.msra.mxu0 0.0
    %697 = vmatprep.subr.mxu0 0.0
    %698 = vmatpush1.msra.mxu0 0.0
    %699 = vmatprep.subr.mxu0 0.0
    %700 = vmatpush1.msra.mxu0 0.0
    %701 = vmatprep.mubr.f32.mxu0 0.0
    %702 = vmatmul.mubr.f32.gmra.mrb[0].mxu0 %v581
    %v703 = vpop.f32.mrb[0].mxu0
    %v704 = vadd.f32 0.0, %v703
    %v705 = vpop.f32.mrb[0].mxu0
    %v706 = vadd.f32 0.0, %v705
    %707 = vdwg.mxu0
    %708 = vmatprep.subr.mxu0 0.0
    %709 = vmatpush1.msra.mxu0 %v591
    %710 = vmatprep.subr.mxu0 0.0
    %711 = vmatpush1.msra.mxu0 %v594
    %712 = vmatprep.subr.mxu0 0.0
    %713 = vmatpush1.msra.mxu0 %v597
    %714 = vmatprep.subr.mxu0 0.0
    %715 = vmatpush1.msra.mxu0 %v600
    %716 = vmatprep.subr.mxu0 0.0
    %717 = vmatpush1.msra.mxu0 %v603
    %718 = vmatprep.subr.mxu0 0.0
    %719 = vmatpush1.msra.mxu0 %v606
    %720 = vmatprep.subr.mxu0 0.0
    %721 = vmatpush1.msra.mxu0 %v609
    %722 = vmatprep.subr.mxu0 0.0
    %723 = vmatpush1.msra.mxu0 %v612
    %724 = vmatprep.subr.mxu0 0.0
    %725 = vmatpush1.msra.mxu0 %v615
    %726 = vmatprep.subr.mxu0 0.0
    %727 = vmatpush1.msra.mxu0 %v618
    %728 = vmatprep.subr.mxu0 0.0
    %729 = vmatpush1.msra.mxu0 %v621
    %730 = vmatprep.subr.mxu0 0.0
    %731 = vmatpush1.msra.mxu0 %v624
    %732 = vmatprep.subr.mxu0 0.0
    %733 = vmatpush1.msra.mxu0 %v627
    %734 = vmatprep.subr.mxu0 0.0
    %735 = vmatpush1.msra.mxu0 %v630
    %736 = vmatprep.subr.mxu0 0.0
    %737 = vmatpush1.msra.mxu0 %v633
    %738 = vmatprep.subr.mxu0 0.0
    %739 = vmatpush1.msra.mxu0 %v636
    %740 = vmatprep.subr.mxu0 0.0
    %741 = vmatpush1.msra.mxu0 0.0
    %742 = vmatprep.subr.mxu0 0.0
    %743 = vmatpush1.msra.mxu0 0.0
    %744 = vmatprep.subr.mxu0 0.0
    %745 = vmatpush1.msra.mxu0 0.0
    %746 = vmatprep.subr.mxu0 0.0
    %747 = vmatpush1.msra.mxu0 0.0
    %748 = vmatprep.subr.mxu0 0.0
    %749 = vmatpush1.msra.mxu0 0.0
    %750 = vmatprep.subr.mxu0 0.0
    %751 = vmatpush1.msra.mxu0 0.0
    %752 = vmatprep.subr.mxu0 0.0
    %753 = vmatpush1.msra.mxu0 0.0
    %754 = vmatprep.subr.mxu0 0.0
    %755 = vmatpush1.msra.mxu0 0.0
    %756 = vmatprep.subr.mxu0 0.0
    %757 = vmatpush1.msra.mxu0 0.0
    %758 = vmatprep.subr.mxu0 0.0
    %759 = vmatpush1.msra.mxu0 0.0
    %760 = vmatprep.subr.mxu0 0.0
    %761 = vmatpush1.msra.mxu0 0.0
    %762 = vmatprep.subr.mxu0 0.0
    %763 = vmatpush1.msra.mxu0 0.0
    %764 = vmatprep.subr.mxu0 0.0
    %765 = vmatpush1.msra.mxu0 0.0
    %766 = vmatprep.subr.mxu0 0.0
    %767 = vmatpush1.msra.mxu0 0.0
    %768 = vmatprep.subr.mxu0 0.0
    %769 = vmatpush1.msra.mxu0 0.0
    %770 = vmatprep.subr.mxu0 0.0
    %771 = vmatpush1.msra.mxu0 0.0
    %772 = vmatprep.mubr.f32.mxu0 0.0
    %773 = vmatmul.mubr.f32.gmra.mrb[0].mxu0 %v581
    %v774 = vpop.f32.mrb[0].mxu0
    %v775 = vadd.f32 0.0, %v774
    %v776 = vpop.f32.mrb[0].mxu0
    %777 = vdwg.mxu0
    %v778 = vadd.f32 %v586, %v704
    %v779 = vmul.f32 %v778, 0.5
    %v780 = vtanh.pop %v779
    %v781 = vmul.f32 %v780, 0.5
    %v782 = vadd.f32 %v781, 0.5
    %v783 = vadd.f32 %v587, %v706
    %v784 = vmul.f32 %v783, 0.5
    %v785 = vtanh.pop %v784
    %v786 = vmul.f32 %v785, 0.5
    %v787 = vadd.f32 %v786, 0.5
    %v788 = vadd.f32 %v775, %v368
    %v789 = vmul.f32 %v782, %v788
    %v790 = vadd.f32 %v588, %v789
    %v791 = vtanh.pop %v790
    %v792 = vsub.f32 %v581, %v791
    %v793 = vmul.f32 %v787, %v792
    %v794 = vadd.f32 %v791, %v793
    %s795 = scalar_lea.vmem [#allocation2], 8
    %796 = vst [vmem:[%s795] sm:$0xff] %v794
    %s797 = smul.u32 2, 3
    %s798 = smul.addr %s797, 8
    %s799 = scalar_lea.vmem [#allocation3], %s798
    %v800 = vld [vmem:[%s799] sm:$0xff]
    %v801 = vld [vmem:[%s799 + $0x8] sm:$0xff]
    %v802 = vld [vmem:[%s799 + $0x10] sm:$0xff]
    %v803 = vld [vmem:[#allocation6] sm:$0xff]
    %v804 = vld [vmem:[#allocation6 + $0x8] sm:$0xff]
    %v805 = vld [vmem:[#allocation6 + $0x10] sm:$0xff]
    %v806 = vld [vmem:[#allocation6 + $0x18] sm:$0xff]
    %v807 = vld [vmem:[#allocation6 + $0x20] sm:$0xff]
    %v808 = vld [vmem:[#allocation6 + $0x28] sm:$0xff]
    %v809 = vld [vmem:[#allocation6 + $0x30] sm:$0xff]
    %v810 = vld [vmem:[#allocation6 + $0x38] sm:$0xff]
    %v811 = vld [vmem:[#allocation6 + $0x40] sm:$0xff]
    %v812 = vld [vmem:[#allocation6 + $0x48] sm:$0xff]
    %v813 = vld [vmem:[#allocation6 + $0x50] sm:$0xff]
    %v814 = vld [vmem:[#allocation6 + $0x58] sm:$0xff]
    %v815 = vld [vmem:[#allocation6 + $0x60] sm:$0xff]
    %v816 = vld [vmem:[#allocation6 + $0x68] sm:$0xff]
    %v817 = vld [vmem:[#allocation6 + $0x70] sm:$0xff]
    %v818 = vld [vmem:[#allocation6 + $0x78] sm:$0xff]
    %v819 = vld [vmem:[#allocation6 + $0x80] sm:$0xff]
    %v820 = vld [vmem:[#allocation6 + $0x88] sm:$0xff]
    %v821 = vld [vmem:[#allocation6 + $0x90] sm:$0xff]
    %v822 = vld [vmem:[#allocation6 + $0x98] sm:$0xff]
    %v823 = vld [vmem:[#allocation6 + $0xa0] sm:$0xff]
    %v824 = vld [vmem:[#allocation6 + $0xa8] sm:$0xff]
    %v825 = vld [vmem:[#allocation6 + $0xb0] sm:$0xff]
    %v826 = vld [vmem:[#allocation6 + $0xb8] sm:$0xff]
    %v827 = vld [vmem:[#allocation6 + $0xc0] sm:$0xff]
    %v828 = vld [vmem:[#allocation6 + $0xc8] sm:$0xff]
    %v829 = vld [vmem:[#allocation6 + $0xd0] sm:$0xff]
    %v830 = vld [vmem:[#allocation6 + $0xd8] sm:$0xff]
    %v831 = vld [vmem:[#allocation6 + $0xe0] sm:$0xff]
    %v832 = vld [vmem:[#allocation6 + $0xe8] sm:$0xff]
    %v833 = vld [vmem:[#allocation6 + $0xf0] sm:$0xff]
    %v834 = vld [vmem:[#allocation6 + $0xf8] sm:$0xff]
    %v835 = vld [vmem:[#allocation6 + $0x100] sm:$0xff]
    %v836 = vld [vmem:[#allocation6 + $0x108] sm:$0xff]
    %v837 = vld [vmem:[#allocation6 + $0x110] sm:$0xff]
    %v838 = vld [vmem:[#allocation6 + $0x118] sm:$0xff]
    %v839 = vld [vmem:[#allocation6 + $0x120] sm:$0xff]
    %v840 = vld [vmem:[#allocation6 + $0x128] sm:$0xff]
    %v841 = vld [vmem:[#allocation6 + $0x130] sm:$0xff]
    %v842 = vld [vmem:[#allocation6 + $0x138] sm:$0xff]
    %v843 = vld [vmem:[#allocation6 + $0x140] sm:$0xff]
    %v844 = vld [vmem:[#allocation6 + $0x148] sm:$0xff]
    %v845 = vld [vmem:[#allocation6 + $0x150] sm:$0xff]
    %v846 = vld [vmem:[#allocation6 + $0x158] sm:$0xff]
    %v847 = vld [vmem:[#allocation6 + $0x160] sm:$0xff]
    %v848 = vld [vmem:[#allocation6 + $0x168] sm:$0xff]
    %v849 = vld [vmem:[#allocation6 + $0x170] sm:$0xff]
    %v850 = vld [vmem:[#allocation6 + $0x178] sm:$0xff]
    %851 = vmatprep.subr.mxu0 %v804
    %852 = vmatpush1.msra.mxu0 %v803
    %853 = vmatprep.subr.mxu0 %v807
    %854 = vmatpush1.msra.mxu0 %v806
    %855 = vmatprep.subr.mxu0 %v810
    %856 = vmatpush1.msra.mxu0 %v809
    %857 = vmatprep.subr.mxu0 %v813
    %858 = vmatpush1.msra.mxu0 %v812
    %859 = vmatprep.subr.mxu0 %v816
    %860 = vmatpush1.msra.mxu0 %v815
    %861 = vmatprep.subr.mxu0 %v819
    %862 = vmatpush1.msra.mxu0 %v818
    %863 = vmatprep.subr.mxu0 %v822
    %864 = vmatpush1.msra.mxu0 %v821
    %865 = vmatprep.subr.mxu0 %v825
    %866 = vmatpush1.msra.mxu0 %v824
    %867 = vmatprep.subr.mxu0 %v828
    %868 = vmatpush1.msra.mxu0 %v827
    %869 = vmatprep.subr.mxu0 %v831
    %870 = vmatpush1.msra.mxu0 %v830
    %871 = vmatprep.subr.mxu0 %v834
    %872 = vmatpush1.msra.mxu0 %v833
    %873 = vmatprep.subr.mxu0 %v837
    %874 = vmatpush1.msra.mxu0 %v836
    %875 = vmatprep.subr.mxu0 %v840
    %876 = vmatpush1.msra.mxu0 %v839
    %877 = vmatprep.subr.mxu0 %v843
    %878 = vmatpush1.msra.mxu0 %v842
    %879 = vmatprep.subr.mxu0 %v846
    %880 = vmatpush1.msra.mxu0 %v845
    %881 = vmatprep.subr.mxu0 %v849
    %882 = vmatpush1.msra.mxu0 %v848
    %883 = vmatprep.subr.mxu0 0.0
    %884 = vmatpush1.msra.mxu0 0.0
    %885 = vmatprep.subr.mxu0 0.0
    %886 = vmatpush1.msra.mxu0 0.0
    %887 = vmatprep.subr.mxu0 0.0
    %888 = vmatpush1.msra.mxu0 0.0
    %889 = vmatprep.subr.mxu0 0.0
    %890 = vmatpush1.msra.mxu0 0.0
    %891 = vmatprep.subr.mxu0 0.0
    %892 = vmatpush1.msra.mxu0 0.0
    %893 = vmatprep.subr.mxu0 0.0
    %894 = vmatpush1.msra.mxu0 0.0
    %895 = vmatprep.subr.mxu0 0.0
    %896 = vmatpush1.msra.mxu0 0.0
    %897 = vmatprep.subr.mxu0 0.0
    %898 = vmatpush1.msra.mxu0 0.0
    %899 = vmatprep.subr.mxu0 0.0
    %900 = vmatpush1.msra.mxu0 0.0
    %901 = vmatprep.subr.mxu0 0.0
    %902 = vmatpush1.msra.mxu0 0.0
    %903 = vmatprep.subr.mxu0 0.0
    %904 = vmatpush1.msra.mxu0 0.0
    %905 = vmatprep.subr.mxu0 0.0
    %906 = vmatpush1.msra.mxu0 0.0
    %907 = vmatprep.subr.mxu0 0.0
    %908 = vmatpush1.msra.mxu0 0.0
    %909 = vmatprep.subr.mxu0 0.0
    %910 = vmatpush1.msra.mxu0 0.0
    %911 = vmatprep.subr.mxu0 0.0
    %912 = vmatpush1.msra.mxu0 0.0
    %913 = vmatprep.subr.mxu0 0.0
    %914 = vmatpush1.msra.mxu0 0.0
    %915 = vmatprep.mubr.f32.mxu0 0.0
    %916 = vmatmul.mubr.f32.gmra.mrb[0].mxu0 %v794
    %v917 = vpop.f32.mrb[0].mxu0
    %v918 = vadd.f32 0.0, %v917
    %v919 = vpop.f32.mrb[0].mxu0
    %v920 = vadd.f32 0.0, %v919
    %921 = vdwg.mxu0
    %922 = vmatprep.subr.mxu0 0.0
    %923 = vmatpush1.msra.mxu0 %v805
    %924 = vmatprep.subr.mxu0 0.0
    %925 = vmatpush1.msra.mxu0 %v808
    %926 = vmatprep.subr.mxu0 0.0
    %927 = vmatpush1.msra.mxu0 %v811
    %928 = vmatprep.subr.mxu0 0.0
    %929 = vmatpush1.msra.mxu0 %v814
    %930 = vmatprep.subr.mxu0 0.0
    %931 = vmatpush1.msra.mxu0 %v817
    %932 = vmatprep.subr.mxu0 0.0
    %933 = vmatpush1.msra.mxu0 %v820
    %934 = vmatprep.subr.mxu0 0.0
    %935 = vmatpush1.msra.mxu0 %v823
    %936 = vmatprep.subr.mxu0 0.0
    %937 = vmatpush1.msra.mxu0 %v826
    %938 = vmatprep.subr.mxu0 0.0
    %939 = vmatpush1.msra.mxu0 %v829
    %940 = vmatprep.subr.mxu0 0.0
    %941 = vmatpush1.msra.mxu0 %v832
    %942 = vmatprep.subr.mxu0 0.0
    %943 = vmatpush1.msra.mxu0 %v835
    %944 = vmatprep.subr.mxu0 0.0
    %945 = vmatpush1.msra.mxu0 %v838
    %946 = vmatprep.subr.mxu0 0.0
    %947 = vmatpush1.msra.mxu0 %v841
    %948 = vmatprep.subr.mxu0 0.0
    %949 = vmatpush1.msra.mxu0 %v844
    %950 = vmatprep.subr.mxu0 0.0
    %951 = vmatpush1.msra.mxu0 %v847
    %952 = vmatprep.subr.mxu0 0.0
    %953 = vmatpush1.msra.mxu0 %v850
    %954 = vmatprep.subr.mxu0 0.0
    %955 = vmatpush1.msra.mxu0 0.0
    %956 = vmatprep.subr.mxu0 0.0
    %957 = vmatpush1.msra.mxu0 0.0
    %958 = vmatprep.subr.mxu0 0.0
    %959 = vmatpush1.msra.mxu0 0.0
    %960 = vmatprep.subr.mxu0 0.0
    %961 = vmatpush1.msra.mxu0 0.0
    %962 = vmatprep.subr.mxu0 0.0
    %963 = vmatpush1.msra.mxu0 0.0
    %964 = vmatprep.subr.mxu0 0.0
    %965 = vmatpush1.msra.mxu0 0.0
    %966 = vmatprep.subr.mxu0 0.0
    %967 = vmatpush1.msra.mxu0 0.0
    %968 = vmatprep.subr.mxu0 0.0
    %969 = vmatpush1.msra.mxu0 0.0
    %970 = vmatprep.subr.mxu0 0.0
    %971 = vmatpush1.msra.mxu0 0.0
    %972 = vmatprep.subr.mxu0 0.0
    %973 = vmatpush1.msra.mxu0 0.0
    %974 = vmatprep.subr.mxu0 0.0
    %975 = vmatpush1.msra.mxu0 0.0
    %976 = vmatprep.subr.mxu0 0.0
    %977 = vmatpush1.msra.mxu0 0.0
    %978 = vmatprep.subr.mxu0 0.0
    %979 = vmatpush1.msra.mxu0 0.0
    %980 = vmatprep.subr.mxu0 0.0
    %981 = vmatpush1.msra.mxu0 0.0
    %982 = vmatprep.subr.mxu0 0.0
    %983 = vmatpush1.msra.mxu0 0.0
    %984 = vmatprep.subr.mxu0 0.0
    %985 = vmatpush1.msra.mxu0 0.0
    %986 = vmatprep.mubr.f32.mxu0 0.0
    %987 = vmatmul.mubr.f32.gmra.mrb[0].mxu0 %v794
    %v988 = vpop.f32.mrb[0].mxu0
    %v989 = vadd.f32 0.0, %v988
    %v990 = vpop.f32.mrb[0].mxu0
    %991 = vdwg.mxu0
    %v992 = vadd.f32 %v800, %v918
    %v993 = vmul.f32 %v992, 0.5
    %v994 = vtanh.pop %v993
    %v995 = vmul.f32 %v994, 0.5
    %v996 = vadd.f32 %v995, 0.5
    %v997 = vadd.f32 %v801, %v920
    %v998 = vmul.f32 %v997, 0.5
    %v999 = vtanh.pop %v998
    %v1000 = vmul.f32 %v999, 0.5
    %v1001 = vadd.f32 %v1000, 0.5
    %v1002 = vadd.f32 %v989, %v368
    %v1003 = vmul.f32 %v996, %v1002
    %v1004 = vadd.f32 %v802, %v1003
    %v1005 = vtanh.pop %v1004
    %v1006 = vsub.f32 %v794, %v1005
    %v1007 = vmul.f32 %v1001, %v1006
    %v1008 = vadd.f32 %v1005, %v1007
    %s1009 = scalar_lea.vmem [#allocation2], 16
    %1010 = vst [vmem:[%s1009] sm:$0xff] %v1008
    %s1011 = smul.u32 3, 3
    %s1012 = smul.addr %s1011, 8
    %s1013 = scalar_lea.vmem [#allocation3], %s1012
    %v1014 = vld [vmem:[%s1013] sm:$0xff]
    %v1015 = vld [vmem:[%s1013 + $0x8] sm:$0xff]
    %v1016 = vld [vmem:[%s1013 + $0x10] sm:$0xff]
    %v1017 = vld [vmem:[#allocation6] sm:$0xff]
    %v1018 = vld [vmem:[#allocation6 + $0x8] sm:$0xff]
    %v1019 = vld [vmem:[#allocation6 + $0x10] sm:$0xff]
    %v1020 = vld [vmem:[#allocation6 + $0x18] sm:$0xff]
    %v1021 = vld [vmem:[#allocation6 + $0x20] sm:$0xff]
    %v1022 = vld [vmem:[#allocation6 + $0x28] sm:$0xff]
    %v1023 = vld [vmem:[#allocation6 + $0x30] sm:$0xff]
    %v1024 = vld [vmem:[#allocation6 + $0x38] sm:$0xff]
    %v1025 = vld [vmem:[#allocation6 + $0x40] sm:$0xff]
    %v1026 = vld [vmem:[#allocation6 + $0x48] sm:$0xff]
    %v1027 = vld [vmem:[#allocation6 + $0x50] sm:$0xff]
    %v1028 = vld [vmem:[#allocation6 + $0x58] sm:$0xff]
    %v1029 = vld [vmem:[#allocation6 + $0x60] sm:$0xff]
    %v1030 = vld [vmem:[#allocation6 + $0x68] sm:$0xff]
    %v1031 = vld [vmem:[#allocation6 + $0x70] sm:$0xff]
    %v1032 = vld [vmem:[#allocation6 + $0x78] sm:$0xff]
    %v1033 = vld [vmem:[#allocation6 + $0x80] sm:$0xff]
    %v1034 = vld [vmem:[#allocation6 + $0x88] sm:$0xff]
    %v1035 = vld [vmem:[#allocation6 + $0x90] sm:$0xff]
    %v1036 = vld [vmem:[#allocation6 + $0x98] sm:$0xff]
    %v1037 = vld [vmem:[#allocation6 + $0xa0] sm:$0xff]
    %v1038 = vld [vmem:[#allocation6 + $0xa8] sm:$0xff]
    %v1039 = vld [vmem:[#allocation6 + $0xb0] sm:$0xff]
    %v1040 = vld [vmem:[#allocation6 + $0xb8] sm:$0xff]
    %v1041 = vld [vmem:[#allocation6 + $0xc0] sm:$0xff]
    %v1042 = vld [vmem:[#allocation6 + $0xc8] sm:$0xff]
    %v1043 = vld [vmem:[#allocation6 + $0xd0] sm:$0xff]
    %v1044 = vld [vmem:[#allocation6 + $0xd8] sm:$0xff]
    %v1045 = vld [vmem:[#allocation6 + $0xe0] sm:$0xff]
    %v1046 = vld [vmem:[#allocation6 + $0xe8] sm:$0xff]
    %v1047 = vld [vmem:[#allocation6 + $0xf0] sm:$0xff]
    %v1048 = vld [vmem:[#allocation6 + $0xf8] sm:$0xff]
    %v1049 = vld [vmem:[#allocation6 + $0x100] sm:$0xff]
    %v1050 = vld [vmem:[#allocation6 + $0x108] sm:$0xff]
    %v1051 = vld [vmem:[#allocation6 + $0x110] sm:$0xff]
    %v1052 = vld [vmem:[#allocation6 + $0x118] sm:$0xff]
    %v1053 = vld [vmem:[#allocation6 + $0x120] sm:$0xff]
    %v1054 = vld [vmem:[#allocation6 + $0x128] sm:$0xff]
    %v1055 = vld [vmem:[#allocation6 + $0x130] sm:$0xff]
    %v1056 = vld [vmem:[#allocation6 + $0x138] sm:$0xff]
    %v1057 = vld [vmem:[#allocation6 + $0x140] sm:$0xff]
    %v1058 = vld [vmem:[#allocation6 + $0x148] sm:$0xff]
    %v1059 = vld [vmem:[#allocation6 + $0x150] sm:$0xff]
    %v1060 = vld [vmem:[#allocation6 + $0x158] sm:$0xff]
    %v1061 = vld [vmem:[#allocation6 + $0x160] sm:$0xff]
    %v1062 = vld [vmem:[#allocation6 + $0x168] sm:$0xff]
    %v1063 = vld [vmem:[#allocation6 + $0x170] sm:$0xff]
    %v1064 = vld [vmem:[#allocation6 + $0x178] sm:$0xff]
    %1065 = vmatprep.subr.mxu0 %v1018
    %1066 = vmatpush1.msra.mxu0 %v1017
    %1067 = vmatprep.subr.mxu0 %v1021
    %1068 = vmatpush1.msra.mxu0 %v1020
    %1069 = vmatprep.subr.mxu0 %v1024
    %1070 = vmatpush1.msra.mxu0 %v1023
    %1071 = vmatprep.subr.mxu0 %v1027
    %1072 = vmatpush1.msra.mxu0 %v1026
    %1073 = vmatprep.subr.mxu0 %v1030
    %1074 = vmatpush1.msra.mxu0 %v1029
    %1075 = vmatprep.subr.mxu0 %v1033
    %1076 = vmatpush1.msra.mxu0 %v1032
    %1077 = vmatprep.subr.mxu0 %v1036
    %1078 = vmatpush1.msra.mxu0 %v1035
    %1079 = vmatprep.subr.mxu0 %v1039
    %1080 = vmatpush1.msra.mxu0 %v1038
    %1081 = vmatprep.subr.mxu0 %v1042
    %1082 = vmatpush1.msra.mxu0 %v1041
    %1083 = vmatprep.subr.mxu0 %v1045
    %1084 = vmatpush1.msra.mxu0 %v1044
    %1085 = vmatprep.subr.mxu0 %v1048
    %1086 = vmatpush1.msra.mxu0 %v1047
    %1087 = vmatprep.subr.mxu0 %v1051
    %1088 = vmatpush1.msra.mxu0 %v1050
    %1089 = vmatprep.subr.mxu0 %v1054
    %1090 = vmatpush1.msra.mxu0 %v1053
    %1091 = vmatprep.subr.mxu0 %v1057
    %1092 = vmatpush1.msra.mxu0 %v1056
    %1093 = vmatprep.subr.mxu0 %v1060
    %1094 = vmatpush1.msra.mxu0 %v1059
    %1095 = vmatprep.subr.mxu0 %v1063
    %1096 = vmatpush1.msra.mxu0 %v1062
    %1097 = vmatprep.subr.mxu0 0.0
    %1098 = vmatpush1.msra.mxu0 0.0
    %1099 = vmatprep.subr.mxu0 0.0
    %1100 = vmatpush1.msra.mxu0 0.0
    %1101 = vmatprep.subr.mxu0 0.0
    %1102 = vmatpush1.msra.mxu0 0.0
    %1103 = vmatprep.subr.mxu0 0.0
    %1104 = vmatpush1.msra.mxu0 0.0
    %1105 = vmatprep.subr.mxu0 0.0
    %1106 = vmatpush1.msra.mxu0 0.0
    %1107 = vmatprep.subr.mxu0 0.0
    %1108 = vmatpush1.msra.mxu0 0.0
    %1109 = vmatprep.subr.mxu0 0.0
    %1110 = vmatpush1.msra.mxu0 0.0
    %1111 = vmatprep.subr.mxu0 0.0
    %1112 = vmatpush1.msra.mxu0 0.0
    %1113 = vmatprep.subr.mxu0 0.0
    %1114 = vmatpush1.msra.mxu0 0.0
    %1115 = vmatprep.subr.mxu0 0.0
    %1116 = vmatpush1.msra.mxu0 0.0
    %1117 = vmatprep.subr.mxu0 0.0
    %1118 = vmatpush1.msra.mxu0 0.0
    %1119 = vmatprep.subr.mxu0 0.0
    %1120 = vmatpush1.msra.mxu0 0.0
    %1121 = vmatprep.subr.mxu0 0.0
    %1122 = vmatpush1.msra.mxu0 0.0
    %1123 = vmatprep.subr.mxu0 0.0
    %1124 = vmatpush1.msra.mxu0 0.0
    %1125 = vmatprep.subr.mxu0 0.0
    %1126 = vmatpush1.msra.mxu0 0.0
    %1127 = vmatprep.subr.mxu0 0.0
    %1128 = vmatpush1.msra.mxu0 0.0
    %1129 = vmatprep.mubr.f32.mxu0 0.0
    %1130 = vmatmul.mubr.f32.gmra.mrb[0].mxu0 %v1008
    %v1131 = vpop.f32.mrb[0].mxu0
    %v1132 = vadd.f32 0.0, %v1131
    %v1133 = vpop.f32.mrb[0].mxu0
    %v1134 = vadd.f32 0.0, %v1133
    %1135 = vdwg.mxu0
    %1136 = vmatprep.subr.mxu0 0.0
    %1137 = vmatpush1.msra.mxu0 %v1019
    %1138 = vmatprep.subr.mxu0 0.0
    %1139 = vmatpush1.msra.mxu0 %v1022
    %1140 = vmatprep.subr.mxu0 0.0
    %1141 = vmatpush1.msra.mxu0 %v1025
    %1142 = vmatprep.subr.mxu0 0.0
    %1143 = vmatpush1.msra.mxu0 %v1028
    %1144 = vmatprep.subr.mxu0 0.0
    %1145 = vmatpush1.msra.mxu0 %v1031
    %1146 = vmatprep.subr.mxu0 0.0
    %1147 = vmatpush1.msra.mxu0 %v1034
    %1148 = vmatprep.subr.mxu0 0.0
    %1149 = vmatpush1.msra.mxu0 %v1037
    %1150 = vmatprep.subr.mxu0 0.0
    %1151 = vmatpush1.msra.mxu0 %v1040
    %1152 = vmatprep.subr.mxu0 0.0
    %1153 = vmatpush1.msra.mxu0 %v1043
    %1154 = vmatprep.subr.mxu0 0.0
    %1155 = vmatpush1.msra.mxu0 %v1046
    %1156 = vmatprep.subr.mxu0 0.0
    %1157 = vmatpush1.msra.mxu0 %v1049
    %1158 = vmatprep.subr.mxu0 0.0
    %1159 = vmatpush1.msra.mxu0 %v1052
    %1160 = vmatprep.subr.mxu0 0.0
    %1161 = vmatpush1.msra.mxu0 %v1055
    %1162 = vmatprep.subr.mxu0 0.0
    %1163 = vmatpush1.msra.mxu0 %v1058
    %1164 = vmatprep.subr.mxu0 0.0
    %1165 = vmatpush1.msra.mxu0 %v1061
    %1166 = vmatprep.subr.mxu0 0.0
    %1167 = vmatpush1.msra.mxu0 %v1064
    %1168 = vmatprep.subr.mxu0 0.0
    %1169 = vmatpush1.msra.mxu0 0.0
    %1170 = vmatprep.subr.mxu0 0.0
    %1171 = vmatpush1.msra.mxu0 0.0
    %1172 = vmatprep.subr.mxu0 0.0
    %1173 = vmatpush1.msra.mxu0 0.0
    %1174 = vmatprep.subr.mxu0 0.0
    %1175 = vmatpush1.msra.mxu0 0.0
    %1176 = vmatprep.subr.mxu0 0.0
    %1177 = vmatpush1.msra.mxu0 0.0
    %1178 = vmatprep.subr.mxu0 0.0
    %1179 = vmatpush1.msra.mxu0 0.0
    %1180 = vmatprep.subr.mxu0 0.0
    %1181 = vmatpush1.msra.mxu0 0.0
    %1182 = vmatprep.subr.mxu0 0.0
    %1183 = vmatpush1.msra.mxu0 0.0
    %1184 = vmatprep.subr.mxu0 0.0
    %1185 = vmatpush1.msra.mxu0 0.0
    %1186 = vmatprep.subr.mxu0 0.0
    %1187 = vmatpush1.msra.mxu0 0.0
    %1188 = vmatprep.subr.mxu0 0.0
    %1189 = vmatpush1.msra.mxu0 0.0
    %1190 = vmatprep.subr.mxu0 0.0
    %1191 = vmatpush1.msra.mxu0 0.0
    %1192 = vmatprep.subr.mxu0 0.0
    %1193 = vmatpush1.msra.mxu0 0.0
    %1194 = vmatprep.subr.mxu0 0.0
    %1195 = vmatpush1.msra.mxu0 0.0
    %1196 = vmatprep.subr.mxu0 0.0
    %1197 = vmatpush1.msra.mxu0 0.0
    %1198 = vmatprep.subr.mxu0 0.0
    %1199 = vmatpush1.msra.mxu0 0.0
    %1200 = vmatprep.mubr.f32.mxu0 0.0
    %1201 = vmatmul.mubr.f32.gmra.mrb[0].mxu0 %v1008
    %v1202 = vpop.f32.mrb[0].mxu0
    %v1203 = vadd.f32 0.0, %v1202
    %v1204 = vpop.f32.mrb[0].mxu0
    %1205 = vdwg.mxu0
    %v1206 = vadd.f32 %v1014, %v1132
    %v1207 = vmul.f32 %v1206, 0.5
    %v1208 = vtanh.pop %v1207
    %v1209 = vmul.f32 %v1208, 0.5
    %v1210 = vadd.f32 %v1209, 0.5
    %v1211 = vadd.f32 %v1015, %v1134
    %v1212 = vmul.f32 %v1211, 0.5
    %v1213 = vtanh.pop %v1212
    %v1214 = vmul.f32 %v1213, 0.5
    %v1215 = vadd.f32 %v1214, 0.5
    %v1216 = vadd.f32 %v1203, %v368
    %v1217 = vmul.f32 %v1210, %v1216
    %v1218 = vadd.f32 %v1016, %v1217
    %v1219 = vtanh.pop %v1218
    %v1220 = vsub.f32 %v1008, %v1219
    %v1221 = vmul.f32 %v1215, %v1220
    %v1222 = vadd.f32 %v1219, %v1221
    %s1223 = scalar_lea.vmem [#allocation2], 24
    %1224 = vst [vmem:[%s1223] sm:$0xff] %v1222
    %s1225 = smul.u32 4, 3
    %s1226 = smul.addr %s1225, 8
    %s1227 = scalar_lea.vmem [#allocation3], %s1226
    %v1228 = vld [vmem:[%s1227] sm:$0xff]
    %v1229 = vld [vmem:[%s1227 + $0x8] sm:$0xff]
    %v1230 = vld [vmem:[%s1227 + $0x10] sm:$0xff]
    %v1231 = vld [vmem:[#allocation6] sm:$0xff]
    %v1232 = vld [vmem:[#allocation6 + $0x8] sm:$0xff]
    %v1233 = vld [vmem:[#allocation6 + $0x10] sm:$0xff]
    %v1234 = vld [vmem:[#allocation6 + $0x18] sm:$0xff]
    %v1235 = vld [vmem:[#allocation6 + $0x20] sm:$0xff]
    %v1236 = vld [vmem:[#allocation6 + $0x28] sm:$0xff]
    %v1237 = vld [vmem:[#allocation6 + $0x30] sm:$0xff]
    %v1238 = vld [vmem:[#allocation6 + $0x38] sm:$0xff]
    %v1239 = vld [vmem:[#allocation6 + $0x40] sm:$0xff]
    %v1240 = vld [vmem:[#allocation6 + $0x48] sm:$0xff]
    %v1241 = vld [vmem:[#allocation6 + $0x50] sm:$0xff]
    %v1242 = vld [vmem:[#allocation6 + $0x58] sm:$0xff]
    %v1243 = vld [vmem:[#allocation6 + $0x60] sm:$0xff]
    %v1244 = vld [vmem:[#allocation6 + $0x68] sm:$0xff]
    %v1245 = vld [vmem:[#allocation6 + $0x70] sm:$0xff]
    %v1246 = vld [vmem:[#allocation6 + $0x78] sm:$0xff]
    %v1247 = vld [vmem:[#allocation6 + $0x80] sm:$0xff]
    %v1248 = vld [vmem:[#allocation6 + $0x88] sm:$0xff]
    %v1249 = vld [vmem:[#allocation6 + $0x90] sm:$0xff]
    %v1250 = vld [vmem:[#allocation6 + $0x98] sm:$0xff]
    %v1251 = vld [vmem:[#allocation6 + $0xa0] sm:$0xff]
    %v1252 = vld [vmem:[#allocation6 + $0xa8] sm:$0xff]
    %v1253 = vld [vmem:[#allocation6 + $0xb0] sm:$0xff]
    %v1254 = vld [vmem:[#allocation6 + $0xb8] sm:$0xff]
    %v1255 = vld [vmem:[#allocation6 + $0xc0] sm:$0xff]
    %v1256 = vld [vmem:[#allocation6 + $0xc8] sm:$0xff]
    %v1257 = vld [vmem:[#allocation6 + $0xd0] sm:$0xff]
    %v1258 = vld [vmem:[#allocation6 + $0xd8] sm:$0xff]
    %v1259 = vld [vmem:[#allocation6 + $0xe0] sm:$0xff]
    %v1260 = vld [vmem:[#allocation6 + $0xe8] sm:$0xff]
    %v1261 = vld [vmem:[#allocation6 + $0xf0] sm:$0xff]
    %v1262 = vld [vmem:[#allocation6 + $0xf8] sm:$0xff]
    %v1263 = vld [vmem:[#allocation6 + $0x100] sm:$0xff]
    %v1264 = vld [vmem:[#allocation6 + $0x108] sm:$0xff]
    %v1265 = vld [vmem:[#allocation6 + $0x110] sm:$0xff]
    %v1266 = vld [vmem:[#allocation6 + $0x118] sm:$0xff]
    %v1267 = vld [vmem:[#allocation6 + $0x120] sm:$0xff]
    %v1268 = vld [vmem:[#allocation6 + $0x128] sm:$0xff]
    %v1269 = vld [vmem:[#allocation6 + $0x130] sm:$0xff]
    %v1270 = vld [vmem:[#allocation6 + $0x138] sm:$0xff]
    %v1271 = vld [vmem:[#allocation6 + $0x140] sm:$0xff]
    %v1272 = vld [vmem:[#allocation6 + $0x148] sm:$0xff]
    %v1273 = vld [vmem:[#allocation6 + $0x150] sm:$0xff]
    %v1274 = vld [vmem:[#allocation6 + $0x158] sm:$0xff]
    %v1275 = vld [vmem:[#allocation6 + $0x160] sm:$0xff]
    %v1276 = vld [vmem:[#allocation6 + $0x168] sm:$0xff]
    %v1277 = vld [vmem:[#allocation6 + $0x170] sm:$0xff]
    %v1278 = vld [vmem:[#allocation6 + $0x178] sm:$0xff]
    %1279 = vmatprep.subr.mxu0 %v1232
    %1280 = vmatpush1.msra.mxu0 %v1231
    %1281 = vmatprep.subr.mxu0 %v1235
    %1282 = vmatpush1.msra.mxu0 %v1234
    %1283 = vmatprep.subr.mxu0 %v1238
    %1284 = vmatpush1.msra.mxu0 %v1237
    %1285 = vmatprep.subr.mxu0 %v1241
    %1286 = vmatpush1.msra.mxu0 %v1240
    %1287 = vmatprep.subr.mxu0 %v1244
    %1288 = vmatpush1.msra.mxu0 %v1243
    %1289 = vmatprep.subr.mxu0 %v1247
    %1290 = vmatpush1.msra.mxu0 %v1246
    %1291 = vmatprep.subr.mxu0 %v1250
    %1292 = vmatpush1.msra.mxu0 %v1249
    %1293 = vmatprep.subr.mxu0 %v1253
    %1294 = vmatpush1.msra.mxu0 %v1252
    %1295 = vmatprep.subr.mxu0 %v1256
    %1296 = vmatpush1.msra.mxu0 %v1255
    %1297 = vmatprep.subr.mxu0 %v1259
    %1298 = vmatpush1.msra.mxu0 %v1258
    %1299 = vmatprep.subr.mxu0 %v1262
    %1300 = vmatpush1.msra.mxu0 %v1261
    %1301 = vmatprep.subr.mxu0 %v1265
    %1302 = vmatpush1.msra.mxu0 %v1264
    %1303 = vmatprep.subr.mxu0 %v1268
    %1304 = vmatpush1.msra.mxu0 %v1267
    %1305 = vmatprep.subr.mxu0 %v1271
    %1306 = vmatpush1.msra.mxu0 %v1270
    %1307 = vmatprep.subr.mxu0 %v1274
    %1308 = vmatpush1.msra.mxu0 %v1273
    %1309 = vmatprep.subr.mxu0 %v1277
    %1310 = vmatpush1.msra.mxu0 %v1276
    %1311 = vmatprep.subr.mxu0 0.0
    %1312 = vmatpush1.msra.mxu0 0.0
    %1313 = vmatprep.subr.mxu0 0.0
    %1314 = vmatpush1.msra.mxu0 0.0
    %1315 = vmatprep.subr.mxu0 0.0
    %1316 = vmatpush1.msra.mxu0 0.0
    %1317 = vmatprep.subr.mxu0 0.0
    %1318 = vmatpush1.msra.mxu0 0.0
    %1319 = vmatprep.subr.mxu0 0.0
    %1320 = vmatpush1.msra.mxu0 0.0
    %1321 = vmatprep.subr.mxu0 0.0
    %1322 = vmatpush1.msra.mxu0 0.0
    %1323 = vmatprep.subr.mxu0 0.0
    %1324 = vmatpush1.msra.mxu0 0.0
    %1325 = vmatprep.subr.mxu0 0.0
    %1326 = vmatpush1.msra.mxu0 0.0
    %1327 = vmatprep.subr.mxu0 0.0
    %1328 = vmatpush1.msra.mxu0 0.0
    %1329 = vmatprep.subr.mxu0 0.0
    %1330 = vmatpush1.msra.mxu0 0.0
    %1331 = vmatprep.subr.mxu0 0.0
    %1332 = vmatpush1.msra.mxu0 0.0
    %1333 = vmatprep.subr.mxu0 0.0
    %1334 = vmatpush1.msra.mxu0 0.0
    %1335 = vmatprep.subr.mxu0 0.0
    %1336 = vmatpush1.msra.mxu0 0.0
    %1337 = vmatprep.subr.mxu0 0.0
    %1338 = vmatpush1.msra.mxu0 0.0
    %1339 = vmatprep.subr.mxu0 0.0
    %1340 = vmatpush1.msra.mxu0 0.0
    %1341 = vmatprep.subr.mxu0 0.0
    %1342 = vmatpush1.msra.mxu0 0.0
    %1343 = vmatprep.mubr.f32.mxu0 0.0
    %1344 = vmatmul.mubr.f32.gmra.mrb[0].mxu0 %v1222
    %v1345 = vpop.f32.mrb[0].mxu0
    %v1346 = vadd.f32 0.0, %v1345
    %v1347 = vpop.f32.mrb[0].mxu0
    %v1348 = vadd.f32 0.0, %v1347
    %1349 = vdwg.mxu0
    %1350 = vmatprep.subr.mxu0 0.0
    %1351 = vmatpush1.msra.mxu0 %v1233
    %1352 = vmatprep.subr.mxu0 0.0
    %1353 = vmatpush1.msra.mxu0 %v1236
    %1354 = vmatprep.subr.mxu0 0.0
    %1355 = vmatpush1.msra.mxu0 %v1239
    %1356 = vmatprep.subr.mxu0 0.0
    %1357 = vmatpush1.msra.mxu0 %v1242
    %1358 = vmatprep.subr.mxu0 0.0
    %1359 = vmatpush1.msra.mxu0 %v1245
    %1360 = vmatprep.subr.mxu0 0.0
    %1361 = vmatpush1.msra.mxu0 %v1248
    %1362 = vmatprep.subr.mxu0 0.0
    %1363 = vmatpush1.msra.mxu0 %v1251
    %1364 = vmatprep.subr.mxu0 0.0
    %1365 = vmatpush1.msra.mxu0 %v1254
    %1366 = vmatprep.subr.mxu0 0.0
    %1367 = vmatpush1.msra.mxu0 %v1257
    %1368 = vmatprep.subr.mxu0 0.0
    %1369 = vmatpush1.msra.mxu0 %v1260
    %1370 = vmatprep.subr.mxu0 0.0
    %1371 = vmatpush1.msra.mxu0 %v1263
    %1372 = vmatprep.subr.mxu0 0.0
    %1373 = vmatpush1.msra.mxu0 %v1266
    %1374 = vmatprep.subr.mxu0 0.0
    %1375 = vmatpush1.msra.mxu0 %v1269
    %1376 = vmatprep.subr.mxu0 0.0
    %1377 = vmatpush1.msra.mxu0 %v1272
    %1378 = vmatprep.subr.mxu0 0.0
    %1379 = vmatpush1.msra.mxu0 %v1275
    %1380 = vmatprep.subr.mxu0 0.0
    %1381 = vmatpush1.msra.mxu0 %v1278
    %1382 = vmatprep.subr.mxu0 0.0
    %1383 = vmatpush1.msra.mxu0 0.0
    %1384 = vmatprep.subr.mxu0 0.0
    %1385 = vmatpush1.msra.mxu0 0.0
    %1386 = vmatprep.subr.mxu0 0.0
    %1387 = vmatpush1.msra.mxu0 0.0
    %1388 = vmatprep.subr.mxu0 0.0
    %1389 = vmatpush1.msra.mxu0 0.0
    %1390 = vmatprep.subr.mxu0 0.0
    %1391 = vmatpush1.msra.mxu0 0.0
    %1392 = vmatprep.subr.mxu0 0.0
    %1393 = vmatpush1.msra.mxu0 0.0
    %1394 = vmatprep.subr.mxu0 0.0
    %1395 = vmatpush1.msra.mxu0 0.0
    %1396 = vmatprep.subr.mxu0 0.0
    %1397 = vmatpush1.msra.mxu0 0.0
    %1398 = vmatprep.subr.mxu0 0.0
    %1399 = vmatpush1.msra.mxu0 0.0
    %1400 = vmatprep.subr.mxu0 0.0
    %1401 = vmatpush1.msra.mxu0 0.0
    %1402 = vmatprep.subr.mxu0 0.0
    %1403 = vmatpush1.msra.mxu0 0.0
    %1404 = vmatprep.subr.mxu0 0.0
    %1405 = vmatpush1.msra.mxu0 0.0
    %1406 = vmatprep.subr.mxu0 0.0
    %1407 = vmatpush1.msra.mxu0 0.0
    %1408 = vmatprep.subr.mxu0 0.0
    %1409 = vmatpush1.msra.mxu0 0.0
    %1410 = vmatprep.subr.mxu0 0.0
    %1411 = vmatpush1.msra.mxu0 0.0
    %1412 = vmatprep.subr.mxu0 0.0
    %1413 = vmatpush1.msra.mxu0 0.0
    %1414 = vmatprep.mubr.f32.mxu0 0.0
    %1415 = vmatmul.mubr.f32.gmra.mrb[0].mxu0 %v1222
    %v1416 = vpop.f32.mrb[0].mxu0
    %v1417 = vadd.f32 0.0, %v1416
    %v1418 = vpop.f32.mrb[0].mxu0
    %1419 = vdwg.mxu0
    %v1420 = vadd.f32 %v1228, %v1346
    %v1421 = vmul.f32 %v1420, 0.5
    %v1422 = vtanh.pop %v1421
    %v1423 = vmul.f32 %v1422, 0.5
    %v1424 = vadd.f32 %v1423, 0.5
    %v1425 = vadd.f32 %v1229, %v1348
    %v1426 = vmul.f32 %v1425, 0.5
    %v1427 = vtanh.pop %v1426
    %v1428 = vmul.f32 %v1427, 0.5
    %v1429 = vadd.f32 %v1428, 0.5
    %v1430 = vadd.f32 %v1417, %v368
    %v1431 = vmul.f32 %v1424, %v1430
    %v1432 = vadd.f32 %v1230, %v1431
    %v1433 = vtanh.pop %v1432
    %v1434 = vsub.f32 %v1222, %v1433
    %v1435 = vmul.f32 %v1429, %v1434
    %v1436 = vadd.f32 %v1433, %v1435
    %s1437 = scalar_lea.vmem [#allocation2], 32
    %1438 = vst [vmem:[%s1437] sm:$0xff] %v1436
    %s1439 = smul.u32 5, 3
    %s1440 = smul.addr %s1439, 8
    %s1441 = scalar_lea.vmem [#allocation3], %s1440
    %v1442 = vld [vmem:[%s1441] sm:$0xff]
    %v1443 = vld [vmem:[%s1441 + $0x8] sm:$0xff]
    %v1444 = vld [vmem:[%s1441 + $0x10] sm:$0xff]
    %v1445 = vld [vmem:[#allocation6] sm:$0xff]
    %v1446 = vld [vmem:[#allocation6 + $0x8] sm:$0xff]
    %v1447 = vld [vmem:[#allocation6 + $0x10] sm:$0xff]
    %v1448 = vld [vmem:[#allocation6 + $0x18] sm:$0xff]
    %v1449 = vld [vmem:[#allocation6 + $0x20] sm:$0xff]
    %v1450 = vld [vmem:[#allocation6 + $0x28] sm:$0xff]
    %v1451 = vld [vmem:[#allocation6 + $0x30] sm:$0xff]
    %v1452 = vld [vmem:[#allocation6 + $0x38] sm:$0xff]
    %v1453 = vld [vmem:[#allocation6 + $0x40] sm:$0xff]
    %v1454 = vld [vmem:[#allocation6 + $0x48] sm:$0xff]
    %v1455 = vld [vmem:[#allocation6 + $0x50] sm:$0xff]
    %v1456 = vld [vmem:[#allocation6 + $0x58] sm:$0xff]
    %v1457 = vld [vmem:[#allocation6 + $0x60] sm:$0xff]
    %v1458 = vld [vmem:[#allocation6 + $0x68] sm:$0xff]
    %v1459 = vld [vmem:[#allocation6 + $0x70] sm:$0xff]
    %v1460 = vld [vmem:[#allocation6 + $0x78] sm:$0xff]
    %v1461 = vld [vmem:[#allocation6 + $0x80] sm:$0xff]
    %v1462 = vld [vmem:[#allocation6 + $0x88] sm:$0xff]
    %v1463 = vld [vmem:[#allocation6 + $0x90] sm:$0xff]
    %v1464 = vld [vmem:[#allocation6 + $0x98] sm:$0xff]
    %v1465 = vld [vmem:[#allocation6 + $0xa0] sm:$0xff]
    %v1466 = vld [vmem:[#allocation6 + $0xa8] sm:$0xff]
    %v1467 = vld [vmem:[#allocation6 + $0xb0] sm:$0xff]
    %v1468 = vld [vmem:[#allocation6 + $0xb8] sm:$0xff]
    %v1469 = vld [vmem:[#allocation6 + $0xc0] sm:$0xff]
    %v1470 = vld [vmem:[#allocation6 + $0xc8] sm:$0xff]
    %v1471 = vld [vmem:[#allocation6 + $0xd0] sm:$0xff]
    %v1472 = vld [vmem:[#allocation6 + $0xd8] sm:$0xff]
    %v1473 = vld [vmem:[#allocation6 + $0xe0] sm:$0xff]
    %v1474 = vld [vmem:[#allocation6 + $0xe8] sm:$0xff]
    %v1475 = vld [vmem:[#allocation6 + $0xf0] sm:$0xff]
    %v1476 = vld [vmem:[#allocation6 + $0xf8] sm:$0xff]
    %v1477 = vld [vmem:[#allocation6 + $0x100] sm:$0xff]
    %v1478 = vld [vmem:[#allocation6 + $0x108] sm:$0xff]
    %v1479 = vld [vmem:[#allocation6 + $0x110] sm:$0xff]
    %v1480 = vld [vmem:[#allocation6 + $0x118] sm:$0xff]
    %v1481 = vld [vmem:[#allocation6 + $0x120] sm:$0xff]
    %v1482 = vld [vmem:[#allocation6 + $0x128] sm:$0xff]
    %v1483 = vld [vmem:[#allocation6 + $0x130] sm:$0xff]
    %v1484 = vld [vmem:[#allocation6 + $0x138] sm:$0xff]
    %v1485 = vld [vmem:[#allocation6 + $0x140] sm:$0xff]
    %v1486 = vld [vmem:[#allocation6 + $0x148] sm:$0xff]
    %v1487 = vld [vmem:[#allocation6 + $0x150] sm:$0xff]
    %v1488 = vld [vmem:[#allocation6 + $0x158] sm:$0xff]
    %v1489 = vld [vmem:[#allocation6 + $0x160] sm:$0xff]
    %v1490 = vld [vmem:[#allocation6 + $0x168] sm:$0xff]
    %v1491 = vld [vmem:[#allocation6 + $0x170] sm:$0xff]
    %v1492 = vld [vmem:[#allocation6 + $0x178] sm:$0xff]
    %1493 = vmatprep.subr.mxu0 %v1446
    %1494 = vmatpush1.msra.mxu0 %v1445
    %1495 = vmatprep.subr.mxu0 %v1449
    %1496 = vmatpush1.msra.mxu0 %v1448
    %1497 = vmatprep.subr.mxu0 %v1452
    %1498 = vmatpush1.msra.mxu0 %v1451
    %1499 = vmatprep.subr.mxu0 %v1455
    %1500 = vmatpush1.msra.mxu0 %v1454
    %1501 = vmatprep.subr.mxu0 %v1458
    %1502 = vmatpush1.msra.mxu0 %v1457
    %1503 = vmatprep.subr.mxu0 %v1461
    %1504 = vmatpush1.msra.mxu0 %v1460
    %1505 = vmatprep.subr.mxu0 %v1464
    %1506 = vmatpush1.msra.mxu0 %v1463
    %1507 = vmatprep.subr.mxu0 %v1467
    %1508 = vmatpush1.msra.mxu0 %v1466
    %1509 = vmatprep.subr.mxu0 %v1470
    %1510 = vmatpush1.msra.mxu0 %v1469
    %1511 = vmatprep.subr.mxu0 %v1473
    %1512 = vmatpush1.msra.mxu0 %v1472
    %1513 = vmatprep.subr.mxu0 %v1476
    %1514 = vmatpush1.msra.mxu0 %v1475
    %1515 = vmatprep.subr.mxu0 %v1479
    %1516 = vmatpush1.msra.mxu0 %v1478
    %1517 = vmatprep.subr.mxu0 %v1482
    %1518 = vmatpush1.msra.mxu0 %v1481
    %1519 = vmatprep.subr.mxu0 %v1485
    %1520 = vmatpush1.msra.mxu0 %v1484
    %1521 = vmatprep.subr.mxu0 %v1488
    %1522 = vmatpush1.msra.mxu0 %v1487
    %1523 = vmatprep.subr.mxu0 %v1491
    %1524 = vmatpush1.msra.mxu0 %v1490
    %1525 = vmatprep.subr.mxu0 0.0
    %1526 = vmatpush1.msra.mxu0 0.0
    %1527 = vmatprep.subr.mxu0 0.0
    %1528 = vmatpush1.msra.mxu0 0.0
    %1529 = vmatprep.subr.mxu0 0.0
    %1530 = vmatpush1.msra.mxu0 0.0
    %1531 = vmatprep.subr.mxu0 0.0
    %1532 = vmatpush1.msra.mxu0 0.0
    %1533 = vmatprep.subr.mxu0 0.0
    %1534 = vmatpush1.msra.mxu0 0.0
    %1535 = vmatprep.subr.mxu0 0.0
    %1536 = vmatpush1.msra.mxu0 0.0
    %1537 = vmatprep.subr.mxu0 0.0
    %1538 = vmatpush1.msra.mxu0 0.0
    %1539 = vmatprep.subr.mxu0 0.0
    %1540 = vmatpush1.msra.mxu0 0.0
    %1541 = vmatprep.subr.mxu0 0.0
    %1542 = vmatpush1.msra.mxu0 0.0
    %1543 = vmatprep.subr.mxu0 0.0
    %1544 = vmatpush1.msra.mxu0 0.0
    %1545 = vmatprep.subr.mxu0 0.0
    %1546 = vmatpush1.msra.mxu0 0.0
    %1547 = vmatprep.subr.mxu0 0.0
    %1548 = vmatpush1.msra.mxu0 0.0
    %1549 = vmatprep.subr.mxu0 0.0
    %1550 = vmatpush1.msra.mxu0 0.0
    %1551 = vmatprep.subr.mxu0 0.0
    %1552 = vmatpush1.msra.mxu0 0.0
    %1553 = vmatprep.subr.mxu0 0.0
    %1554 = vmatpush1.msra.mxu0 0.0
    %1555 = vmatprep.subr.mxu0 0.0
    %1556 = vmatpush1.msra.mxu0 0.0
    %1557 = vmatprep.mubr.f32.mxu0 0.0
    %1558 = vmatmul.mubr.f32.gmra.mrb[0].mxu0 %v1436
    %v1559 = vpop.f32.mrb[0].mxu0
    %v1560 = vadd.f32 0.0, %v1559
    %v1561 = vpop.f32.mrb[0].mxu0
    %v1562 = vadd.f32 0.0, %v1561
    %1563 = vdwg.mxu0
    %1564 = vmatprep.subr.mxu0 0.0
    %1565 = vmatpush1.msra.mxu0 %v1447
    %1566 = vmatprep.subr.mxu0 0.0
    %1567 = vmatpush1.msra.mxu0 %v1450
    %1568 = vmatprep.subr.mxu0 0.0
    %1569 = vmatpush1.msra.mxu0 %v1453
    %1570 = vmatprep.subr.mxu0 0.0
    %1571 = vmatpush1.msra.mxu0 %v1456
    %1572 = vmatprep.subr.mxu0 0.0
    %1573 = vmatpush1.msra.mxu0 %v1459
    %1574 = vmatprep.subr.mxu0 0.0
    %1575 = vmatpush1.msra.mxu0 %v1462
    %1576 = vmatprep.subr.mxu0 0.0
    %1577 = vmatpush1.msra.mxu0 %v1465
    %1578 = vmatprep.subr.mxu0 0.0
    %1579 = vmatpush1.msra.mxu0 %v1468
    %1580 = vmatprep.subr.mxu0 0.0
    %1581 = vmatpush1.msra.mxu0 %v1471
    %1582 = vmatprep.subr.mxu0 0.0
    %1583 = vmatpush1.msra.mxu0 %v1474
    %1584 = vmatprep.subr.mxu0 0.0
    %1585 = vmatpush1.msra.mxu0 %v1477
    %1586 = vmatprep.subr.mxu0 0.0
    %1587 = vmatpush1.msra.mxu0 %v1480
    %1588 = vmatprep.subr.mxu0 0.0
    %1589 = vmatpush1.msra.mxu0 %v1483
    %1590 = vmatprep.subr.mxu0 0.0
    %1591 = vmatpush1.msra.mxu0 %v1486
    %1592 = vmatprep.subr.mxu0 0.0
    %1593 = vmatpush1.msra.mxu0 %v1489
    %1594 = vmatprep.subr.mxu0 0.0
    %1595 = vmatpush1.msra.mxu0 %v1492
    %1596 = vmatprep.subr.mxu0 0.0
    %1597 = vmatpush1.msra.mxu0 0.0
    %1598 = vmatprep.subr.mxu0 0.0
    %1599 = vmatpush1.msra.mxu0 0.0
    %1600 = vmatprep.subr.mxu0 0.0
    %1601 = vmatpush1.msra.mxu0 0.0
    %1602 = vmatprep.subr.mxu0 0.0
    %1603 = vmatpush1.msra.mxu0 0.0
    %1604 = vmatprep.subr.mxu0 0.0
    %1605 = vmatpush1.msra.mxu0 0.0
    %1606 = vmatprep.subr.mxu0 0.0
    %1607 = vmatpush1.msra.mxu0 0.0
    %1608 = vmatprep.subr.mxu0 0.0
    %1609 = vmatpush1.msra.mxu0 0.0
    %1610 = vmatprep.subr.mxu0 0.0
    %1611 = vmatpush1.msra.mxu0 0.0
    %1612 = vmatprep.subr.mxu0 0.0
    %1613 = vmatpush1.msra.mxu0 0.0
    %1614 = vmatprep.subr.mxu0 0.0
    %1615 = vmatpush1.msra.mxu0 0.0
    %1616 = vmatprep.subr.mxu0 0.0
    %1617 = vmatpush1.msra.mxu0 0.0
    %1618 = vmatprep.subr.mxu0 0.0
    %1619 = vmatpush1.msra.mxu0 0.0
    %1620 = vmatprep.subr.mxu0 0.0
    %1621 = vmatpush1.msra.mxu0 0.0
    %1622 = vmatprep.subr.mxu0 0.0
    %1623 = vmatpush1.msra.mxu0 0.0
    %1624 = vmatprep.subr.mxu0 0.0
    %1625 = vmatpush1.msra.mxu0 0.0
    %1626 = vmatprep.subr.mxu0 0.0
    %1627 = vmatpush1.msra.mxu0 0.0
    %1628 = vmatprep.mubr.f32.mxu0 0.0
    %1629 = vmatmul.mubr.f32.gmra.mrb[0].mxu0 %v1436
    %v1630 = vpop.f32.mrb[0].mxu0
    %v1631 = vadd.f32 0.0, %v1630
    %v1632 = vpop.f32.mrb[0].mxu0
    %1633 = vdwg.mxu0
    %v1634 = vadd.f32 %v1442, %v1560
    %v1635 = vmul.f32 %v1634, 0.5
    %v1636 = vtanh.pop %v1635
    %v1637 = vmul.f32 %v1636, 0.5
    %v1638 = vadd.f32 %v1637, 0.5
    %v1639 = vadd.f32 %v1443, %v1562
    %v1640 = vmul.f32 %v1639, 0.5
    %v1641 = vtanh.pop %v1640
    %v1642 = vmul.f32 %v1641, 0.5
    %v1643 = vadd.f32 %v1642, 0.5
    %v1644 = vadd.f32 %v1631, %v368
    %v1645 = vmul.f32 %v1638, %v1644
    %v1646 = vadd.f32 %v1444, %v1645
    %v1647 = vtanh.pop %v1646
    %v1648 = vsub.f32 %v1436, %v1647
    %v1649 = vmul.f32 %v1643, %v1648
    %v1650 = vadd.f32 %v1647, %v1649
    %s1651 = scalar_lea.vmem [#allocation2], 40
    %1652 = vst [vmem:[%s1651] sm:$0xff] %v1650
    %s1653 = smul.u32 6, 3
    %s1654 = smul.addr %s1653, 8
    %s1655 = scalar_lea.vmem [#allocation3], %s1654
    %v1656 = vld [vmem:[%s1655] sm:$0xff]
    %v1657 = vld [vmem:[%s1655 + $0x8] sm:$0xff]
    %v1658 = vld [vmem:[%s1655 + $0x10] sm:$0xff]
    %v1659 = vld [vmem:[#allocation6] sm:$0xff]
    %v1660 = vld [vmem:[#allocation6 + $0x8] sm:$0xff]
    %v1661 = vld [vmem:[#allocation6 + $0x10] sm:$0xff]
    %v1662 = vld [vmem:[#allocation6 + $0x18] sm:$0xff]
    %v1663 = vld [vmem:[#allocation6 + $0x20] sm:$0xff]
    %v1664 = vld [vmem:[#allocation6 + $0x28] sm:$0xff]
    %v1665 = vld [vmem:[#allocation6 + $0x30] sm:$0xff]
    %v1666 = vld [vmem:[#allocation6 + $0x38] sm:$0xff]
    %v1667 = vld [vmem:[#allocation6 + $0x40] sm:$0xff]
    %v1668 = vld [vmem:[#allocation6 + $0x48] sm:$0xff]
    %v1669 = vld [vmem:[#allocation6 + $0x50] sm:$0xff]
    %v1670 = vld [vmem:[#allocation6 + $0x58] sm:$0xff]
    %v1671 = vld [vmem:[#allocation6 + $0x60] sm:$0xff]
    %v1672 = vld [vmem:[#allocation6 + $0x68] sm:$0xff]
    %v1673 = vld [vmem:[#allocation6 + $0x70] sm:$0xff]
    %v1674 = vld [vmem:[#allocation6 + $0x78] sm:$0xff]
    %v1675 = vld [vmem:[#allocation6 + $0x80] sm:$0xff]
    %v1676 = vld [vmem:[#allocation6 + $0x88] sm:$0xff]
    %v1677 = vld [vmem:[#allocation6 + $0x90] sm:$0xff]
    %v1678 = vld [vmem:[#allocation6 + $0x98] sm:$0xff]
    %v1679 = vld [vmem:[#allocation6 + $0xa0] sm:$0xff]
    %v1680 = vld [vmem:[#allocation6 + $0xa8] sm:$0xff]
    %v1681 = vld [vmem:[#allocation6 + $0xb0] sm:$0xff]
    %v1682 = vld [vmem:[#allocation6 + $0xb8] sm:$0xff]
    %v1683 = vld [vmem:[#allocation6 + $0xc0] sm:$0xff]
    %v1684 = vld [vmem:[#allocation6 + $0xc8] sm:$0xff]
    %v1685 = vld [vmem:[#allocation6 + $0xd0] sm:$0xff]
    %v1686 = vld [vmem:[#allocation6 + $0xd8] sm:$0xff]
    %v1687 = vld [vmem:[#allocation6 + $0xe0] sm:$0xff]
    %v1688 = vld [vmem:[#allocation6 + $0xe8] sm:$0xff]
    %v1689 = vld [vmem:[#allocation6 + $0xf0] sm:$0xff]
    %v1690 = vld [vmem:[#allocation6 + $0xf8] sm:$0xff]
    %v1691 = vld [vmem:[#allocation6 + $0x100] sm:$0xff]
    %v1692 = vld [vmem:[#allocation6 + $0x108] sm:$0xff]
    %v1693 = vld [vmem:[#allocation6 + $0x110] sm:$0xff]
    %v1694 = vld [vmem:[#allocation6 + $0x118] sm:$0xff]
    %v1695 = vld [vmem:[#allocation6 + $0x120] sm:$0xff]
    %v1696 = vld [vmem:[#allocation6 + $0x128] sm:$0xff]
    %v1697 = vld [vmem:[#allocation6 + $0x130] sm:$0xff]
    %v1698 = vld [vmem:[#allocation6 + $0x138] sm:$0xff]
    %v1699 = vld [vmem:[#allocation6 + $0x140] sm:$0xff]
    %v1700 = vld [vmem:[#allocation6 + $0x148] sm:$0xff]
    %v1701 = vld [vmem:[#allocation6 + $0x150] sm:$0xff]
    %v1702 = vld [vmem:[#allocation6 + $0x158] sm:$0xff]
    %v1703 = vld [vmem:[#allocation6 + $0x160] sm:$0xff]
    %v1704 = vld [vmem:[#allocation6 + $0x168] sm:$0xff]
    %v1705 = vld [vmem:[#allocation6 + $0x170] sm:$0xff]
    %v1706 = vld [vmem:[#allocation6 + $0x178] sm:$0xff]
    %1707 = vmatprep.subr.mxu0 %v1660
    %1708 = vmatpush1.msra.mxu0 %v1659
    %1709 = vmatprep.subr.mxu0 %v1663
    %1710 = vmatpush1.msra.mxu0 %v1662
    %1711 = vmatprep.subr.mxu0 %v1666
    %1712 = vmatpush1.msra.mxu0 %v1665
    %1713 = vmatprep.subr.mxu0 %v1669
    %1714 = vmatpush1.msra.mxu0 %v1668
    %1715 = vmatprep.subr.mxu0 %v1672
    %1716 = vmatpush1.msra.mxu0 %v1671
    %1717 = vmatprep.subr.mxu0 %v1675
    %1718 = vmatpush1.msra.mxu0 %v1674
    %1719 = vmatprep.subr.mxu0 %v1678
    %1720 = vmatpush1.msra.mxu0 %v1677
    %1721 = vmatprep.subr.mxu0 %v1681
    %1722 = vmatpush1.msra.mxu0 %v1680
    %1723 = vmatprep.subr.mxu0 %v1684
    %1724 = vmatpush1.msra.mxu0 %v1683
    %1725 = vmatprep.subr.mxu0 %v1687
    %1726 = vmatpush1.msra.mxu0 %v1686
    %1727 = vmatprep.subr.mxu0 %v1690
    %1728 = vmatpush1.msra.mxu0 %v1689
    %1729 = vmatprep.subr.mxu0 %v1693
    %1730 = vmatpush1.msra.mxu0 %v1692
    %1731 = vmatprep.subr.mxu0 %v1696
    %1732 = vmatpush1.msra.mxu0 %v1695
    %1733 = vmatprep.subr.mxu0 %v1699
    %1734 = vmatpush1.msra.mxu0 %v1698
    %1735 = vmatprep.subr.mxu0 %v1702
    %1736 = vmatpush1.msra.mxu0 %v1701
    %1737 = vmatprep.subr.mxu0 %v1705
    %1738 = vmatpush1.msra.mxu0 %v1704
    %1739 = vmatprep.subr.mxu0 0.0
    %1740 = vmatpush1.msra.mxu0 0.0
    %1741 = vmatprep.subr.mxu0 0.0
    %1742 = vmatpush1.msra.mxu0 0.0
    %1743 = vmatprep.subr.mxu0 0.0
    %1744 = vmatpush1.msra.mxu0 0.0
    %1745 = vmatprep.subr.mxu0 0.0
    %1746 = vmatpush1.msra.mxu0 0.0
    %1747 = vmatprep.subr.mxu0 0.0
    %1748 = vmatpush1.msra.mxu0 0.0
    %1749 = vmatprep.subr.mxu0 0.0
    %1750 = vmatpush1.msra.mxu0 0.0
    %1751 = vmatprep.subr.mxu0 0.0
    %1752 = vmatpush1.msra.mxu0 0.0
    %1753 = vmatprep.subr.mxu0 0.0
    %1754 = vmatpush1.msra.mxu0 0.0
    %1755 = vmatprep.subr.mxu0 0.0
    %1756 = vmatpush1.msra.mxu0 0.0
    %1757 = vmatprep.subr.mxu0 0.0
    %1758 = vmatpush1.msra.mxu0 0.0
    %1759 = vmatprep.subr.mxu0 0.0
    %1760 = vmatpush1.msra.mxu0 0.0
    %1761 = vmatprep.subr.mxu0 0.0
    %1762 = vmatpush1.msra.mxu0 0.0
    %1763 = vmatprep.subr.mxu0 0.0
    %1764 = vmatpush1.msra.mxu0 0.0
    %1765 = vmatprep.subr.mxu0 0.0
    %1766 = vmatpush1.msra.mxu0 0.0
    %1767 = vmatprep.subr.mxu0 0.0
    %1768 = vmatpush1.msra.mxu0 0.0
    %1769 = vmatprep.subr.mxu0 0.0
    %1770 = vmatpush1.msra.mxu0 0.0
    %1771 = vmatprep.mubr.f32.mxu0 0.0
    %1772 = vmatmul.mubr.f32.gmra.mrb[0].mxu0 %v1650
    %v1773 = vpop.f32.mrb[0].mxu0
    %v1774 = vadd.f32 0.0, %v1773
    %v1775 = vpop.f32.mrb[0].mxu0
    %v1776 = vadd.f32 0.0, %v1775
    %1777 = vdwg.mxu0
    %1778 = vmatprep.subr.mxu0 0.0
    %1779 = vmatpush1.msra.mxu0 %v1661
    %1780 = vmatprep.subr.mxu0 0.0
    %1781 = vmatpush1.msra.mxu0 %v1664
    %1782 = vmatprep.subr.mxu0 0.0
    %1783 = vmatpush1.msra.mxu0 %v1667
    %1784 = vmatprep.subr.mxu0 0.0
    %1785 = vmatpush1.msra.mxu0 %v1670
    %1786 = vmatprep.subr.mxu0 0.0
    %1787 = vmatpush1.msra.mxu0 %v1673
    %1788 = vmatprep.subr.mxu0 0.0
    %1789 = vmatpush1.msra.mxu0 %v1676
    %1790 = vmatprep.subr.mxu0 0.0
    %1791 = vmatpush1.msra.mxu0 %v1679
    %1792 = vmatprep.subr.mxu0 0.0
    %1793 = vmatpush1.msra.mxu0 %v1682
    %1794 = vmatprep.subr.mxu0 0.0
    %1795 = vmatpush1.msra.mxu0 %v1685
    %1796 = vmatprep.subr.mxu0 0.0
    %1797 = vmatpush1.msra.mxu0 %v1688
    %1798 = vmatprep.subr.mxu0 0.0
    %1799 = vmatpush1.msra.mxu0 %v1691
    %1800 = vmatprep.subr.mxu0 0.0
    %1801 = vmatpush1.msra.mxu0 %v1694
    %1802 = vmatprep.subr.mxu0 0.0
    %1803 = vmatpush1.msra.mxu0 %v1697
    %1804 = vmatprep.subr.mxu0 0.0
    %1805 = vmatpush1.msra.mxu0 %v1700
    %1806 = vmatprep.subr.mxu0 0.0
    %1807 = vmatpush1.msra.mxu0 %v1703
    %1808 = vmatprep.subr.mxu0 0.0
    %1809 = vmatpush1.msra.mxu0 %v1706
    %1810 = vmatprep.subr.mxu0 0.0
    %1811 = vmatpush1.msra.mxu0 0.0
    %1812 = vmatprep.subr.mxu0 0.0
    %1813 = vmatpush1.msra.mxu0 0.0
    %1814 = vmatprep.subr.mxu0 0.0
    %1815 = vmatpush1.msra.mxu0 0.0
    %1816 = vmatprep.subr.mxu0 0.0
    %1817 = vmatpush1.msra.mxu0 0.0
    %1818 = vmatprep.subr.mxu0 0.0
    %1819 = vmatpush1.msra.mxu0 0.0
    %1820 = vmatprep.subr.mxu0 0.0
    %1821 = vmatpush1.msra.mxu0 0.0
    %1822 = vmatprep.subr.mxu0 0.0
    %1823 = vmatpush1.msra.mxu0 0.0
    %1824 = vmatprep.subr.mxu0 0.0
    %1825 = vmatpush1.msra.mxu0 0.0
    %1826 = vmatprep.subr.mxu0 0.0
    %1827 = vmatpush1.msra.mxu0 0.0
    %1828 = vmatprep.subr.mxu0 0.0
    %1829 = vmatpush1.msra.mxu0 0.0
    %1830 = vmatprep.subr.mxu0 0.0
    %1831 = vmatpush1.msra.mxu0 0.0
    %1832 = vmatprep.subr.mxu0 0.0
    %1833 = vmatpush1.msra.mxu0 0.0
    %1834 = vmatprep.subr.mxu0 0.0
    %1835 = vmatpush1.msra.mxu0 0.0
    %1836 = vmatprep.subr.mxu0 0.0
    %1837 = vmatpush1.msra.mxu0 0.0
    %1838 = vmatprep.subr.mxu0 0.0
    %1839 = vmatpush1.msra.mxu0 0.0
    %1840 = vmatprep.subr.mxu0 0.0
    %1841 = vmatpush1.msra.mxu0 0.0
    %1842 = vmatprep.mubr.f32.mxu0 0.0
    %1843 = vmatmul.mubr.f32.gmra.mrb[0].mxu0 %v1650
    %v1844 = vpop.f32.mrb[0].mxu0
    %v1845 = vadd.f32 0.0, %v1844
    %v1846 = vpop.f32.mrb[0].mxu0
    %1847 = vdwg.mxu0
    %v1848 = vadd.f32 %v1656, %v1774
    %v1849 = vmul.f32 %v1848, 0.5
    %v1850 = vtanh.pop %v1849
    %v1851 = vmul.f32 %v1850, 0.5
    %v1852 = vadd.f32 %v1851, 0.5
    %v1853 = vadd.f32 %v1657, %v1776
    %v1854 = vmul.f32 %v1853, 0.5
    %v1855 = vtanh.pop %v1854
    %v1856 = vmul.f32 %v1855, 0.5
    %v1857 = vadd.f32 %v1856, 0.5
    %v1858 = vadd.f32 %v1845, %v368
    %v1859 = vmul.f32 %v1852, %v1858
    %v1860 = vadd.f32 %v1658, %v1859
    %v1861 = vtanh.pop %v1860
    %v1862 = vsub.f32 %v1650, %v1861
    %v1863 = vmul.f32 %v1857, %v1862
    %v1864 = vadd.f32 %v1861, %v1863
    %s1865 = scalar_lea.vmem [#allocation2], 48
    %1866 = vst [vmem:[%s1865] sm:$0xff] %v1864
    %s1867 = smul.u32 7, 3
    %s1868 = smul.addr %s1867, 8
    %s1869 = scalar_lea.vmem [#allocation3], %s1868
    %v1870 = vld [vmem:[%s1869] sm:$0xff]
    %v1871 = vld [vmem:[%s1869 + $0x8] sm:$0xff]
    %v1872 = vld [vmem:[%s1869 + $0x10] sm:$0xff]
    %v1873 = vld [vmem:[#allocation6] sm:$0xff]
    %v1874 = vld [vmem:[#allocation6 + $0x8] sm:$0xff]
    %v1875 = vld [vmem:[#allocation6 + $0x10] sm:$0xff]
    %v1876 = vld [vmem:[#allocation6 + $0x18] sm:$0xff]
    %v1877 = vld [vmem:[#allocation6 + $0x20] sm:$0xff]
    %v1878 = vld [vmem:[#allocation6 + $0x28] sm:$0xff]
    %v1879 = vld [vmem:[#allocation6 + $0x30] sm:$0xff]
    %v1880 = vld [vmem:[#allocation6 + $0x38] sm:$0xff]
    %v1881 = vld [vmem:[#allocation6 + $0x40] sm:$0xff]
    %v1882 = vld [vmem:[#allocation6 + $0x48] sm:$0xff]
    %v1883 = vld [vmem:[#allocation6 + $0x50] sm:$0xff]
    %v1884 = vld [vmem:[#allocation6 + $0x58] sm:$0xff]
    %v1885 = vld [vmem:[#allocation6 + $0x60] sm:$0xff]
    %v1886 = vld [vmem:[#allocation6 + $0x68] sm:$0xff]
    %v1887 = vld [vmem:[#allocation6 + $0x70] sm:$0xff]
    %v1888 = vld [vmem:[#allocation6 + $0x78] sm:$0xff]
    %v1889 = vld [vmem:[#allocation6 + $0x80] sm:$0xff]
    %v1890 = vld [vmem:[#allocation6 + $0x88] sm:$0xff]
    %v1891 = vld [vmem:[#allocation6 + $0x90] sm:$0xff]
    %v1892 = vld [vmem:[#allocation6 + $0x98] sm:$0xff]
    %v1893 = vld [vmem:[#allocation6 + $0xa0] sm:$0xff]
    %v1894 = vld [vmem:[#allocation6 + $0xa8] sm:$0xff]
    %v1895 = vld [vmem:[#allocation6 + $0xb0] sm:$0xff]
    %v1896 = vld [vmem:[#allocation6 + $0xb8] sm:$0xff]
    %v1897 = vld [vmem:[#allocation6 + $0xc0] sm:$0xff]
    %v1898 = vld [vmem:[#allocation6 + $0xc8] sm:$0xff]
    %v1899 = vld [vmem:[#allocation6 + $0xd0] sm:$0xff]
    %v1900 = vld [vmem:[#allocation6 + $0xd8] sm:$0xff]
    %v1901 = vld [vmem:[#allocation6 + $0xe0] sm:$0xff]
    %v1902 = vld [vmem:[#allocation6 + $0xe8] sm:$0xff]
    %v1903 = vld [vmem:[#allocation6 + $0xf0] sm:$0xff]
    %v1904 = vld [vmem:[#allocation6 + $0xf8] sm:$0xff]
    %v1905 = vld [vmem:[#allocation6 + $0x100] sm:$0xff]
    %v1906 = vld [vmem:[#allocation6 + $0x108] sm:$0xff]
    %v1907 = vld [vmem:[#allocation6 + $0x110] sm:$0xff]
    %v1908 = vld [vmem:[#allocation6 + $0x118] sm:$0xff]
    %v1909 = vld [vmem:[#allocation6 + $0x120] sm:$0xff]
    %v1910 = vld [vmem:[#allocation6 + $0x128] sm:$0xff]
    %v1911 = vld [vmem:[#allocation6 + $0x130] sm:$0xff]
    %v1912 = vld [vmem:[#allocation6 + $0x138] sm:$0xff]
    %v1913 = vld [vmem:[#allocation6 + $0x140] sm:$0xff]
    %v1914 = vld [vmem:[#allocation6 + $0x148] sm:$0xff]
    %v1915 = vld [vmem:[#allocation6 + $0x150] sm:$0xff]
    %v1916 = vld [vmem:[#allocation6 + $0x158] sm:$0xff]
    %v1917 = vld [vmem:[#allocation6 + $0x160] sm:$0xff]
    %v1918 = vld [vmem:[#allocation6 + $0x168] sm:$0xff]
    %v1919 = vld [vmem:[#allocation6 + $0x170] sm:$0xff]
    %v1920 = vld [vmem:[#allocation6 + $0x178] sm:$0xff]
    %1921 = vmatprep.subr.mxu0 %v1874
    %1922 = vmatpush1.msra.mxu0 %v1873
    %1923 = vmatprep.subr.mxu0 %v1877
    %1924 = vmatpush1.msra.mxu0 %v1876
    %1925 = vmatprep.subr.mxu0 %v1880
    %1926 = vmatpush1.msra.mxu0 %v1879
    %1927 = vmatprep.subr.mxu0 %v1883
    %1928 = vmatpush1.msra.mxu0 %v1882
    %1929 = vmatprep.subr.mxu0 %v1886
    %1930 = vmatpush1.msra.mxu0 %v1885
    %1931 = vmatprep.subr.mxu0 %v1889
    %1932 = vmatpush1.msra.mxu0 %v1888
    %1933 = vmatprep.subr.mxu0 %v1892
    %1934 = vmatpush1.msra.mxu0 %v1891
    %1935 = vmatprep.subr.mxu0 %v1895
    %1936 = vmatpush1.msra.mxu0 %v1894
    %1937 = vmatprep.subr.mxu0 %v1898
    %1938 = vmatpush1.msra.mxu0 %v1897
    %1939 = vmatprep.subr.mxu0 %v1901
    %1940 = vmatpush1.msra.mxu0 %v1900
    %1941 = vmatprep.subr.mxu0 %v1904
    %1942 = vmatpush1.msra.mxu0 %v1903
    %1943 = vmatprep.subr.mxu0 %v1907
    %1944 = vmatpush1.msra.mxu0 %v1906
    %1945 = vmatprep.subr.mxu0 %v1910
    %1946 = vmatpush1.msra.mxu0 %v1909
    %1947 = vmatprep.subr.mxu0 %v1913
    %1948 = vmatpush1.msra.mxu0 %v1912
    %1949 = vmatprep.subr.mxu0 %v1916
    %1950 = vmatpush1.msra.mxu0 %v1915
    %1951 = vmatprep.subr.mxu0 %v1919
    %1952 = vmatpush1.msra.mxu0 %v1918
    %1953 = vmatprep.subr.mxu0 0.0
    %1954 = vmatpush1.msra.mxu0 0.0
    %1955 = vmatprep.subr.mxu0 0.0
    %1956 = vmatpush1.msra.mxu0 0.0
    %1957 = vmatprep.subr.mxu0 0.0
    %1958 = vmatpush1.msra.mxu0 0.0
    %1959 = vmatprep.subr.mxu0 0.0
    %1960 = vmatpush1.msra.mxu0 0.0
    %1961 = vmatprep.subr.mxu0 0.0
    %1962 = vmatpush1.msra.mxu0 0.0
    %1963 = vmatprep.subr.mxu0 0.0
    %1964 = vmatpush1.msra.mxu0 0.0
    %1965 = vmatprep.subr.mxu0 0.0
    %1966 = vmatpush1.msra.mxu0 0.0
    %1967 = vmatprep.subr.mxu0 0.0
    %1968 = vmatpush1.msra.mxu0 0.0
    %1969 = vmatprep.subr.mxu0 0.0
    %1970 = vmatpush1.msra.mxu0 0.0
    %1971 = vmatprep.subr.mxu0 0.0
    %1972 = vmatpush1.msra.mxu0 0.0
    %1973 = vmatprep.subr.mxu0 0.0
    %1974 = vmatpush1.msra.mxu0 0.0
    %1975 = vmatprep.subr.mxu0 0.0
    %1976 = vmatpush1.msra.mxu0 0.0
    %1977 = vmatprep.subr.mxu0 0.0
    %1978 = vmatpush1.msra.mxu0 0.0
    %1979 = vmatprep.subr.mxu0 0.0
    %1980 = vmatpush1.msra.mxu0 0.0
    %1981 = vmatprep.subr.mxu0 0.0
    %1982 = vmatpush1.msra.mxu0 0.0
    %1983 = vmatprep.subr.mxu0 0.0
    %1984 = vmatpush1.msra.mxu0 0.0
    %1985 = vmatprep.mubr.f32.mxu0 0.0
    %1986 = vmatmul.mubr.f32.gmra.mrb[0].mxu0 %v1864
    %v1987 = vpop.f32.mrb[0].mxu0
    %v1988 = vadd.f32 0.0, %v1987
    %v1989 = vpop.f32.mrb[0].mxu0
    %v1990 = vadd.f32 0.0, %v1989
    %1991 = vdwg.mxu0
    %1992 = vmatprep.subr.mxu0 0.0
    %1993 = vmatpush1.msra.mxu0 %v1875
    %1994 = vmatprep.subr.mxu0 0.0
    %1995 = vmatpush1.msra.mxu0 %v1878
    %1996 = vmatprep.subr.mxu0 0.0
    %1997 = vmatpush1.msra.mxu0 %v1881
    %1998 = vmatprep.subr.mxu0 0.0
    %1999 = vmatpush1.msra.mxu0 %v1884
    %2000 = vmatprep.subr.mxu0 0.0
    %2001 = vmatpush1.msra.mxu0 %v1887
    %2002 = vmatprep.subr.mxu0 0.0
    %2003 = vmatpush1.msra.mxu0 %v1890
    %2004 = vmatprep.subr.mxu0 0.0
    %2005 = vmatpush1.msra.mxu0 %v1893
    %2006 = vmatprep.subr.mxu0 0.0
    %2007 = vmatpush1.msra.mxu0 %v1896
    %2008 = vmatprep.subr.mxu0 0.0
    %2009 = vmatpush1.msra.mxu0 %v1899
    %2010 = vmatprep.subr.mxu0 0.0
    %2011 = vmatpush1.msra.mxu0 %v1902
    %2012 = vmatprep.subr.mxu0 0.0
    %2013 = vmatpush1.msra.mxu0 %v1905
    %2014 = vmatprep.subr.mxu0 0.0
    %2015 = vmatpush1.msra.mxu0 %v1908
    %2016 = vmatprep.subr.mxu0 0.0
    %2017 = vmatpush1.msra.mxu0 %v1911
    %2018 = vmatprep.subr.mxu0 0.0
    %2019 = vmatpush1.msra.mxu0 %v1914
    %2020 = vmatprep.subr.mxu0 0.0
    %2021 = vmatpush1.msra.mxu0 %v1917
    %2022 = vmatprep.subr.mxu0 0.0
    %2023 = vmatpush1.msra.mxu0 %v1920
    %2024 = vmatprep.subr.mxu0 0.0
    %2025 = vmatpush1.msra.mxu0 0.0
    %2026 = vmatprep.subr.mxu0 0.0
    %2027 = vmatpush1.msra.mxu0 0.0
    %2028 = vmatprep.subr.mxu0 0.0
    %2029 = vmatpush1.msra.mxu0 0.0
    %2030 = vmatprep.subr.mxu0 0.0
    %2031 = vmatpush1.msra.mxu0 0.0
    %2032 = vmatprep.subr.mxu0 0.0
    %2033 = vmatpush1.msra.mxu0 0.0
    %2034 = vmatprep.subr.mxu0 0.0
    %2035 = vmatpush1.msra.mxu0 0.0
    %2036 = vmatprep.subr.mxu0 0.0
    %2037 = vmatpush1.msra.mxu0 0.0
    %2038 = vmatprep.subr.mxu0 0.0
    %2039 = vmatpush1.msra.mxu0 0.0
    %2040 = vmatprep.subr.mxu0 0.0
    %2041 = vmatpush1.msra.mxu0 0.0
    %2042 = vmatprep.subr.mxu0 0.0
    %2043 = vmatpush1.msra.mxu0 0.0
    %2044 = vmatprep.subr.mxu0 0.0
    %2045 = vmatpush1.msra.mxu0 0.0
    %2046 = vmatprep.subr.mxu0 0.0
    %2047 = vmatpush1.msra.mxu0 0.0
    %2048 = vmatprep.subr.mxu0 0.0
    %2049 = vmatpush1.msra.mxu0 0.0
    %2050 = vmatprep.subr.mxu0 0.0
    %2051 = vmatpush1.msra.mxu0 0.0
    %2052 = vmatprep.subr.mxu0 0.0
    %2053 = vmatpush1.msra.mxu0 0.0
    %2054 = vmatprep.subr.mxu0 0.0
    %2055 = vmatpush1.msra.mxu0 0.0
    %2056 = vmatprep.mubr.f32.mxu0 0.0
    %2057 = vmatmul.mubr.f32.gmra.mrb[0].mxu0 %v1864
    %v2058 = vpop.f32.mrb[0].mxu0
    %v2059 = vadd.f32 0.0, %v2058
    %v2060 = vpop.f32.mrb[0].mxu0
    %2061 = vdwg.mxu0
    %v2062 = vadd.f32 %v1870, %v1988
    %v2063 = vmul.f32 %v2062, 0.5
    %v2064 = vtanh.pop %v2063
    %v2065 = vmul.f32 %v2064, 0.5
    %v2066 = vadd.f32 %v2065, 0.5
    %v2067 = vadd.f32 %v1871, %v1990
    %v2068 = vmul.f32 %v2067, 0.5
    %v2069 = vtanh.pop %v2068
    %v2070 = vmul.f32 %v2069, 0.5
    %v2071 = vadd.f32 %v2070, 0.5
    %v2072 = vadd.f32 %v2059, %v368
    %v2073 = vmul.f32 %v2066, %v2072
    %v2074 = vadd.f32 %v1872, %v2073
    %v2075 = vtanh.pop %v2074
    %v2076 = vsub.f32 %v1864, %v2075
    %v2077 = vmul.f32 %v2071, %v2076
    %v2078 = vadd.f32 %v2075, %v2077
    %s2079 = scalar_lea.vmem [#allocation2], 56
    %2080 = vst [vmem:[%s2079] sm:$0xff] %v2078
    %v2081 = vld [vmem:[#allocation2] sm:$0xff]
    %v2082 = vld [vmem:[#allocation2 + $0x8] sm:$0xff]
    %v2083 = vld [vmem:[#allocation2 + $0x10] sm:$0xff]
    %v2084 = vld [vmem:[#allocation2 + $0x18] sm:$0xff]
    %v2085 = vld [vmem:[#allocation2 + $0x20] sm:$0xff]
    %v2086 = vld [vmem:[#allocation2 + $0x28] sm:$0xff]
    %v2087 = vld [vmem:[#allocation2 + $0x30] sm:$0xff]
    %v2088 = vld [vmem:[#allocation2 + $0x38] sm:$0xff]
    %s2089 = scalar_lea.vmem [#allocation4], 384
    %v2090 = vld [vmem:[%s2089] sm:$0xff]
    %v2091 = vld [vmem:[%s2089 + $0x8] sm:$0xff]
    %v2092 = vld [vmem:[%s2089 + $0x10] sm:$0xff]
    %v2093 = vld [vmem:[%s2089 + $0x18] sm:$0xff]
    %v2094 = vld [vmem:[%s2089 + $0x20] sm:$0xff]
    %v2095 = vld [vmem:[%s2089 + $0x28] sm:$0xff]
    %v2096 = vld [vmem:[%s2089 + $0x30] sm:$0xff]
    %v2097 = vld [vmem:[%s2089 + $0x38] sm:$0xff]
    %v2098 = vld [vmem:[%s2089 + $0x40] sm:$0xff]
    %v2099 = vld [vmem:[%s2089 + $0x48] sm:$0xff]
    %v2100 = vld [vmem:[%s2089 + $0x50] sm:$0xff]
    %v2101 = vld [vmem:[%s2089 + $0x58] sm:$0xff]
    %v2102 = vld [vmem:[%s2089 + $0x60] sm:$0xff]
    %v2103 = vld [vmem:[%s2089 + $0x68] sm:$0xff]
    %v2104 = vld [vmem:[%s2089 + $0x70] sm:$0xff]
    %v2105 = vld [vmem:[%s2089 + $0x78] sm:$0xff]
    %v2106 = vld [vmem:[%s2089 + $0x80] sm:$0xff]
    %v2107 = vld [vmem:[%s2089 + $0x88] sm:$0xff]
    %v2108 = vld [vmem:[%s2089 + $0x90] sm:$0xff]
    %v2109 = vld [vmem:[%s2089 + $0x98] sm:$0xff]
    %v2110 = vld [vmem:[%s2089 + $0xa0] sm:$0xff]
    %v2111 = vld [vmem:[%s2089 + $0xa8] sm:$0xff]
    %v2112 = vld [vmem:[%s2089 + $0xb0] sm:$0xff]
    %v2113 = vld [vmem:[%s2089 + $0xb8] sm:$0xff]
    %v2114 = vld [vmem:[%s2089 + $0xc0] sm:$0xff]
    %v2115 = vld [vmem:[%s2089 + $0xc8] sm:$0xff]
    %v2116 = vld [vmem:[%s2089 + $0xd0] sm:$0xff]
    %v2117 = vld [vmem:[%s2089 + $0xd8] sm:$0xff]
    %v2118 = vld [vmem:[%s2089 + $0xe0] sm:$0xff]
    %v2119 = vld [vmem:[%s2089 + $0xe8] sm:$0xff]
    %v2120 = vld [vmem:[%s2089 + $0xf0] sm:$0xff]
    %v2121 = vld [vmem:[%s2089 + $0xf8] sm:$0xff]
    %v2122 = vld [vmem:[%s2089 + $0x100] sm:$0xff]
    %v2123 = vld [vmem:[%s2089 + $0x108] sm:$0xff]
    %v2124 = vld [vmem:[%s2089 + $0x110] sm:$0xff]
    %v2125 = vld [vmem:[%s2089 + $0x118] sm:$0xff]
    %v2126 = vld [vmem:[%s2089 + $0x120] sm:$0xff]
    %v2127 = vld [vmem:[%s2089 + $0x128] sm:$0xff]
    %v2128 = vld [vmem:[%s2089 + $0x130] sm:$0xff]
    %v2129 = vld [vmem:[%s2089 + $0x138] sm:$0xff]
    %v2130 = vld [vmem:[%s2089 + $0x140] sm:$0xff]
    %v2131 = vld [vmem:[%s2089 + $0x148] sm:$0xff]
    %v2132 = vld [vmem:[%s2089 + $0x150] sm:$0xff]
    %v2133 = vld [vmem:[%s2089 + $0x158] sm:$0xff]
    %v2134 = vld [vmem:[%s2089 + $0x160] sm:$0xff]
    %v2135 = vld [vmem:[%s2089 + $0x168] sm:$0xff]
    %v2136 = vld [vmem:[%s2089 + $0x170] sm:$0xff]
    %v2137 = vld [vmem:[%s2089 + $0x178] sm:$0xff]
    %s2138 = scalar_lea.vmem %s3, 3
    %v2139 = vld [vmem:[%s2138] sm:$0x7]
    %v2141 = vlaneseq
    %v2142 = vshrl.u32 %v2141, 7
    %v2143 = vsub.s32 0, %v2142
    %v2144 = vrot.slane %v2139, %v2143
    %v2145 = vlaneseq
    %v2146 = vshrl.u32 %v2145, 7
    %v2147 = vsub.s32 1, %v2146
    %v2148 = vrot.slane %v2139, %v2147
    %v2149 = vlaneseq
    %v2150 = vshrl.u32 %v2149, 7
    %v2151 = vsub.s32 2, %v2150
    %v2152 = vrot.slane %v2139, %v2151
    %2156 = vmatprep.subr.mxu0 %v2091
    %2157 = vmatpush1.msra.mxu0 %v2090
    %2158 = vmatprep.subr.mxu0 %v2094
    %2159 = vmatpush1.msra.mxu0 %v2093
    %2160 = vmatprep.subr.mxu0 %v2097
    %2161 = vmatpush1.msra.mxu0 %v2096
    %2162 = vmatprep.subr.mxu0 %v2100
    %2163 = vmatpush1.msra.mxu0 %v2099
    %2164 = vmatprep.subr.mxu0 %v2103
    %2165 = vmatpush1.msra.mxu0 %v2102
    %2166 = vmatprep.subr.mxu0 %v2106
    %2167 = vmatpush1.msra.mxu0 %v2105
    %2168 = vmatprep.subr.mxu0 %v2109
    %2169 = vmatpush1.msra.mxu0 %v2108
    %2170 = vmatprep.subr.mxu0 %v2112
    %2171 = vmatpush1.msra.mxu0 %v2111
    %2172 = vmatprep.subr.mxu0 %v2115
    %2173 = vmatpush1.msra.mxu0 %v2114
    %2174 = vmatprep.subr.mxu0 %v2118
    %2175 = vmatpush1.msra.mxu0 %v2117
    %2176 = vmatprep.subr.mxu0 %v2121
    %2177 = vmatpush1.msra.mxu0 %v2120
    %2178 = vmatprep.subr.mxu0 %v2124
    %2179 = vmatpush1.msra.mxu0 %v2123
    %2180 = vmatprep.subr.mxu0 %v2127
    %2181 = vmatpush1.msra.mxu0 %v2126
    %2182 = vmatprep.subr.mxu0 %v2130
    %2183 = vmatpush1.msra.mxu0 %v2129
    %2184 = vmatprep.subr.mxu0 %v2133
    %2185 = vmatpush1.msra.mxu0 %v2132
    %2186 = vmatprep.subr.mxu0 %v2136
    %2187 = vmatpush1.msra.mxu0 %v2135
    %2188 = vmatprep.subr.mxu0 0.0
    %2189 = vmatpush1.msra.mxu0 0.0
    %2190 = vmatprep.subr.mxu0 0.0
    %2191 = vmatpush1.msra.mxu0 0.0
    %2192 = vmatprep.subr.mxu0 0.0
    %2193 = vmatpush1.msra.mxu0 0.0
    %2194 = vmatprep.subr.mxu0 0.0
    %2195 = vmatpush1.msra.mxu0 0.0
    %2196 = vmatprep.subr.mxu0 0.0
    %2197 = vmatpush1.msra.mxu0 0.0
    %2198 = vmatprep.subr.mxu0 0.0
    %2199 = vmatpush1.msra.mxu0 0.0
    %2200 = vmatprep.subr.mxu0 0.0
    %2201 = vmatpush1.msra.mxu0 0.0
    %2202 = vmatprep.subr.mxu0 0.0
    %2203 = vmatpush1.msra.mxu0 0.0
    %2204 = vmatprep.subr.mxu0 0.0
    %2205 = vmatpush1.msra.mxu0 0.0
    %2206 = vmatprep.subr.mxu0 0.0
    %2207 = vmatpush1.msra.mxu0 0.0
    %2208 = vmatprep.subr.mxu0 0.0
    %2209 = vmatpush1.msra.mxu0 0.0
    %2210 = vmatprep.subr.mxu0 0.0
    %2211 = vmatpush1.msra.mxu0 0.0
    %2212 = vmatprep.subr.mxu0 0.0
    %2213 = vmatpush1.msra.mxu0 0.0
    %2214 = vmatprep.subr.mxu0 0.0
    %2215 = vmatpush1.msra.mxu0 0.0
    %2216 = vmatprep.subr.mxu0 0.0
    %2217 = vmatpush1.msra.mxu0 0.0
    %2218 = vmatprep.subr.mxu0 0.0
    %2219 = vmatpush1.msra.mxu0 0.0
    %2220 = vmatprep.mubr.f32.mxu0 0.0
    %2221 = vmatmul.mubr.f32.gmra.mrb[0].mxu0 %v2081
    %v2222 = vpop.f32.mrb[0].mxu0
    %v2223 = vadd.f32 %v2144, %v2222
    %v2224 = vpop.f32.mrb[0].mxu0
    %v2225 = vadd.f32 %v2148, %v2224
    %2226 = vmatprep.mubr.f32.mxu0 0.0
    %2227 = vmatmul.mubr.f32.gmra.mrb[0].mxu0 %v2082
    %v2228 = vpop.f32.mrb[0].mxu0
    %v2229 = vadd.f32 %v2144, %v2228
    %v2230 = vpop.f32.mrb[0].mxu0
    %v2231 = vadd.f32 %v2148, %v2230
    %2232 = vmatprep.mubr.f32.mxu0 0.0
    %2233 = vmatmul.mubr.f32.gmra.mrb[0].mxu0 %v2083
    %v2234 = vpop.f32.mrb[0].mxu0
    %v2235 = vadd.f32 %v2144, %v2234
    %v2236 = vpop.f32.mrb[0].mxu0
    %v2237 = vadd.f32 %v2148, %v2236
    %2238 = vmatprep.mubr.f32.mxu0 0.0
    %2239 = vmatmul.mubr.f32.gmra.mrb[0].mxu0 %v2084
    %v2240 = vpop.f32.mrb[0].mxu0
    %v2241 = vadd.f32 %v2144, %v2240
    %v2242 = vpop.f32.mrb[0].mxu0
    %v2243 = vadd.f32 %v2148, %v2242
    %2244 = vmatprep.mubr.f32.mxu0 0.0
    %2245 = vmatmul.mubr.f32.gmra.mrb[0].mxu0 %v2085
    %v2246 = vpop.f32.mrb[0].mxu0
    %v2247 = vadd.f32 %v2144, %v2246
    %v2248 = vpop.f32.mrb[0].mxu0
    %v2249 = vadd.f32 %v2148, %v2248
    %2250 = vmatprep.mubr.f32.mxu0 0.0
    %2251 = vmatmul.mubr.f32.gmra.mrb[0].mxu0 %v2086
    %v2252 = vpop.f32.mrb[0].mxu0
    %v2253 = vadd.f32 %v2144, %v2252
    %v2254 = vpop.f32.mrb[0].mxu0
    %v2255 = vadd.f32 %v2148, %v2254
    %2256 = vmatprep.mubr.f32.mxu0 0.0
    %2257 = vmatmul.mubr.f32.gmra.mrb[0].mxu0 %v2087
    %v2258 = vpop.f32.mrb[0].mxu0
    %v2259 = vadd.f32 %v2144, %v2258
    %v2260 = vpop.f32.mrb[0].mxu0
    %v2261 = vadd.f32 %v2148, %v2260
    %2262 = vmatprep.mubr.f32.mxu0 0.0
    %2263 = vmatmul.mubr.f32.gmra.mrb[0].mxu0 %v2088
    %v2264 = vpop.f32.mrb[0].mxu0
    %v2265 = vadd.f32 %v2144, %v2264
    %v2266 = vpop.f32.mrb[0].mxu0
    %v2267 = vadd.f32 %v2148, %v2266
    %2268 = vdwg.mxu0
    %2269 = vmatprep.subr.mxu0 0.0
    %2270 = vmatpush1.msra.mxu0 %v2092
    %2271 = vmatprep.subr.mxu0 0.0
    %2272 = vmatpush1.msra.mxu0 %v2095
    %2273 = vmatprep.subr.mxu0 0.0
    %2274 = vmatpush1.msra.mxu0 %v2098
    %2275 = vmatprep.subr.mxu0 0.0
    %2276 = vmatpush1.msra.mxu0 %v2101
    %2277 = vmatprep.subr.mxu0 0.0
    %2278 = vmatpush1.msra.mxu0 %v2104
    %2279 = vmatprep.subr.mxu0 0.0
    %2280 = vmatpush1.msra.mxu0 %v2107
    %2281 = vmatprep.subr.mxu0 0.0
    %2282 = vmatpush1.msra.mxu0 %v2110
    %2283 = vmatprep.subr.mxu0 0.0
    %2284 = vmatpush1.msra.mxu0 %v2113
    %2285 = vmatprep.subr.mxu0 0.0
    %2286 = vmatpush1.msra.mxu0 %v2116
    %2287 = vmatprep.subr.mxu0 0.0
    %2288 = vmatpush1.msra.mxu0 %v2119
    %2289 = vmatprep.subr.mxu0 0.0
    %2290 = vmatpush1.msra.mxu0 %v2122
    %2291 = vmatprep.subr.mxu0 0.0
    %2292 = vmatpush1.msra.mxu0 %v2125
    %2293 = vmatprep.subr.mxu0 0.0
    %2294 = vmatpush1.msra.mxu0 %v2128
    %2295 = vmatprep.subr.mxu0 0.0
    %2296 = vmatpush1.msra.mxu0 %v2131
    %2297 = vmatprep.subr.mxu0 0.0
    %2298 = vmatpush1.msra.mxu0 %v2134
    %2299 = vmatprep.subr.mxu0 0.0
    %2300 = vmatpush1.msra.mxu0 %v2137
    %2301 = vmatprep.subr.mxu0 0.0
    %2302 = vmatpush1.msra.mxu0 0.0
    %2303 = vmatprep.subr.mxu0 0.0
    %2304 = vmatpush1.msra.mxu0 0.0
    %2305 = vmatprep.subr.mxu0 0.0
    %2306 = vmatpush1.msra.mxu0 0.0
    %2307 = vmatprep.subr.mxu0 0.0
    %2308 = vmatpush1.msra.mxu0 0.0
    %2309 = vmatprep.subr.mxu0 0.0
    %2310 = vmatpush1.msra.mxu0 0.0
    %2311 = vmatprep.subr.mxu0 0.0
    %2312 = vmatpush1.msra.mxu0 0.0
    %2313 = vmatprep.subr.mxu0 0.0
    %2314 = vmatpush1.msra.mxu0 0.0
    %2315 = vmatprep.subr.mxu0 0.0
    %2316 = vmatpush1.msra.mxu0 0.0
    %2317 = vmatprep.subr.mxu0 0.0
    %2318 = vmatpush1.msra.mxu0 0.0
    %2319 = vmatprep.subr.mxu0 0.0
    %2320 = vmatpush1.msra.mxu0 0.0
    %2321 = vmatprep.subr.mxu0 0.0
    %2322 = vmatpush1.msra.mxu0 0.0
    %2323 = vmatprep.subr.mxu0 0.0
    %2324 = vmatpush1.msra.mxu0 0.0
    %2325 = vmatprep.subr.mxu0 0.0
    %2326 = vmatpush1.msra.mxu0 0.0
    %2327 = vmatprep.subr.mxu0 0.0
    %2328 = vmatpush1.msra.mxu0 0.0
    %2329 = vmatprep.subr.mxu0 0.0
    %2330 = vmatpush1.msra.mxu0 0.0
    %2331 = vmatprep.subr.mxu0 0.0
    %2332 = vmatpush1.msra.mxu0 0.0
    %2333 = vmatprep.mubr.f32.mxu0 0.0
    %2334 = vmatmul.mubr.f32.gmra.mrb[0].mxu0 %v2081
    %v2335 = vpop.f32.mrb[0].mxu0
    %v2336 = vadd.f32 %v2152, %v2335
    %v2337 = vpop.f32.mrb[0].mxu0
    %2338 = vmatprep.mubr.f32.mxu0 0.0
    %2339 = vmatmul.mubr.f32.gmra.mrb[0].mxu0 %v2082
    %v2340 = vpop.f32.mrb[0].mxu0
    %v2341 = vadd.f32 %v2152, %v2340
    %v2342 = vpop.f32.mrb[0].mxu0
    %2343 = vmatprep.mubr.f32.mxu0 0.0
    %2344 = vmatmul.mubr.f32.gmra.mrb[0].mxu0 %v2083
    %v2345 = vpop.f32.mrb[0].mxu0
    %v2346 = vadd.f32 %v2152, %v2345
    %v2347 = vpop.f32.mrb[0].mxu0
    %2348 = vmatprep.mubr.f32.mxu0 0.0
    %2349 = vmatmul.mubr.f32.gmra.mrb[0].mxu0 %v2084
    %v2350 = vpop.f32.mrb[0].mxu0
    %v2351 = vadd.f32 %v2152, %v2350
    %v2352 = vpop.f32.mrb[0].mxu0
    %2353 = vmatprep.mubr.f32.mxu0 0.0
    %2354 = vmatmul.mubr.f32.gmra.mrb[0].mxu0 %v2085
    %v2355 = vpop.f32.mrb[0].mxu0
    %v2356 = vadd.f32 %v2152, %v2355
    %v2357 = vpop.f32.mrb[0].mxu0
    %2358 = vmatprep.mubr.f32.mxu0 0.0
    %2359 = vmatmul.mubr.f32.gmra.mrb[0].mxu0 %v2086
    %v2360 = vpop.f32.mrb[0].mxu0
    %v2361 = vadd.f32 %v2152, %v2360
    %v2362 = vpop.f32.mrb[0].mxu0
    %2363 = vmatprep.mubr.f32.mxu0 0.0
    %2364 = vmatmul.mubr.f32.gmra.mrb[0].mxu0 %v2087
    %v2365 = vpop.f32.mrb[0].mxu0
    %v2366 = vadd.f32 %v2152, %v2365
    %v2367 = vpop.f32.mrb[0].mxu0
    %2368 = vmatprep.mubr.f32.mxu0 0.0
    %2369 = vmatmul.mubr.f32.gmra.mrb[0].mxu0 %v2088
    %v2370 = vpop.f32.mrb[0].mxu0
    %v2371 = vadd.f32 %v2152, %v2370
    %v2372 = vpop.f32.mrb[0].mxu0
    %2373 = vdwg.mxu0
    %2374 = vst [vmem:[#allocation3] sm:$0xff] %v2223
    %2375 = vst [vmem:[#allocation3 + $0x8] sm:$0xff] %v2225
    %2376 = vst [vmem:[#allocation3 + $0x10] sm:$0xff] %v2336
    %2377 = vst [vmem:[#allocation3 + $0x18] sm:$0xff] %v2229
    %2378 = vst [vmem:[#allocation3 + $0x20] sm:$0xff] %v2231
    %2379 = vst [vmem:[#allocation3 + $0x28] sm:$0xff] %v2341
    %2380 = vst [vmem:[#allocation3 + $0x30] sm:$0xff] %v2235
    %2381 = vst [vmem:[#allocation3 + $0x38] sm:$0xff] %v2237
    %2382 = vst [vmem:[#allocation3 + $0x40] sm:$0xff] %v2346
    %2383 = vst [vmem:[#allocation3 + $0x48] sm:$0xff] %v2241
    %2384 = vst [vmem:[#allocation3 + $0x50] sm:$0xff] %v2243
    %2385 = vst [vmem:[#allocation3 + $0x58] sm:$0xff] %v2351
    %2386 = vst [vmem:[#allocation3 + $0x60] sm:$0xff] %v2247
    %2387 = vst [vmem:[#allocation3 + $0x68] sm:$0xff] %v2249
    %2388 = vst [vmem:[#allocation3 + $0x70] sm:$0xff] %v2356
    %2389 = vst [vmem:[#allocation3 + $0x78] sm:$0xff] %v2253
    %2390 = vst [vmem:[#allocation3 + $0x80] sm:$0xff] %v2255
    %2391 = vst [vmem:[#allocation3 + $0x88] sm:$0xff] %v2361
    %2392 = vst [vmem:[#allocation3 + $0x90] sm:$0xff] %v2259
    %2393 = vst [vmem:[#allocation3 + $0x98] sm:$0xff] %v2261
    %2394 = vst [vmem:[#allocation3 + $0xa0] sm:$0xff] %v2366
    %2395 = vst [vmem:[#allocation3 + $0xa8] sm:$0xff] %v2265
    %2396 = vst [vmem:[#allocation3 + $0xb0] sm:$0xff] %v2267
    %2397 = vst [vmem:[#allocation3 + $0xb8] sm:$0xff] %v2371
    %s2398 = scalar_lea.vmem %s4, 1
    %v2399 = vld [vmem:[%s2398] sm:$0x1]
    %v2401 = vlaneseq
    %v2402 = vshrl.u32 %v2401, 7
    %v2403 = vsub.s32 0, %v2402
    %v2404 = vrot.slane %v2399, %v2403
    %v2406 = vld [vmem:[%s372] sm:$0xff]
    %v2407 = vld [vmem:[%s372 + $0x8] sm:$0xff]
    %v2408 = vld [vmem:[%s372 + $0x10] sm:$0xff]
    %s2409 = scalar_lea.vmem [#allocation6], 384
    %v2410 = vld [vmem:[%s2409] sm:$0xff]
    %v2411 = vld [vmem:[%s2409 + $0x8] sm:$0xff]
    %v2412 = vld [vmem:[%s2409 + $0x10] sm:$0xff]
    %v2413 = vld [vmem:[%s2409 + $0x18] sm:$0xff]
    %v2414 = vld [vmem:[%s2409 + $0x20] sm:$0xff]
    %v2415 = vld [vmem:[%s2409 + $0x28] sm:$0xff]
    %v2416 = vld [vmem:[%s2409 + $0x30] sm:$0xff]
    %v2417 = vld [vmem:[%s2409 + $0x38] sm:$0xff]
    %v2418 = vld [vmem:[%s2409 + $0x40] sm:$0xff]
    %v2419 = vld [vmem:[%s2409 + $0x48] sm:$0xff]
    %v2420 = vld [vmem:[%s2409 + $0x50] sm:$0xff]
    %v2421 = vld [vmem:[%s2409 + $0x58] sm:$0xff]
    %v2422 = vld [vmem:[%s2409 + $0x60] sm:$0xff]
    %v2423 = vld [vmem:[%s2409 + $0x68] sm:$0xff]
    %v2424 = vld [vmem:[%s2409 + $0x70] sm:$0xff]
    %v2425 = vld [vmem:[%s2409 + $0x78] sm:$0xff]
    %v2426 = vld [vmem:[%s2409 + $0x80] sm:$0xff]
    %v2427 = vld [vmem:[%s2409 + $0x88] sm:$0xff]
    %v2428 = vld [vmem:[%s2409 + $0x90] sm:$0xff]
    %v2429 = vld [vmem:[%s2409 + $0x98] sm:$0xff]
    %v2430 = vld [vmem:[%s2409 + $0xa0] sm:$0xff]
    %v2431 = vld [vmem:[%s2409 + $0xa8] sm:$0xff]
    %v2432 = vld [vmem:[%s2409 + $0xb0] sm:$0xff]
    %v2433 = vld [vmem:[%s2409 + $0xb8] sm:$0xff]
    %v2434 = vld [vmem:[%s2409 + $0xc0] sm:$0xff]
    %v2435 = vld [vmem:[%s2409 + $0xc8] sm:$0xff]
    %v2436 = vld [vmem:[%s2409 + $0xd0] sm:$0xff]
    %v2437 = vld [vmem:[%s2409 + $0xd8] sm:$0xff]
    %v2438 = vld [vmem:[%s2409 + $0xe0] sm:$0xff]
    %v2439 = vld [vmem:[%s2409 + $0xe8] sm:$0xff]
    %v2440 = vld [vmem:[%s2409 + $0xf0] sm:$0xff]
    %v2441 = vld [vmem:[%s2409 + $0xf8] sm:$0xff]
    %v2442 = vld [vmem:[%s2409 + $0x100] sm:$0xff]
    %v2443 = vld [vmem:[%s2409 + $0x108] sm:$0xff]
    %v2444 = vld [vmem:[%s2409 + $0x110] sm:$0xff]
    %v2445 = vld [vmem:[%s2409 + $0x118] sm:$0xff]
    %v2446 = vld [vmem:[%s2409 + $0x120] sm:$0xff]
    %v2447 = vld [vmem:[%s2409 + $0x128] sm:$0xff]
    %v2448 = vld [vmem:[%s2409 + $0x130] sm:$0xff]
    %v2449 = vld [vmem:[%s2409 + $0x138] sm:$0xff]
    %v2450 = vld [vmem:[%s2409 + $0x140] sm:$0xff]
    %v2451 = vld [vmem:[%s2409 + $0x148] sm:$0xff]
    %v2452 = vld [vmem:[%s2409 + $0x150] sm:$0xff]
    %v2453 = vld [vmem:[%s2409 + $0x158] sm:$0xff]
    %v2454 = vld [vmem:[%s2409 + $0x160] sm:$0xff]
    %v2455 = vld [vmem:[%s2409 + $0x168] sm:$0xff]
    %v2456 = vld [vmem:[%s2409 + $0x170] sm:$0xff]
    %v2457 = vld [vmem:[%s2409 + $0x178] sm:$0xff]
    %2458 = vmatprep.subr.mxu0 %v2411
    %2459 = vmatpush1.msra.mxu0 %v2410
    %2460 = vmatprep.subr.mxu0 %v2414
    %2461 = vmatpush1.msra.mxu0 %v2413
    %2462 = vmatprep.subr.mxu0 %v2417
    %2463 = vmatpush1.msra.mxu0 %v2416
    %2464 = vmatprep.subr.mxu0 %v2420
    %2465 = vmatpush1.msra.mxu0 %v2419
    %2466 = vmatprep.subr.mxu0 %v2423
    %2467 = vmatpush1.msra.mxu0 %v2422
    %2468 = vmatprep.subr.mxu0 %v2426
    %2469 = vmatpush1.msra.mxu0 %v2425
    %2470 = vmatprep.subr.mxu0 %v2429
    %2471 = vmatpush1.msra.mxu0 %v2428
    %2472 = vmatprep.subr.mxu0 %v2432
    %2473 = vmatpush1.msra.mxu0 %v2431
    %2474 = vmatprep.subr.mxu0 %v2435
    %2475 = vmatpush1.msra.mxu0 %v2434
    %2476 = vmatprep.subr.mxu0 %v2438
    %2477 = vmatpush1.msra.mxu0 %v2437
    %2478 = vmatprep.subr.mxu0 %v2441
    %2479 = vmatpush1.msra.mxu0 %v2440
    %2480 = vmatprep.subr.mxu0 %v2444
    %2481 = vmatpush1.msra.mxu0 %v2443
    %2482 = vmatprep.subr.mxu0 %v2447
    %2483 = vmatpush1.msra.mxu0 %v2446
    %2484 = vmatprep.subr.mxu0 %v2450
    %2485 = vmatpush1.msra.mxu0 %v2449
    %2486 = vmatprep.subr.mxu0 %v2453
    %2487 = vmatpush1.msra.mxu0 %v2452
    %2488 = vmatprep.subr.mxu0 %v2456
    %2489 = vmatpush1.msra.mxu0 %v2455
    %2490 = vmatprep.subr.mxu0 0.0
    %2491 = vmatpush1.msra.mxu0 0.0
    %2492 = vmatprep.subr.mxu0 0.0
    %2493 = vmatpush1.msra.mxu0 0.0
    %2494 = vmatprep.subr.mxu0 0.0
    %2495 = vmatpush1.msra.mxu0 0.0
    %2496 = vmatprep.subr.mxu0 0.0
    %2497 = vmatpush1.msra.mxu0 0.0
    %2498 = vmatprep.subr.mxu0 0.0
    %2499 = vmatpush1.msra.mxu0 0.0
    %2500 = vmatprep.subr.mxu0 0.0
    %2501 = vmatpush1.msra.mxu0 0.0
    %2502 = vmatprep.subr.mxu0 0.0
    %2503 = vmatpush1.msra.mxu0 0.0
    %2504 = vmatprep.subr.mxu0 0.0
    %2505 = vmatpush1.msra.mxu0 0.0
    %2506 = vmatprep.subr.mxu0 0.0
    %2507 = vmatpush1.msra.mxu0 0.0
    %2508 = vmatprep.subr.mxu0 0.0
    %2509 = vmatpush1.msra.mxu0 0.0
    %2510 = vmatprep.subr.mxu0 0.0
    %2511 = vmatpush1.msra.mxu0 0.0
    %2512 = vmatprep.subr.mxu0 0.0
    %2513 = vmatpush1.msra.mxu0 0.0
    %2514 = vmatprep.subr.mxu0 0.0
    %2515 = vmatpush1.msra.mxu0 0.0
    %2516 = vmatprep.subr.mxu0 0.0
    %2517 = vmatpush1.msra.mxu0 0.0
    %2518 = vmatprep.subr.mxu0 0.0
    %2519 = vmatpush1.msra.mxu0 0.0
    %2520 = vmatprep.subr.mxu0 0.0
    %2521 = vmatpush1.msra.mxu0 0.0
    %2522 = vmatprep.mubr.f32.mxu0 0.0
    %2523 = vmatmul.mubr.f32.gmra.mrb[0].mxu0 0.0
    %v2524 = vpop.f32.mrb[0].mxu0
    %v2525 = vadd.f32 0.0, %v2524
    %v2526 = vpop.f32.mrb[0].mxu0
    %v2527 = vadd.f32 0.0, %v2526
    %2528 = vdwg.mxu0
    %2529 = vmatprep.subr.mxu0 0.0
    %2530 = vmatpush1.msra.mxu0 %v2412
    %2531 = vmatprep.subr.mxu0 0.0
    %2532 = vmatpush1.msra.mxu0 %v2415
    %2533 = vmatprep.subr.mxu0 0.0
    %2534 = vmatpush1.msra.mxu0 %v2418
    %2535 = vmatprep.subr.mxu0 0.0
    %2536 = vmatpush1.msra.mxu0 %v2421
    %2537 = vmatprep.subr.mxu0 0.0
    %2538 = vmatpush1.msra.mxu0 %v2424
    %2539 = vmatprep.subr.mxu0 0.0
    %2540 = vmatpush1.msra.mxu0 %v2427
    %2541 = vmatprep.subr.mxu0 0.0
    %2542 = vmatpush1.msra.mxu0 %v2430
    %2543 = vmatprep.subr.mxu0 0.0
    %2544 = vmatpush1.msra.mxu0 %v2433
    %2545 = vmatprep.subr.mxu0 0.0
    %2546 = vmatpush1.msra.mxu0 %v2436
    %2547 = vmatprep.subr.mxu0 0.0
    %2548 = vmatpush1.msra.mxu0 %v2439
    %2549 = vmatprep.subr.mxu0 0.0
    %2550 = vmatpush1.msra.mxu0 %v2442
    %2551 = vmatprep.subr.mxu0 0.0
    %2552 = vmatpush1.msra.mxu0 %v2445
    %2553 = vmatprep.subr.mxu0 0.0
    %2554 = vmatpush1.msra.mxu0 %v2448
    %2555 = vmatprep.subr.mxu0 0.0
    %2556 = vmatpush1.msra.mxu0 %v2451
    %2557 = vmatprep.subr.mxu0 0.0
    %2558 = vmatpush1.msra.mxu0 %v2454
    %2559 = vmatprep.subr.mxu0 0.0
    %2560 = vmatpush1.msra.mxu0 %v2457
    %2561 = vmatprep.subr.mxu0 0.0
    %2562 = vmatpush1.msra.mxu0 0.0
    %2563 = vmatprep.subr.mxu0 0.0
    %2564 = vmatpush1.msra.mxu0 0.0
    %2565 = vmatprep.subr.mxu0 0.0
    %2566 = vmatpush1.msra.mxu0 0.0
    %2567 = vmatprep.subr.mxu0 0.0
    %2568 = vmatpush1.msra.mxu0 0.0
    %2569 = vmatprep.subr.mxu0 0.0
    %2570 = vmatpush1.msra.mxu0 0.0
    %2571 = vmatprep.subr.mxu0 0.0
    %2572 = vmatpush1.msra.mxu0 0.0
    %2573 = vmatprep.subr.mxu0 0.0
    %2574 = vmatpush1.msra.mxu0 0.0
    %2575 = vmatprep.subr.mxu0 0.0
    %2576 = vmatpush1.msra.mxu0 0.0
    %2577 = vmatprep.subr.mxu0 0.0
    %2578 = vmatpush1.msra.mxu0 0.0
    %2579 = vmatprep.subr.mxu0 0.0
    %2580 = vmatpush1.msra.mxu0 0.0
    %2581 = vmatprep.subr.mxu0 0.0
    %2582 = vmatpush1.msra.mxu0 0.0
    %2583 = vmatprep.subr.mxu0 0.0
    %2584 = vmatpush1.msra.mxu0 0.0
    %2585 = vmatprep.subr.mxu0 0.0
    %2586 = vmatpush1.msra.mxu0 0.0
    %2587 = vmatprep.subr.mxu0 0.0
    %2588 = vmatpush1.msra.mxu0 0.0
    %2589 = vmatprep.subr.mxu0 0.0
    %2590 = vmatpush1.msra.mxu0 0.0
    %2591 = vmatprep.subr.mxu0 0.0
    %2592 = vmatpush1.msra.mxu0 0.0
    %2593 = vmatprep.mubr.f32.mxu0 0.0
    %2594 = vmatmul.mubr.f32.gmra.mrb[0].mxu0 0.0
    %v2595 = vpop.f32.mrb[0].mxu0
    %v2596 = vadd.f32 0.0, %v2595
    %v2597 = vpop.f32.mrb[0].mxu0
    %2598 = vdwg.mxu0
    %v2599 = vadd.f32 %v2406, %v2525
    %v2600 = vmul.f32 %v2599, 0.5
    %v2601 = vtanh.pop %v2600
    %v2602 = vmul.f32 %v2601, 0.5
    %v2603 = vadd.f32 %v2602, 0.5
    %v2604 = vadd.f32 %v2407, %v2527
    %v2605 = vmul.f32 %v2604, 0.5
    %v2606 = vtanh.pop %v2605
    %v2607 = vmul.f32 %v2606, 0.5
    %v2608 = vadd.f32 %v2607, 0.5
    %v2609 = vadd.f32 %v2596, %v2404
    %v2610 = vmul.f32 %v2603, %v2609
    %v2611 = vadd.f32 %v2408, %v2610
    %v2612 = vtanh.pop %v2611
    %v2613 = vsub.f32 0.0, %v2612
    %v2614 = vmul.f32 %v2608, %v2613
    %v2615 = vadd.f32 %v2612, %v2614
    %2616 = vst [vmem:[#allocation2] sm:$0xff] %v2615
    %v2617 = vld [vmem:[%s585] sm:$0xff]
    %v2618 = vld [vmem:[%s585 + $0x8] sm:$0xff]
    %v2619 = vld [vmem:[%s585 + $0x10] sm:$0xff]
    %v2620 = vld [vmem:[%s2409] sm:$0xff]
    %v2621 = vld [vmem:[%s2409 + $0x8] sm:$0xff]
    %v2622 = vld [vmem:[%s2409 + $0x10] sm:$0xff]
    %v2623 = vld [vmem:[%s2409 + $0x18] sm:$0xff]
    %v2624 = vld [vmem:[%s2409 + $0x20] sm:$0xff]
    %v2625 = vld [vmem:[%s2409 + $0x28] sm:$0xff]
    %v2626 = vld [vmem:[%s2409 + $0x30] sm:$0xff]
    %v2627 = vld [vmem:[%s2409 + $0x38] sm:$0xff]
    %v2628 = vld [vmem:[%s2409 + $0x40] sm:$0xff]
    %v2629 = vld [vmem:[%s2409 + $0x48] sm:$0xff]
    %v2630 = vld [vmem:[%s2409 + $0x50] sm:$0xff]
    %v2631 = vld [vmem:[%s2409 + $0x58] sm:$0xff]
    %v2632 = vld [vmem:[%s2409 + $0x60] sm:$0xff]
    %v2633 = vld [vmem:[%s2409 + $0x68] sm:$0xff]
    %v2634 = vld [vmem:[%s2409 + $0x70] sm:$0xff]
    %v2635 = vld [vmem:[%s2409 + $0x78] sm:$0xff]
    %v2636 = vld [vmem:[%s2409 + $0x80] sm:$0xff]
    %v2637 = vld [vmem:[%s2409 + $0x88] sm:$0xff]
    %v2638 = vld [vmem:[%s2409 + $0x90] sm:$0xff]
    %v2639 = vld [vmem:[%s2409 + $0x98] sm:$0xff]
    %v2640 = vld [vmem:[%s2409 + $0xa0] sm:$0xff]
    %v2641 = vld [vmem:[%s2409 + $0xa8] sm:$0xff]
    %v2642 = vld [vmem:[%s2409 + $0xb0] sm:$0xff]
    %v2643 = vld [vmem:[%s2409 + $0xb8] sm:$0xff]
    %v2644 = vld [vmem:[%s2409 + $0xc0] sm:$0xff]
    %v2645 = vld [vmem:[%s2409 + $0xc8] sm:$0xff]
    %v2646 = vld [vmem:[%s2409 + $0xd0] sm:$0xff]
    %v2647 = vld [vmem:[%s2409 + $0xd8] sm:$0xff]
    %v2648 = vld [vmem:[%s2409 + $0xe0] sm:$0xff]
    %v2649 = vld [vmem:[%s2409 + $0xe8] sm:$0xff]
    %v2650 = vld [vmem:[%s2409 + $0xf0] sm:$0xff]
    %v2651 = vld [vmem:[%s2409 + $0xf8] sm:$0xff]
    %v2652 = vld [vmem:[%s2409 + $0x100] sm:$0xff]
    %v2653 = vld [vmem:[%s2409 + $0x108] sm:$0xff]
    %v2654 = vld [vmem:[%s2409 + $0x110] sm:$0xff]
    %v2655 = vld [vmem:[%s2409 + $0x118] sm:$0xff]
    %v2656 = vld [vmem:[%s2409 + $0x120] sm:$0xff]
    %v2657 = vld [vmem:[%s2409 + $0x128] sm:$0xff]
    %v2658 = vld [vmem:[%s2409 + $0x130] sm:$0xff]
    %v2659 = vld [vmem:[%s2409 + $0x138] sm:$0xff]
    %v2660 = vld [vmem:[%s2409 + $0x140] sm:$0xff]
    %v2661 = vld [vmem:[%s2409 + $0x148] sm:$0xff]
    %v2662 = vld [vmem:[%s2409 + $0x150] sm:$0xff]
    %v2663 = vld [vmem:[%s2409 + $0x158] sm:$0xff]
    %v2664 = vld [vmem:[%s2409 + $0x160] sm:$0xff]
    %v2665 = vld [vmem:[%s2409 + $0x168] sm:$0xff]
    %v2666 = vld [vmem:[%s2409 + $0x170] sm:$0xff]
    %v2667 = vld [vmem:[%s2409 + $0x178] sm:$0xff]
    %2668 = vmatprep.subr.mxu0 %v2621
    %2669 = vmatpush1.msra.mxu0 %v2620
    %2670 = vmatprep.subr.mxu0 %v2624
    %2671 = vmatpush1.msra.mxu0 %v2623
    %2672 = vmatprep.subr.mxu0 %v2627
    %2673 = vmatpush1.msra.mxu0 %v2626
    %2674 = vmatprep.subr.mxu0 %v2630
    %2675 = vmatpush1.msra.mxu0 %v2629
    %2676 = vmatprep.subr.mxu0 %v2633
    %2677 = vmatpush1.msra.mxu0 %v2632
    %2678 = vmatprep.subr.mxu0 %v2636
    %2679 = vmatpush1.msra.mxu0 %v2635
    %2680 = vmatprep.subr.mxu0 %v2639
    %2681 = vmatpush1.msra.mxu0 %v2638
    %2682 = vmatprep.subr.mxu0 %v2642
    %2683 = vmatpush1.msra.mxu0 %v2641
    %2684 = vmatprep.subr.mxu0 %v2645
    %2685 = vmatpush1.msra.mxu0 %v2644
    %2686 = vmatprep.subr.mxu0 %v2648
    %2687 = vmatpush1.msra.mxu0 %v2647
    %2688 = vmatprep.subr.mxu0 %v2651
    %2689 = vmatpush1.msra.mxu0 %v2650
    %2690 = vmatprep.subr.mxu0 %v2654
    %2691 = vmatpush1.msra.mxu0 %v2653
    %2692 = vmatprep.subr.mxu0 %v2657
    %2693 = vmatpush1.msra.mxu0 %v2656
    %2694 = vmatprep.subr.mxu0 %v2660
    %2695 = vmatpush1.msra.mxu0 %v2659
    %2696 = vmatprep.subr.mxu0 %v2663
    %2697 = vmatpush1.msra.mxu0 %v2662
    %2698 = vmatprep.subr.mxu0 %v2666
    %2699 = vmatpush1.msra.mxu0 %v2665
    %2700 = vmatprep.subr.mxu0 0.0
    %2701 = vmatpush1.msra.mxu0 0.0
    %2702 = vmatprep.subr.mxu0 0.0
    %2703 = vmatpush1.msra.mxu0 0.0
    %2704 = vmatprep.subr.mxu0 0.0
    %2705 = vmatpush1.msra.mxu0 0.0
    %2706 = vmatprep.subr.mxu0 0.0
    %2707 = vmatpush1.msra.mxu0 0.0
    %2708 = vmatprep.subr.mxu0 0.0
    %2709 = vmatpush1.msra.mxu0 0.0
    %2710 = vmatprep.subr.mxu0 0.0
    %2711 = vmatpush1.msra.mxu0 0.0
    %2712 = vmatprep.subr.mxu0 0.0
    %2713 = vmatpush1.msra.mxu0 0.0
    %2714 = vmatprep.subr.mxu0 0.0
    %2715 = vmatpush1.msra.mxu0 0.0
    %2716 = vmatprep.subr.mxu0 0.0
    %2717 = vmatpush1.msra.mxu0 0.0
    %2718 = vmatprep.subr.mxu0 0.0
    %2719 = vmatpush1.msra.mxu0 0.0
    %2720 = vmatprep.subr.mxu0 0.0
    %2721 = vmatpush1.msra.mxu0 0.0
    %2722 = vmatprep.subr.mxu0 0.0
    %2723 = vmatpush1.msra.mxu0 0.0
    %2724 = vmatprep.subr.mxu0 0.0
    %2725 = vmatpush1.msra.mxu0 0.0
    %2726 = vmatprep.subr.mxu0 0.0
    %2727 = vmatpush1.msra.mxu0 0.0
    %2728 = vmatprep.subr.mxu0 0.0
    %2729 = vmatpush1.msra.mxu0 0.0
    %2730 = vmatprep.subr.mxu0 0.0
    %2731 = vmatpush1.msra.mxu0 0.0
    %2732 = vmatprep.mubr.f32.mxu0 0.0
    %2733 = vmatmul.mubr.f32.gmra.mrb[0].mxu0 %v2615
    %v2734 = vpop.f32.mrb[0].mxu0
    %v2735 = vadd.f32 0.0, %v2734
    %v2736 = vpop.f32.mrb[0].mxu0
    %v2737 = vadd.f32 0.0, %v2736
    %2738 = vdwg.mxu0
    %2739 = vmatprep.subr.mxu0 0.0
    %2740 = vmatpush1.msra.mxu0 %v2622
    %2741 = vmatprep.subr.mxu0 0.0
    %2742 = vmatpush1.msra.mxu0 %v2625
    %2743 = vmatprep.subr.mxu0 0.0
    %2744 = vmatpush1.msra.mxu0 %v2628
    %2745 = vmatprep.subr.mxu0 0.0
    %2746 = vmatpush1.msra.mxu0 %v2631
    %2747 = vmatprep.subr.mxu0 0.0
    %2748 = vmatpush1.msra.mxu0 %v2634
    %2749 = vmatprep.subr.mxu0 0.0
    %2750 = vmatpush1.msra.mxu0 %v2637
    %2751 = vmatprep.subr.mxu0 0.0
    %2752 = vmatpush1.msra.mxu0 %v2640
    %2753 = vmatprep.subr.mxu0 0.0
    %2754 = vmatpush1.msra.mxu0 %v2643
    %2755 = vmatprep.subr.mxu0 0.0
    %2756 = vmatpush1.msra.mxu0 %v2646
    %2757 = vmatprep.subr.mxu0 0.0
    %2758 = vmatpush1.msra.mxu0 %v2649
    %2759 = vmatprep.subr.mxu0 0.0
    %2760 = vmatpush1.msra.mxu0 %v2652
    %2761 = vmatprep.subr.mxu0 0.0
    %2762 = vmatpush1.msra.mxu0 %v2655
    %2763 = vmatprep.subr.mxu0 0.0
    %2764 = vmatpush1.msra.mxu0 %v2658
    %2765 = vmatprep.subr.mxu0 0.0
    %2766 = vmatpush1.msra.mxu0 %v2661
    %2767 = vmatprep.subr.mxu0 0.0
    %2768 = vmatpush1.msra.mxu0 %v2664
    %2769 = vmatprep.subr.mxu0 0.0
    %2770 = vmatpush1.msra.mxu0 %v2667
    %2771 = vmatprep.subr.mxu0 0.0
    %2772 = vmatpush1.msra.mxu0 0.0
    %2773 = vmatprep.subr.mxu0 0.0
    %2774 = vmatpush1.msra.mxu0 0.0
    %2775 = vmatprep.subr.mxu0 0.0
    %2776 = vmatpush1.msra.mxu0 0.0
    %2777 = vmatprep.subr.mxu0 0.0
    %2778 = vmatpush1.msra.mxu0 0.0
    %2779 = vmatprep.subr.mxu0 0.0
    %2780 = vmatpush1.msra.mxu0 0.0
    %2781 = vmatprep.subr.mxu0 0.0
    %2782 = vmatpush1.msra.mxu0 0.0
    %2783 = vmatprep.subr.mxu0 0.0
    %2784 = vmatpush1.msra.mxu0 0.0
    %2785 = vmatprep.subr.mxu0 0.0
    %2786 = vmatpush1.msra.mxu0 0.0
    %2787 = vmatprep.subr.mxu0 0.0
    %2788 = vmatpush1.msra.mxu0 0.0
    %2789 = vmatprep.subr.mxu0 0.0
    %2790 = vmatpush1.msra.mxu0 0.0
    %2791 = vmatprep.subr.mxu0 0.0
    %2792 = vmatpush1.msra.mxu0 0.0
    %2793 = vmatprep.subr.mxu0 0.0
    %2794 = vmatpush1.msra.mxu0 0.0
    %2795 = vmatprep.subr.mxu0 0.0
    %2796 = vmatpush1.msra.mxu0 0.0
    %2797 = vmatprep.subr.mxu0 0.0
    %2798 = vmatpush1.msra.mxu0 0.0
    %2799 = vmatprep.subr.mxu0 0.0
    %2800 = vmatpush1.msra.mxu0 0.0
    %2801 = vmatprep.subr.mxu0 0.0
    %2802 = vmatpush1.msra.mxu0 0.0
    %2803 = vmatprep.mubr.f32.mxu0 0.0
    %2804 = vmatmul.mubr.f32.gmra.mrb[0].mxu0 %v2615
    %v2805 = vpop.f32.mrb[0].mxu0
    %v2806 = vadd.f32 0.0, %v2805
    %v2807 = vpop.f32.mrb[0].mxu0
    %2808 = vdwg.mxu0
    %v2809 = vadd.f32 %v2617, %v2735
    %v2810 = vmul.f32 %v2809, 0.5
    %v2811 = vtanh.pop %v2810
    %v2812 = vmul.f32 %v2811, 0.5
    %v2813 = vadd.f32 %v2812, 0.5
    %v2814 = vadd.f32 %v2618, %v2737
    %v2815 = vmul.f32 %v2814, 0.5
    %v2816 = vtanh.pop %v2815
    %v2817 = vmul.f32 %v2816, 0.5
    %v2818 = vadd.f32 %v2817, 0.5
    %v2819 = vadd.f32 %v2806, %v2404
    %v2820 = vmul.f32 %v2813, %v2819
    %v2821 = vadd.f32 %v2619, %v2820
    %v2822 = vtanh.pop %v2821
    %v2823 = vsub.f32 %v2615, %v2822
    %v2824 = vmul.f32 %v2818, %v2823
    %v2825 = vadd.f32 %v2822, %v2824
    %2826 = vst [vmem:[%s795] sm:$0xff] %v2825
    %v2827 = vld [vmem:[%s799] sm:$0xff]
    %v2828 = vld [vmem:[%s799 + $0x8] sm:$0xff]
    %v2829 = vld [vmem:[%s799 + $0x10] sm:$0xff]
    %v2830 = vld [vmem:[%s2409] sm:$0xff]
    %v2831 = vld [vmem:[%s2409 + $0x8] sm:$0xff]
    %v2832 = vld [vmem:[%s2409 + $0x10] sm:$0xff]
    %v2833 = vld [vmem:[%s2409 + $0x18] sm:$0xff]
    %v2834 = vld [vmem:[%s2409 + $0x20] sm:$0xff]
    %v2835 = vld [vmem:[%s2409 + $0x28] sm:$0xff]
    %v2836 = vld [vmem:[%s2409 + $0x30] sm:$0xff]
    %v2837 = vld [vmem:[%s2409 + $0x38] sm:$0xff]
    %v2838 = vld [vmem:[%s2409 + $0x40] sm:$0xff]
    %v2839 = vld [vmem:[%s2409 + $0x48] sm:$0xff]
    %v2840 = vld [vmem:[%s2409 + $0x50] sm:$0xff]
    %v2841 = vld [vmem:[%s2409 + $0x58] sm:$0xff]
    %v2842 = vld [vmem:[%s2409 + $0x60] sm:$0xff]
    %v2843 = vld [vmem:[%s2409 + $0x68] sm:$0xff]
    %v2844 = vld [vmem:[%s2409 + $0x70] sm:$0xff]
    %v2845 = vld [vmem:[%s2409 + $0x78] sm:$0xff]
    %v2846 = vld [vmem:[%s2409 + $0x80] sm:$0xff]
    %v2847 = vld [vmem:[%s2409 + $0x88] sm:$0xff]
    %v2848 = vld [vmem:[%s2409 + $0x90] sm:$0xff]
    %v2849 = vld [vmem:[%s2409 + $0x98] sm:$0xff]
    %v2850 = vld [vmem:[%s2409 + $0xa0] sm:$0xff]
    %v2851 = vld [vmem:[%s2409 + $0xa8] sm:$0xff]
    %v2852 = vld [vmem:[%s2409 + $0xb0] sm:$0xff]
    %v2853 = vld [vmem:[%s2409 + $0xb8] sm:$0xff]
    %v2854 = vld [vmem:[%s2409 + $0xc0] sm:$0xff]
    %v2855 = vld [vmem:[%s2409 + $0xc8] sm:$0xff]
    %v2856 = vld [vmem:[%s2409 + $0xd0] sm:$0xff]
    %v2857 = vld [vmem:[%s2409 + $0xd8] sm:$0xff]
    %v2858 = vld [vmem:[%s2409 + $0xe0] sm:$0xff]
    %v2859 = vld [vmem:[%s2409 + $0xe8] sm:$0xff]
    %v2860 = vld [vmem:[%s2409 + $0xf0] sm:$0xff]
    %v2861 = vld [vmem:[%s2409 + $0xf8] sm:$0xff]
    %v2862 = vld [vmem:[%s2409 + $0x100] sm:$0xff]
    %v2863 = vld [vmem:[%s2409 + $0x108] sm:$0xff]
    %v2864 = vld [vmem:[%s2409 + $0x110] sm:$0xff]
    %v2865 = vld [vmem:[%s2409 + $0x118] sm:$0xff]
    %v2866 = vld [vmem:[%s2409 + $0x120] sm:$0xff]
    %v2867 = vld [vmem:[%s2409 + $0x128] sm:$0xff]
    %v2868 = vld [vmem:[%s2409 + $0x130] sm:$0xff]
    %v2869 = vld [vmem:[%s2409 + $0x138] sm:$0xff]
    %v2870 = vld [vmem:[%s2409 + $0x140] sm:$0xff]
    %v2871 = vld [vmem:[%s2409 + $0x148] sm:$0xff]
    %v2872 = vld [vmem:[%s2409 + $0x150] sm:$0xff]
    %v2873 = vld [vmem:[%s2409 + $0x158] sm:$0xff]
    %v2874 = vld [vmem:[%s2409 + $0x160] sm:$0xff]
    %v2875 = vld [vmem:[%s2409 + $0x168] sm:$0xff]
    %v2876 = vld [vmem:[%s2409 + $0x170] sm:$0xff]
    %v2877 = vld [vmem:[%s2409 + $0x178] sm:$0xff]
    %2878 = vmatprep.subr.mxu0 %v2831
    %2879 = vmatpush1.msra.mxu0 %v2830
    %2880 = vmatprep.subr.mxu0 %v2834
    %2881 = vmatpush1.msra.mxu0 %v2833
    %2882 = vmatprep.subr.mxu0 %v2837
    %2883 = vmatpush1.msra.mxu0 %v2836
    %2884 = vmatprep.subr.mxu0 %v2840
    %2885 = vmatpush1.msra.mxu0 %v2839
    %2886 = vmatprep.subr.mxu0 %v2843
    %2887 = vmatpush1.msra.mxu0 %v2842
    %2888 = vmatprep.subr.mxu0 %v2846
    %2889 = vmatpush1.msra.mxu0 %v2845
    %2890 = vmatprep.subr.mxu0 %v2849
    %2891 = vmatpush1.msra.mxu0 %v2848
    %2892 = vmatprep.subr.mxu0 %v2852
    %2893 = vmatpush1.msra.mxu0 %v2851
    %2894 = vmatprep.subr.mxu0 %v2855
    %2895 = vmatpush1.msra.mxu0 %v2854
    %2896 = vmatprep.subr.mxu0 %v2858
    %2897 = vmatpush1.msra.mxu0 %v2857
    %2898 = vmatprep.subr.mxu0 %v2861
    %2899 = vmatpush1.msra.mxu0 %v2860
    %2900 = vmatprep.subr.mxu0 %v2864
    %2901 = vmatpush1.msra.mxu0 %v2863
    %2902 = vmatprep.subr.mxu0 %v2867
    %2903 = vmatpush1.msra.mxu0 %v2866
    %2904 = vmatprep.subr.mxu0 %v2870
    %2905 = vmatpush1.msra.mxu0 %v2869
    %2906 = vmatprep.subr.mxu0 %v2873
    %2907 = vmatpush1.msra.mxu0 %v2872
    %2908 = vmatprep.subr.mxu0 %v2876
    %2909 = vmatpush1.msra.mxu0 %v2875
    %2910 = vmatprep.subr.mxu0 0.0
    %2911 = vmatpush1.msra.mxu0 0.0
    %2912 = vmatprep.subr.mxu0 0.0
    %2913 = vmatpush1.msra.mxu0 0.0
    %2914 = vmatprep.subr.mxu0 0.0
    %2915 = vmatpush1.msra.mxu0 0.0
    %2916 = vmatprep.subr.mxu0 0.0
    %2917 = vmatpush1.msra.mxu0 0.0
    %2918 = vmatprep.subr.mxu0 0.0
    %2919 = vmatpush1.msra.mxu0 0.0
    %2920 = vmatprep.subr.mxu0 0.0
    %2921 = vmatpush1.msra.mxu0 0.0
    %2922 = vmatprep.subr.mxu0 0.0
    %2923 = vmatpush1.msra.mxu0 0.0
    %2924 = vmatprep.subr.mxu0 0.0
    %2925 = vmatpush1.msra.mxu0 0.0
    %2926 = vmatprep.subr.mxu0 0.0
    %2927 = vmatpush1.msra.mxu0 0.0
    %2928 = vmatprep.subr.mxu0 0.0
    %2929 = vmatpush1.msra.mxu0 0.0
    %2930 = vmatprep.subr.mxu0 0.0
    %2931 = vmatpush1.msra.mxu0 0.0
    %2932 = vmatprep.subr.mxu0 0.0
    %2933 = vmatpush1.msra.mxu0 0.0
    %2934 = vmatprep.subr.mxu0 0.0
    %2935 = vmatpush1.msra.mxu0 0.0
    %2936 = vmatprep.subr.mxu0 0.0
    %2937 = vmatpush1.msra.mxu0 0.0
    %2938 = vmatprep.subr.mxu0 0.0
    %2939 = vmatpush1.msra.mxu0 0.0
    %2940 = vmatprep.subr.mxu0 0.0
    %2941 = vmatpush1.msra.mxu0 0.0
    %2942 = vmatprep.mubr.f32.mxu0 0.0
    %2943 = vmatmul.mubr.f32.gmra.mrb[0].mxu0 %v2825
    %v2944 = vpop.f32.mrb[0].mxu0
    %v2945 = vadd.f32 0.0, %v2944
    %v2946 = vpop.f32.mrb[0].mxu0
    %v2947 = vadd.f32 0.0, %v2946
    %2948 = vdwg.mxu0
    %2949 = vmatprep.subr.mxu0 0.0
    %2950 = vmatpush1.msra.mxu0 %v2832
    %2951 = vmatprep.subr.mxu0 0.0
    %2952 = vmatpush1.msra.mxu0 %v2835
    %2953 = vmatprep.subr.mxu0 0.0
    %2954 = vmatpush1.msra.mxu0 %v2838
    %2955 = vmatprep.subr.mxu0 0.0
    %2956 = vmatpush1.msra.mxu0 %v2841
    %2957 = vmatprep.subr.mxu0 0.0
    %2958 = vmatpush1.msra.mxu0 %v2844
    %2959 = vmatprep.subr.mxu0 0.0
    %2960 = vmatpush1.msra.mxu0 %v2847
    %2961 = vmatprep.subr.mxu0 0.0
    %2962 = vmatpush1.msra.mxu0 %v2850
    %2963 = vmatprep.subr.mxu0 0.0
    %2964 = vmatpush1.msra.mxu0 %v2853
    %2965 = vmatprep.subr.mxu0 0.0
    %2966 = vmatpush1.msra.mxu0 %v2856
    %2967 = vmatprep.subr.mxu0 0.0
    %2968 = vmatpush1.msra.mxu0 %v2859
    %2969 = vmatprep.subr.mxu0 0.0
    %2970 = vmatpush1.msra.mxu0 %v2862
    %2971 = vmatprep.subr.mxu0 0.0
    %2972 = vmatpush1.msra.mxu0 %v2865
    %2973 = vmatprep.subr.mxu0 0.0
    %2974 = vmatpush1.msra.mxu0 %v2868
    %2975 = vmatprep.subr.mxu0 0.0
    %2976 = vmatpush1.msra.mxu0 %v2871
    %2977 = vmatprep.subr.mxu0 0.0
    %2978 = vmatpush1.msra.mxu0 %v2874
    %2979 = vmatprep.subr.mxu0 0.0
    %2980 = vmatpush1.msra.mxu0 %v2877
    %2981 = vmatprep.subr.mxu0 0.0
    %2982 = vmatpush1.msra.mxu0 0.0
    %2983 = vmatprep.subr.mxu0 0.0
    %2984 = vmatpush1.msra.mxu0 0.0
    %2985 = vmatprep.subr.mxu0 0.0
    %2986 = vmatpush1.msra.mxu0 0.0
    %2987 = vmatprep.subr.mxu0 0.0
    %2988 = vmatpush1.msra.mxu0 0.0
    %2989 = vmatprep.subr.mxu0 0.0
    %2990 = vmatpush1.msra.mxu0 0.0
    %2991 = vmatprep.subr.mxu0 0.0
    %2992 = vmatpush1.msra.mxu0 0.0
    %2993 = vmatprep.subr.mxu0 0.0
    %2994 = vmatpush1.msra.mxu0 0.0
    %2995 = vmatprep.subr.mxu0 0.0
    %2996 = vmatpush1.msra.mxu0 0.0
    %2997 = vmatprep.subr.mxu0 0.0
    %2998 = vmatpush1.msra.mxu0 0.0
    %2999 = vmatprep.subr.mxu0 0.0
    %3000 = vmatpush1.msra.mxu0 0.0
    %3001 = vmatprep.subr.mxu0 0.0
    %3002 = vmatpush1.msra.mxu0 0.0
    %3003 = vmatprep.subr.mxu0 0.0
    %3004 = vmatpush1.msra.mxu0 0.0
    %3005 = vmatprep.subr.mxu0 0.0
    %3006 = vmatpush1.msra.mxu0 0.0
    %3007 = vmatprep.subr.mxu0 0.0
    %3008 = vmatpush1.msra.mxu0 0.0
    %3009 = vmatprep.subr.mxu0 0.0
    %3010 = vmatpush1.msra.mxu0 0.0
    %3011 = vmatprep.subr.mxu0 0.0
    %3012 = vmatpush1.msra.mxu0 0.0
    %3013 = vmatprep.mubr.f32.mxu0 0.0
    %3014 = vmatmul.mubr.f32.gmra.mrb[0].mxu0 %v2825
    %v3015 = vpop.f32.mrb[0].mxu0
    %v3016 = vadd.f32 0.0, %v3015
    %v3017 = vpop.f32.mrb[0].mxu0
    %3018 = vdwg.mxu0
    %v3019 = vadd.f32 %v2827, %v2945
    %v3020 = vmul.f32 %v3019, 0.5
    %v3021 = vtanh.pop %v3020
    %v3022 = vmul.f32 %v3021, 0.5
    %v3023 = vadd.f32 %v3022, 0.5
    %v3024 = vadd.f32 %v2828, %v2947
    %v3025 = vmul.f32 %v3024, 0.5
    %v3026 = vtanh.pop %v3025
    %v3027 = vmul.f32 %v3026, 0.5
    %v3028 = vadd.f32 %v3027, 0.5
    %v3029 = vadd.f32 %v3016, %v2404
    %v3030 = vmul.f32 %v3023, %v3029
    %v3031 = vadd.f32 %v2829, %v3030
    %v3032 = vtanh.pop %v3031
    %v3033 = vsub.f32 %v2825, %v3032
    %v3034 = vmul.f32 %v3028, %v3033
    %v3035 = vadd.f32 %v3032, %v3034
    %3036 = vst [vmem:[%s1009] sm:$0xff] %v3035
    %v3037 = vld [vmem:[%s1013] sm:$0xff]
    %v3038 = vld [vmem:[%s1013 + $0x8] sm:$0xff]
    %v3039 = vld [vmem:[%s1013 + $0x10] sm:$0xff]
    %v3040 = vld [vmem:[%s2409] sm:$0xff]
    %v3041 = vld [vmem:[%s2409 + $0x8] sm:$0xff]
    %v3042 = vld [vmem:[%s2409 + $0x10] sm:$0xff]
    %v3043 = vld [vmem:[%s2409 + $0x18] sm:$0xff]
    %v3044 = vld [vmem:[%s2409 + $0x20] sm:$0xff]
    %v3045 = vld [vmem:[%s2409 + $0x28] sm:$0xff]
    %v3046 = vld [vmem:[%s2409 + $0x30] sm:$0xff]
    %v3047 = vld [vmem:[%s2409 + $0x38] sm:$0xff]
    %v3048 = vld [vmem:[%s2409 + $0x40] sm:$0xff]
    %v3049 = vld [vmem:[%s2409 + $0x48] sm:$0xff]
    %v3050 = vld [vmem:[%s2409 + $0x50] sm:$0xff]
    %v3051 = vld [vmem:[%s2409 + $0x58] sm:$0xff]
    %v3052 = vld [vmem:[%s2409 + $0x60] sm:$0xff]
    %v3053 = vld [vmem:[%s2409 + $0x68] sm:$0xff]
    %v3054 = vld [vmem:[%s2409 + $0x70] sm:$0xff]
    %v3055 = vld [vmem:[%s2409 + $0x78] sm:$0xff]
    %v3056 = vld [vmem:[%s2409 + $0x80] sm:$0xff]
    %v3057 = vld [vmem:[%s2409 + $0x88] sm:$0xff]
    %v3058 = vld [vmem:[%s2409 + $0x90] sm:$0xff]
    %v3059 = vld [vmem:[%s2409 + $0x98] sm:$0xff]
    %v3060 = vld [vmem:[%s2409 + $0xa0] sm:$0xff]
    %v3061 = vld [vmem:[%s2409 + $0xa8] sm:$0xff]
    %v3062 = vld [vmem:[%s2409 + $0xb0] sm:$0xff]
    %v3063 = vld [vmem:[%s2409 + $0xb8] sm:$0xff]
    %v3064 = vld [vmem:[%s2409 + $0xc0] sm:$0xff]
    %v3065 = vld [vmem:[%s2409 + $0xc8] sm:$0xff]
    %v3066 = vld [vmem:[%s2409 + $0xd0] sm:$0xff]
    %v3067 = vld [vmem:[%s2409 + $0xd8] sm:$0xff]
    %v3068 = vld [vmem:[%s2409 + $0xe0] sm:$0xff]
    %v3069 = vld [vmem:[%s2409 + $0xe8] sm:$0xff]
    %v3070 = vld [vmem:[%s2409 + $0xf0] sm:$0xff]
    %v3071 = vld [vmem:[%s2409 + $0xf8] sm:$0xff]
    %v3072 = vld [vmem:[%s2409 + $0x100] sm:$0xff]
    %v3073 = vld [vmem:[%s2409 + $0x108] sm:$0xff]
    %v3074 = vld [vmem:[%s2409 + $0x110] sm:$0xff]
    %v3075 = vld [vmem:[%s2409 + $0x118] sm:$0xff]
    %v3076 = vld [vmem:[%s2409 + $0x120] sm:$0xff]
    %v3077 = vld [vmem:[%s2409 + $0x128] sm:$0xff]
    %v3078 = vld [vmem:[%s2409 + $0x130] sm:$0xff]
    %v3079 = vld [vmem:[%s2409 + $0x138] sm:$0xff]
    %v3080 = vld [vmem:[%s2409 + $0x140] sm:$0xff]
    %v3081 = vld [vmem:[%s2409 + $0x148] sm:$0xff]
    %v3082 = vld [vmem:[%s2409 + $0x150] sm:$0xff]
    %v3083 = vld [vmem:[%s2409 + $0x158] sm:$0xff]
    %v3084 = vld [vmem:[%s2409 + $0x160] sm:$0xff]
    %v3085 = vld [vmem:[%s2409 + $0x168] sm:$0xff]
    %v3086 = vld [vmem:[%s2409 + $0x170] sm:$0xff]
    %v3087 = vld [vmem:[%s2409 + $0x178] sm:$0xff]
    %3088 = vmatprep.subr.mxu0 %v3041
    %3089 = vmatpush1.msra.mxu0 %v3040
    %3090 = vmatprep.subr.mxu0 %v3044
    %3091 = vmatpush1.msra.mxu0 %v3043
    %3092 = vmatprep.subr.mxu0 %v3047
    %3093 = vmatpush1.msra.mxu0 %v3046
    %3094 = vmatprep.subr.mxu0 %v3050
    %3095 = vmatpush1.msra.mxu0 %v3049
    %3096 = vmatprep.subr.mxu0 %v3053
    %3097 = vmatpush1.msra.mxu0 %v3052
    %3098 = vmatprep.subr.mxu0 %v3056
    %3099 = vmatpush1.msra.mxu0 %v3055
    %3100 = vmatprep.subr.mxu0 %v3059
    %3101 = vmatpush1.msra.mxu0 %v3058
    %3102 = vmatprep.subr.mxu0 %v3062
    %3103 = vmatpush1.msra.mxu0 %v3061
    %3104 = vmatprep.subr.mxu0 %v3065
    %3105 = vmatpush1.msra.mxu0 %v3064
    %3106 = vmatprep.subr.mxu0 %v3068
    %3107 = vmatpush1.msra.mxu0 %v3067
    %3108 = vmatprep.subr.mxu0 %v3071
    %3109 = vmatpush1.msra.mxu0 %v3070
    %3110 = vmatprep.subr.mxu0 %v3074
    %3111 = vmatpush1.msra.mxu0 %v3073
    %3112 = vmatprep.subr.mxu0 %v3077
    %3113 = vmatpush1.msra.mxu0 %v3076
    %3114 = vmatprep.subr.mxu0 %v3080
    %3115 = vmatpush1.msra.mxu0 %v3079
    %3116 = vmatprep.subr.mxu0 %v3083
    %3117 = vmatpush1.msra.mxu0 %v3082
    %3118 = vmatprep.subr.mxu0 %v3086
    %3119 = vmatpush1.msra.mxu0 %v3085
    %3120 = vmatprep.subr.mxu0 0.0
    %3121 = vmatpush1.msra.mxu0 0.0
    %3122 = vmatprep.subr.mxu0 0.0
    %3123 = vmatpush1.msra.mxu0 0.0
    %3124 = vmatprep.subr.mxu0 0.0
    %3125 = vmatpush1.msra.mxu0 0.0
    %3126 = vmatprep.subr.mxu0 0.0
    %3127 = vmatpush1.msra.mxu0 0.0
    %3128 = vmatprep.subr.mxu0 0.0
    %3129 = vmatpush1.msra.mxu0 0.0
    %3130 = vmatprep.subr.mxu0 0.0
    %3131 = vmatpush1.msra.mxu0 0.0
    %3132 = vmatprep.subr.mxu0 0.0
    %3133 = vmatpush1.msra.mxu0 0.0
    %3134 = vmatprep.subr.mxu0 0.0
    %3135 = vmatpush1.msra.mxu0 0.0
    %3136 = vmatprep.subr.mxu0 0.0
    %3137 = vmatpush1.msra.mxu0 0.0
    %3138 = vmatprep.subr.mxu0 0.0
    %3139 = vmatpush1.msra.mxu0 0.0
    %3140 = vmatprep.subr.mxu0 0.0
    %3141 = vmatpush1.msra.mxu0 0.0
    %3142 = vmatprep.subr.mxu0 0.0
    %3143 = vmatpush1.msra.mxu0 0.0
    %3144 = vmatprep.subr.mxu0 0.0
    %3145 = vmatpush1.msra.mxu0 0.0
    %3146 = vmatprep.subr.mxu0 0.0
    %3147 = vmatpush1.msra.mxu0 0.0
    %3148 = vmatprep.subr.mxu0 0.0
    %3149 = vmatpush1.msra.mxu0 0.0
    %3150 = vmatprep.subr.mxu0 0.0
    %3151 = vmatpush1.msra.mxu0 0.0
    %3152 = vmatprep.mubr.f32.mxu0 0.0
    %3153 = vmatmul.mubr.f32.gmra.mrb[0].mxu0 %v3035
    %v3154 = vpop.f32.mrb[0].mxu0
    %v3155 = vadd.f32 0.0, %v3154
    %v3156 = vpop.f32.mrb[0].mxu0
    %v3157 = vadd.f32 0.0, %v3156
    %3158 = vdwg.mxu0
    %3159 = vmatprep.subr.mxu0 0.0
    %3160 = vmatpush1.msra.mxu0 %v3042
    %3161 = vmatprep.subr.mxu0 0.0
    %3162 = vmatpush1.msra.mxu0 %v3045
    %3163 = vmatprep.subr.mxu0 0.0
    %3164 = vmatpush1.msra.mxu0 %v3048
    %3165 = vmatprep.subr.mxu0 0.0
    %3166 = vmatpush1.msra.mxu0 %v3051
    %3167 = vmatprep.subr.mxu0 0.0
    %3168 = vmatpush1.msra.mxu0 %v3054
    %3169 = vmatprep.subr.mxu0 0.0
    %3170 = vmatpush1.msra.mxu0 %v3057
    %3171 = vmatprep.subr.mxu0 0.0
    %3172 = vmatpush1.msra.mxu0 %v3060
    %3173 = vmatprep.subr.mxu0 0.0
    %3174 = vmatpush1.msra.mxu0 %v3063
    %3175 = vmatprep.subr.mxu0 0.0
    %3176 = vmatpush1.msra.mxu0 %v3066
    %3177 = vmatprep.subr.mxu0 0.0
    %3178 = vmatpush1.msra.mxu0 %v3069
    %3179 = vmatprep.subr.mxu0 0.0
    %3180 = vmatpush1.msra.mxu0 %v3072
    %3181 = vmatprep.subr.mxu0 0.0
    %3182 = vmatpush1.msra.mxu0 %v3075
    %3183 = vmatprep.subr.mxu0 0.0
    %3184 = vmatpush1.msra.mxu0 %v3078
    %3185 = vmatprep.subr.mxu0 0.0
    %3186 = vmatpush1.msra.mxu0 %v3081
    %3187 = vmatprep.subr.mxu0 0.0
    %3188 = vmatpush1.msra.mxu0 %v3084
    %3189 = vmatprep.subr.mxu0 0.0
    %3190 = vmatpush1.msra.mxu0 %v3087
    %3191 = vmatprep.subr.mxu0 0.0
    %3192 = vmatpush1.msra.mxu0 0.0
    %3193 = vmatprep.subr.mxu0 0.0
    %3194 = vmatpush1.msra.mxu0 0.0
    %3195 = vmatprep.subr.mxu0 0.0
    %3196 = vmatpush1.msra.mxu0 0.0
    %3197 = vmatprep.subr.mxu0 0.0
    %3198 = vmatpush1.msra.mxu0 0.0
    %3199 = vmatprep.subr.mxu0 0.0
    %3200 = vmatpush1.msra.mxu0 0.0
    %3201 = vmatprep.subr.mxu0 0.0
    %3202 = vmatpush1.msra.mxu0 0.0
    %3203 = vmatprep.subr.mxu0 0.0
    %3204 = vmatpush1.msra.mxu0 0.0
    %3205 = vmatprep.subr.mxu0 0.0
    %3206 = vmatpush1.msra.mxu0 0.0
    %3207 = vmatprep.subr.mxu0 0.0
    %3208 = vmatpush1.msra.mxu0 0.0
    %3209 = vmatprep.subr.mxu0 0.0
    %3210 = vmatpush1.msra.mxu0 0.0
    %3211 = vmatprep.subr.mxu0 0.0
    %3212 = vmatpush1.msra.mxu0 0.0
    %3213 = vmatprep.subr.mxu0 0.0
    %3214 = vmatpush1.msra.mxu0 0.0
    %3215 = vmatprep.subr.mxu0 0.0
    %3216 = vmatpush1.msra.mxu0 0.0
    %3217 = vmatprep.subr.mxu0 0.0
    %3218 = vmatpush1.msra.mxu0 0.0
    %3219 = vmatprep.subr.mxu0 0.0
    %3220 = vmatpush1.msra.mxu0 0.0
    %3221 = vmatprep.subr.mxu0 0.0
    %3222 = vmatpush1.msra.mxu0 0.0
    %3223 = vmatprep.mubr.f32.mxu0 0.0
    %3224 = vmatmul.mubr.f32.gmra.mrb[0].mxu0 %v3035
    %v3225 = vpop.f32.mrb[0].mxu0
    %v3226 = vadd.f32 0.0, %v3225
    %v3227 = vpop.f32.mrb[0].mxu0
    %3228 = vdwg.mxu0
    %v3229 = vadd.f32 %v3037, %v3155
    %v3230 = vmul.f32 %v3229, 0.5
    %v3231 = vtanh.pop %v3230
    %v3232 = vmul.f32 %v3231, 0.5
    %v3233 = vadd.f32 %v3232, 0.5
    %v3234 = vadd.f32 %v3038, %v3157
    %v3235 = vmul.f32 %v3234, 0.5
    %v3236 = vtanh.pop %v3235
    %v3237 = vmul.f32 %v3236, 0.5
    %v3238 = vadd.f32 %v3237, 0.5
    %v3239 = vadd.f32 %v3226, %v2404
    %v3240 = vmul.f32 %v3233, %v3239
    %v3241 = vadd.f32 %v3039, %v3240
    %v3242 = vtanh.pop %v3241
    %v3243 = vsub.f32 %v3035, %v3242
    %v3244 = vmul.f32 %v3238, %v3243
    %v3245 = vadd.f32 %v3242, %v3244
    %3246 = vst [vmem:[%s1223] sm:$0xff] %v3245
    %v3247 = vld [vmem:[%s1227] sm:$0xff]
    %v3248 = vld [vmem:[%s1227 + $0x8] sm:$0xff]
    %v3249 = vld [vmem:[%s1227 + $0x10] sm:$0xff]
    %v3250 = vld [vmem:[%s2409] sm:$0xff]
    %v3251 = vld [vmem:[%s2409 + $0x8] sm:$0xff]
    %v3252 = vld [vmem:[%s2409 + $0x10] sm:$0xff]
    %v3253 = vld [vmem:[%s2409 + $0x18] sm:$0xff]
    %v3254 = vld [vmem:[%s2409 + $0x20] sm:$0xff]
    %v3255 = vld [vmem:[%s2409 + $0x28] sm:$0xff]
    %v3256 = vld [vmem:[%s2409 + $0x30] sm:$0xff]
    %v3257 = vld [vmem:[%s2409 + $0x38] sm:$0xff]
    %v3258 = vld [vmem:[%s2409 + $0x40] sm:$0xff]
    %v3259 = vld [vmem:[%s2409 + $0x48] sm:$0xff]
    %v3260 = vld [vmem:[%s2409 + $0x50] sm:$0xff]
    %v3261 = vld [vmem:[%s2409 + $0x58] sm:$0xff]
    %v3262 = vld [vmem:[%s2409 + $0x60] sm:$0xff]
    %v3263 = vld [vmem:[%s2409 + $0x68] sm:$0xff]
    %v3264 = vld [vmem:[%s2409 + $0x70] sm:$0xff]
    %v3265 = vld [vmem:[%s2409 + $0x78] sm:$0xff]
    %v3266 = vld [vmem:[%s2409 + $0x80] sm:$0xff]
    %v3267 = vld [vmem:[%s2409 + $0x88] sm:$0xff]
    %v3268 = vld [vmem:[%s2409 + $0x90] sm:$0xff]
    %v3269 = vld [vmem:[%s2409 + $0x98] sm:$0xff]
    %v3270 = vld [vmem:[%s2409 + $0xa0] sm:$0xff]
    %v3271 = vld [vmem:[%s2409 + $0xa8] sm:$0xff]
    %v3272 = vld [vmem:[%s2409 + $0xb0] sm:$0xff]
    %v3273 = vld [vmem:[%s2409 + $0xb8] sm:$0xff]
    %v3274 = vld [vmem:[%s2409 + $0xc0] sm:$0xff]
    %v3275 = vld [vmem:[%s2409 + $0xc8] sm:$0xff]
    %v3276 = vld [vmem:[%s2409 + $0xd0] sm:$0xff]
    %v3277 = vld [vmem:[%s2409 + $0xd8] sm:$0xff]
    %v3278 = vld [vmem:[%s2409 + $0xe0] sm:$0xff]
    %v3279 = vld [vmem:[%s2409 + $0xe8] sm:$0xff]
    %v3280 = vld [vmem:[%s2409 + $0xf0] sm:$0xff]
    %v3281 = vld [vmem:[%s2409 + $0xf8] sm:$0xff]
    %v3282 = vld [vmem:[%s2409 + $0x100] sm:$0xff]
    %v3283 = vld [vmem:[%s2409 + $0x108] sm:$0xff]
    %v3284 = vld [vmem:[%s2409 + $0x110] sm:$0xff]
    %v3285 = vld [vmem:[%s2409 + $0x118] sm:$0xff]
    %v3286 = vld [vmem:[%s2409 + $0x120] sm:$0xff]
    %v3287 = vld [vmem:[%s2409 + $0x128] sm:$0xff]
    %v3288 = vld [vmem:[%s2409 + $0x130] sm:$0xff]
    %v3289 = vld [vmem:[%s2409 + $0x138] sm:$0xff]
    %v3290 = vld [vmem:[%s2409 + $0x140] sm:$0xff]
    %v3291 = vld [vmem:[%s2409 + $0x148] sm:$0xff]
    %v3292 = vld [vmem:[%s2409 + $0x150] sm:$0xff]
    %v3293 = vld [vmem:[%s2409 + $0x158] sm:$0xff]
    %v3294 = vld [vmem:[%s2409 + $0x160] sm:$0xff]
    %v3295 = vld [vmem:[%s2409 + $0x168] sm:$0xff]
    %v3296 = vld [vmem:[%s2409 + $0x170] sm:$0xff]
    %v3297 = vld [vmem:[%s2409 + $0x178] sm:$0xff]
    %3298 = vmatprep.subr.mxu0 %v3251
    %3299 = vmatpush1.msra.mxu0 %v3250
    %3300 = vmatprep.subr.mxu0 %v3254
    %3301 = vmatpush1.msra.mxu0 %v3253
    %3302 = vmatprep.subr.mxu0 %v3257
    %3303 = vmatpush1.msra.mxu0 %v3256
    %3304 = vmatprep.subr.mxu0 %v3260
    %3305 = vmatpush1.msra.mxu0 %v3259
    %3306 = vmatprep.subr.mxu0 %v3263
    %3307 = vmatpush1.msra.mxu0 %v3262
    %3308 = vmatprep.subr.mxu0 %v3266
    %3309 = vmatpush1.msra.mxu0 %v3265
    %3310 = vmatprep.subr.mxu0 %v3269
    %3311 = vmatpush1.msra.mxu0 %v3268
    %3312 = vmatprep.subr.mxu0 %v3272
    %3313 = vmatpush1.msra.mxu0 %v3271
    %3314 = vmatprep.subr.mxu0 %v3275
    %3315 = vmatpush1.msra.mxu0 %v3274
    %3316 = vmatprep.subr.mxu0 %v3278
    %3317 = vmatpush1.msra.mxu0 %v3277
    %3318 = vmatprep.subr.mxu0 %v3281
    %3319 = vmatpush1.msra.mxu0 %v3280
    %3320 = vmatprep.subr.mxu0 %v3284
    %3321 = vmatpush1.msra.mxu0 %v3283
    %3322 = vmatprep.subr.mxu0 %v3287
    %3323 = vmatpush1.msra.mxu0 %v3286
    %3324 = vmatprep.subr.mxu0 %v3290
    %3325 = vmatpush1.msra.mxu0 %v3289
    %3326 = vmatprep.subr.mxu0 %v3293
    %3327 = vmatpush1.msra.mxu0 %v3292
    %3328 = vmatprep.subr.mxu0 %v3296
    %3329 = vmatpush1.msra.mxu0 %v3295
    %3330 = vmatprep.subr.mxu0 0.0
    %3331 = vmatpush1.msra.mxu0 0.0
    %3332 = vmatprep.subr.mxu0 0.0
    %3333 = vmatpush1.msra.mxu0 0.0
    %3334 = vmatprep.subr.mxu0 0.0
    %3335 = vmatpush1.msra.mxu0 0.0
    %3336 = vmatprep.subr.mxu0 0.0
    %3337 = vmatpush1.msra.mxu0 0.0
    %3338 = vmatprep.subr.mxu0 0.0
    %3339 = vmatpush1.msra.mxu0 0.0
    %3340 = vmatprep.subr.mxu0 0.0
    %3341 = vmatpush1.msra.mxu0 0.0
    %3342 = vmatprep.subr.mxu0 0.0
    %3343 = vmatpush1.msra.mxu0 0.0
    %3344 = vmatprep.subr.mxu0 0.0
    %3345 = vmatpush1.msra.mxu0 0.0
    %3346 = vmatprep.subr.mxu0 0.0
    %3347 = vmatpush1.msra.mxu0 0.0
    %3348 = vmatprep.subr.mxu0 0.0
    %3349 = vmatpush1.msra.mxu0 0.0
    %3350 = vmatprep.subr.mxu0 0.0
    %3351 = vmatpush1.msra.mxu0 0.0
    %3352 = vmatprep.subr.mxu0 0.0
    %3353 = vmatpush1.msra.mxu0 0.0
    %3354 = vmatprep.subr.mxu0 0.0
    %3355 = vmatpush1.msra.mxu0 0.0
    %3356 = vmatprep.subr.mxu0 0.0
    %3357 = vmatpush1.msra.mxu0 0.0
    %3358 = vmatprep.subr.mxu0 0.0
    %3359 = vmatpush1.msra.mxu0 0.0
    %3360 = vmatprep.subr.mxu0 0.0
    %3361 = vmatpush1.msra.mxu0 0.0
    %3362 = vmatprep.mubr.f32.mxu0 0.0
    %3363 = vmatmul.mubr.f32.gmra.mrb[0].mxu0 %v3245
    %v3364 = vpop.f32.mrb[0].mxu0
    %v3365 = vadd.f32 0.0, %v3364
    %v3366 = vpop.f32.mrb[0].mxu0
    %v3367 = vadd.f32 0.0, %v3366
    %3368 = vdwg.mxu0
    %3369 = vmatprep.subr.mxu0 0.0
    %3370 = vmatpush1.msra.mxu0 %v3252
    %3371 = vmatprep.subr.mxu0 0.0
    %3372 = vmatpush1.msra.mxu0 %v3255
    %3373 = vmatprep.subr.mxu0 0.0
    %3374 = vmatpush1.msra.mxu0 %v3258
    %3375 = vmatprep.subr.mxu0 0.0
    %3376 = vmatpush1.msra.mxu0 %v3261
    %3377 = vmatprep.subr.mxu0 0.0
    %3378 = vmatpush1.msra.mxu0 %v3264
    %3379 = vmatprep.subr.mxu0 0.0
    %3380 = vmatpush1.msra.mxu0 %v3267
    %3381 = vmatprep.subr.mxu0 0.0
    %3382 = vmatpush1.msra.mxu0 %v3270
    %3383 = vmatprep.subr.mxu0 0.0
    %3384 = vmatpush1.msra.mxu0 %v3273
    %3385 = vmatprep.subr.mxu0 0.0
    %3386 = vmatpush1.msra.mxu0 %v3276
    %3387 = vmatprep.subr.mxu0 0.0
    %3388 = vmatpush1.msra.mxu0 %v3279
    %3389 = vmatprep.subr.mxu0 0.0
    %3390 = vmatpush1.msra.mxu0 %v3282
    %3391 = vmatprep.subr.mxu0 0.0
    %3392 = vmatpush1.msra.mxu0 %v3285
    %3393 = vmatprep.subr.mxu0 0.0
    %3394 = vmatpush1.msra.mxu0 %v3288
    %3395 = vmatprep.subr.mxu0 0.0
    %3396 = vmatpush1.msra.mxu0 %v3291
    %3397 = vmatprep.subr.mxu0 0.0
    %3398 = vmatpush1.msra.mxu0 %v3294
    %3399 = vmatprep.subr.mxu0 0.0
    %3400 = vmatpush1.msra.mxu0 %v3297
    %3401 = vmatprep.subr.mxu0 0.0
    %3402 = vmatpush1.msra.mxu0 0.0
    %3403 = vmatprep.subr.mxu0 0.0
    %3404 = vmatpush1.msra.mxu0 0.0
    %3405 = vmatprep.subr.mxu0 0.0
    %3406 = vmatpush1.msra.mxu0 0.0
    %3407 = vmatprep.subr.mxu0 0.0
    %3408 = vmatpush1.msra.mxu0 0.0
    %3409 = vmatprep.subr.mxu0 0.0
    %3410 = vmatpush1.msra.mxu0 0.0
    %3411 = vmatprep.subr.mxu0 0.0
    %3412 = vmatpush1.msra.mxu0 0.0
    %3413 = vmatprep.subr.mxu0 0.0
    %3414 = vmatpush1.msra.mxu0 0.0
    %3415 = vmatprep.subr.mxu0 0.0
    %3416 = vmatpush1.msra.mxu0 0.0
    %3417 = vmatprep.subr.mxu0 0.0
    %3418 = vmatpush1.msra.mxu0 0.0
    %3419 = vmatprep.subr.mxu0 0.0
    %3420 = vmatpush1.msra.mxu0 0.0
    %3421 = vmatprep.subr.mxu0 0.0
    %3422 = vmatpush1.msra.mxu0 0.0
    %3423 = vmatprep.subr.mxu0 0.0
    %3424 = vmatpush1.msra.mxu0 0.0
    %3425 = vmatprep.subr.mxu0 0.0
    %3426 = vmatpush1.msra.mxu0 0.0
    %3427 = vmatprep.subr.mxu0 0.0
    %3428 = vmatpush1.msra.mxu0 0.0
    %3429 = vmatprep.subr.mxu0 0.0
    %3430 = vmatpush1.msra.mxu0 0.0
    %3431 = vmatprep.subr.mxu0 0.0
    %3432 = vmatpush1.msra.mxu0 0.0
    %3433 = vmatprep.mubr.f32.mxu0 0.0
    %3434 = vmatmul.mubr.f32.gmra.mrb[0].mxu0 %v3245
    %v3435 = vpop.f32.mrb[0].mxu0
    %v3436 = vadd.f32 0.0, %v3435
    %v3437 = vpop.f32.mrb[0].mxu0
    %3438 = vdwg.mxu0
    %v3439 = vadd.f32 %v3247, %v3365
    %v3440 = vmul.f32 %v3439, 0.5
    %v3441 = vtanh.pop %v3440
    %v3442 = vmul.f32 %v3441, 0.5
    %v3443 = vadd.f32 %v3442, 0.5
    %v3444 = vadd.f32 %v3248, %v3367
    %v3445 = vmul.f32 %v3444, 0.5
    %v3446 = vtanh.pop %v3445
    %v3447 = vmul.f32 %v3446, 0.5
    %v3448 = vadd.f32 %v3447, 0.5
    %v3449 = vadd.f32 %v3436, %v2404
    %v3450 = vmul.f32 %v3443, %v3449
    %v3451 = vadd.f32 %v3249, %v3450
    %v3452 = vtanh.pop %v3451
    %v3453 = vsub.f32 %v3245, %v3452
    %v3454 = vmul.f32 %v3448, %v3453
    %v3455 = vadd.f32 %v3452, %v3454
    %3456 = vst [vmem:[%s1437] sm:$0xff] %v3455
    %v3457 = vld [vmem:[%s1441] sm:$0xff]
    %v3458 = vld [vmem:[%s1441 + $0x8] sm:$0xff]
    %v3459 = vld [vmem:[%s1441 + $0x10] sm:$0xff]
    %v3460 = vld [vmem:[%s2409] sm:$0xff]
    %v3461 = vld [vmem:[%s2409 + $0x8] sm:$0xff]
    %v3462 = vld [vmem:[%s2409 + $0x10] sm:$0xff]
    %v3463 = vld [vmem:[%s2409 + $0x18] sm:$0xff]
    %v3464 = vld [vmem:[%s2409 + $0x20] sm:$0xff]
    %v3465 = vld [vmem:[%s2409 + $0x28] sm:$0xff]
    %v3466 = vld [vmem:[%s2409 + $0x30] sm:$0xff]
    %v3467 = vld [vmem:[%s2409 + $0x38] sm:$0xff]
    %v3468 = vld [vmem:[%s2409 + $0x40] sm:$0xff]
    %v3469 = vld [vmem:[%s2409 + $0x48] sm:$0xff]
    %v3470 = vld [vmem:[%s2409 + $0x50] sm:$0xff]
    %v3471 = vld [vmem:[%s2409 + $0x58] sm:$0xff]
    %v3472 = vld [vmem:[%s2409 + $0x60] sm:$0xff]
    %v3473 = vld [vmem:[%s2409 + $0x68] sm:$0xff]
    %v3474 = vld [vmem:[%s2409 + $0x70] sm:$0xff]
    %v3475 = vld [vmem:[%s2409 + $0x78] sm:$0xff]
    %v3476 = vld [vmem:[%s2409 + $0x80] sm:$0xff]
    %v3477 = vld [vmem:[%s2409 + $0x88] sm:$0xff]
    %v3478 = vld [vmem:[%s2409 + $0x90] sm:$0xff]
    %v3479 = vld [vmem:[%s2409 + $0x98] sm:$0xff]
    %v3480 = vld [vmem:[%s2409 + $0xa0] sm:$0xff]
    %v3481 = vld [vmem:[%s2409 + $0xa8] sm:$0xff]
    %v3482 = vld [vmem:[%s2409 + $0xb0] sm:$0xff]
    %v3483 = vld [vmem:[%s2409 + $0xb8] sm:$0xff]
    %v3484 = vld [vmem:[%s2409 + $0xc0] sm:$0xff]
    %v3485 = vld [vmem:[%s2409 + $0xc8] sm:$0xff]
    %v3486 = vld [vmem:[%s2409 + $0xd0] sm:$0xff]
    %v3487 = vld [vmem:[%s2409 + $0xd8] sm:$0xff]
    %v3488 = vld [vmem:[%s2409 + $0xe0] sm:$0xff]
    %v3489 = vld [vmem:[%s2409 + $0xe8] sm:$0xff]
    %v3490 = vld [vmem:[%s2409 + $0xf0] sm:$0xff]
    %v3491 = vld [vmem:[%s2409 + $0xf8] sm:$0xff]
    %v3492 = vld [vmem:[%s2409 + $0x100] sm:$0xff]
    %v3493 = vld [vmem:[%s2409 + $0x108] sm:$0xff]
    %v3494 = vld [vmem:[%s2409 + $0x110] sm:$0xff]
    %v3495 = vld [vmem:[%s2409 + $0x118] sm:$0xff]
    %v3496 = vld [vmem:[%s2409 + $0x120] sm:$0xff]
    %v3497 = vld [vmem:[%s2409 + $0x128] sm:$0xff]
    %v3498 = vld [vmem:[%s2409 + $0x130] sm:$0xff]
    %v3499 = vld [vmem:[%s2409 + $0x138] sm:$0xff]
    %v3500 = vld [vmem:[%s2409 + $0x140] sm:$0xff]
    %v3501 = vld [vmem:[%s2409 + $0x148] sm:$0xff]
    %v3502 = vld [vmem:[%s2409 + $0x150] sm:$0xff]
    %v3503 = vld [vmem:[%s2409 + $0x158] sm:$0xff]
    %v3504 = vld [vmem:[%s2409 + $0x160] sm:$0xff]
    %v3505 = vld [vmem:[%s2409 + $0x168] sm:$0xff]
    %v3506 = vld [vmem:[%s2409 + $0x170] sm:$0xff]
    %v3507 = vld [vmem:[%s2409 + $0x178] sm:$0xff]
    %3508 = vmatprep.subr.mxu0 %v3461
    %3509 = vmatpush1.msra.mxu0 %v3460
    %3510 = vmatprep.subr.mxu0 %v3464
    %3511 = vmatpush1.msra.mxu0 %v3463
    %3512 = vmatprep.subr.mxu0 %v3467
    %3513 = vmatpush1.msra.mxu0 %v3466
    %3514 = vmatprep.subr.mxu0 %v3470
    %3515 = vmatpush1.msra.mxu0 %v3469
    %3516 = vmatprep.subr.mxu0 %v3473
    %3517 = vmatpush1.msra.mxu0 %v3472
    %3518 = vmatprep.subr.mxu0 %v3476
    %3519 = vmatpush1.msra.mxu0 %v3475
    %3520 = vmatprep.subr.mxu0 %v3479
    %3521 = vmatpush1.msra.mxu0 %v3478
    %3522 = vmatprep.subr.mxu0 %v3482
    %3523 = vmatpush1.msra.mxu0 %v3481
    %3524 = vmatprep.subr.mxu0 %v3485
    %3525 = vmatpush1.msra.mxu0 %v3484
    %3526 = vmatprep.subr.mxu0 %v3488
    %3527 = vmatpush1.msra.mxu0 %v3487
    %3528 = vmatprep.subr.mxu0 %v3491
    %3529 = vmatpush1.msra.mxu0 %v3490
    %3530 = vmatprep.subr.mxu0 %v3494
    %3531 = vmatpush1.msra.mxu0 %v3493
    %3532 = vmatprep.subr.mxu0 %v3497
    %3533 = vmatpush1.msra.mxu0 %v3496
    %3534 = vmatprep.subr.mxu0 %v3500
    %3535 = vmatpush1.msra.mxu0 %v3499
    %3536 = vmatprep.subr.mxu0 %v3503
    %3537 = vmatpush1.msra.mxu0 %v3502
    %3538 = vmatprep.subr.mxu0 %v3506
    %3539 = vmatpush1.msra.mxu0 %v3505
    %3540 = vmatprep.subr.mxu0 0.0
    %3541 = vmatpush1.msra.mxu0 0.0
    %3542 = vmatprep.subr.mxu0 0.0
    %3543 = vmatpush1.msra.mxu0 0.0
    %3544 = vmatprep.subr.mxu0 0.0
    %3545 = vmatpush1.msra.mxu0 0.0
    %3546 = vmatprep.subr.mxu0 0.0
    %3547 = vmatpush1.msra.mxu0 0.0
    %3548 = vmatprep.subr.mxu0 0.0
    %3549 = vmatpush1.msra.mxu0 0.0
    %3550 = vmatprep.subr.mxu0 0.0
    %3551 = vmatpush1.msra.mxu0 0.0
    %3552 = vmatprep.subr.mxu0 0.0
    %3553 = vmatpush1.msra.mxu0 0.0
    %3554 = vmatprep.subr.mxu0 0.0
    %3555 = vmatpush1.msra.mxu0 0.0
    %3556 = vmatprep.subr.mxu0 0.0
    %3557 = vmatpush1.msra.mxu0 0.0
    %3558 = vmatprep.subr.mxu0 0.0
    %3559 = vmatpush1.msra.mxu0 0.0
    %3560 = vmatprep.subr.mxu0 0.0
    %3561 = vmatpush1.msra.mxu0 0.0
    %3562 = vmatprep.subr.mxu0 0.0
    %3563 = vmatpush1.msra.mxu0 0.0
    %3564 = vmatprep.subr.mxu0 0.0
    %3565 = vmatpush1.msra.mxu0 0.0
    %3566 = vmatprep.subr.mxu0 0.0
    %3567 = vmatpush1.msra.mxu0 0.0
    %3568 = vmatprep.subr.mxu0 0.0
    %3569 = vmatpush1.msra.mxu0 0.0
    %3570 = vmatprep.subr.mxu0 0.0
    %3571 = vmatpush1.msra.mxu0 0.0
    %3572 = vmatprep.mubr.f32.mxu0 0.0
    %3573 = vmatmul.mubr.f32.gmra.mrb[0].mxu0 %v3455
    %v3574 = vpop.f32.mrb[0].mxu0
    %v3575 = vadd.f32 0.0, %v3574
    %v3576 = vpop.f32.mrb[0].mxu0
    %v3577 = vadd.f32 0.0, %v3576
    %3578 = vdwg.mxu0
    %3579 = vmatprep.subr.mxu0 0.0
    %3580 = vmatpush1.msra.mxu0 %v3462
    %3581 = vmatprep.subr.mxu0 0.0
    %3582 = vmatpush1.msra.mxu0 %v3465
    %3583 = vmatprep.subr.mxu0 0.0
    %3584 = vmatpush1.msra.mxu0 %v3468
    %3585 = vmatprep.subr.mxu0 0.0
    %3586 = vmatpush1.msra.mxu0 %v3471
    %3587 = vmatprep.subr.mxu0 0.0
    %3588 = vmatpush1.msra.mxu0 %v3474
    %3589 = vmatprep.subr.mxu0 0.0
    %3590 = vmatpush1.msra.mxu0 %v3477
    %3591 = vmatprep.subr.mxu0 0.0
    %3592 = vmatpush1.msra.mxu0 %v3480
    %3593 = vmatprep.subr.mxu0 0.0
    %3594 = vmatpush1.msra.mxu0 %v3483
    %3595 = vmatprep.subr.mxu0 0.0
    %3596 = vmatpush1.msra.mxu0 %v3486
    %3597 = vmatprep.subr.mxu0 0.0
    %3598 = vmatpush1.msra.mxu0 %v3489
    %3599 = vmatprep.subr.mxu0 0.0
    %3600 = vmatpush1.msra.mxu0 %v3492
    %3601 = vmatprep.subr.mxu0 0.0
    %3602 = vmatpush1.msra.mxu0 %v3495
    %3603 = vmatprep.subr.mxu0 0.0
    %3604 = vmatpush1.msra.mxu0 %v3498
    %3605 = vmatprep.subr.mxu0 0.0
    %3606 = vmatpush1.msra.mxu0 %v3501
    %3607 = vmatprep.subr.mxu0 0.0
    %3608 = vmatpush1.msra.mxu0 %v3504
    %3609 = vmatprep.subr.mxu0 0.0
    %3610 = vmatpush1.msra.mxu0 %v3507
    %3611 = vmatprep.subr.mxu0 0.0
    %3612 = vmatpush1.msra.mxu0 0.0
    %3613 = vmatprep.subr.mxu0 0.0
    %3614 = vmatpush1.msra.mxu0 0.0
    %3615 = vmatprep.subr.mxu0 0.0
    %3616 = vmatpush1.msra.mxu0 0.0
    %3617 = vmatprep.subr.mxu0 0.0
    %3618 = vmatpush1.msra.mxu0 0.0
    %3619 = vmatprep.subr.mxu0 0.0
    %3620 = vmatpush1.msra.mxu0 0.0
    %3621 = vmatprep.subr.mxu0 0.0
    %3622 = vmatpush1.msra.mxu0 0.0
    %3623 = vmatprep.subr.mxu0 0.0
    %3624 = vmatpush1.msra.mxu0 0.0
    %3625 = vmatprep.subr.mxu0 0.0
    %3626 = vmatpush1.msra.mxu0 0.0
    %3627 = vmatprep.subr.mxu0 0.0
    %3628 = vmatpush1.msra.mxu0 0.0
    %3629 = vmatprep.subr.mxu0 0.0
    %3630 = vmatpush1.msra.mxu0 0.0
    %3631 = vmatprep.subr.mxu0 0.0
    %3632 = vmatpush1.msra.mxu0 0.0
    %3633 = vmatprep.subr.mxu0 0.0
    %3634 = vmatpush1.msra.mxu0 0.0
    %3635 = vmatprep.subr.mxu0 0.0
    %3636 = vmatpush1.msra.mxu0 0.0
    %3637 = vmatprep.subr.mxu0 0.0
    %3638 = vmatpush1.msra.mxu0 0.0
    %3639 = vmatprep.subr.mxu0 0.0
    %3640 = vmatpush1.msra.mxu0 0.0
    %3641 = vmatprep.subr.mxu0 0.0
    %3642 = vmatpush1.msra.mxu0 0.0
    %3643 = vmatprep.mubr.f32.mxu0 0.0
    %3644 = vmatmul.mubr.f32.gmra.mrb[0].mxu0 %v3455
    %v3645 = vpop.f32.mrb[0].mxu0
    %v3646 = vadd.f32 0.0, %v3645
    %v3647 = vpop.f32.mrb[0].mxu0
    %3648 = vdwg.mxu0
    %v3649 = vadd.f32 %v3457, %v3575
    %v3650 = vmul.f32 %v3649, 0.5
    %v3651 = vtanh.pop %v3650
    %v3652 = vmul.f32 %v3651, 0.5
    %v3653 = vadd.f32 %v3652, 0.5
    %v3654 = vadd.f32 %v3458, %v3577
    %v3655 = vmul.f32 %v3654, 0.5
    %v3656 = vtanh.pop %v3655
    %v3657 = vmul.f32 %v3656, 0.5
    %v3658 = vadd.f32 %v3657, 0.5
    %v3659 = vadd.f32 %v3646, %v2404
    %v3660 = vmul.f32 %v3653, %v3659
    %v3661 = vadd.f32 %v3459, %v3660
    %v3662 = vtanh.pop %v3661
    %v3663 = vsub.f32 %v3455, %v3662
    %v3664 = vmul.f32 %v3658, %v3663
    %v3665 = vadd.f32 %v3662, %v3664
    %3666 = vst [vmem:[%s1651] sm:$0xff] %v3665
    %v3667 = vld [vmem:[%s1655] sm:$0xff]
    %v3668 = vld [vmem:[%s1655 + $0x8] sm:$0xff]
    %v3669 = vld [vmem:[%s1655 + $0x10] sm:$0xff]
    %v3670 = vld [vmem:[%s2409] sm:$0xff]
    %v3671 = vld [vmem:[%s2409 + $0x8] sm:$0xff]
    %v3672 = vld [vmem:[%s2409 + $0x10] sm:$0xff]
    %v3673 = vld [vmem:[%s2409 + $0x18] sm:$0xff]
    %v3674 = vld [vmem:[%s2409 + $0x20] sm:$0xff]
    %v3675 = vld [vmem:[%s2409 + $0x28] sm:$0xff]
    %v3676 = vld [vmem:[%s2409 + $0x30] sm:$0xff]
    %v3677 = vld [vmem:[%s2409 + $0x38] sm:$0xff]
    %v3678 = vld [vmem:[%s2409 + $0x40] sm:$0xff]
    %v3679 = vld [vmem:[%s2409 + $0x48] sm:$0xff]
    %v3680 = vld [vmem:[%s2409 + $0x50] sm:$0xff]
    %v3681 = vld [vmem:[%s2409 + $0x58] sm:$0xff]
    %v3682 = vld [vmem:[%s2409 + $0x60] sm:$0xff]
    %v3683 = vld [vmem:[%s2409 + $0x68] sm:$0xff]
    %v3684 = vld [vmem:[%s2409 + $0x70] sm:$0xff]
    %v3685 = vld [vmem:[%s2409 + $0x78] sm:$0xff]
    %v3686 = vld [vmem:[%s2409 + $0x80] sm:$0xff]
    %v3687 = vld [vmem:[%s2409 + $0x88] sm:$0xff]
    %v3688 = vld [vmem:[%s2409 + $0x90] sm:$0xff]
    %v3689 = vld [vmem:[%s2409 + $0x98] sm:$0xff]
    %v3690 = vld [vmem:[%s2409 + $0xa0] sm:$0xff]
    %v3691 = vld [vmem:[%s2409 + $0xa8] sm:$0xff]
    %v3692 = vld [vmem:[%s2409 + $0xb0] sm:$0xff]
    %v3693 = vld [vmem:[%s2409 + $0xb8] sm:$0xff]
    %v3694 = vld [vmem:[%s2409 + $0xc0] sm:$0xff]
    %v3695 = vld [vmem:[%s2409 + $0xc8] sm:$0xff]
    %v3696 = vld [vmem:[%s2409 + $0xd0] sm:$0xff]
    %v3697 = vld [vmem:[%s2409 + $0xd8] sm:$0xff]
    %v3698 = vld [vmem:[%s2409 + $0xe0] sm:$0xff]
    %v3699 = vld [vmem:[%s2409 + $0xe8] sm:$0xff]
    %v3700 = vld [vmem:[%s2409 + $0xf0] sm:$0xff]
    %v3701 = vld [vmem:[%s2409 + $0xf8] sm:$0xff]
    %v3702 = vld [vmem:[%s2409 + $0x100] sm:$0xff]
    %v3703 = vld [vmem:[%s2409 + $0x108] sm:$0xff]
    %v3704 = vld [vmem:[%s2409 + $0x110] sm:$0xff]
    %v3705 = vld [vmem:[%s2409 + $0x118] sm:$0xff]
    %v3706 = vld [vmem:[%s2409 + $0x120] sm:$0xff]
    %v3707 = vld [vmem:[%s2409 + $0x128] sm:$0xff]
    %v3708 = vld [vmem:[%s2409 + $0x130] sm:$0xff]
    %v3709 = vld [vmem:[%s2409 + $0x138] sm:$0xff]
    %v3710 = vld [vmem:[%s2409 + $0x140] sm:$0xff]
    %v3711 = vld [vmem:[%s2409 + $0x148] sm:$0xff]
    %v3712 = vld [vmem:[%s2409 + $0x150] sm:$0xff]
    %v3713 = vld [vmem:[%s2409 + $0x158] sm:$0xff]
    %v3714 = vld [vmem:[%s2409 + $0x160] sm:$0xff]
    %v3715 = vld [vmem:[%s2409 + $0x168] sm:$0xff]
    %v3716 = vld [vmem:[%s2409 + $0x170] sm:$0xff]
    %v3717 = vld [vmem:[%s2409 + $0x178] sm:$0xff]
    %3718 = vmatprep.subr.mxu0 %v3671
    %3719 = vmatpush1.msra.mxu0 %v3670
    %3720 = vmatprep.subr.mxu0 %v3674
    %3721 = vmatpush1.msra.mxu0 %v3673
    %3722 = vmatprep.subr.mxu0 %v3677
    %3723 = vmatpush1.msra.mxu0 %v3676
    %3724 = vmatprep.subr.mxu0 %v3680
    %3725 = vmatpush1.msra.mxu0 %v3679
    %3726 = vmatprep.subr.mxu0 %v3683
    %3727 = vmatpush1.msra.mxu0 %v3682
    %3728 = vmatprep.subr.mxu0 %v3686
    %3729 = vmatpush1.msra.mxu0 %v3685
    %3730 = vmatprep.subr.mxu0 %v3689
    %3731 = vmatpush1.msra.mxu0 %v3688
    %3732 = vmatprep.subr.mxu0 %v3692
    %3733 = vmatpush1.msra.mxu0 %v3691
    %3734 = vmatprep.subr.mxu0 %v3695
    %3735 = vmatpush1.msra.mxu0 %v3694
    %3736 = vmatprep.subr.mxu0 %v3698
    %3737 = vmatpush1.msra.mxu0 %v3697
    %3738 = vmatprep.subr.mxu0 %v3701
    %3739 = vmatpush1.msra.mxu0 %v3700
    %3740 = vmatprep.subr.mxu0 %v3704
    %3741 = vmatpush1.msra.mxu0 %v3703
    %3742 = vmatprep.subr.mxu0 %v3707
    %3743 = vmatpush1.msra.mxu0 %v3706
    %3744 = vmatprep.subr.mxu0 %v3710
    %3745 = vmatpush1.msra.mxu0 %v3709
    %3746 = vmatprep.subr.mxu0 %v3713
    %3747 = vmatpush1.msra.mxu0 %v3712
    %3748 = vmatprep.subr.mxu0 %v3716
    %3749 = vmatpush1.msra.mxu0 %v3715
    %3750 = vmatprep.subr.mxu0 0.0
    %3751 = vmatpush1.msra.mxu0 0.0
    %3752 = vmatprep.subr.mxu0 0.0
    %3753 = vmatpush1.msra.mxu0 0.0
    %3754 = vmatprep.subr.mxu0 0.0
    %3755 = vmatpush1.msra.mxu0 0.0
    %3756 = vmatprep.subr.mxu0 0.0
    %3757 = vmatpush1.msra.mxu0 0.0
    %3758 = vmatprep.subr.mxu0 0.0
    %3759 = vmatpush1.msra.mxu0 0.0
    %3760 = vmatprep.subr.mxu0 0.0
    %3761 = vmatpush1.msra.mxu0 0.0
    %3762 = vmatprep.subr.mxu0 0.0
    %3763 = vmatpush1.msra.mxu0 0.0
    %3764 = vmatprep.subr.mxu0 0.0
    %3765 = vmatpush1.msra.mxu0 0.0
    %3766 = vmatprep.subr.mxu0 0.0
    %3767 = vmatpush1.msra.mxu0 0.0
    %3768 = vmatprep.subr.mxu0 0.0
    %3769 = vmatpush1.msra.mxu0 0.0
    %3770 = vmatprep.subr.mxu0 0.0
    %3771 = vmatpush1.msra.mxu0 0.0
    %3772 = vmatprep.subr.mxu0 0.0
    %3773 = vmatpush1.msra.mxu0 0.0
    %3774 = vmatprep.subr.mxu0 0.0
    %3775 = vmatpush1.msra.mxu0 0.0
    %3776 = vmatprep.subr.mxu0 0.0
    %3777 = vmatpush1.msra.mxu0 0.0
    %3778 = vmatprep.subr.mxu0 0.0
    %3779 = vmatpush1.msra.mxu0 0.0
    %3780 = vmatprep.subr.mxu0 0.0
    %3781 = vmatpush1.msra.mxu0 0.0
    %3782 = vmatprep.mubr.f32.mxu0 0.0
    %3783 = vmatmul.mubr.f32.gmra.mrb[0].mxu0 %v3665
    %v3784 = vpop.f32.mrb[0].mxu0
    %v3785 = vadd.f32 0.0, %v3784
    %v3786 = vpop.f32.mrb[0].mxu0
    %v3787 = vadd.f32 0.0, %v3786
    %3788 = vdwg.mxu0
    %3789 = vmatprep.subr.mxu0 0.0
    %3790 = vmatpush1.msra.mxu0 %v3672
    %3791 = vmatprep.subr.mxu0 0.0
    %3792 = vmatpush1.msra.mxu0 %v3675
    %3793 = vmatprep.subr.mxu0 0.0
    %3794 = vmatpush1.msra.mxu0 %v3678
    %3795 = vmatprep.subr.mxu0 0.0
    %3796 = vmatpush1.msra.mxu0 %v3681
    %3797 = vmatprep.subr.mxu0 0.0
    %3798 = vmatpush1.msra.mxu0 %v3684
    %3799 = vmatprep.subr.mxu0 0.0
    %3800 = vmatpush1.msra.mxu0 %v3687
    %3801 = vmatprep.subr.mxu0 0.0
    %3802 = vmatpush1.msra.mxu0 %v3690
    %3803 = vmatprep.subr.mxu0 0.0
    %3804 = vmatpush1.msra.mxu0 %v3693
    %3805 = vmatprep.subr.mxu0 0.0
    %3806 = vmatpush1.msra.mxu0 %v3696
    %3807 = vmatprep.subr.mxu0 0.0
    %3808 = vmatpush1.msra.mxu0 %v3699
    %3809 = vmatprep.subr.mxu0 0.0
    %3810 = vmatpush1.msra.mxu0 %v3702
    %3811 = vmatprep.subr.mxu0 0.0
    %3812 = vmatpush1.msra.mxu0 %v3705
    %3813 = vmatprep.subr.mxu0 0.0
    %3814 = vmatpush1.msra.mxu0 %v3708
    %3815 = vmatprep.subr.mxu0 0.0
    %3816 = vmatpush1.msra.mxu0 %v3711
    %3817 = vmatprep.subr.mxu0 0.0
    %3818 = vmatpush1.msra.mxu0 %v3714
    %3819 = vmatprep.subr.mxu0 0.0
    %3820 = vmatpush1.msra.mxu0 %v3717
    %3821 = vmatprep.subr.mxu0 0.0
    %3822 = vmatpush1.msra.mxu0 0.0
    %3823 = vmatprep.subr.mxu0 0.0
    %3824 = vmatpush1.msra.mxu0 0.0
    %3825 = vmatprep.subr.mxu0 0.0
    %3826 = vmatpush1.msra.mxu0 0.0
    %3827 = vmatprep.subr.mxu0 0.0
    %3828 = vmatpush1.msra.mxu0 0.0
    %3829 = vmatprep.subr.mxu0 0.0
    %3830 = vmatpush1.msra.mxu0 0.0
    %3831 = vmatprep.subr.mxu0 0.0
    %3832 = vmatpush1.msra.mxu0 0.0
    %3833 = vmatprep.subr.mxu0 0.0
    %3834 = vmatpush1.msra.mxu0 0.0
    %3835 = vmatprep.subr.mxu0 0.0
    %3836 = vmatpush1.msra.mxu0 0.0
    %3837 = vmatprep.subr.mxu0 0.0
    %3838 = vmatpush1.msra.mxu0 0.0
    %3839 = vmatprep.subr.mxu0 0.0
    %3840 = vmatpush1.msra.mxu0 0.0
    %3841 = vmatprep.subr.mxu0 0.0
    %3842 = vmatpush1.msra.mxu0 0.0
    %3843 = vmatprep.subr.mxu0 0.0
    %3844 = vmatpush1.msra.mxu0 0.0
    %3845 = vmatprep.subr.mxu0 0.0
    %3846 = vmatpush1.msra.mxu0 0.0
    %3847 = vmatprep.subr.mxu0 0.0
    %3848 = vmatpush1.msra.mxu0 0.0
    %3849 = vmatprep.subr.mxu0 0.0
    %3850 = vmatpush1.msra.mxu0 0.0
    %3851 = vmatprep.subr.mxu0 0.0
    %3852 = vmatpush1.msra.mxu0 0.0
    %3853 = vmatprep.mubr.f32.mxu0 0.0
    %3854 = vmatmul.mubr.f32.gmra.mrb[0].mxu0 %v3665
    %v3855 = vpop.f32.mrb[0].mxu0
    %v3856 = vadd.f32 0.0, %v3855
    %v3857 = vpop.f32.mrb[0].mxu0
    %3858 = vdwg.mxu0
    %v3859 = vadd.f32 %v3667, %v3785
    %v3860 = vmul.f32 %v3859, 0.5
    %v3861 = vtanh.pop %v3860
    %v3862 = vmul.f32 %v3861, 0.5
    %v3863 = vadd.f32 %v3862, 0.5
    %v3864 = vadd.f32 %v3668, %v3787
    %v3865 = vmul.f32 %v3864, 0.5
    %v3866 = vtanh.pop %v3865
    %v3867 = vmul.f32 %v3866, 0.5
    %v3868 = vadd.f32 %v3867, 0.5
    %v3869 = vadd.f32 %v3856, %v2404
    %v3870 = vmul.f32 %v3863, %v3869
    %v3871 = vadd.f32 %v3669, %v3870
    %v3872 = vtanh.pop %v3871
    %v3873 = vsub.f32 %v3665, %v3872
    %v3874 = vmul.f32 %v3868, %v3873
    %v3875 = vadd.f32 %v3872, %v3874
    %3876 = vst [vmem:[%s1865] sm:$0xff] %v3875
    %v3877 = vld [vmem:[%s1869] sm:$0xff]
    %v3878 = vld [vmem:[%s1869 + $0x8] sm:$0xff]
    %v3879 = vld [vmem:[%s1869 + $0x10] sm:$0xff]
    %v3880 = vld [vmem:[%s2409] sm:$0xff]
    %v3881 = vld [vmem:[%s2409 + $0x8] sm:$0xff]
    %v3882 = vld [vmem:[%s2409 + $0x10] sm:$0xff]
    %v3883 = vld [vmem:[%s2409 + $0x18] sm:$0xff]
    %v3884 = vld [vmem:[%s2409 + $0x20] sm:$0xff]
    %v3885 = vld [vmem:[%s2409 + $0x28] sm:$0xff]
    %v3886 = vld [vmem:[%s2409 + $0x30] sm:$0xff]
    %v3887 = vld [vmem:[%s2409 + $0x38] sm:$0xff]
    %v3888 = vld [vmem:[%s2409 + $0x40] sm:$0xff]
    %v3889 = vld [vmem:[%s2409 + $0x48] sm:$0xff]
    %v3890 = vld [vmem:[%s2409 + $0x50] sm:$0xff]
    %v3891 = vld [vmem:[%s2409 + $0x58] sm:$0xff]
    %v3892 = vld [vmem:[%s2409 + $0x60] sm:$0xff]
    %v3893 = vld [vmem:[%s2409 + $0x68] sm:$0xff]
    %v3894 = vld [vmem:[%s2409 + $0x70] sm:$0xff]
    %v3895 = vld [vmem:[%s2409 + $0x78] sm:$0xff]
    %v3896 = vld [vmem:[%s2409 + $0x80] sm:$0xff]
    %v3897 = vld [vmem:[%s2409 + $0x88] sm:$0xff]
    %v3898 = vld [vmem:[%s2409 + $0x90] sm:$0xff]
    %v3899 = vld [vmem:[%s2409 + $0x98] sm:$0xff]
    %v3900 = vld [vmem:[%s2409 + $0xa0] sm:$0xff]
    %v3901 = vld [vmem:[%s2409 + $0xa8] sm:$0xff]
    %v3902 = vld [vmem:[%s2409 + $0xb0] sm:$0xff]
    %v3903 = vld [vmem:[%s2409 + $0xb8] sm:$0xff]
    %v3904 = vld [vmem:[%s2409 + $0xc0] sm:$0xff]
    %v3905 = vld [vmem:[%s2409 + $0xc8] sm:$0xff]
    %v3906 = vld [vmem:[%s2409 + $0xd0] sm:$0xff]
    %v3907 = vld [vmem:[%s2409 + $0xd8] sm:$0xff]
    %v3908 = vld [vmem:[%s2409 + $0xe0] sm:$0xff]
    %v3909 = vld [vmem:[%s2409 + $0xe8] sm:$0xff]
    %v3910 = vld [vmem:[%s2409 + $0xf0] sm:$0xff]
    %v3911 = vld [vmem:[%s2409 + $0xf8] sm:$0xff]
    %v3912 = vld [vmem:[%s2409 + $0x100] sm:$0xff]
    %v3913 = vld [vmem:[%s2409 + $0x108] sm:$0xff]
    %v3914 = vld [vmem:[%s2409 + $0x110] sm:$0xff]
    %v3915 = vld [vmem:[%s2409 + $0x118] sm:$0xff]
    %v3916 = vld [vmem:[%s2409 + $0x120] sm:$0xff]
    %v3917 = vld [vmem:[%s2409 + $0x128] sm:$0xff]
    %v3918 = vld [vmem:[%s2409 + $0x130] sm:$0xff]
    %v3919 = vld [vmem:[%s2409 + $0x138] sm:$0xff]
    %v3920 = vld [vmem:[%s2409 + $0x140] sm:$0xff]
    %v3921 = vld [vmem:[%s2409 + $0x148] sm:$0xff]
    %v3922 = vld [vmem:[%s2409 + $0x150] sm:$0xff]
    %v3923 = vld [vmem:[%s2409 + $0x158] sm:$0xff]
    %v3924 = vld [vmem:[%s2409 + $0x160] sm:$0xff]
    %v3925 = vld [vmem:[%s2409 + $0x168] sm:$0xff]
    %v3926 = vld [vmem:[%s2409 + $0x170] sm:$0xff]
    %v3927 = vld [vmem:[%s2409 + $0x178] sm:$0xff]
    %3928 = vmatprep.subr.mxu0 %v3881
    %3929 = vmatpush1.msra.mxu0 %v3880
    %3930 = vmatprep.subr.mxu0 %v3884
    %3931 = vmatpush1.msra.mxu0 %v3883
    %3932 = vmatprep.subr.mxu0 %v3887
    %3933 = vmatpush1.msra.mxu0 %v3886
    %3934 = vmatprep.subr.mxu0 %v3890
    %3935 = vmatpush1.msra.mxu0 %v3889
    %3936 = vmatprep.subr.mxu0 %v3893
    %3937 = vmatpush1.msra.mxu0 %v3892
    %3938 = vmatprep.subr.mxu0 %v3896
    %3939 = vmatpush1.msra.mxu0 %v3895
    %3940 = vmatprep.subr.mxu0 %v3899
    %3941 = vmatpush1.msra.mxu0 %v3898
    %3942 = vmatprep.subr.mxu0 %v3902
    %3943 = vmatpush1.msra.mxu0 %v3901
    %3944 = vmatprep.subr.mxu0 %v3905
    %3945 = vmatpush1.msra.mxu0 %v3904
    %3946 = vmatprep.subr.mxu0 %v3908
    %3947 = vmatpush1.msra.mxu0 %v3907
    %3948 = vmatprep.subr.mxu0 %v3911
    %3949 = vmatpush1.msra.mxu0 %v3910
    %3950 = vmatprep.subr.mxu0 %v3914
    %3951 = vmatpush1.msra.mxu0 %v3913
    %3952 = vmatprep.subr.mxu0 %v3917
    %3953 = vmatpush1.msra.mxu0 %v3916
    %3954 = vmatprep.subr.mxu0 %v3920
    %3955 = vmatpush1.msra.mxu0 %v3919
    %3956 = vmatprep.subr.mxu0 %v3923
    %3957 = vmatpush1.msra.mxu0 %v3922
    %3958 = vmatprep.subr.mxu0 %v3926
    %3959 = vmatpush1.msra.mxu0 %v3925
    %3960 = vmatprep.subr.mxu0 0.0
    %3961 = vmatpush1.msra.mxu0 0.0
    %3962 = vmatprep.subr.mxu0 0.0
    %3963 = vmatpush1.msra.mxu0 0.0
    %3964 = vmatprep.subr.mxu0 0.0
    %3965 = vmatpush1.msra.mxu0 0.0
    %3966 = vmatprep.subr.mxu0 0.0
    %3967 = vmatpush1.msra.mxu0 0.0
    %3968 = vmatprep.subr.mxu0 0.0
    %3969 = vmatpush1.msra.mxu0 0.0
    %3970 = vmatprep.subr.mxu0 0.0
    %3971 = vmatpush1.msra.mxu0 0.0
    %3972 = vmatprep.subr.mxu0 0.0
    %3973 = vmatpush1.msra.mxu0 0.0
    %3974 = vmatprep.subr.mxu0 0.0
    %3975 = vmatpush1.msra.mxu0 0.0
    %3976 = vmatprep.subr.mxu0 0.0
    %3977 = vmatpush1.msra.mxu0 0.0
    %3978 = vmatprep.subr.mxu0 0.0
    %3979 = vmatpush1.msra.mxu0 0.0
    %3980 = vmatprep.subr.mxu0 0.0
    %3981 = vmatpush1.msra.mxu0 0.0
    %3982 = vmatprep.subr.mxu0 0.0
    %3983 = vmatpush1.msra.mxu0 0.0
    %3984 = vmatprep.subr.mxu0 0.0
    %3985 = vmatpush1.msra.mxu0 0.0
    %3986 = vmatprep.subr.mxu0 0.0
    %3987 = vmatpush1.msra.mxu0 0.0
    %3988 = vmatprep.subr.mxu0 0.0
    %3989 = vmatpush1.msra.mxu0 0.0
    %3990 = vmatprep.subr.mxu0 0.0
    %3991 = vmatpush1.msra.mxu0 0.0
    %3992 = vmatprep.mubr.f32.mxu0 0.0
    %3993 = vmatmul.mubr.f32.gmra.mrb[0].mxu0 %v3875
    %v3994 = vpop.f32.mrb[0].mxu0
    %v3995 = vadd.f32 0.0, %v3994
    %v3996 = vpop.f32.mrb[0].mxu0
    %v3997 = vadd.f32 0.0, %v3996
    %3998 = vdwg.mxu0
    %3999 = vmatprep.subr.mxu0 0.0
    %4000 = vmatpush1.msra.mxu0 %v3882
    %4001 = vmatprep.subr.mxu0 0.0
    %4002 = vmatpush1.msra.mxu0 %v3885
    %4003 = vmatprep.subr.mxu0 0.0
    %4004 = vmatpush1.msra.mxu0 %v3888
    %4005 = vmatprep.subr.mxu0 0.0
    %4006 = vmatpush1.msra.mxu0 %v3891
    %4007 = vmatprep.subr.mxu0 0.0
    %4008 = vmatpush1.msra.mxu0 %v3894
    %4009 = vmatprep.subr.mxu0 0.0
    %4010 = vmatpush1.msra.mxu0 %v3897
    %4011 = vmatprep.subr.mxu0 0.0
    %4012 = vmatpush1.msra.mxu0 %v3900
    %4013 = vmatprep.subr.mxu0 0.0
    %4014 = vmatpush1.msra.mxu0 %v3903
    %4015 = vmatprep.subr.mxu0 0.0
    %4016 = vmatpush1.msra.mxu0 %v3906
    %4017 = vmatprep.subr.mxu0 0.0
    %4018 = vmatpush1.msra.mxu0 %v3909
    %4019 = vmatprep.subr.mxu0 0.0
    %4020 = vmatpush1.msra.mxu0 %v3912
    %4021 = vmatprep.subr.mxu0 0.0
    %4022 = vmatpush1.msra.mxu0 %v3915
    %4023 = vmatprep.subr.mxu0 0.0
    %4024 = vmatpush1.msra.mxu0 %v3918
    %4025 = vmatprep.subr.mxu0 0.0
    %4026 = vmatpush1.msra.mxu0 %v3921
    %4027 = vmatprep.subr.mxu0 0.0
    %4028 = vmatpush1.msra.mxu0 %v3924
    %4029 = vmatprep.subr.mxu0 0.0
    %4030 = vmatpush1.msra.mxu0 %v3927
    %4031 = vmatprep.subr.mxu0 0.0
    %4032 = vmatpush1.msra.mxu0 0.0
    %4033 = vmatprep.subr.mxu0 0.0
    %4034 = vmatpush1.msra.mxu0 0.0
    %4035 = vmatprep.subr.mxu0 0.0
    %4036 = vmatpush1.msra.mxu0 0.0
    %4037 = vmatprep.subr.mxu0 0.0
    %4038 = vmatpush1.msra.mxu0 0.0
    %4039 = vmatprep.subr.mxu0 0.0
    %4040 = vmatpush1.msra.mxu0 0.0
    %4041 = vmatprep.subr.mxu0 0.0
    %4042 = vmatpush1.msra.mxu0 0.0
    %4043 = vmatprep.subr.mxu0 0.0
    %4044 = vmatpush1.msra.mxu0 0.0
    %4045 = vmatprep.subr.mxu0 0.0
    %4046 = vmatpush1.msra.mxu0 0.0
    %4047 = vmatprep.subr.mxu0 0.0
    %4048 = vmatpush1.msra.mxu0 0.0
    %4049 = vmatprep.subr.mxu0 0.0
    %4050 = vmatpush1.msra.mxu0 0.0
    %4051 = vmatprep.subr.mxu0 0.0
    %4052 = vmatpush1.msra.mxu0 0.0
    %4053 = vmatprep.subr.mxu0 0.0
    %4054 = vmatpush1.msra.mxu0 0.0
    %4055 = vmatprep.subr.mxu0 0.0
    %4056 = vmatpush1.msra.mxu0 0.0
    %4057 = vmatprep.subr.mxu0 0.0
    %4058 = vmatpush1.msra.mxu0 0.0
    %4059 = vmatprep.subr.mxu0 0.0
    %4060 = vmatpush1.msra.mxu0 0.0
    %4061 = vmatprep.subr.mxu0 0.0
    %4062 = vmatpush1.msra.mxu0 0.0
    %4063 = vmatprep.mubr.f32.mxu0 0.0
    %4064 = vmatmul.mubr.f32.gmra.mrb[0].mxu0 %v3875
    %v4065 = vpop.f32.mrb[0].mxu0
    %v4066 = vadd.f32 0.0, %v4065
    %v4067 = vpop.f32.mrb[0].mxu0
    %4068 = vdwg.mxu0
    %v4069 = vadd.f32 %v3877, %v3995
    %v4070 = vmul.f32 %v4069, 0.5
    %v4071 = vtanh.pop %v4070
    %v4072 = vmul.f32 %v4071, 0.5
    %v4073 = vadd.f32 %v4072, 0.5
    %v4074 = vadd.f32 %v3878, %v3997
    %v4075 = vmul.f32 %v4074, 0.5
    %v4076 = vtanh.pop %v4075
    %v4077 = vmul.f32 %v4076, 0.5
    %v4078 = vadd.f32 %v4077, 0.5
    %v4079 = vadd.f32 %v4066, %v2404
    %v4080 = vmul.f32 %v4073, %v4079
    %v4081 = vadd.f32 %v3879, %v4080
    %v4082 = vtanh.pop %v4081
    %v4083 = vsub.f32 %v3875, %v4082
    %v4084 = vmul.f32 %v4078, %v4083
    %v4085 = vadd.f32 %v4082, %v4084
    %4086 = vst [vmem:[%s2079] sm:$0xff] %v4085
    %v4087 = vld [vmem:[#allocation2] sm:$0xff]
    %v4088 = vld [vmem:[#allocation2 + $0x8] sm:$0xff]
    %v4089 = vld [vmem:[#allocation2 + $0x10] sm:$0xff]
    %v4090 = vld [vmem:[#allocation2 + $0x18] sm:$0xff]
    %v4091 = vld [vmem:[#allocation2 + $0x20] sm:$0xff]
    %v4092 = vld [vmem:[#allocation2 + $0x28] sm:$0xff]
    %v4093 = vld [vmem:[#allocation2 + $0x30] sm:$0xff]
    %v4094 = vld [vmem:[#allocation2 + $0x38] sm:$0xff]
    %s4095 = scalar_lea.vmem [#allocation4], 768
    %v4096 = vld [vmem:[%s4095] sm:$0xff]
    %v4097 = vld [vmem:[%s4095 + $0x8] sm:$0xff]
    %v4098 = vld [vmem:[%s4095 + $0x10] sm:$0xff]
    %v4099 = vld [vmem:[%s4095 + $0x18] sm:$0xff]
    %v4100 = vld [vmem:[%s4095 + $0x20] sm:$0xff]
    %v4101 = vld [vmem:[%s4095 + $0x28] sm:$0xff]
    %v4102 = vld [vmem:[%s4095 + $0x30] sm:$0xff]
    %v4103 = vld [vmem:[%s4095 + $0x38] sm:$0xff]
    %v4104 = vld [vmem:[%s4095 + $0x40] sm:$0xff]
    %v4105 = vld [vmem:[%s4095 + $0x48] sm:$0xff]
    %v4106 = vld [vmem:[%s4095 + $0x50] sm:$0xff]
    %v4107 = vld [vmem:[%s4095 + $0x58] sm:$0xff]
    %v4108 = vld [vmem:[%s4095 + $0x60] sm:$0xff]
    %v4109 = vld [vmem:[%s4095 + $0x68] sm:$0xff]
    %v4110 = vld [vmem:[%s4095 + $0x70] sm:$0xff]
    %v4111 = vld [vmem:[%s4095 + $0x78] sm:$0xff]
    %v4112 = vld [vmem:[%s4095 + $0x80] sm:$0xff]
    %v4113 = vld [vmem:[%s4095 + $0x88] sm:$0xff]
    %v4114 = vld [vmem:[%s4095 + $0x90] sm:$0xff]
    %v4115 = vld [vmem:[%s4095 + $0x98] sm:$0xff]
    %v4116 = vld [vmem:[%s4095 + $0xa0] sm:$0xff]
    %v4117 = vld [vmem:[%s4095 + $0xa8] sm:$0xff]
    %v4118 = vld [vmem:[%s4095 + $0xb0] sm:$0xff]
    %v4119 = vld [vmem:[%s4095 + $0xb8] sm:$0xff]
    %v4120 = vld [vmem:[%s4095 + $0xc0] sm:$0xff]
    %v4121 = vld [vmem:[%s4095 + $0xc8] sm:$0xff]
    %v4122 = vld [vmem:[%s4095 + $0xd0] sm:$0xff]
    %v4123 = vld [vmem:[%s4095 + $0xd8] sm:$0xff]
    %v4124 = vld [vmem:[%s4095 + $0xe0] sm:$0xff]
    %v4125 = vld [vmem:[%s4095 + $0xe8] sm:$0xff]
    %v4126 = vld [vmem:[%s4095 + $0xf0] sm:$0xff]
    %v4127 = vld [vmem:[%s4095 + $0xf8] sm:$0xff]
    %v4128 = vld [vmem:[%s4095 + $0x100] sm:$0xff]
    %v4129 = vld [vmem:[%s4095 + $0x108] sm:$0xff]
    %v4130 = vld [vmem:[%s4095 + $0x110] sm:$0xff]
    %v4131 = vld [vmem:[%s4095 + $0x118] sm:$0xff]
    %v4132 = vld [vmem:[%s4095 + $0x120] sm:$0xff]
    %v4133 = vld [vmem:[%s4095 + $0x128] sm:$0xff]
    %v4134 = vld [vmem:[%s4095 + $0x130] sm:$0xff]
    %v4135 = vld [vmem:[%s4095 + $0x138] sm:$0xff]
    %v4136 = vld [vmem:[%s4095 + $0x140] sm:$0xff]
    %v4137 = vld [vmem:[%s4095 + $0x148] sm:$0xff]
    %v4138 = vld [vmem:[%s4095 + $0x150] sm:$0xff]
    %v4139 = vld [vmem:[%s4095 + $0x158] sm:$0xff]
    %v4140 = vld [vmem:[%s4095 + $0x160] sm:$0xff]
    %v4141 = vld [vmem:[%s4095 + $0x168] sm:$0xff]
    %v4142 = vld [vmem:[%s4095 + $0x170] sm:$0xff]
    %v4143 = vld [vmem:[%s4095 + $0x178] sm:$0xff]
    %s4144 = scalar_lea.vmem %s3, 6
    %v4145 = vld [vmem:[%s4144] sm:$0x7]
    %v4147 = vlaneseq
    %v4148 = vshrl.u32 %v4147, 7
    %v4149 = vsub.s32 0, %v4148
    %v4150 = vrot.slane %v4145, %v4149
    %v4151 = vlaneseq
    %v4152 = vshrl.u32 %v4151, 7
    %v4153 = vsub.s32 1, %v4152
    %v4154 = vrot.slane %v4145, %v4153
    %v4155 = vlaneseq
    %v4156 = vshrl.u32 %v4155, 7
    %v4157 = vsub.s32 2, %v4156
    %v4158 = vrot.slane %v4145, %v4157
    %4162 = vmatprep.subr.mxu0 %v4097
    %4163 = vmatpush1.msra.mxu0 %v4096
    %4164 = vmatprep.subr.mxu0 %v4100
    %4165 = vmatpush1.msra.mxu0 %v4099
    %4166 = vmatprep.subr.mxu0 %v4103
    %4167 = vmatpush1.msra.mxu0 %v4102
    %4168 = vmatprep.subr.mxu0 %v4106
    %4169 = vmatpush1.msra.mxu0 %v4105
    %4170 = vmatprep.subr.mxu0 %v4109
    %4171 = vmatpush1.msra.mxu0 %v4108
    %4172 = vmatprep.subr.mxu0 %v4112
    %4173 = vmatpush1.msra.mxu0 %v4111
    %4174 = vmatprep.subr.mxu0 %v4115
    %4175 = vmatpush1.msra.mxu0 %v4114
    %4176 = vmatprep.subr.mxu0 %v4118
    %4177 = vmatpush1.msra.mxu0 %v4117
    %4178 = vmatprep.subr.mxu0 %v4121
    %4179 = vmatpush1.msra.mxu0 %v4120
    %4180 = vmatprep.subr.mxu0 %v4124
    %4181 = vmatpush1.msra.mxu0 %v4123
    %4182 = vmatprep.subr.mxu0 %v4127
    %4183 = vmatpush1.msra.mxu0 %v4126
    %4184 = vmatprep.subr.mxu0 %v4130
    %4185 = vmatpush1.msra.mxu0 %v4129
    %4186 = vmatprep.subr.mxu0 %v4133
    %4187 = vmatpush1.msra.mxu0 %v4132
    %4188 = vmatprep.subr.mxu0 %v4136
    %4189 = vmatpush1.msra.mxu0 %v4135
    %4190 = vmatprep.subr.mxu0 %v4139
    %4191 = vmatpush1.msra.mxu0 %v4138
    %4192 = vmatprep.subr.mxu0 %v4142
    %4193 = vmatpush1.msra.mxu0 %v4141
    %4194 = vmatprep.subr.mxu0 0.0
    %4195 = vmatpush1.msra.mxu0 0.0
    %4196 = vmatprep.subr.mxu0 0.0
    %4197 = vmatpush1.msra.mxu0 0.0
    %4198 = vmatprep.subr.mxu0 0.0
    %4199 = vmatpush1.msra.mxu0 0.0
    %4200 = vmatprep.subr.mxu0 0.0
    %4201 = vmatpush1.msra.mxu0 0.0
    %4202 = vmatprep.subr.mxu0 0.0
    %4203 = vmatpush1.msra.mxu0 0.0
    %4204 = vmatprep.subr.mxu0 0.0
    %4205 = vmatpush1.msra.mxu0 0.0
    %4206 = vmatprep.subr.mxu0 0.0
    %4207 = vmatpush1.msra.mxu0 0.0
    %4208 = vmatprep.subr.mxu0 0.0
    %4209 = vmatpush1.msra.mxu0 0.0
    %4210 = vmatprep.subr.mxu0 0.0
    %4211 = vmatpush1.msra.mxu0 0.0
    %4212 = vmatprep.subr.mxu0 0.0
    %4213 = vmatpush1.msra.mxu0 0.0
    %4214 = vmatprep.subr.mxu0 0.0
    %4215 = vmatpush1.msra.mxu0 0.0
    %4216 = vmatprep.subr.mxu0 0.0
    %4217 = vmatpush1.msra.mxu0 0.0
    %4218 = vmatprep.subr.mxu0 0.0
    %4219 = vmatpush1.msra.mxu0 0.0
    %4220 = vmatprep.subr.mxu0 0.0
    %4221 = vmatpush1.msra.mxu0 0.0
    %4222 = vmatprep.subr.mxu0 0.0
    %4223 = vmatpush1.msra.mxu0 0.0
    %4224 = vmatprep.subr.mxu0 0.0
    %4225 = vmatpush1.msra.mxu0 0.0
    %4226 = vmatprep.mubr.f32.mxu0 0.0
    %4227 = vmatmul.mubr.f32.gmra.mrb[0].mxu0 %v4087
    %v4228 = vpop.f32.mrb[0].mxu0
    %v4229 = vadd.f32 %v4150, %v4228
    %v4230 = vpop.f32.mrb[0].mxu0
    %v4231 = vadd.f32 %v4154, %v4230
    %4232 = vmatprep.mubr.f32.mxu0 0.0
    %4233 = vmatmul.mubr.f32.gmra.mrb[0].mxu0 %v4088
    %v4234 = vpop.f32.mrb[0].mxu0
    %v4235 = vadd.f32 %v4150, %v4234
    %v4236 = vpop.f32.mrb[0].mxu0
    %v4237 = vadd.f32 %v4154, %v4236
    %4238 = vmatprep.mubr.f32.mxu0 0.0
    %4239 = vmatmul.mubr.f32.gmra.mrb[0].mxu0 %v4089
    %v4240 = vpop.f32.mrb[0].mxu0
    %v4241 = vadd.f32 %v4150, %v4240
    %v4242 = vpop.f32.mrb[0].mxu0
    %v4243 = vadd.f32 %v4154, %v4242
    %4244 = vmatprep.mubr.f32.mxu0 0.0
    %4245 = vmatmul.mubr.f32.gmra.mrb[0].mxu0 %v4090
    %v4246 = vpop.f32.mrb[0].mxu0
    %v4247 = vadd.f32 %v4150, %v4246
    %v4248 = vpop.f32.mrb[0].mxu0
    %v4249 = vadd.f32 %v4154, %v4248
    %4250 = vmatprep.mubr.f32.mxu0 0.0
    %4251 = vmatmul.mubr.f32.gmra.mrb[0].mxu0 %v4091
    %v4252 = vpop.f32.mrb[0].mxu0
    %v4253 = vadd.f32 %v4150, %v4252
    %v4254 = vpop.f32.mrb[0].mxu0
    %v4255 = vadd.f32 %v4154, %v4254
    %4256 = vmatprep.mubr.f32.mxu0 0.0
    %4257 = vmatmul.mubr.f32.gmra.mrb[0].mxu0 %v4092
    %v4258 = vpop.f32.mrb[0].mxu0
    %v4259 = vadd.f32 %v4150, %v4258
    %v4260 = vpop.f32.mrb[0].mxu0
    %v4261 = vadd.f32 %v4154, %v4260
    %4262 = vmatprep.mubr.f32.mxu0 0.0
    %4263 = vmatmul.mubr.f32.gmra.mrb[0].mxu0 %v4093
    %v4264 = vpop.f32.mrb[0].mxu0
    %v4265 = vadd.f32 %v4150, %v4264
    %v4266 = vpop.f32.mrb[0].mxu0
    %v4267 = vadd.f32 %v4154, %v4266
    %4268 = vmatprep.mubr.f32.mxu0 0.0
    %4269 = vmatmul.mubr.f32.gmra.mrb[0].mxu0 %v4094
    %v4270 = vpop.f32.mrb[0].mxu0
    %v4271 = vadd.f32 %v4150, %v4270
    %v4272 = vpop.f32.mrb[0].mxu0
    %v4273 = vadd.f32 %v4154, %v4272
    %4274 = vdwg.mxu0
    %4275 = vmatprep.subr.mxu0 0.0
    %4276 = vmatpush1.msra.mxu0 %v4098
    %4277 = vmatprep.subr.mxu0 0.0
    %4278 = vmatpush1.msra.mxu0 %v4101
    %4279 = vmatprep.subr.mxu0 0.0
    %4280 = vmatpush1.msra.mxu0 %v4104
    %4281 = vmatprep.subr.mxu0 0.0
    %4282 = vmatpush1.msra.mxu0 %v4107
    %4283 = vmatprep.subr.mxu0 0.0
    %4284 = vmatpush1.msra.mxu0 %v4110
    %4285 = vmatprep.subr.mxu0 0.0
    %4286 = vmatpush1.msra.mxu0 %v4113
    %4287 = vmatprep.subr.mxu0 0.0
    %4288 = vmatpush1.msra.mxu0 %v4116
    %4289 = vmatprep.subr.mxu0 0.0
    %4290 = vmatpush1.msra.mxu0 %v4119
    %4291 = vmatprep.subr.mxu0 0.0
    %4292 = vmatpush1.msra.mxu0 %v4122
    %4293 = vmatprep.subr.mxu0 0.0
    %4294 = vmatpush1.msra.mxu0 %v4125
    %4295 = vmatprep.subr.mxu0 0.0
    %4296 = vmatpush1.msra.mxu0 %v4128
    %4297 = vmatprep.subr.mxu0 0.0
    %4298 = vmatpush1.msra.mxu0 %v4131
    %4299 = vmatprep.subr.mxu0 0.0
    %4300 = vmatpush1.msra.mxu0 %v4134
    %4301 = vmatprep.subr.mxu0 0.0
    %4302 = vmatpush1.msra.mxu0 %v4137
    %4303 = vmatprep.subr.mxu0 0.0
    %4304 = vmatpush1.msra.mxu0 %v4140
    %4305 = vmatprep.subr.mxu0 0.0
    %4306 = vmatpush1.msra.mxu0 %v4143
    %4307 = vmatprep.subr.mxu0 0.0
    %4308 = vmatpush1.msra.mxu0 0.0
    %4309 = vmatprep.subr.mxu0 0.0
    %4310 = vmatpush1.msra.mxu0 0.0
    %4311 = vmatprep.subr.mxu0 0.0
    %4312 = vmatpush1.msra.mxu0 0.0
    %4313 = vmatprep.subr.mxu0 0.0
    %4314 = vmatpush1.msra.mxu0 0.0
    %4315 = vmatprep.subr.mxu0 0.0
    %4316 = vmatpush1.msra.mxu0 0.0
    %4317 = vmatprep.subr.mxu0 0.0
    %4318 = vmatpush1.msra.mxu0 0.0
    %4319 = vmatprep.subr.mxu0 0.0
    %4320 = vmatpush1.msra.mxu0 0.0
    %4321 = vmatprep.subr.mxu0 0.0
    %4322 = vmatpush1.msra.mxu0 0.0
    %4323 = vmatprep.subr.mxu0 0.0
    %4324 = vmatpush1.msra.mxu0 0.0
    %4325 = vmatprep.subr.mxu0 0.0
    %4326 = vmatpush1.msra.mxu0 0.0
    %4327 = vmatprep.subr.mxu0 0.0
    %4328 = vmatpush1.msra.mxu0 0.0
    %4329 = vmatprep.subr.mxu0 0.0
    %4330 = vmatpush1.msra.mxu0 0.0
    %4331 = vmatprep.subr.mxu0 0.0
    %4332 = vmatpush1.msra.mxu0 0.0
    %4333 = vmatprep.subr.mxu0 0.0
    %4334 = vmatpush1.msra.mxu0 0.0
    %4335 = vmatprep.subr.mxu0 0.0
    %4336 = vmatpush1.msra.mxu0 0.0
    %4337 = vmatprep.subr.mxu0 0.0
    %4338 = vmatpush1.msra.mxu0 0.0
    %4339 = vmatprep.mubr.f32.mxu0 0.0
    %4340 = vmatmul.mubr.f32.gmra.mrb[0].mxu0 %v4087
    %v4341 = vpop.f32.mrb[0].mxu0
    %v4342 = vadd.f32 %v4158, %v4341
    %v4343 = vpop.f32.mrb[0].mxu0
    %4344 = vmatprep.mubr.f32.mxu0 0.0
    %4345 = vmatmul.mubr.f32.gmra.mrb[0].mxu0 %v4088
    %v4346 = vpop.f32.mrb[0].mxu0
    %v4347 = vadd.f32 %v4158, %v4346
    %v4348 = vpop.f32.mrb[0].mxu0
    %4349 = vmatprep.mubr.f32.mxu0 0.0
    %4350 = vmatmul.mubr.f32.gmra.mrb[0].mxu0 %v4089
    %v4351 = vpop.f32.mrb[0].mxu0
    %v4352 = vadd.f32 %v4158, %v4351
    %v4353 = vpop.f32.mrb[0].mxu0
    %4354 = vmatprep.mubr.f32.mxu0 0.0
    %4355 = vmatmul.mubr.f32.gmra.mrb[0].mxu0 %v4090
    %v4356 = vpop.f32.mrb[0].mxu0
    %v4357 = vadd.f32 %v4158, %v4356
    %v4358 = vpop.f32.mrb[0].mxu0
    %4359 = vmatprep.mubr.f32.mxu0 0.0
    %4360 = vmatmul.mubr.f32.gmra.mrb[0].mxu0 %v4091
    %v4361 = vpop.f32.mrb[0].mxu0
    %v4362 = vadd.f32 %v4158, %v4361
    %v4363 = vpop.f32.mrb[0].mxu0
    %4364 = vmatprep.mubr.f32.mxu0 0.0
    %4365 = vmatmul.mubr.f32.gmra.mrb[0].mxu0 %v4092
    %v4366 = vpop.f32.mrb[0].mxu0
    %v4367 = vadd.f32 %v4158, %v4366
    %v4368 = vpop.f32.mrb[0].mxu0
    %4369 = vmatprep.mubr.f32.mxu0 0.0
    %4370 = vmatmul.mubr.f32.gmra.mrb[0].mxu0 %v4093
    %v4371 = vpop.f32.mrb[0].mxu0
    %v4372 = vadd.f32 %v4158, %v4371
    %v4373 = vpop.f32.mrb[0].mxu0
    %4374 = vmatprep.mubr.f32.mxu0 0.0
    %4375 = vmatmul.mubr.f32.gmra.mrb[0].mxu0 %v4094
    %v4376 = vpop.f32.mrb[0].mxu0
    %v4377 = vadd.f32 %v4158, %v4376
    %v4378 = vpop.f32.mrb[0].mxu0
    %4379 = vdwg.mxu0
    %4380 = vst [vmem:[#allocation3] sm:$0xff] %v4229
    %4381 = vst [vmem:[#allocation3 + $0x8] sm:$0xff] %v4231
    %4382 = vst [vmem:[#allocation3 + $0x10] sm:$0xff] %v4342
    %4383 = vst [vmem:[#allocation3 + $0x18] sm:$0xff] %v4235
    %4384 = vst [vmem:[#allocation3 + $0x20] sm:$0xff] %v4237
    %4385 = vst [vmem:[#allocation3 + $0x28] sm:$0xff] %v4347
    %4386 = vst [vmem:[#allocation3 + $0x30] sm:$0xff] %v4241
    %4387 = vst [vmem:[#allocation3 + $0x38] sm:$0xff] %v4243
    %4388 = vst [vmem:[#allocation3 + $0x40] sm:$0xff] %v4352
    %4389 = vst [vmem:[#allocation3 + $0x48] sm:$0xff] %v4247
    %4390 = vst [vmem:[#allocation3 + $0x50] sm:$0xff] %v4249
    %4391 = vst [vmem:[#allocation3 + $0x58] sm:$0xff] %v4357
    %4392 = vst [vmem:[#allocation3 + $0x60] sm:$0xff] %v4253
    %4393 = vst [vmem:[#allocation3 + $0x68] sm:$0xff] %v4255
    %4394 = vst [vmem:[#allocation3 + $0x70] sm:$0xff] %v4362
    %4395 = vst [vmem:[#allocation3 + $0x78] sm:$0xff] %v4259
    %4396 = vst [vmem:[#allocation3 + $0x80] sm:$0xff] %v4261
    %4397 = vst [vmem:[#allocation3 + $0x88] sm:$0xff] %v4367
    %4398 = vst [vmem:[#allocation3 + $0x90] sm:$0xff] %v4265
    %4399 = vst [vmem:[#allocation3 + $0x98] sm:$0xff] %v4267
    %4400 = vst [vmem:[#allocation3 + $0xa0] sm:$0xff] %v4372
    %4401 = vst [vmem:[#allocation3 + $0xa8] sm:$0xff] %v4271
    %4402 = vst [vmem:[#allocation3 + $0xb0] sm:$0xff] %v4273
    %4403 = vst [vmem:[#allocation3 + $0xb8] sm:$0xff] %v4377
    %s4404 = scalar_lea.vmem %s4, 2
    %v4405 = vld [vmem:[%s4404] sm:$0x1]
    %v4407 = vlaneseq
    %v4408 = vshrl.u32 %v4407, 7
    %v4409 = vsub.s32 0, %v4408
    %v4410 = vrot.slane %v4405, %v4409
    %v4412 = vld [vmem:[%s372] sm:$0xff]
    %v4413 = vld [vmem:[%s372 + $0x8] sm:$0xff]
    %v4414 = vld [vmem:[%s372 + $0x10] sm:$0xff]
    %s4415 = scalar_lea.vmem [#allocation6], 768
    %v4416 = vld [vmem:[%s4415] sm:$0xff]
    %v4417 = vld [vmem:[%s4415 + $0x8] sm:$0xff]
    %v4418 = vld [vmem:[%s4415 + $0x10] sm:$0xff]
    %v4419 = vld [vmem:[%s4415 + $0x18] sm:$0xff]
    %v4420 = vld [vmem:[%s4415 + $0x20] sm:$0xff]
    %v4421 = vld [vmem:[%s4415 + $0x28] sm:$0xff]
    %v4422 = vld [vmem:[%s4415 + $0x30] sm:$0xff]
    %v4423 = vld [vmem:[%s4415 + $0x38] sm:$0xff]
    %v4424 = vld [vmem:[%s4415 + $0x40] sm:$0xff]
    %v4425 = vld [vmem:[%s4415 + $0x48] sm:$0xff]
    %v4426 = vld [vmem:[%s4415 + $0x50] sm:$0xff]
    %v4427 = vld [vmem:[%s4415 + $0x58] sm:$0xff]
    %v4428 = vld [vmem:[%s4415 + $0x60] sm:$0xff]
    %v4429 = vld [vmem:[%s4415 + $0x68] sm:$0xff]
    %v4430 = vld [vmem:[%s4415 + $0x70] sm:$0xff]
    %v4431 = vld [vmem:[%s4415 + $0x78] sm:$0xff]
    %v4432 = vld [vmem:[%s4415 + $0x80] sm:$0xff]
    %v4433 = vld [vmem:[%s4415 + $0x88] sm:$0xff]
    %v4434 = vld [vmem:[%s4415 + $0x90] sm:$0xff]
    %v4435 = vld [vmem:[%s4415 + $0x98] sm:$0xff]
    %v4436 = vld [vmem:[%s4415 + $0xa0] sm:$0xff]
    %v4437 = vld [vmem:[%s4415 + $0xa8] sm:$0xff]
    %v4438 = vld [vmem:[%s4415 + $0xb0] sm:$0xff]
    %v4439 = vld [vmem:[%s4415 + $0xb8] sm:$0xff]
    %v4440 = vld [vmem:[%s4415 + $0xc0] sm:$0xff]
    %v4441 = vld [vmem:[%s4415 + $0xc8] sm:$0xff]
    %v4442 = vld [vmem:[%s4415 + $0xd0] sm:$0xff]
    %v4443 = vld [vmem:[%s4415 + $0xd8] sm:$0xff]
    %v4444 = vld [vmem:[%s4415 + $0xe0] sm:$0xff]
    %v4445 = vld [vmem:[%s4415 + $0xe8] sm:$0xff]
    %v4446 = vld [vmem:[%s4415 + $0xf0] sm:$0xff]
    %v4447 = vld [vmem:[%s4415 + $0xf8] sm:$0xff]
    %v4448 = vld [vmem:[%s4415 + $0x100] sm:$0xff]
    %v4449 = vld [vmem:[%s4415 + $0x108] sm:$0xff]
    %v4450 = vld [vmem:[%s4415 + $0x110] sm:$0xff]
    %v4451 = vld [vmem:[%s4415 + $0x118] sm:$0xff]
    %v4452 = vld [vmem:[%s4415 + $0x120] sm:$0xff]
    %v4453 = vld [vmem:[%s4415 + $0x128] sm:$0xff]
    %v4454 = vld [vmem:[%s4415 + $0x130] sm:$0xff]
    %v4455 = vld [vmem:[%s4415 + $0x138] sm:$0xff]
    %v4456 = vld [vmem:[%s4415 + $0x140] sm:$0xff]
    %v4457 = vld [vmem:[%s4415 + $0x148] sm:$0xff]
    %v4458 = vld [vmem:[%s4415 + $0x150] sm:$0xff]
    %v4459 = vld [vmem:[%s4415 + $0x158] sm:$0xff]
    %v4460 = vld [vmem:[%s4415 + $0x160] sm:$0xff]
    %v4461 = vld [vmem:[%s4415 + $0x168] sm:$0xff]
    %v4462 = vld [vmem:[%s4415 + $0x170] sm:$0xff]
    %v4463 = vld [vmem:[%s4415 + $0x178] sm:$0xff]
    %4464 = vmatprep.subr.mxu0 %v4417
    %4465 = vmatpush1.msra.mxu0 %v4416
    %4466 = vmatprep.subr.mxu0 %v4420
    %4467 = vmatpush1.msra.mxu0 %v4419
    %4468 = vmatprep.subr.mxu0 %v4423
    %4469 = vmatpush1.msra.mxu0 %v4422
    %4470 = vmatprep.subr.mxu0 %v4426
    %4471 = vmatpush1.msra.mxu0 %v4425
    %4472 = vmatprep.subr.mxu0 %v4429
    %4473 = vmatpush1.msra.mxu0 %v4428
    %4474 = vmatprep.subr.mxu0 %v4432
    %4475 = vmatpush1.msra.mxu0 %v4431
    %4476 = vmatprep.subr.mxu0 %v4435
    %4477 = vmatpush1.msra.mxu0 %v4434
    %4478 = vmatprep.subr.mxu0 %v4438
    %4479 = vmatpush1.msra.mxu0 %v4437
    %4480 = vmatprep.subr.mxu0 %v4441
    %4481 = vmatpush1.msra.mxu0 %v4440
    %4482 = vmatprep.subr.mxu0 %v4444
    %4483 = vmatpush1.msra.mxu0 %v4443
    %4484 = vmatprep.subr.mxu0 %v4447
    %4485 = vmatpush1.msra.mxu0 %v4446
    %4486 = vmatprep.subr.mxu0 %v4450
    %4487 = vmatpush1.msra.mxu0 %v4449
    %4488 = vmatprep.subr.mxu0 %v4453
    %4489 = vmatpush1.msra.mxu0 %v4452
    %4490 = vmatprep.subr.mxu0 %v4456
    %4491 = vmatpush1.msra.mxu0 %v4455
    %4492 = vmatprep.subr.mxu0 %v4459
    %4493 = vmatpush1.msra.mxu0 %v4458
    %4494 = vmatprep.subr.mxu0 %v4462
    %4495 = vmatpush1.msra.mxu0 %v4461
    %4496 = vmatprep.subr.mxu0 0.0
    %4497 = vmatpush1.msra.mxu0 0.0
    %4498 = vmatprep.subr.mxu0 0.0
    %4499 = vmatpush1.msra.mxu0 0.0
    %4500 = vmatprep.subr.mxu0 0.0
    %4501 = vmatpush1.msra.mxu0 0.0
    %4502 = vmatprep.subr.mxu0 0.0
    %4503 = vmatpush1.msra.mxu0 0.0
    %4504 = vmatprep.subr.mxu0 0.0
    %4505 = vmatpush1.msra.mxu0 0.0
    %4506 = vmatprep.subr.mxu0 0.0
    %4507 = vmatpush1.msra.mxu0 0.0
    %4508 = vmatprep.subr.mxu0 0.0
    %4509 = vmatpush1.msra.mxu0 0.0
    %4510 = vmatprep.subr.mxu0 0.0
    %4511 = vmatpush1.msra.mxu0 0.0
    %4512 = vmatprep.subr.mxu0 0.0
    %4513 = vmatpush1.msra.mxu0 0.0
    %4514 = vmatprep.subr.mxu0 0.0
    %4515 = vmatpush1.msra.mxu0 0.0
    %4516 = vmatprep.subr.mxu0 0.0
    %4517 = vmatpush1.msra.mxu0 0.0
    %4518 = vmatprep.subr.mxu0 0.0
    %4519 = vmatpush1.msra.mxu0 0.0
    %4520 = vmatprep.subr.mxu0 0.0
    %4521 = vmatpush1.msra.mxu0 0.0
    %4522 = vmatprep.subr.mxu0 0.0
    %4523 = vmatpush1.msra.mxu0 0.0
    %4524 = vmatprep.subr.mxu0 0.0
    %4525 = vmatpush1.msra.mxu0 0.0
    %4526 = vmatprep.subr.mxu0 0.0
    %4527 = vmatpush1.msra.mxu0 0.0
    %4528 = vmatprep.mubr.f32.mxu0 0.0
    %4529 = vmatmul.mubr.f32.gmra.mrb[0].mxu0 0.0
    %v4530 = vpop.f32.mrb[0].mxu0
    %v4531 = vadd.f32 0.0, %v4530
    %v4532 = vpop.f32.mrb[0].mxu0
    %v4533 = vadd.f32 0.0, %v4532
    %4534 = vdwg.mxu0
    %4535 = vmatprep.subr.mxu0 0.0
    %4536 = vmatpush1.msra.mxu0 %v4418
    %4537 = vmatprep.subr.mxu0 0.0
    %4538 = vmatpush1.msra.mxu0 %v4421
    %4539 = vmatprep.subr.mxu0 0.0
    %4540 = vmatpush1.msra.mxu0 %v4424
    %4541 = vmatprep.subr.mxu0 0.0
    %4542 = vmatpush1.msra.mxu0 %v4427
    %4543 = vmatprep.subr.mxu0 0.0
    %4544 = vmatpush1.msra.mxu0 %v4430
    %4545 = vmatprep.subr.mxu0 0.0
    %4546 = vmatpush1.msra.mxu0 %v4433
    %4547 = vmatprep.subr.mxu0 0.0
    %4548 = vmatpush1.msra.mxu0 %v4436
    %4549 = vmatprep.subr.mxu0 0.0
    %4550 = vmatpush1.msra.mxu0 %v4439
    %4551 = vmatprep.subr.mxu0 0.0
    %4552 = vmatpush1.msra.mxu0 %v4442
    %4553 = vmatprep.subr.mxu0 0.0
    %4554 = vmatpush1.msra.mxu0 %v4445
    %4555 = vmatprep.subr.mxu0 0.0
    %4556 = vmatpush1.msra.mxu0 %v4448
    %4557 = vmatprep.subr.mxu0 0.0
    %4558 = vmatpush1.msra.mxu0 %v4451
    %4559 = vmatprep.subr.mxu0 0.0
    %4560 = vmatpush1.msra.mxu0 %v4454
    %4561 = vmatprep.subr.mxu0 0.0
    %4562 = vmatpush1.msra.mxu0 %v4457
    %4563 = vmatprep.subr.mxu0 0.0
    %4564 = vmatpush1.msra.mxu0 %v4460
    %4565 = vmatprep.subr.mxu0 0.0
    %4566 = vmatpush1.msra.mxu0 %v4463
    %4567 = vmatprep.subr.mxu0 0.0
    %4568 = vmatpush1.msra.mxu0 0.0
    %4569 = vmatprep.subr.mxu0 0.0
    %4570 = vmatpush1.msra.mxu0 0.0
    %4571 = vmatprep.subr.mxu0 0.0
    %4572 = vmatpush1.msra.mxu0 0.0
    %4573 = vmatprep.subr.mxu0 0.0
    %4574 = vmatpush1.msra.mxu0 0.0
    %4575 = vmatprep.subr.mxu0 0.0
    %4576 = vmatpush1.msra.mxu0 0.0
    %4577 = vmatprep.subr.mxu0 0.0
    %4578 = vmatpush1.msra.mxu0 0.0
    %4579 = vmatprep.subr.mxu0 0.0
    %4580 = vmatpush1.msra.mxu0 0.0
    %4581 = vmatprep.subr.mxu0 0.0
    %4582 = vmatpush1.msra.mxu0 0.0
    %4583 = vmatprep.subr.mxu0 0.0
    %4584 = vmatpush1.msra.mxu0 0.0
    %4585 = vmatprep.subr.mxu0 0.0
    %4586 = vmatpush1.msra.mxu0 0.0
    %4587 = vmatprep.subr.mxu0 0.0
    %4588 = vmatpush1.msra.mxu0 0.0
    %4589 = vmatprep.subr.mxu0 0.0
    %4590 = vmatpush1.msra.mxu0 0.0
    %4591 = vmatprep.subr.mxu0 0.0
    %4592 = vmatpush1.msra.mxu0 0.0
    %4593 = vmatprep.subr.mxu0 0.0
    %4594 = vmatpush1.msra.mxu0 0.0
    %4595 = vmatprep.subr.mxu0 0.0
    %4596 = vmatpush1.msra.mxu0 0.0
    %4597 = vmatprep.subr.mxu0 0.0
    %4598 = vmatpush1.msra.mxu0 0.0
    %4599 = vmatprep.mubr.f32.mxu0 0.0
    %4600 = vmatmul.mubr.f32.gmra.mrb[0].mxu0 0.0
    %v4601 = vpop.f32.mrb[0].mxu0
    %v4602 = vadd.f32 0.0, %v4601
    %v4603 = vpop.f32.mrb[0].mxu0
    %4604 = vdwg.mxu0
    %v4605 = vadd.f32 %v4412, %v4531
    %v4606 = vmul.f32 %v4605, 0.5
    %v4607 = vtanh.pop %v4606
    %v4608 = vmul.f32 %v4607, 0.5
    %v4609 = vadd.f32 %v4608, 0.5
    %v4610 = vadd.f32 %v4413, %v4533
    %v4611 = vmul.f32 %v4610, 0.5
    %v4612 = vtanh.pop %v4611
    %v4613 = vmul.f32 %v4612, 0.5
    %v4614 = vadd.f32 %v4613, 0.5
    %v4615 = vadd.f32 %v4602, %v4410
    %v4616 = vmul.f32 %v4609, %v4615
    %v4617 = vadd.f32 %v4414, %v4616
    %v4618 = vtanh.pop %v4617
    %v4619 = vsub.f32 0.0, %v4618
    %v4620 = vmul.f32 %v4614, %v4619
    %v4621 = vadd.f32 %v4618, %v4620
    %4622 = vst [vmem:[%s5] sm:$0xff] %v4621
    %v4623 = vld [vmem:[%s585] sm:$0xff]
    %v4624 = vld [vmem:[%s585 + $0x8] sm:$0xff]
    %v4625 = vld [vmem:[%s585 + $0x10] sm:$0xff]
    %v4626 = vld [vmem:[%s4415] sm:$0xff]
    %v4627 = vld [vmem:[%s4415 + $0x8] sm:$0xff]
    %v4628 = vld [vmem:[%s4415 + $0x10] sm:$0xff]
    %v4629 = vld [vmem:[%s4415 + $0x18] sm:$0xff]
    %v4630 = vld [vmem:[%s4415 + $0x20] sm:$0xff]
    %v4631 = vld [vmem:[%s4415 + $0x28] sm:$0xff]
    %v4632 = vld [vmem:[%s4415 + $0x30] sm:$0xff]
    %v4633 = vld [vmem:[%s4415 + $0x38] sm:$0xff]
    %v4634 = vld [vmem:[%s4415 + $0x40] sm:$0xff]
    %v4635 = vld [vmem:[%s4415 + $0x48] sm:$0xff]
    %v4636 = vld [vmem:[%s4415 + $0x50] sm:$0xff]
    %v4637 = vld [vmem:[%s4415 + $0x58] sm:$0xff]
    %v4638 = vld [vmem:[%s4415 + $0x60] sm:$0xff]
    %v4639 = vld [vmem:[%s4415 + $0x68] sm:$0xff]
    %v4640 = vld [vmem:[%s4415 + $0x70] sm:$0xff]
    %v4641 = vld [vmem:[%s4415 + $0x78] sm:$0xff]
    %v4642 = vld [vmem:[%s4415 + $0x80] sm:$0xff]
    %v4643 = vld [vmem:[%s4415 + $0x88] sm:$0xff]
    %v4644 = vld [vmem:[%s4415 + $0x90] sm:$0xff]
    %v4645 = vld [vmem:[%s4415 + $0x98] sm:$0xff]
    %v4646 = vld [vmem:[%s4415 + $0xa0] sm:$0xff]
    %v4647 = vld [vmem:[%s4415 + $0xa8] sm:$0xff]
    %v4648 = vld [vmem:[%s4415 + $0xb0] sm:$0xff]
    %v4649 = vld [vmem:[%s4415 + $0xb8] sm:$0xff]
    %v4650 = vld [vmem:[%s4415 + $0xc0] sm:$0xff]
    %v4651 = vld [vmem:[%s4415 + $0xc8] sm:$0xff]
    %v4652 = vld [vmem:[%s4415 + $0xd0] sm:$0xff]
    %v4653 = vld [vmem:[%s4415 + $0xd8] sm:$0xff]
    %v4654 = vld [vmem:[%s4415 + $0xe0] sm:$0xff]
    %v4655 = vld [vmem:[%s4415 + $0xe8] sm:$0xff]
    %v4656 = vld [vmem:[%s4415 + $0xf0] sm:$0xff]
    %v4657 = vld [vmem:[%s4415 + $0xf8] sm:$0xff]
    %v4658 = vld [vmem:[%s4415 + $0x100] sm:$0xff]
    %v4659 = vld [vmem:[%s4415 + $0x108] sm:$0xff]
    %v4660 = vld [vmem:[%s4415 + $0x110] sm:$0xff]
    %v4661 = vld [vmem:[%s4415 + $0x118] sm:$0xff]
    %v4662 = vld [vmem:[%s4415 + $0x120] sm:$0xff]
    %v4663 = vld [vmem:[%s4415 + $0x128] sm:$0xff]
    %v4664 = vld [vmem:[%s4415 + $0x130] sm:$0xff]
    %v4665 = vld [vmem:[%s4415 + $0x138] sm:$0xff]
    %v4666 = vld [vmem:[%s4415 + $0x140] sm:$0xff]
    %v4667 = vld [vmem:[%s4415 + $0x148] sm:$0xff]
    %v4668 = vld [vmem:[%s4415 + $0x150] sm:$0xff]
    %v4669 = vld [vmem:[%s4415 + $0x158] sm:$0xff]
    %v4670 = vld [vmem:[%s4415 + $0x160] sm:$0xff]
    %v4671 = vld [vmem:[%s4415 + $0x168] sm:$0xff]
    %v4672 = vld [vmem:[%s4415 + $0x170] sm:$0xff]
    %v4673 = vld [vmem:[%s4415 + $0x178] sm:$0xff]
    %4674 = vmatprep.subr.mxu0 %v4627
    %4675 = vmatpush1.msra.mxu0 %v4626
    %4676 = vmatprep.subr.mxu0 %v4630
    %4677 = vmatpush1.msra.mxu0 %v4629
    %4678 = vmatprep.subr.mxu0 %v4633
    %4679 = vmatpush1.msra.mxu0 %v4632
    %4680 = vmatprep.subr.mxu0 %v4636
    %4681 = vmatpush1.msra.mxu0 %v4635
    %4682 = vmatprep.subr.mxu0 %v4639
    %4683 = vmatpush1.msra.mxu0 %v4638
    %4684 = vmatprep.subr.mxu0 %v4642
    %4685 = vmatpush1.msra.mxu0 %v4641
    %4686 = vmatprep.subr.mxu0 %v4645
    %4687 = vmatpush1.msra.mxu0 %v4644
    %4688 = vmatprep.subr.mxu0 %v4648
    %4689 = vmatpush1.msra.mxu0 %v4647
    %4690 = vmatprep.subr.mxu0 %v4651
    %4691 = vmatpush1.msra.mxu0 %v4650
    %4692 = vmatprep.subr.mxu0 %v4654
    %4693 = vmatpush1.msra.mxu0 %v4653
    %4694 = vmatprep.subr.mxu0 %v4657
    %4695 = vmatpush1.msra.mxu0 %v4656
    %4696 = vmatprep.subr.mxu0 %v4660
    %4697 = vmatpush1.msra.mxu0 %v4659
    %4698 = vmatprep.subr.mxu0 %v4663
    %4699 = vmatpush1.msra.mxu0 %v4662
    %4700 = vmatprep.subr.mxu0 %v4666
    %4701 = vmatpush1.msra.mxu0 %v4665
    %4702 = vmatprep.subr.mxu0 %v4669
    %4703 = vmatpush1.msra.mxu0 %v4668
    %4704 = vmatprep.subr.mxu0 %v4672
    %4705 = vmatpush1.msra.mxu0 %v4671
    %4706 = vmatprep.subr.mxu0 0.0
    %4707 = vmatpush1.msra.mxu0 0.0
    %4708 = vmatprep.subr.mxu0 0.0
    %4709 = vmatpush1.msra.mxu0 0.0
    %4710 = vmatprep.subr.mxu0 0.0
    %4711 = vmatpush1.msra.mxu0 0.0
    %4712 = vmatprep.subr.mxu0 0.0
    %4713 = vmatpush1.msra.mxu0 0.0
    %4714 = vmatprep.subr.mxu0 0.0
    %4715 = vmatpush1.msra.mxu0 0.0
    %4716 = vmatprep.subr.mxu0 0.0
    %4717 = vmatpush1.msra.mxu0 0.0
    %4718 = vmatprep.subr.mxu0 0.0
    %4719 = vmatpush1.msra.mxu0 0.0
    %4720 = vmatprep.subr.mxu0 0.0
    %4721 = vmatpush1.msra.mxu0 0.0
    %4722 = vmatprep.subr.mxu0 0.0
    %4723 = vmatpush1.msra.mxu0 0.0
    %4724 = vmatprep.subr.mxu0 0.0
    %4725 = vmatpush1.msra.mxu0 0.0
    %4726 = vmatprep.subr.mxu0 0.0
    %4727 = vmatpush1.msra.mxu0 0.0
    %4728 = vmatprep.subr.mxu0 0.0
    %4729 = vmatpush1.msra.mxu0 0.0
    %4730 = vmatprep.subr.mxu0 0.0
    %4731 = vmatpush1.msra.mxu0 0.0
    %4732 = vmatprep.subr.mxu0 0.0
    %4733 = vmatpush1.msra.mxu0 0.0
    %4734 = vmatprep.subr.mxu0 0.0
    %4735 = vmatpush1.msra.mxu0 0.0
    %4736 = vmatprep.subr.mxu0 0.0
    %4737 = vmatpush1.msra.mxu0 0.0
    %4738 = vmatprep.mubr.f32.mxu0 0.0
    %4739 = vmatmul.mubr.f32.gmra.mrb[0].mxu0 %v4621
    %v4740 = vpop.f32.mrb[0].mxu0
    %v4741 = vadd.f32 0.0, %v4740
    %v4742 = vpop.f32.mrb[0].mxu0
    %v4743 = vadd.f32 0.0, %v4742
    %4744 = vdwg.mxu0
    %4745 = vmatprep.subr.mxu0 0.0
    %4746 = vmatpush1.msra.mxu0 %v4628
    %4747 = vmatprep.subr.mxu0 0.0
    %4748 = vmatpush1.msra.mxu0 %v4631
    %4749 = vmatprep.subr.mxu0 0.0
    %4750 = vmatpush1.msra.mxu0 %v4634
    %4751 = vmatprep.subr.mxu0 0.0
    %4752 = vmatpush1.msra.mxu0 %v4637
    %4753 = vmatprep.subr.mxu0 0.0
    %4754 = vmatpush1.msra.mxu0 %v4640
    %4755 = vmatprep.subr.mxu0 0.0
    %4756 = vmatpush1.msra.mxu0 %v4643
    %4757 = vmatprep.subr.mxu0 0.0
    %4758 = vmatpush1.msra.mxu0 %v4646
    %4759 = vmatprep.subr.mxu0 0.0
    %4760 = vmatpush1.msra.mxu0 %v4649
    %4761 = vmatprep.subr.mxu0 0.0
    %4762 = vmatpush1.msra.mxu0 %v4652
    %4763 = vmatprep.subr.mxu0 0.0
    %4764 = vmatpush1.msra.mxu0 %v4655
    %4765 = vmatprep.subr.mxu0 0.0
    %4766 = vmatpush1.msra.mxu0 %v4658
    %4767 = vmatprep.subr.mxu0 0.0
    %4768 = vmatpush1.msra.mxu0 %v4661
    %4769 = vmatprep.subr.mxu0 0.0
    %4770 = vmatpush1.msra.mxu0 %v4664
    %4771 = vmatprep.subr.mxu0 0.0
    %4772 = vmatpush1.msra.mxu0 %v4667
    %4773 = vmatprep.subr.mxu0 0.0
    %4774 = vmatpush1.msra.mxu0 %v4670
    %4775 = vmatprep.subr.mxu0 0.0
    %4776 = vmatpush1.msra.mxu0 %v4673
    %4777 = vmatprep.subr.mxu0 0.0
    %4778 = vmatpush1.msra.mxu0 0.0
    %4779 = vmatprep.subr.mxu0 0.0
    %4780 = vmatpush1.msra.mxu0 0.0
    %4781 = vmatprep.subr.mxu0 0.0
    %4782 = vmatpush1.msra.mxu0 0.0
    %4783 = vmatprep.subr.mxu0 0.0
    %4784 = vmatpush1.msra.mxu0 0.0
    %4785 = vmatprep.subr.mxu0 0.0
    %4786 = vmatpush1.msra.mxu0 0.0
    %4787 = vmatprep.subr.mxu0 0.0
    %4788 = vmatpush1.msra.mxu0 0.0
    %4789 = vmatprep.subr.mxu0 0.0
    %4790 = vmatpush1.msra.mxu0 0.0
    %4791 = vmatprep.subr.mxu0 0.0
    %4792 = vmatpush1.msra.mxu0 0.0
    %4793 = vmatprep.subr.mxu0 0.0
    %4794 = vmatpush1.msra.mxu0 0.0
    %4795 = vmatprep.subr.mxu0 0.0
    %4796 = vmatpush1.msra.mxu0 0.0
    %4797 = vmatprep.subr.mxu0 0.0
    %4798 = vmatpush1.msra.mxu0 0.0
    %4799 = vmatprep.subr.mxu0 0.0
    %4800 = vmatpush1.msra.mxu0 0.0
    %4801 = vmatprep.subr.mxu0 0.0
    %4802 = vmatpush1.msra.mxu0 0.0
    %4803 = vmatprep.subr.mxu0 0.0
    %4804 = vmatpush1.msra.mxu0 0.0
    %4805 = vmatprep.subr.mxu0 0.0
    %4806 = vmatpush1.msra.mxu0 0.0
    %4807 = vmatprep.subr.mxu0 0.0
    %4808 = vmatpush1.msra.mxu0 0.0
    %4809 = vmatprep.mubr.f32.mxu0 0.0
    %4810 = vmatmul.mubr.f32.gmra.mrb[0].mxu0 %v4621
    %v4811 = vpop.f32.mrb[0].mxu0
    %v4812 = vadd.f32 0.0, %v4811
    %v4813 = vpop.f32.mrb[0].mxu0
    %4814 = vdwg.mxu0
    %v4815 = vadd.f32 %v4623, %v4741
    %v4816 = vmul.f32 %v4815, 0.5
    %v4817 = vtanh.pop %v4816
    %v4818 = vmul.f32 %v4817, 0.5
    %v4819 = vadd.f32 %v4818, 0.5
    %v4820 = vadd.f32 %v4624, %v4743
    %v4821 = vmul.f32 %v4820, 0.5
    %v4822 = vtanh.pop %v4821
    %v4823 = vmul.f32 %v4822, 0.5
    %v4824 = vadd.f32 %v4823, 0.5
    %v4825 = vadd.f32 %v4812, %v4410
    %v4826 = vmul.f32 %v4819, %v4825
    %v4827 = vadd.f32 %v4625, %v4826
    %v4828 = vtanh.pop %v4827
    %v4829 = vsub.f32 %v4621, %v4828
    %v4830 = vmul.f32 %v4824, %v4829
    %v4831 = vadd.f32 %v4828, %v4830
    %s4832 = scalar_lea.vmem %s5, 8
    %4833 = vst [vmem:[%s4832] sm:$0xff] %v4831
    %v4834 = vld [vmem:[%s799] sm:$0xff]
    %v4835 = vld [vmem:[%s799 + $0x8] sm:$0xff]
    %v4836 = vld [vmem:[%s799 + $0x10] sm:$0xff]
    %v4837 = vld [vmem:[%s4415] sm:$0xff]
    %v4838 = vld [vmem:[%s4415 + $0x8] sm:$0xff]
    %v4839 = vld [vmem:[%s4415 + $0x10] sm:$0xff]
    %v4840 = vld [vmem:[%s4415 + $0x18] sm:$0xff]
    %v4841 = vld [vmem:[%s4415 + $0x20] sm:$0xff]
    %v4842 = vld [vmem:[%s4415 + $0x28] sm:$0xff]
    %v4843 = vld [vmem:[%s4415 + $0x30] sm:$0xff]
    %v4844 = vld [vmem:[%s4415 + $0x38] sm:$0xff]
    %v4845 = vld [vmem:[%s4415 + $0x40] sm:$0xff]
    %v4846 = vld [vmem:[%s4415 + $0x48] sm:$0xff]
    %v4847 = vld [vmem:[%s4415 + $0x50] sm:$0xff]
    %v4848 = vld [vmem:[%s4415 + $0x58] sm:$0xff]
    %v4849 = vld [vmem:[%s4415 + $0x60] sm:$0xff]
    %v4850 = vld [vmem:[%s4415 + $0x68] sm:$0xff]
    %v4851 = vld [vmem:[%s4415 + $0x70] sm:$0xff]
    %v4852 = vld [vmem:[%s4415 + $0x78] sm:$0xff]
    %v4853 = vld [vmem:[%s4415 + $0x80] sm:$0xff]
    %v4854 = vld [vmem:[%s4415 + $0x88] sm:$0xff]
    %v4855 = vld [vmem:[%s4415 + $0x90] sm:$0xff]
    %v4856 = vld [vmem:[%s4415 + $0x98] sm:$0xff]
    %v4857 = vld [vmem:[%s4415 + $0xa0] sm:$0xff]
    %v4858 = vld [vmem:[%s4415 + $0xa8] sm:$0xff]
    %v4859 = vld [vmem:[%s4415 + $0xb0] sm:$0xff]
    %v4860 = vld [vmem:[%s4415 + $0xb8] sm:$0xff]
    %v4861 = vld [vmem:[%s4415 + $0xc0] sm:$0xff]
    %v4862 = vld [vmem:[%s4415 + $0xc8] sm:$0xff]
    %v4863 = vld [vmem:[%s4415 + $0xd0] sm:$0xff]
    %v4864 = vld [vmem:[%s4415 + $0xd8] sm:$0xff]
    %v4865 = vld [vmem:[%s4415 + $0xe0] sm:$0xff]
    %v4866 = vld [vmem:[%s4415 + $0xe8] sm:$0xff]
    %v4867 = vld [vmem:[%s4415 + $0xf0] sm:$0xff]
    %v4868 = vld [vmem:[%s4415 + $0xf8] sm:$0xff]
    %v4869 = vld [vmem:[%s4415 + $0x100] sm:$0xff]
    %v4870 = vld [vmem:[%s4415 + $0x108] sm:$0xff]
    %v4871 = vld [vmem:[%s4415 + $0x110] sm:$0xff]
    %v4872 = vld [vmem:[%s4415 + $0x118] sm:$0xff]
    %v4873 = vld [vmem:[%s4415 + $0x120] sm:$0xff]
    %v4874 = vld [vmem:[%s4415 + $0x128] sm:$0xff]
    %v4875 = vld [vmem:[%s4415 + $0x130] sm:$0xff]
    %v4876 = vld [vmem:[%s4415 + $0x138] sm:$0xff]
    %v4877 = vld [vmem:[%s4415 + $0x140] sm:$0xff]
    %v4878 = vld [vmem:[%s4415 + $0x148] sm:$0xff]
    %v4879 = vld [vmem:[%s4415 + $0x150] sm:$0xff]
    %v4880 = vld [vmem:[%s4415 + $0x158] sm:$0xff]
    %v4881 = vld [vmem:[%s4415 + $0x160] sm:$0xff]
    %v4882 = vld [vmem:[%s4415 + $0x168] sm:$0xff]
    %v4883 = vld [vmem:[%s4415 + $0x170] sm:$0xff]
    %v4884 = vld [vmem:[%s4415 + $0x178] sm:$0xff]
    %4885 = vmatprep.subr.mxu0 %v4838
    %4886 = vmatpush1.msra.mxu0 %v4837
    %4887 = vmatprep.subr.mxu0 %v4841
    %4888 = vmatpush1.msra.mxu0 %v4840
    %4889 = vmatprep.subr.mxu0 %v4844
    %4890 = vmatpush1.msra.mxu0 %v4843
    %4891 = vmatprep.subr.mxu0 %v4847
    %4892 = vmatpush1.msra.mxu0 %v4846
    %4893 = vmatprep.subr.mxu0 %v4850
    %4894 = vmatpush1.msra.mxu0 %v4849
    %4895 = vmatprep.subr.mxu0 %v4853
    %4896 = vmatpush1.msra.mxu0 %v4852
    %4897 = vmatprep.subr.mxu0 %v4856
    %4898 = vmatpush1.msra.mxu0 %v4855
    %4899 = vmatprep.subr.mxu0 %v4859
    %4900 = vmatpush1.msra.mxu0 %v4858
    %4901 = vmatprep.subr.mxu0 %v4862
    %4902 = vmatpush1.msra.mxu0 %v4861
    %4903 = vmatprep.subr.mxu0 %v4865
    %4904 = vmatpush1.msra.mxu0 %v4864
    %4905 = vmatprep.subr.mxu0 %v4868
    %4906 = vmatpush1.msra.mxu0 %v4867
    %4907 = vmatprep.subr.mxu0 %v4871
    %4908 = vmatpush1.msra.mxu0 %v4870
    %4909 = vmatprep.subr.mxu0 %v4874
    %4910 = vmatpush1.msra.mxu0 %v4873
    %4911 = vmatprep.subr.mxu0 %v4877
    %4912 = vmatpush1.msra.mxu0 %v4876
    %4913 = vmatprep.subr.mxu0 %v4880
    %4914 = vmatpush1.msra.mxu0 %v4879
    %4915 = vmatprep.subr.mxu0 %v4883
    %4916 = vmatpush1.msra.mxu0 %v4882
    %4917 = vmatprep.subr.mxu0 0.0
    %4918 = vmatpush1.msra.mxu0 0.0
    %4919 = vmatprep.subr.mxu0 0.0
    %4920 = vmatpush1.msra.mxu0 0.0
    %4921 = vmatprep.subr.mxu0 0.0
    %4922 = vmatpush1.msra.mxu0 0.0
    %4923 = vmatprep.subr.mxu0 0.0
    %4924 = vmatpush1.msra.mxu0 0.0
    %4925 = vmatprep.subr.mxu0 0.0
    %4926 = vmatpush1.msra.mxu0 0.0
    %4927 = vmatprep.subr.mxu0 0.0
    %4928 = vmatpush1.msra.mxu0 0.0
    %4929 = vmatprep.subr.mxu0 0.0
    %4930 = vmatpush1.msra.mxu0 0.0
    %4931 = vmatprep.subr.mxu0 0.0
    %4932 = vmatpush1.msra.mxu0 0.0
    %4933 = vmatprep.subr.mxu0 0.0
    %4934 = vmatpush1.msra.mxu0 0.0
    %4935 = vmatprep.subr.mxu0 0.0
    %4936 = vmatpush1.msra.mxu0 0.0
    %4937 = vmatprep.subr.mxu0 0.0
    %4938 = vmatpush1.msra.mxu0 0.0
    %4939 = vmatprep.subr.mxu0 0.0
    %4940 = vmatpush1.msra.mxu0 0.0
    %4941 = vmatprep.subr.mxu0 0.0
    %4942 = vmatpush1.msra.mxu0 0.0
    %4943 = vmatprep.subr.mxu0 0.0
    %4944 = vmatpush1.msra.mxu0 0.0
    %4945 = vmatprep.subr.mxu0 0.0
    %4946 = vmatpush1.msra.mxu0 0.0
    %4947 = vmatprep.subr.mxu0 0.0
    %4948 = vmatpush1.msra.mxu0 0.0
    %4949 = vmatprep.mubr.f32.mxu0 0.0
    %4950 = vmatmul.mubr.f32.gmra.mrb[0].mxu0 %v4831
    %v4951 = vpop.f32.mrb[0].mxu0
    %v4952 = vadd.f32 0.0, %v4951
    %v4953 = vpop.f32.mrb[0].mxu0
    %v4954 = vadd.f32 0.0, %v4953
    %4955 = vdwg.mxu0
    %4956 = vmatprep.subr.mxu0 0.0
    %4957 = vmatpush1.msra.mxu0 %v4839
    %4958 = vmatprep.subr.mxu0 0.0
    %4959 = vmatpush1.msra.mxu0 %v4842
    %4960 = vmatprep.subr.mxu0 0.0
    %4961 = vmatpush1.msra.mxu0 %v4845
    %4962 = vmatprep.subr.mxu0 0.0
    %4963 = vmatpush1.msra.mxu0 %v4848
    %4964 = vmatprep.subr.mxu0 0.0
    %4965 = vmatpush1.msra.mxu0 %v4851
    %4966 = vmatprep.subr.mxu0 0.0
    %4967 = vmatpush1.msra.mxu0 %v4854
    %4968 = vmatprep.subr.mxu0 0.0
    %4969 = vmatpush1.msra.mxu0 %v4857
    %4970 = vmatprep.subr.mxu0 0.0
    %4971 = vmatpush1.msra.mxu0 %v4860
    %4972 = vmatprep.subr.mxu0 0.0
    %4973 = vmatpush1.msra.mxu0 %v4863
    %4974 = vmatprep.subr.mxu0 0.0
    %4975 = vmatpush1.msra.mxu0 %v4866
    %4976 = vmatprep.subr.mxu0 0.0
    %4977 = vmatpush1.msra.mxu0 %v4869
    %4978 = vmatprep.subr.mxu0 0.0
    %4979 = vmatpush1.msra.mxu0 %v4872
    %4980 = vmatprep.subr.mxu0 0.0
    %4981 = vmatpush1.msra.mxu0 %v4875
    %4982 = vmatprep.subr.mxu0 0.0
    %4983 = vmatpush1.msra.mxu0 %v4878
    %4984 = vmatprep.subr.mxu0 0.0
    %4985 = vmatpush1.msra.mxu0 %v4881
    %4986 = vmatprep.subr.mxu0 0.0
    %4987 = vmatpush1.msra.mxu0 %v4884
    %4988 = vmatprep.subr.mxu0 0.0
    %4989 = vmatpush1.msra.mxu0 0.0
    %4990 = vmatprep.subr.mxu0 0.0
    %4991 = vmatpush1.msra.mxu0 0.0
    %4992 = vmatprep.subr.mxu0 0.0
    %4993 = vmatpush1.msra.mxu0 0.0
    %4994 = vmatprep.subr.mxu0 0.0
    %4995 = vmatpush1.msra.mxu0 0.0
    %4996 = vmatprep.subr.mxu0 0.0
    %4997 = vmatpush1.msra.mxu0 0.0
    %4998 = vmatprep.subr.mxu0 0.0
    %4999 = vmatpush1.msra.mxu0 0.0
    %5000 = vmatprep.subr.mxu0 0.0
    %5001 = vmatpush1.msra.mxu0 0.0
    %5002 = vmatprep.subr.mxu0 0.0
    %5003 = vmatpush1.msra.mxu0 0.0
    %5004 = vmatprep.subr.mxu0 0.0
    %5005 = vmatpush1.msra.mxu0 0.0
    %5006 = vmatprep.subr.mxu0 0.0
    %5007 = vmatpush1.msra.mxu0 0.0
    %5008 = vmatprep.subr.mxu0 0.0
    %5009 = vmatpush1.msra.mxu0 0.0
    %5010 = vmatprep.subr.mxu0 0.0
    %5011 = vmatpush1.msra.mxu0 0.0
    %5012 = vmatprep.subr.mxu0 0.0
    %5013 = vmatpush1.msra.mxu0 0.0
    %5014 = vmatprep.subr.mxu0 0.0
    %5015 = vmatpush1.msra.mxu0 0.0
    %5016 = vmatprep.subr.mxu0 0.0
    %5017 = vmatpush1.msra.mxu0 0.0
    %5018 = vmatprep.subr.mxu0 0.0
    %5019 = vmatpush1.msra.mxu0 0.0
    %5020 = vmatprep.mubr.f32.mxu0 0.0
    %5021 = vmatmul.mubr.f32.gmra.mrb[0].mxu0 %v4831
    %v5022 = vpop.f32.mrb[0].mxu0
    %v5023 = vadd.f32 0.0, %v5022
    %v5024 = vpop.f32.mrb[0].mxu0
    %5025 = vdwg.mxu0
    %v5026 = vadd.f32 %v4834, %v4952
    %v5027 = vmul.f32 %v5026, 0.5
    %v5028 = vtanh.pop %v5027
    %v5029 = vmul.f32 %v5028, 0.5
    %v5030 = vadd.f32 %v5029, 0.5
    %v5031 = vadd.f32 %v4835, %v4954
    %v5032 = vmul.f32 %v5031, 0.5
    %v5033 = vtanh.pop %v5032
    %v5034 = vmul.f32 %v5033, 0.5
    %v5035 = vadd.f32 %v5034, 0.5
    %v5036 = vadd.f32 %v5023, %v4410
    %v5037 = vmul.f32 %v5030, %v5036
    %v5038 = vadd.f32 %v4836, %v5037
    %v5039 = vtanh.pop %v5038
    %v5040 = vsub.f32 %v4831, %v5039
    %v5041 = vmul.f32 %v5035, %v5040
    %v5042 = vadd.f32 %v5039, %v5041
    %s5043 = scalar_lea.vmem %s5, 16
    %5044 = vst [vmem:[%s5043] sm:$0xff] %v5042
    %v5045 = vld [vmem:[%s1013] sm:$0xff]
    %v5046 = vld [vmem:[%s1013 + $0x8] sm:$0xff]
    %v5047 = vld [vmem:[%s1013 + $0x10] sm:$0xff]
    %v5048 = vld [vmem:[%s4415] sm:$0xff]
    %v5049 = vld [vmem:[%s4415 + $0x8] sm:$0xff]
    %v5050 = vld [vmem:[%s4415 + $0x10] sm:$0xff]
    %v5051 = vld [vmem:[%s4415 + $0x18] sm:$0xff]
    %v5052 = vld [vmem:[%s4415 + $0x20] sm:$0xff]
    %v5053 = vld [vmem:[%s4415 + $0x28] sm:$0xff]
    %v5054 = vld [vmem:[%s4415 + $0x30] sm:$0xff]
    %v5055 = vld [vmem:[%s4415 + $0x38] sm:$0xff]
    %v5056 = vld [vmem:[%s4415 + $0x40] sm:$0xff]
    %v5057 = vld [vmem:[%s4415 + $0x48] sm:$0xff]
    %v5058 = vld [vmem:[%s4415 + $0x50] sm:$0xff]
    %v5059 = vld [vmem:[%s4415 + $0x58] sm:$0xff]
    %v5060 = vld [vmem:[%s4415 + $0x60] sm:$0xff]
    %v5061 = vld [vmem:[%s4415 + $0x68] sm:$0xff]
    %v5062 = vld [vmem:[%s4415 + $0x70] sm:$0xff]
    %v5063 = vld [vmem:[%s4415 + $0x78] sm:$0xff]
    %v5064 = vld [vmem:[%s4415 + $0x80] sm:$0xff]
    %v5065 = vld [vmem:[%s4415 + $0x88] sm:$0xff]
    %v5066 = vld [vmem:[%s4415 + $0x90] sm:$0xff]
    %v5067 = vld [vmem:[%s4415 + $0x98] sm:$0xff]
    %v5068 = vld [vmem:[%s4415 + $0xa0] sm:$0xff]
    %v5069 = vld [vmem:[%s4415 + $0xa8] sm:$0xff]
    %v5070 = vld [vmem:[%s4415 + $0xb0] sm:$0xff]
    %v5071 = vld [vmem:[%s4415 + $0xb8] sm:$0xff]
    %v5072 = vld [vmem:[%s4415 + $0xc0] sm:$0xff]
    %v5073 = vld [vmem:[%s4415 + $0xc8] sm:$0xff]
    %v5074 = vld [vmem:[%s4415 + $0xd0] sm:$0xff]
    %v5075 = vld [vmem:[%s4415 + $0xd8] sm:$0xff]
    %v5076 = vld [vmem:[%s4415 + $0xe0] sm:$0xff]
    %v5077 = vld [vmem:[%s4415 + $0xe8] sm:$0xff]
    %v5078 = vld [vmem:[%s4415 + $0xf0] sm:$0xff]
    %v5079 = vld [vmem:[%s4415 + $0xf8] sm:$0xff]
    %v5080 = vld [vmem:[%s4415 + $0x100] sm:$0xff]
    %v5081 = vld [vmem:[%s4415 + $0x108] sm:$0xff]
    %v5082 = vld [vmem:[%s4415 + $0x110] sm:$0xff]
    %v5083 = vld [vmem:[%s4415 + $0x118] sm:$0xff]
    %v5084 = vld [vmem:[%s4415 + $0x120] sm:$0xff]
    %v5085 = vld [vmem:[%s4415 + $0x128] sm:$0xff]
    %v5086 = vld [vmem:[%s4415 + $0x130] sm:$0xff]
    %v5087 = vld [vmem:[%s4415 + $0x138] sm:$0xff]
    %v5088 = vld [vmem:[%s4415 + $0x140] sm:$0xff]
    %v5089 = vld [vmem:[%s4415 + $0x148] sm:$0xff]
    %v5090 = vld [vmem:[%s4415 + $0x150] sm:$0xff]
    %v5091 = vld [vmem:[%s4415 + $0x158] sm:$0xff]
    %v5092 = vld [vmem:[%s4415 + $0x160] sm:$0xff]
    %v5093 = vld [vmem:[%s4415 + $0x168] sm:$0xff]
    %v5094 = vld [vmem:[%s4415 + $0x170] sm:$0xff]
    %v5095 = vld [vmem:[%s4415 + $0x178] sm:$0xff]
    %5096 = vmatprep.subr.mxu0 %v5049
    %5097 = vmatpush1.msra.mxu0 %v5048
    %5098 = vmatprep.subr.mxu0 %v5052
    %5099 = vmatpush1.msra.mxu0 %v5051
    %5100 = vmatprep.subr.mxu0 %v5055
    %5101 = vmatpush1.msra.mxu0 %v5054
    %5102 = vmatprep.subr.mxu0 %v5058
    %5103 = vmatpush1.msra.mxu0 %v5057
    %5104 = vmatprep.subr.mxu0 %v5061
    %5105 = vmatpush1.msra.mxu0 %v5060
    %5106 = vmatprep.subr.mxu0 %v5064
    %5107 = vmatpush1.msra.mxu0 %v5063
    %5108 = vmatprep.subr.mxu0 %v5067
    %5109 = vmatpush1.msra.mxu0 %v5066
    %5110 = vmatprep.subr.mxu0 %v5070
    %5111 = vmatpush1.msra.mxu0 %v5069
    %5112 = vmatprep.subr.mxu0 %v5073
    %5113 = vmatpush1.msra.mxu0 %v5072
    %5114 = vmatprep.subr.mxu0 %v5076
    %5115 = vmatpush1.msra.mxu0 %v5075
    %5116 = vmatprep.subr.mxu0 %v5079
    %5117 = vmatpush1.msra.mxu0 %v5078
    %5118 = vmatprep.subr.mxu0 %v5082
    %5119 = vmatpush1.msra.mxu0 %v5081
    %5120 = vmatprep.subr.mxu0 %v5085
    %5121 = vmatpush1.msra.mxu0 %v5084
    %5122 = vmatprep.subr.mxu0 %v5088
    %5123 = vmatpush1.msra.mxu0 %v5087
    %5124 = vmatprep.subr.mxu0 %v5091
    %5125 = vmatpush1.msra.mxu0 %v5090
    %5126 = vmatprep.subr.mxu0 %v5094
    %5127 = vmatpush1.msra.mxu0 %v5093
    %5128 = vmatprep.subr.mxu0 0.0
    %5129 = vmatpush1.msra.mxu0 0.0
    %5130 = vmatprep.subr.mxu0 0.0
    %5131 = vmatpush1.msra.mxu0 0.0
    %5132 = vmatprep.subr.mxu0 0.0
    %5133 = vmatpush1.msra.mxu0 0.0
    %5134 = vmatprep.subr.mxu0 0.0
    %5135 = vmatpush1.msra.mxu0 0.0
    %5136 = vmatprep.subr.mxu0 0.0
    %5137 = vmatpush1.msra.mxu0 0.0
    %5138 = vmatprep.subr.mxu0 0.0
    %5139 = vmatpush1.msra.mxu0 0.0
    %5140 = vmatprep.subr.mxu0 0.0
    %5141 = vmatpush1.msra.mxu0 0.0
    %5142 = vmatprep.subr.mxu0 0.0
    %5143 = vmatpush1.msra.mxu0 0.0
    %5144 = vmatprep.subr.mxu0 0.0
    %5145 = vmatpush1.msra.mxu0 0.0
    %5146 = vmatprep.subr.mxu0 0.0
    %5147 = vmatpush1.msra.mxu0 0.0
    %5148 = vmatprep.subr.mxu0 0.0
    %5149 = vmatpush1.msra.mxu0 0.0
    %5150 = vmatprep.subr.mxu0 0.0
    %5151 = vmatpush1.msra.mxu0 0.0
    %5152 = vmatprep.subr.mxu0 0.0
    %5153 = vmatpush1.msra.mxu0 0.0
    %5154 = vmatprep.subr.mxu0 0.0
    %5155 = vmatpush1.msra.mxu0 0.0
    %5156 = vmatprep.subr.mxu0 0.0
    %5157 = vmatpush1.msra.mxu0 0.0
    %5158 = vmatprep.subr.mxu0 0.0
    %5159 = vmatpush1.msra.mxu0 0.0
    %5160 = vmatprep.mubr.f32.mxu0 0.0
    %5161 = vmatmul.mubr.f32.gmra.mrb[0].mxu0 %v5042
    %v5162 = vpop.f32.mrb[0].mxu0
    %v5163 = vadd.f32 0.0, %v5162
    %v5164 = vpop.f32.mrb[0].mxu0
    %v5165 = vadd.f32 0.0, %v5164
    %5166 = vdwg.mxu0
    %5167 = vmatprep.subr.mxu0 0.0
    %5168 = vmatpush1.msra.mxu0 %v5050
    %5169 = vmatprep.subr.mxu0 0.0
    %5170 = vmatpush1.msra.mxu0 %v5053
    %5171 = vmatprep.subr.mxu0 0.0
    %5172 = vmatpush1.msra.mxu0 %v5056
    %5173 = vmatprep.subr.mxu0 0.0
    %5174 = vmatpush1.msra.mxu0 %v5059
    %5175 = vmatprep.subr.mxu0 0.0
    %5176 = vmatpush1.msra.mxu0 %v5062
    %5177 = vmatprep.subr.mxu0 0.0
    %5178 = vmatpush1.msra.mxu0 %v5065
    %5179 = vmatprep.subr.mxu0 0.0
    %5180 = vmatpush1.msra.mxu0 %v5068
    %5181 = vmatprep.subr.mxu0 0.0
    %5182 = vmatpush1.msra.mxu0 %v5071
    %5183 = vmatprep.subr.mxu0 0.0
    %5184 = vmatpush1.msra.mxu0 %v5074
    %5185 = vmatprep.subr.mxu0 0.0
    %5186 = vmatpush1.msra.mxu0 %v5077
    %5187 = vmatprep.subr.mxu0 0.0
    %5188 = vmatpush1.msra.mxu0 %v5080
    %5189 = vmatprep.subr.mxu0 0.0
    %5190 = vmatpush1.msra.mxu0 %v5083
    %5191 = vmatprep.subr.mxu0 0.0
    %5192 = vmatpush1.msra.mxu0 %v5086
    %5193 = vmatprep.subr.mxu0 0.0
    %5194 = vmatpush1.msra.mxu0 %v5089
    %5195 = vmatprep.subr.mxu0 0.0
    %5196 = vmatpush1.msra.mxu0 %v5092
    %5197 = vmatprep.subr.mxu0 0.0
    %5198 = vmatpush1.msra.mxu0 %v5095
    %5199 = vmatprep.subr.mxu0 0.0
    %5200 = vmatpush1.msra.mxu0 0.0
    %5201 = vmatprep.subr.mxu0 0.0
    %5202 = vmatpush1.msra.mxu0 0.0
    %5203 = vmatprep.subr.mxu0 0.0
    %5204 = vmatpush1.msra.mxu0 0.0
    %5205 = vmatprep.subr.mxu0 0.0
    %5206 = vmatpush1.msra.mxu0 0.0
    %5207 = vmatprep.subr.mxu0 0.0
    %5208 = vmatpush1.msra.mxu0 0.0
    %5209 = vmatprep.subr.mxu0 0.0
    %5210 = vmatpush1.msra.mxu0 0.0
    %5211 = vmatprep.subr.mxu0 0.0
    %5212 = vmatpush1.msra.mxu0 0.0
    %5213 = vmatprep.subr.mxu0 0.0
    %5214 = vmatpush1.msra.mxu0 0.0
    %5215 = vmatprep.subr.mxu0 0.0
    %5216 = vmatpush1.msra.mxu0 0.0
    %5217 = vmatprep.subr.mxu0 0.0
    %5218 = vmatpush1.msra.mxu0 0.0
    %5219 = vmatprep.subr.mxu0 0.0
    %5220 = vmatpush1.msra.mxu0 0.0
    %5221 = vmatprep.subr.mxu0 0.0
    %5222 = vmatpush1.msra.mxu0 0.0
    %5223 = vmatprep.subr.mxu0 0.0
    %5224 = vmatpush1.msra.mxu0 0.0
    %5225 = vmatprep.subr.mxu0 0.0
    %5226 = vmatpush1.msra.mxu0 0.0
    %5227 = vmatprep.subr.mxu0 0.0
    %5228 = vmatpush1.msra.mxu0 0.0
    %5229 = vmatprep.subr.mxu0 0.0
    %5230 = vmatpush1.msra.mxu0 0.0
    %5231 = vmatprep.mubr.f32.mxu0 0.0
    %5232 = vmatmul.mubr.f32.gmra.mrb[0].mxu0 %v5042
    %v5233 = vpop.f32.mrb[0].mxu0
    %v5234 = vadd.f32 0.0, %v5233
    %v5235 = vpop.f32.mrb[0].mxu0
    %5236 = vdwg.mxu0
    %v5237 = vadd.f32 %v5045, %v5163
    %v5238 = vmul.f32 %v5237, 0.5
    %v5239 = vtanh.pop %v5238
    %v5240 = vmul.f32 %v5239, 0.5
    %v5241 = vadd.f32 %v5240, 0.5
    %v5242 = vadd.f32 %v5046, %v5165
    %v5243 = vmul.f32 %v5242, 0.5
    %v5244 = vtanh.pop %v5243
    %v5245 = vmul.f32 %v5244, 0.5
    %v5246 = vadd.f32 %v5245, 0.5
    %v5247 = vadd.f32 %v5234, %v4410
    %v5248 = vmul.f32 %v5241, %v5247
    %v5249 = vadd.f32 %v5047, %v5248
    %v5250 = vtanh.pop %v5249
    %v5251 = vsub.f32 %v5042, %v5250
    %v5252 = vmul.f32 %v5246, %v5251
    %v5253 = vadd.f32 %v5250, %v5252
    %s5254 = scalar_lea.vmem %s5, 24
    %5255 = vst [vmem:[%s5254] sm:$0xff] %v5253
    %v5256 = vld [vmem:[%s1227] sm:$0xff]
    %v5257 = vld [vmem:[%s1227 + $0x8] sm:$0xff]
    %v5258 = vld [vmem:[%s1227 + $0x10] sm:$0xff]
    %v5259 = vld [vmem:[%s4415] sm:$0xff]
    %v5260 = vld [vmem:[%s4415 + $0x8] sm:$0xff]
    %v5261 = vld [vmem:[%s4415 + $0x10] sm:$0xff]
    %v5262 = vld [vmem:[%s4415 + $0x18] sm:$0xff]
    %v5263 = vld [vmem:[%s4415 + $0x20] sm:$0xff]
    %v5264 = vld [vmem:[%s4415 + $0x28] sm:$0xff]
    %v5265 = vld [vmem:[%s4415 + $0x30] sm:$0xff]
    %v5266 = vld [vmem:[%s4415 + $0x38] sm:$0xff]
    %v5267 = vld [vmem:[%s4415 + $0x40] sm:$0xff]
    %v5268 = vld [vmem:[%s4415 + $0x48] sm:$0xff]
    %v5269 = vld [vmem:[%s4415 + $0x50] sm:$0xff]
    %v5270 = vld [vmem:[%s4415 + $0x58] sm:$0xff]
    %v5271 = vld [vmem:[%s4415 + $0x60] sm:$0xff]
    %v5272 = vld [vmem:[%s4415 + $0x68] sm:$0xff]
    %v5273 = vld [vmem:[%s4415 + $0x70] sm:$0xff]
    %v5274 = vld [vmem:[%s4415 + $0x78] sm:$0xff]
    %v5275 = vld [vmem:[%s4415 + $0x80] sm:$0xff]
    %v5276 = vld [vmem:[%s4415 + $0x88] sm:$0xff]
    %v5277 = vld [vmem:[%s4415 + $0x90] sm:$0xff]
    %v5278 = vld [vmem:[%s4415 + $0x98] sm:$0xff]
    %v5279 = vld [vmem:[%s4415 + $0xa0] sm:$0xff]
    %v5280 = vld [vmem:[%s4415 + $0xa8] sm:$0xff]
    %v5281 = vld [vmem:[%s4415 + $0xb0] sm:$0xff]
    %v5282 = vld [vmem:[%s4415 + $0xb8] sm:$0xff]
    %v5283 = vld [vmem:[%s4415 + $0xc0] sm:$0xff]
    %v5284 = vld [vmem:[%s4415 + $0xc8] sm:$0xff]
    %v5285 = vld [vmem:[%s4415 + $0xd0] sm:$0xff]
    %v5286 = vld [vmem:[%s4415 + $0xd8] sm:$0xff]
    %v5287 = vld [vmem:[%s4415 + $0xe0] sm:$0xff]
    %v5288 = vld [vmem:[%s4415 + $0xe8] sm:$0xff]
    %v5289 = vld [vmem:[%s4415 + $0xf0] sm:$0xff]
    %v5290 = vld [vmem:[%s4415 + $0xf8] sm:$0xff]
    %v5291 = vld [vmem:[%s4415 + $0x100] sm:$0xff]
    %v5292 = vld [vmem:[%s4415 + $0x108] sm:$0xff]
    %v5293 = vld [vmem:[%s4415 + $0x110] sm:$0xff]
    %v5294 = vld [vmem:[%s4415 + $0x118] sm:$0xff]
    %v5295 = vld [vmem:[%s4415 + $0x120] sm:$0xff]
    %v5296 = vld [vmem:[%s4415 + $0x128] sm:$0xff]
    %v5297 = vld [vmem:[%s4415 + $0x130] sm:$0xff]
    %v5298 = vld [vmem:[%s4415 + $0x138] sm:$0xff]
    %v5299 = vld [vmem:[%s4415 + $0x140] sm:$0xff]
    %v5300 = vld [vmem:[%s4415 + $0x148] sm:$0xff]
    %v5301 = vld [vmem:[%s4415 + $0x150] sm:$0xff]
    %v5302 = vld [vmem:[%s4415 + $0x158] sm:$0xff]
    %v5303 = vld [vmem:[%s4415 + $0x160] sm:$0xff]
    %v5304 = vld [vmem:[%s4415 + $0x168] sm:$0xff]
    %v5305 = vld [vmem:[%s4415 + $0x170] sm:$0xff]
    %v5306 = vld [vmem:[%s4415 + $0x178] sm:$0xff]
    %5307 = vmatprep.subr.mxu0 %v5260
    %5308 = vmatpush1.msra.mxu0 %v5259
    %5309 = vmatprep.subr.mxu0 %v5263
    %5310 = vmatpush1.msra.mxu0 %v5262
    %5311 = vmatprep.subr.mxu0 %v5266
    %5312 = vmatpush1.msra.mxu0 %v5265
    %5313 = vmatprep.subr.mxu0 %v5269
    %5314 = vmatpush1.msra.mxu0 %v5268
    %5315 = vmatprep.subr.mxu0 %v5272
    %5316 = vmatpush1.msra.mxu0 %v5271
    %5317 = vmatprep.subr.mxu0 %v5275
    %5318 = vmatpush1.msra.mxu0 %v5274
    %5319 = vmatprep.subr.mxu0 %v5278
    %5320 = vmatpush1.msra.mxu0 %v5277
    %5321 = vmatprep.subr.mxu0 %v5281
    %5322 = vmatpush1.msra.mxu0 %v5280
    %5323 = vmatprep.subr.mxu0 %v5284
    %5324 = vmatpush1.msra.mxu0 %v5283
    %5325 = vmatprep.subr.mxu0 %v5287
    %5326 = vmatpush1.msra.mxu0 %v5286
    %5327 = vmatprep.subr.mxu0 %v5290
    %5328 = vmatpush1.msra.mxu0 %v5289
    %5329 = vmatprep.subr.mxu0 %v5293
    %5330 = vmatpush1.msra.mxu0 %v5292
    %5331 = vmatprep.subr.mxu0 %v5296
    %5332 = vmatpush1.msra.mxu0 %v5295
    %5333 = vmatprep.subr.mxu0 %v5299
    %5334 = vmatpush1.msra.mxu0 %v5298
    %5335 = vmatprep.subr.mxu0 %v5302
    %5336 = vmatpush1.msra.mxu0 %v5301
    %5337 = vmatprep.subr.mxu0 %v5305
    %5338 = vmatpush1.msra.mxu0 %v5304
    %5339 = vmatprep.subr.mxu0 0.0
    %5340 = vmatpush1.msra.mxu0 0.0
    %5341 = vmatprep.subr.mxu0 0.0
    %5342 = vmatpush1.msra.mxu0 0.0
    %5343 = vmatprep.subr.mxu0 0.0
    %5344 = vmatpush1.msra.mxu0 0.0
    %5345 = vmatprep.subr.mxu0 0.0
    %5346 = vmatpush1.msra.mxu0 0.0
    %5347 = vmatprep.subr.mxu0 0.0
    %5348 = vmatpush1.msra.mxu0 0.0
    %5349 = vmatprep.subr.mxu0 0.0
    %5350 = vmatpush1.msra.mxu0 0.0
    %5351 = vmatprep.subr.mxu0 0.0
    %5352 = vmatpush1.msra.mxu0 0.0
    %5353 = vmatprep.subr.mxu0 0.0
    %5354 = vmatpush1.msra.mxu0 0.0
    %5355 = vmatprep.subr.mxu0 0.0
    %5356 = vmatpush1.msra.mxu0 0.0
    %5357 = vmatprep.subr.mxu0 0.0
    %5358 = vmatpush1.msra.mxu0 0.0
    %5359 = vmatprep.subr.mxu0 0.0
    %5360 = vmatpush1.msra.mxu0 0.0
    %5361 = vmatprep.subr.mxu0 0.0
    %5362 = vmatpush1.msra.mxu0 0.0
    %5363 = vmatprep.subr.mxu0 0.0
    %5364 = vmatpush1.msra.mxu0 0.0
    %5365 = vmatprep.subr.mxu0 0.0
    %5366 = vmatpush1.msra.mxu0 0.0
    %5367 = vmatprep.subr.mxu0 0.0
    %5368 = vmatpush1.msra.mxu0 0.0
    %5369 = vmatprep.subr.mxu0 0.0
    %5370 = vmatpush1.msra.mxu0 0.0
    %5371 = vmatprep.mubr.f32.mxu0 0.0
    %5372 = vmatmul.mubr.f32.gmra.mrb[0].mxu0 %v5253
    %v5373 = vpop.f32.mrb[0].mxu0
    %v5374 = vadd.f32 0.0, %v5373
    %v5375 = vpop.f32.mrb[0].mxu0
    %v5376 = vadd.f32 0.0, %v5375
    %5377 = vdwg.mxu0
    %5378 = vmatprep.subr.mxu0 0.0
    %5379 = vmatpush1.msra.mxu0 %v5261
    %5380 = vmatprep.subr.mxu0 0.0
    %5381 = vmatpush1.msra.mxu0 %v5264
    %5382 = vmatprep.subr.mxu0 0.0
    %5383 = vmatpush1.msra.mxu0 %v5267
    %5384 = vmatprep.subr.mxu0 0.0
    %5385 = vmatpush1.msra.mxu0 %v5270
    %5386 = vmatprep.subr.mxu0 0.0
    %5387 = vmatpush1.msra.mxu0 %v5273
    %5388 = vmatprep.subr.mxu0 0.0
    %5389 = vmatpush1.msra.mxu0 %v5276
    %5390 = vmatprep.subr.mxu0 0.0
    %5391 = vmatpush1.msra.mxu0 %v5279
    %5392 = vmatprep.subr.mxu0 0.0
    %5393 = vmatpush1.msra.mxu0 %v5282
    %5394 = vmatprep.subr.mxu0 0.0
    %5395 = vmatpush1.msra.mxu0 %v5285
    %5396 = vmatprep.subr.mxu0 0.0
    %5397 = vmatpush1.msra.mxu0 %v5288
    %5398 = vmatprep.subr.mxu0 0.0
    %5399 = vmatpush1.msra.mxu0 %v5291
    %5400 = vmatprep.subr.mxu0 0.0
    %5401 = vmatpush1.msra.mxu0 %v5294
    %5402 = vmatprep.subr.mxu0 0.0
    %5403 = vmatpush1.msra.mxu0 %v5297
    %5404 = vmatprep.subr.mxu0 0.0
    %5405 = vmatpush1.msra.mxu0 %v5300
    %5406 = vmatprep.subr.mxu0 0.0
    %5407 = vmatpush1.msra.mxu0 %v5303
    %5408 = vmatprep.subr.mxu0 0.0
    %5409 = vmatpush1.msra.mxu0 %v5306
    %5410 = vmatprep.subr.mxu0 0.0
    %5411 = vmatpush1.msra.mxu0 0.0
    %5412 = vmatprep.subr.mxu0 0.0
    %5413 = vmatpush1.msra.mxu0 0.0
    %5414 = vmatprep.subr.mxu0 0.0
    %5415 = vmatpush1.msra.mxu0 0.0
    %5416 = vmatprep.subr.mxu0 0.0
    %5417 = vmatpush1.msra.mxu0 0.0
    %5418 = vmatprep.subr.mxu0 0.0
    %5419 = vmatpush1.msra.mxu0 0.0
    %5420 = vmatprep.subr.mxu0 0.0
    %5421 = vmatpush1.msra.mxu0 0.0
    %5422 = vmatprep.subr.mxu0 0.0
    %5423 = vmatpush1.msra.mxu0 0.0
    %5424 = vmatprep.subr.mxu0 0.0
    %5425 = vmatpush1.msra.mxu0 0.0
    %5426 = vmatprep.subr.mxu0 0.0
    %5427 = vmatpush1.msra.mxu0 0.0
    %5428 = vmatprep.subr.mxu0 0.0
    %5429 = vmatpush1.msra.mxu0 0.0
    %5430 = vmatprep.subr.mxu0 0.0
    %5431 = vmatpush1.msra.mxu0 0.0
    %5432 = vmatprep.subr.mxu0 0.0
    %5433 = vmatpush1.msra.mxu0 0.0
    %5434 = vmatprep.subr.mxu0 0.0
    %5435 = vmatpush1.msra.mxu0 0.0
    %5436 = vmatprep.subr.mxu0 0.0
    %5437 = vmatpush1.msra.mxu0 0.0
    %5438 = vmatprep.subr.mxu0 0.0
    %5439 = vmatpush1.msra.mxu0 0.0
    %5440 = vmatprep.subr.mxu0 0.0
    %5441 = vmatpush1.msra.mxu0 0.0
    %5442 = vmatprep.mubr.f32.mxu0 0.0
    %5443 = vmatmul.mubr.f32.gmra.mrb[0].mxu0 %v5253
    %v5444 = vpop.f32.mrb[0].mxu0
    %v5445 = vadd.f32 0.0, %v5444
    %v5446 = vpop.f32.mrb[0].mxu0
    %5447 = vdwg.mxu0
    %v5448 = vadd.f32 %v5256, %v5374
    %v5449 = vmul.f32 %v5448, 0.5
    %v5450 = vtanh.pop %v5449
    %v5451 = vmul.f32 %v5450, 0.5
    %v5452 = vadd.f32 %v5451, 0.5
    %v5453 = vadd.f32 %v5257, %v5376
    %v5454 = vmul.f32 %v5453, 0.5
    %v5455 = vtanh.pop %v5454
    %v5456 = vmul.f32 %v5455, 0.5
    %v5457 = vadd.f32 %v5456, 0.5
    %v5458 = vadd.f32 %v5445, %v4410
    %v5459 = vmul.f32 %v5452, %v5458
    %v5460 = vadd.f32 %v5258, %v5459
    %v5461 = vtanh.pop %v5460
    %v5462 = vsub.f32 %v5253, %v5461
    %v5463 = vmul.f32 %v5457, %v5462
    %v5464 = vadd.f32 %v5461, %v5463
    %s5465 = scalar_lea.vmem %s5, 32
    %5466 = vst [vmem:[%s5465] sm:$0xff] %v5464
    %v5467 = vld [vmem:[%s1441] sm:$0xff]
    %v5468 = vld [vmem:[%s1441 + $0x8] sm:$0xff]
    %v5469 = vld [vmem:[%s1441 + $0x10] sm:$0xff]
    %v5470 = vld [vmem:[%s4415] sm:$0xff]
    %v5471 = vld [vmem:[%s4415 + $0x8] sm:$0xff]
    %v5472 = vld [vmem:[%s4415 + $0x10] sm:$0xff]
    %v5473 = vld [vmem:[%s4415 + $0x18] sm:$0xff]
    %v5474 = vld [vmem:[%s4415 + $0x20] sm:$0xff]
    %v5475 = vld [vmem:[%s4415 + $0x28] sm:$0xff]
    %v5476 = vld [vmem:[%s4415 + $0x30] sm:$0xff]
    %v5477 = vld [vmem:[%s4415 + $0x38] sm:$0xff]
    %v5478 = vld [vmem:[%s4415 + $0x40] sm:$0xff]
    %v5479 = vld [vmem:[%s4415 + $0x48] sm:$0xff]
    %v5480 = vld [vmem:[%s4415 + $0x50] sm:$0xff]
    %v5481 = vld [vmem:[%s4415 + $0x58] sm:$0xff]
    %v5482 = vld [vmem:[%s4415 + $0x60] sm:$0xff]
    %v5483 = vld [vmem:[%s4415 + $0x68] sm:$0xff]
    %v5484 = vld [vmem:[%s4415 + $0x70] sm:$0xff]
    %v5485 = vld [vmem:[%s4415 + $0x78] sm:$0xff]
    %v5486 = vld [vmem:[%s4415 + $0x80] sm:$0xff]
    %v5487 = vld [vmem:[%s4415 + $0x88] sm:$0xff]
    %v5488 = vld [vmem:[%s4415 + $0x90] sm:$0xff]
    %v5489 = vld [vmem:[%s4415 + $0x98] sm:$0xff]
    %v5490 = vld [vmem:[%s4415 + $0xa0] sm:$0xff]
    %v5491 = vld [vmem:[%s4415 + $0xa8] sm:$0xff]
    %v5492 = vld [vmem:[%s4415 + $0xb0] sm:$0xff]
    %v5493 = vld [vmem:[%s4415 + $0xb8] sm:$0xff]
    %v5494 = vld [vmem:[%s4415 + $0xc0] sm:$0xff]
    %v5495 = vld [vmem:[%s4415 + $0xc8] sm:$0xff]
    %v5496 = vld [vmem:[%s4415 + $0xd0] sm:$0xff]
    %v5497 = vld [vmem:[%s4415 + $0xd8] sm:$0xff]
    %v5498 = vld [vmem:[%s4415 + $0xe0] sm:$0xff]
    %v5499 = vld [vmem:[%s4415 + $0xe8] sm:$0xff]
    %v5500 = vld [vmem:[%s4415 + $0xf0] sm:$0xff]
    %v5501 = vld [vmem:[%s4415 + $0xf8] sm:$0xff]
    %v5502 = vld [vmem:[%s4415 + $0x100] sm:$0xff]
    %v5503 = vld [vmem:[%s4415 + $0x108] sm:$0xff]
    %v5504 = vld [vmem:[%s4415 + $0x110] sm:$0xff]
    %v5505 = vld [vmem:[%s4415 + $0x118] sm:$0xff]
    %v5506 = vld [vmem:[%s4415 + $0x120] sm:$0xff]
    %v5507 = vld [vmem:[%s4415 + $0x128] sm:$0xff]
    %v5508 = vld [vmem:[%s4415 + $0x130] sm:$0xff]
    %v5509 = vld [vmem:[%s4415 + $0x138] sm:$0xff]
    %v5510 = vld [vmem:[%s4415 + $0x140] sm:$0xff]
    %v5511 = vld [vmem:[%s4415 + $0x148] sm:$0xff]
    %v5512 = vld [vmem:[%s4415 + $0x150] sm:$0xff]
    %v5513 = vld [vmem:[%s4415 + $0x158] sm:$0xff]
    %v5514 = vld [vmem:[%s4415 + $0x160] sm:$0xff]
    %v5515 = vld [vmem:[%s4415 + $0x168] sm:$0xff]
    %v5516 = vld [vmem:[%s4415 + $0x170] sm:$0xff]
    %v5517 = vld [vmem:[%s4415 + $0x178] sm:$0xff]
    %5518 = vmatprep.subr.mxu0 %v5471
    %5519 = vmatpush1.msra.mxu0 %v5470
    %5520 = vmatprep.subr.mxu0 %v5474
    %5521 = vmatpush1.msra.mxu0 %v5473
    %5522 = vmatprep.subr.mxu0 %v5477
    %5523 = vmatpush1.msra.mxu0 %v5476
    %5524 = vmatprep.subr.mxu0 %v5480
    %5525 = vmatpush1.msra.mxu0 %v5479
    %5526 = vmatprep.subr.mxu0 %v5483
    %5527 = vmatpush1.msra.mxu0 %v5482
    %5528 = vmatprep.subr.mxu0 %v5486
    %5529 = vmatpush1.msra.mxu0 %v5485
    %5530 = vmatprep.subr.mxu0 %v5489
    %5531 = vmatpush1.msra.mxu0 %v5488
    %5532 = vmatprep.subr.mxu0 %v5492
    %5533 = vmatpush1.msra.mxu0 %v5491
    %5534 = vmatprep.subr.mxu0 %v5495
    %5535 = vmatpush1.msra.mxu0 %v5494
    %5536 = vmatprep.subr.mxu0 %v5498
    %5537 = vmatpush1.msra.mxu0 %v5497
    %5538 = vmatprep.subr.mxu0 %v5501
    %5539 = vmatpush1.msra.mxu0 %v5500
    %5540 = vmatprep.subr.mxu0 %v5504
    %5541 = vmatpush1.msra.mxu0 %v5503
    %5542 = vmatprep.subr.mxu0 %v5507
    %5543 = vmatpush1.msra.mxu0 %v5506
    %5544 = vmatprep.subr.mxu0 %v5510
    %5545 = vmatpush1.msra.mxu0 %v5509
    %5546 = vmatprep.subr.mxu0 %v5513
    %5547 = vmatpush1.msra.mxu0 %v5512
    %5548 = vmatprep.subr.mxu0 %v5516
    %5549 = vmatpush1.msra.mxu0 %v5515
    %5550 = vmatprep.subr.mxu0 0.0
    %5551 = vmatpush1.msra.mxu0 0.0
    %5552 = vmatprep.subr.mxu0 0.0
    %5553 = vmatpush1.msra.mxu0 0.0
    %5554 = vmatprep.subr.mxu0 0.0
    %5555 = vmatpush1.msra.mxu0 0.0
    %5556 = vmatprep.subr.mxu0 0.0
    %5557 = vmatpush1.msra.mxu0 0.0
    %5558 = vmatprep.subr.mxu0 0.0
    %5559 = vmatpush1.msra.mxu0 0.0
    %5560 = vmatprep.subr.mxu0 0.0
    %5561 = vmatpush1.msra.mxu0 0.0
    %5562 = vmatprep.subr.mxu0 0.0
    %5563 = vmatpush1.msra.mxu0 0.0
    %5564 = vmatprep.subr.mxu0 0.0
    %5565 = vmatpush1.msra.mxu0 0.0
    %5566 = vmatprep.subr.mxu0 0.0
    %5567 = vmatpush1.msra.mxu0 0.0
    %5568 = vmatprep.subr.mxu0 0.0
    %5569 = vmatpush1.msra.mxu0 0.0
    %5570 = vmatprep.subr.mxu0 0.0
    %5571 = vmatpush1.msra.mxu0 0.0
    %5572 = vmatprep.subr.mxu0 0.0
    %5573 = vmatpush1.msra.mxu0 0.0
    %5574 = vmatprep.subr.mxu0 0.0
    %5575 = vmatpush1.msra.mxu0 0.0
    %5576 = vmatprep.subr.mxu0 0.0
    %5577 = vmatpush1.msra.mxu0 0.0
    %5578 = vmatprep.subr.mxu0 0.0
    %5579 = vmatpush1.msra.mxu0 0.0
    %5580 = vmatprep.subr.mxu0 0.0
    %5581 = vmatpush1.msra.mxu0 0.0
    %5582 = vmatprep.mubr.f32.mxu0 0.0
    %5583 = vmatmul.mubr.f32.gmra.mrb[0].mxu0 %v5464
    %v5584 = vpop.f32.mrb[0].mxu0
    %v5585 = vadd.f32 0.0, %v5584
    %v5586 = vpop.f32.mrb[0].mxu0
    %v5587 = vadd.f32 0.0, %v5586
    %5588 = vdwg.mxu0
    %5589 = vmatprep.subr.mxu0 0.0
    %5590 = vmatpush1.msra.mxu0 %v5472
    %5591 = vmatprep.subr.mxu0 0.0
    %5592 = vmatpush1.msra.mxu0 %v5475
    %5593 = vmatprep.subr.mxu0 0.0
    %5594 = vmatpush1.msra.mxu0 %v5478
    %5595 = vmatprep.subr.mxu0 0.0
    %5596 = vmatpush1.msra.mxu0 %v5481
    %5597 = vmatprep.subr.mxu0 0.0
    %5598 = vmatpush1.msra.mxu0 %v5484
    %5599 = vmatprep.subr.mxu0 0.0
    %5600 = vmatpush1.msra.mxu0 %v5487
    %5601 = vmatprep.subr.mxu0 0.0
    %5602 = vmatpush1.msra.mxu0 %v5490
    %5603 = vmatprep.subr.mxu0 0.0
    %5604 = vmatpush1.msra.mxu0 %v5493
    %5605 = vmatprep.subr.mxu0 0.0
    %5606 = vmatpush1.msra.mxu0 %v5496
    %5607 = vmatprep.subr.mxu0 0.0
    %5608 = vmatpush1.msra.mxu0 %v5499
    %5609 = vmatprep.subr.mxu0 0.0
    %5610 = vmatpush1.msra.mxu0 %v5502
    %5611 = vmatprep.subr.mxu0 0.0
    %5612 = vmatpush1.msra.mxu0 %v5505
    %5613 = vmatprep.subr.mxu0 0.0
    %5614 = vmatpush1.msra.mxu0 %v5508
    %5615 = vmatprep.subr.mxu0 0.0
    %5616 = vmatpush1.msra.mxu0 %v5511
    %5617 = vmatprep.subr.mxu0 0.0
    %5618 = vmatpush1.msra.mxu0 %v5514
    %5619 = vmatprep.subr.mxu0 0.0
    %5620 = vmatpush1.msra.mxu0 %v5517
    %5621 = vmatprep.subr.mxu0 0.0
    %5622 = vmatpush1.msra.mxu0 0.0
    %5623 = vmatprep.subr.mxu0 0.0
    %5624 = vmatpush1.msra.mxu0 0.0
    %5625 = vmatprep.subr.mxu0 0.0
    %5626 = vmatpush1.msra.mxu0 0.0
    %5627 = vmatprep.subr.mxu0 0.0
    %5628 = vmatpush1.msra.mxu0 0.0
    %5629 = vmatprep.subr.mxu0 0.0
    %5630 = vmatpush1.msra.mxu0 0.0
    %5631 = vmatprep.subr.mxu0 0.0
    %5632 = vmatpush1.msra.mxu0 0.0
    %5633 = vmatprep.subr.mxu0 0.0
    %5634 = vmatpush1.msra.mxu0 0.0
    %5635 = vmatprep.subr.mxu0 0.0
    %5636 = vmatpush1.msra.mxu0 0.0
    %5637 = vmatprep.subr.mxu0 0.0
    %5638 = vmatpush1.msra.mxu0 0.0
    %5639 = vmatprep.subr.mxu0 0.0
    %5640 = vmatpush1.msra.mxu0 0.0
    %5641 = vmatprep.subr.mxu0 0.0
    %5642 = vmatpush1.msra.mxu0 0.0
    %5643 = vmatprep.subr.mxu0 0.0
    %5644 = vmatpush1.msra.mxu0 0.0
    %5645 = vmatprep.subr.mxu0 0.0
    %5646 = vmatpush1.msra.mxu0 0.0
    %5647 = vmatprep.subr.mxu0 0.0
    %5648 = vmatpush1.msra.mxu0 0.0
    %5649 = vmatprep.subr.mxu0 0.0
    %5650 = vmatpush1.msra.mxu0 0.0
    %5651 = vmatprep.subr.mxu0 0.0
    %5652 = vmatpush1.msra.mxu0 0.0
    %5653 = vmatprep.mubr.f32.mxu0 0.0
    %5654 = vmatmul.mubr.f32.gmra.mrb[0].mxu0 %v5464
    %v5655 = vpop.f32.mrb[0].mxu0
    %v5656 = vadd.f32 0.0, %v5655
    %v5657 = vpop.f32.mrb[0].mxu0
    %5658 = vdwg.mxu0
    %v5659 = vadd.f32 %v5467, %v5585
    %v5660 = vmul.f32 %v5659, 0.5
    %v5661 = vtanh.pop %v5660
    %v5662 = vmul.f32 %v5661, 0.5
    %v5663 = vadd.f32 %v5662, 0.5
    %v5664 = vadd.f32 %v5468, %v5587
    %v5665 = vmul.f32 %v5664, 0.5
    %v5666 = vtanh.pop %v5665
    %v5667 = vmul.f32 %v5666, 0.5
    %v5668 = vadd.f32 %v5667, 0.5
    %v5669 = vadd.f32 %v5656, %v4410
    %v5670 = vmul.f32 %v5663, %v5669
    %v5671 = vadd.f32 %v5469, %v5670
    %v5672 = vtanh.pop %v5671
    %v5673 = vsub.f32 %v5464, %v5672
    %v5674 = vmul.f32 %v5668, %v5673
    %v5675 = vadd.f32 %v5672, %v5674
    %s5676 = scalar_lea.vmem %s5, 40
    %5677 = vst [vmem:[%s5676] sm:$0xff] %v5675
    %v5678 = vld [vmem:[%s1655] sm:$0xff]
    %v5679 = vld [vmem:[%s1655 + $0x8] sm:$0xff]
    %v5680 = vld [vmem:[%s1655 + $0x10] sm:$0xff]
    %v5681 = vld [vmem:[%s4415] sm:$0xff]
    %v5682 = vld [vmem:[%s4415 + $0x8] sm:$0xff]
    %v5683 = vld [vmem:[%s4415 + $0x10] sm:$0xff]
    %v5684 = vld [vmem:[%s4415 + $0x18] sm:$0xff]
    %v5685 = vld [vmem:[%s4415 + $0x20] sm:$0xff]
    %v5686 = vld [vmem:[%s4415 + $0x28] sm:$0xff]
    %v5687 = vld [vmem:[%s4415 + $0x30] sm:$0xff]
    %v5688 = vld [vmem:[%s4415 + $0x38] sm:$0xff]
    %v5689 = vld [vmem:[%s4415 + $0x40] sm:$0xff]
    %v5690 = vld [vmem:[%s4415 + $0x48] sm:$0xff]
    %v5691 = vld [vmem:[%s4415 + $0x50] sm:$0xff]
    %v5692 = vld [vmem:[%s4415 + $0x58] sm:$0xff]
    %v5693 = vld [vmem:[%s4415 + $0x60] sm:$0xff]
    %v5694 = vld [vmem:[%s4415 + $0x68] sm:$0xff]
    %v5695 = vld [vmem:[%s4415 + $0x70] sm:$0xff]
    %v5696 = vld [vmem:[%s4415 + $0x78] sm:$0xff]
    %v5697 = vld [vmem:[%s4415 + $0x80] sm:$0xff]
    %v5698 = vld [vmem:[%s4415 + $0x88] sm:$0xff]
    %v5699 = vld [vmem:[%s4415 + $0x90] sm:$0xff]
    %v5700 = vld [vmem:[%s4415 + $0x98] sm:$0xff]
    %v5701 = vld [vmem:[%s4415 + $0xa0] sm:$0xff]
    %v5702 = vld [vmem:[%s4415 + $0xa8] sm:$0xff]
    %v5703 = vld [vmem:[%s4415 + $0xb0] sm:$0xff]
    %v5704 = vld [vmem:[%s4415 + $0xb8] sm:$0xff]
    %v5705 = vld [vmem:[%s4415 + $0xc0] sm:$0xff]
    %v5706 = vld [vmem:[%s4415 + $0xc8] sm:$0xff]
    %v5707 = vld [vmem:[%s4415 + $0xd0] sm:$0xff]
    %v5708 = vld [vmem:[%s4415 + $0xd8] sm:$0xff]
    %v5709 = vld [vmem:[%s4415 + $0xe0] sm:$0xff]
    %v5710 = vld [vmem:[%s4415 + $0xe8] sm:$0xff]
    %v5711 = vld [vmem:[%s4415 + $0xf0] sm:$0xff]
    %v5712 = vld [vmem:[%s4415 + $0xf8] sm:$0xff]
    %v5713 = vld [vmem:[%s4415 + $0x100] sm:$0xff]
    %v5714 = vld [vmem:[%s4415 + $0x108] sm:$0xff]
    %v5715 = vld [vmem:[%s4415 + $0x110] sm:$0xff]
    %v5716 = vld [vmem:[%s4415 + $0x118] sm:$0xff]
    %v5717 = vld [vmem:[%s4415 + $0x120] sm:$0xff]
    %v5718 = vld [vmem:[%s4415 + $0x128] sm:$0xff]
    %v5719 = vld [vmem:[%s4415 + $0x130] sm:$0xff]
    %v5720 = vld [vmem:[%s4415 + $0x138] sm:$0xff]
    %v5721 = vld [vmem:[%s4415 + $0x140] sm:$0xff]
    %v5722 = vld [vmem:[%s4415 + $0x148] sm:$0xff]
    %v5723 = vld [vmem:[%s4415 + $0x150] sm:$0xff]
    %v5724 = vld [vmem:[%s4415 + $0x158] sm:$0xff]
    %v5725 = vld [vmem:[%s4415 + $0x160] sm:$0xff]
    %v5726 = vld [vmem:[%s4415 + $0x168] sm:$0xff]
    %v5727 = vld [vmem:[%s4415 + $0x170] sm:$0xff]
    %v5728 = vld [vmem:[%s4415 + $0x178] sm:$0xff]
    %5729 = vmatprep.subr.mxu0 %v5682
    %5730 = vmatpush1.msra.mxu0 %v5681
    %5731 = vmatprep.subr.mxu0 %v5685
    %5732 = vmatpush1.msra.mxu0 %v5684
    %5733 = vmatprep.subr.mxu0 %v5688
    %5734 = vmatpush1.msra.mxu0 %v5687
    %5735 = vmatprep.subr.mxu0 %v5691
    %5736 = vmatpush1.msra.mxu0 %v5690
    %5737 = vmatprep.subr.mxu0 %v5694
    %5738 = vmatpush1.msra.mxu0 %v5693
    %5739 = vmatprep.subr.mxu0 %v5697
    %5740 = vmatpush1.msra.mxu0 %v5696
    %5741 = vmatprep.subr.mxu0 %v5700
    %5742 = vmatpush1.msra.mxu0 %v5699
    %5743 = vmatprep.subr.mxu0 %v5703
    %5744 = vmatpush1.msra.mxu0 %v5702
    %5745 = vmatprep.subr.mxu0 %v5706
    %5746 = vmatpush1.msra.mxu0 %v5705
    %5747 = vmatprep.subr.mxu0 %v5709
    %5748 = vmatpush1.msra.mxu0 %v5708
    %5749 = vmatprep.subr.mxu0 %v5712
    %5750 = vmatpush1.msra.mxu0 %v5711
    %5751 = vmatprep.subr.mxu0 %v5715
    %5752 = vmatpush1.msra.mxu0 %v5714
    %5753 = vmatprep.subr.mxu0 %v5718
    %5754 = vmatpush1.msra.mxu0 %v5717
    %5755 = vmatprep.subr.mxu0 %v5721
    %5756 = vmatpush1.msra.mxu0 %v5720
    %5757 = vmatprep.subr.mxu0 %v5724
    %5758 = vmatpush1.msra.mxu0 %v5723
    %5759 = vmatprep.subr.mxu0 %v5727
    %5760 = vmatpush1.msra.mxu0 %v5726
    %5761 = vmatprep.subr.mxu0 0.0
    %5762 = vmatpush1.msra.mxu0 0.0
    %5763 = vmatprep.subr.mxu0 0.0
    %5764 = vmatpush1.msra.mxu0 0.0
    %5765 = vmatprep.subr.mxu0 0.0
    %5766 = vmatpush1.msra.mxu0 0.0
    %5767 = vmatprep.subr.mxu0 0.0
    %5768 = vmatpush1.msra.mxu0 0.0
    %5769 = vmatprep.subr.mxu0 0.0
    %5770 = vmatpush1.msra.mxu0 0.0
    %5771 = vmatprep.subr.mxu0 0.0
    %5772 = vmatpush1.msra.mxu0 0.0
    %5773 = vmatprep.subr.mxu0 0.0
    %5774 = vmatpush1.msra.mxu0 0.0
    %5775 = vmatprep.subr.mxu0 0.0
    %5776 = vmatpush1.msra.mxu0 0.0
    %5777 = vmatprep.subr.mxu0 0.0
    %5778 = vmatpush1.msra.mxu0 0.0
    %5779 = vmatprep.subr.mxu0 0.0
    %5780 = vmatpush1.msra.mxu0 0.0
    %5781 = vmatprep.subr.mxu0 0.0
    %5782 = vmatpush1.msra.mxu0 0.0
    %5783 = vmatprep.subr.mxu0 0.0
    %5784 = vmatpush1.msra.mxu0 0.0
    %5785 = vmatprep.subr.mxu0 0.0
    %5786 = vmatpush1.msra.mxu0 0.0
    %5787 = vmatprep.subr.mxu0 0.0
    %5788 = vmatpush1.msra.mxu0 0.0
    %5789 = vmatprep.subr.mxu0 0.0
    %5790 = vmatpush1.msra.mxu0 0.0
    %5791 = vmatprep.subr.mxu0 0.0
    %5792 = vmatpush1.msra.mxu0 0.0
    %5793 = vmatprep.mubr.f32.mxu0 0.0
    %5794 = vmatmul.mubr.f32.gmra.mrb[0].mxu0 %v5675
    %v5795 = vpop.f32.mrb[0].mxu0
    %v5796 = vadd.f32 0.0, %v5795
    %v5797 = vpop.f32.mrb[0].mxu0
    %v5798 = vadd.f32 0.0, %v5797
    %5799 = vdwg.mxu0
    %5800 = vmatprep.subr.mxu0 0.0
    %5801 = vmatpush1.msra.mxu0 %v5683
    %5802 = vmatprep.subr.mxu0 0.0
    %5803 = vmatpush1.msra.mxu0 %v5686
    %5804 = vmatprep.subr.mxu0 0.0
    %5805 = vmatpush1.msra.mxu0 %v5689
    %5806 = vmatprep.subr.mxu0 0.0
    %5807 = vmatpush1.msra.mxu0 %v5692
    %5808 = vmatprep.subr.mxu0 0.0
    %5809 = vmatpush1.msra.mxu0 %v5695
    %5810 = vmatprep.subr.mxu0 0.0
    %5811 = vmatpush1.msra.mxu0 %v5698
    %5812 = vmatprep.subr.mxu0 0.0
    %5813 = vmatpush1.msra.mxu0 %v5701
    %5814 = vmatprep.subr.mxu0 0.0
    %5815 = vmatpush1.msra.mxu0 %v5704
    %5816 = vmatprep.subr.mxu0 0.0
    %5817 = vmatpush1.msra.mxu0 %v5707
    %5818 = vmatprep.subr.mxu0 0.0
    %5819 = vmatpush1.msra.mxu0 %v5710
    %5820 = vmatprep.subr.mxu0 0.0
    %5821 = vmatpush1.msra.mxu0 %v5713
    %5822 = vmatprep.subr.mxu0 0.0
    %5823 = vmatpush1.msra.mxu0 %v5716
    %5824 = vmatprep.subr.mxu0 0.0
    %5825 = vmatpush1.msra.mxu0 %v5719
    %5826 = vmatprep.subr.mxu0 0.0
    %5827 = vmatpush1.msra.mxu0 %v5722
    %5828 = vmatprep.subr.mxu0 0.0
    %5829 = vmatpush1.msra.mxu0 %v5725
    %5830 = vmatprep.subr.mxu0 0.0
    %5831 = vmatpush1.msra.mxu0 %v5728
    %5832 = vmatprep.subr.mxu0 0.0
    %5833 = vmatpush1.msra.mxu0 0.0
    %5834 = vmatprep.subr.mxu0 0.0
    %5835 = vmatpush1.msra.mxu0 0.0
    %5836 = vmatprep.subr.mxu0 0.0
    %5837 = vmatpush1.msra.mxu0 0.0
    %5838 = vmatprep.subr.mxu0 0.0
    %5839 = vmatpush1.msra.mxu0 0.0
    %5840 = vmatprep.subr.mxu0 0.0
    %5841 = vmatpush1.msra.mxu0 0.0
    %5842 = vmatprep.subr.mxu0 0.0
    %5843 = vmatpush1.msra.mxu0 0.0
    %5844 = vmatprep.subr.mxu0 0.0
    %5845 = vmatpush1.msra.mxu0 0.0
    %5846 = vmatprep.subr.mxu0 0.0
    %5847 = vmatpush1.msra.mxu0 0.0
    %5848 = vmatprep.subr.mxu0 0.0
    %5849 = vmatpush1.msra.mxu0 0.0
    %5850 = vmatprep.subr.mxu0 0.0
    %5851 = vmatpush1.msra.mxu0 0.0
    %5852 = vmatprep.subr.mxu0 0.0
    %5853 = vmatpush1.msra.mxu0 0.0
    %5854 = vmatprep.subr.mxu0 0.0
    %5855 = vmatpush1.msra.mxu0 0.0
    %5856 = vmatprep.subr.mxu0 0.0
    %5857 = vmatpush1.msra.mxu0 0.0
    %5858 = vmatprep.subr.mxu0 0.0
    %5859 = vmatpush1.msra.mxu0 0.0
    %5860 = vmatprep.subr.mxu0 0.0
    %5861 = vmatpush1.msra.mxu0 0.0
    %5862 = vmatprep.subr.mxu0 0.0
    %5863 = vmatpush1.msra.mxu0 0.0
    %5864 = vmatprep.mubr.f32.mxu0 0.0
    %5865 = vmatmul.mubr.f32.gmra.mrb[0].mxu0 %v5675
    %v5866 = vpop.f32.mrb[0].mxu0
    %v5867 = vadd.f32 0.0, %v5866
    %v5868 = vpop.f32.mrb[0].mxu0
    %5869 = vdwg.mxu0
    %v5870 = vadd.f32 %v5678, %v5796
    %v5871 = vmul.f32 %v5870, 0.5
    %v5872 = vtanh.pop %v5871
    %v5873 = vmul.f32 %v5872, 0.5
    %v5874 = vadd.f32 %v5873, 0.5
    %v5875 = vadd.f32 %v5679, %v5798
    %v5876 = vmul.f32 %v5875, 0.5
    %v5877 = vtanh.pop %v5876
    %v5878 = vmul.f32 %v5877, 0.5
    %v5879 = vadd.f32 %v5878, 0.5
    %v5880 = vadd.f32 %v5867, %v4410
    %v5881 = vmul.f32 %v5874, %v5880
    %v5882 = vadd.f32 %v5680, %v5881
    %v5883 = vtanh.pop %v5882
    %v5884 = vsub.f32 %v5675, %v5883
    %v5885 = vmul.f32 %v5879, %v5884
    %v5886 = vadd.f32 %v5883, %v5885
    %s5887 = scalar_lea.vmem %s5, 48
    %5888 = vst [vmem:[%s5887] sm:$0xff] %v5886
    %v5889 = vld [vmem:[%s1869] sm:$0xff]
    %v5890 = vld [vmem:[%s1869 + $0x8] sm:$0xff]
    %v5891 = vld [vmem:[%s1869 + $0x10] sm:$0xff]
    %v5892 = vld [vmem:[%s4415] sm:$0xff]
    %v5893 = vld [vmem:[%s4415 + $0x8] sm:$0xff]
    %v5894 = vld [vmem:[%s4415 + $0x10] sm:$0xff]
    %v5895 = vld [vmem:[%s4415 + $0x18] sm:$0xff]
    %v5896 = vld [vmem:[%s4415 + $0x20] sm:$0xff]
    %v5897 = vld [vmem:[%s4415 + $0x28] sm:$0xff]
    %v5898 = vld [vmem:[%s4415 + $0x30] sm:$0xff]
    %v5899 = vld [vmem:[%s4415 + $0x38] sm:$0xff]
    %v5900 = vld [vmem:[%s4415 + $0x40] sm:$0xff]
    %v5901 = vld [vmem:[%s4415 + $0x48] sm:$0xff]
    %v5902 = vld [vmem:[%s4415 + $0x50] sm:$0xff]
    %v5903 = vld [vmem:[%s4415 + $0x58] sm:$0xff]
    %v5904 = vld [vmem:[%s4415 + $0x60] sm:$0xff]
    %v5905 = vld [vmem:[%s4415 + $0x68] sm:$0xff]
    %v5906 = vld [vmem:[%s4415 + $0x70] sm:$0xff]
    %v5907 = vld [vmem:[%s4415 + $0x78] sm:$0xff]
    %v5908 = vld [vmem:[%s4415 + $0x80] sm:$0xff]
    %v5909 = vld [vmem:[%s4415 + $0x88] sm:$0xff]
    %v5910 = vld [vmem:[%s4415 + $0x90] sm:$0xff]
    %v5911 = vld [vmem:[%s4415 + $0x98] sm:$0xff]
    %v5912 = vld [vmem:[%s4415 + $0xa0] sm:$0xff]
    %v5913 = vld [vmem:[%s4415 + $0xa8] sm:$0xff]
    %v5914 = vld [vmem:[%s4415 + $0xb0] sm:$0xff]
    %v5915 = vld [vmem:[%s4415 + $0xb8] sm:$0xff]
    %v5916 = vld [vmem:[%s4415 + $0xc0] sm:$0xff]
    %v5917 = vld [vmem:[%s4415 + $0xc8] sm:$0xff]
    %v5918 = vld [vmem:[%s4415 + $0xd0] sm:$0xff]
    %v5919 = vld [vmem:[%s4415 + $0xd8] sm:$0xff]
    %v5920 = vld [vmem:[%s4415 + $0xe0] sm:$0xff]
    %v5921 = vld [vmem:[%s4415 + $0xe8] sm:$0xff]
    %v5922 = vld [vmem:[%s4415 + $0xf0] sm:$0xff]
    %v5923 = vld [vmem:[%s4415 + $0xf8] sm:$0xff]
    %v5924 = vld [vmem:[%s4415 + $0x100] sm:$0xff]
    %v5925 = vld [vmem:[%s4415 + $0x108] sm:$0xff]
    %v5926 = vld [vmem:[%s4415 + $0x110] sm:$0xff]
    %v5927 = vld [vmem:[%s4415 + $0x118] sm:$0xff]
    %v5928 = vld [vmem:[%s4415 + $0x120] sm:$0xff]
    %v5929 = vld [vmem:[%s4415 + $0x128] sm:$0xff]
    %v5930 = vld [vmem:[%s4415 + $0x130] sm:$0xff]
    %v5931 = vld [vmem:[%s4415 + $0x138] sm:$0xff]
    %v5932 = vld [vmem:[%s4415 + $0x140] sm:$0xff]
    %v5933 = vld [vmem:[%s4415 + $0x148] sm:$0xff]
    %v5934 = vld [vmem:[%s4415 + $0x150] sm:$0xff]
    %v5935 = vld [vmem:[%s4415 + $0x158] sm:$0xff]
    %v5936 = vld [vmem:[%s4415 + $0x160] sm:$0xff]
    %v5937 = vld [vmem:[%s4415 + $0x168] sm:$0xff]
    %v5938 = vld [vmem:[%s4415 + $0x170] sm:$0xff]
    %v5939 = vld [vmem:[%s4415 + $0x178] sm:$0xff]
    %5940 = vmatprep.subr.mxu0 %v5893
    %5941 = vmatpush1.msra.mxu0 %v5892
    %5942 = vmatprep.subr.mxu0 %v5896
    %5943 = vmatpush1.msra.mxu0 %v5895
    %5944 = vmatprep.subr.mxu0 %v5899
    %5945 = vmatpush1.msra.mxu0 %v5898
    %5946 = vmatprep.subr.mxu0 %v5902
    %5947 = vmatpush1.msra.mxu0 %v5901
    %5948 = vmatprep.subr.mxu0 %v5905
    %5949 = vmatpush1.msra.mxu0 %v5904
    %5950 = vmatprep.subr.mxu0 %v5908
    %5951 = vmatpush1.msra.mxu0 %v5907
    %5952 = vmatprep.subr.mxu0 %v5911
    %5953 = vmatpush1.msra.mxu0 %v5910
    %5954 = vmatprep.subr.mxu0 %v5914
    %5955 = vmatpush1.msra.mxu0 %v5913
    %5956 = vmatprep.subr.mxu0 %v5917
    %5957 = vmatpush1.msra.mxu0 %v5916
    %5958 = vmatprep.subr.mxu0 %v5920
    %5959 = vmatpush1.msra.mxu0 %v5919
    %5960 = vmatprep.subr.mxu0 %v5923
    %5961 = vmatpush1.msra.mxu0 %v5922
    %5962 = vmatprep.subr.mxu0 %v5926
    %5963 = vmatpush1.msra.mxu0 %v5925
    %5964 = vmatprep.subr.mxu0 %v5929
    %5965 = vmatpush1.msra.mxu0 %v5928
    %5966 = vmatprep.subr.mxu0 %v5932
    %5967 = vmatpush1.msra.mxu0 %v5931
    %5968 = vmatprep.subr.mxu0 %v5935
    %5969 = vmatpush1.msra.mxu0 %v5934
    %5970 = vmatprep.subr.mxu0 %v5938
    %5971 = vmatpush1.msra.mxu0 %v5937
    %5972 = vmatprep.subr.mxu0 0.0
    %5973 = vmatpush1.msra.mxu0 0.0
    %5974 = vmatprep.subr.mxu0 0.0
    %5975 = vmatpush1.msra.mxu0 0.0
    %5976 = vmatprep.subr.mxu0 0.0
    %5977 = vmatpush1.msra.mxu0 0.0
    %5978 = vmatprep.subr.mxu0 0.0
    %5979 = vmatpush1.msra.mxu0 0.0
    %5980 = vmatprep.subr.mxu0 0.0
    %5981 = vmatpush1.msra.mxu0 0.0
    %5982 = vmatprep.subr.mxu0 0.0
    %5983 = vmatpush1.msra.mxu0 0.0
    %5984 = vmatprep.subr.mxu0 0.0
    %5985 = vmatpush1.msra.mxu0 0.0
    %5986 = vmatprep.subr.mxu0 0.0
    %5987 = vmatpush1.msra.mxu0 0.0
    %5988 = vmatprep.subr.mxu0 0.0
    %5989 = vmatpush1.msra.mxu0 0.0
    %5990 = vmatprep.subr.mxu0 0.0
    %5991 = vmatpush1.msra.mxu0 0.0
    %5992 = vmatprep.subr.mxu0 0.0
    %5993 = vmatpush1.msra.mxu0 0.0
    %5994 = vmatprep.subr.mxu0 0.0
    %5995 = vmatpush1.msra.mxu0 0.0
    %5996 = vmatprep.subr.mxu0 0.0
    %5997 = vmatpush1.msra.mxu0 0.0
    %5998 = vmatprep.subr.mxu0 0.0
    %5999 = vmatpush1.msra.mxu0 0.0
    %6000 = vmatprep.subr.mxu0 0.0
    %6001 = vmatpush1.msra.mxu0 0.0
    %6002 = vmatprep.subr.mxu0 0.0
    %6003 = vmatpush1.msra.mxu0 0.0
    %6004 = vmatprep.mubr.f32.mxu0 0.0
    %6005 = vmatmul.mubr.f32.gmra.mrb[0].mxu0 %v5886
    %v6006 = vpop.f32.mrb[0].mxu0
    %v6007 = vadd.f32 0.0, %v6006
    %v6008 = vpop.f32.mrb[0].mxu0
    %v6009 = vadd.f32 0.0, %v6008
    %6010 = vdwg.mxu0
    %6011 = vmatprep.subr.mxu0 0.0
    %6012 = vmatpush1.msra.mxu0 %v5894
    %6013 = vmatprep.subr.mxu0 0.0
    %6014 = vmatpush1.msra.mxu0 %v5897
    %6015 = vmatprep.subr.mxu0 0.0
    %6016 = vmatpush1.msra.mxu0 %v5900
    %6017 = vmatprep.subr.mxu0 0.0
    %6018 = vmatpush1.msra.mxu0 %v5903
    %6019 = vmatprep.subr.mxu0 0.0
    %6020 = vmatpush1.msra.mxu0 %v5906
    %6021 = vmatprep.subr.mxu0 0.0
    %6022 = vmatpush1.msra.mxu0 %v5909
    %6023 = vmatprep.subr.mxu0 0.0
    %6024 = vmatpush1.msra.mxu0 %v5912
    %6025 = vmatprep.subr.mxu0 0.0
    %6026 = vmatpush1.msra.mxu0 %v5915
    %6027 = vmatprep.subr.mxu0 0.0
    %6028 = vmatpush1.msra.mxu0 %v5918
    %6029 = vmatprep.subr.mxu0 0.0
    %6030 = vmatpush1.msra.mxu0 %v5921
    %6031 = vmatprep.subr.mxu0 0.0
    %6032 = vmatpush1.msra.mxu0 %v5924
    %6033 = vmatprep.subr.mxu0 0.0
    %6034 = vmatpush1.msra.mxu0 %v5927
    %6035 = vmatprep.subr.mxu0 0.0
    %6036 = vmatpush1.msra.mxu0 %v5930
    %6037 = vmatprep.subr.mxu0 0.0
    %6038 = vmatpush1.msra.mxu0 %v5933
    %6039 = vmatprep.subr.mxu0 0.0
    %6040 = vmatpush1.msra.mxu0 %v5936
    %6041 = vmatprep.subr.mxu0 0.0
    %6042 = vmatpush1.msra.mxu0 %v5939
    %6043 = vmatprep.subr.mxu0 0.0
    %6044 = vmatpush1.msra.mxu0 0.0
    %6045 = vmatprep.subr.mxu0 0.0
    %6046 = vmatpush1.msra.mxu0 0.0
    %6047 = vmatprep.subr.mxu0 0.0
    %6048 = vmatpush1.msra.mxu0 0.0
    %6049 = vmatprep.subr.mxu0 0.0
    %6050 = vmatpush1.msra.mxu0 0.0
    %6051 = vmatprep.subr.mxu0 0.0
    %6052 = vmatpush1.msra.mxu0 0.0
    %6053 = vmatprep.subr.mxu0 0.0
    %6054 = vmatpush1.msra.mxu0 0.0
    %6055 = vmatprep.subr.mxu0 0.0
    %6056 = vmatpush1.msra.mxu0 0.0
    %6057 = vmatprep.subr.mxu0 0.0
    %6058 = vmatpush1.msra.mxu0 0.0
    %6059 = vmatprep.subr.mxu0 0.0
    %6060 = vmatpush1.msra.mxu0 0.0
    %6061 = vmatprep.subr.mxu0 0.0
    %6062 = vmatpush1.msra.mxu0 0.0
    %6063 = vmatprep.subr.mxu0 0.0
    %6064 = vmatpush1.msra.mxu0 0.0
    %6065 = vmatprep.subr.mxu0 0.0
    %6066 = vmatpush1.msra.mxu0 0.0
    %6067 = vmatprep.subr.mxu0 0.0
    %6068 = vmatpush1.msra.mxu0 0.0
    %6069 = vmatprep.subr.mxu0 0.0
    %6070 = vmatpush1.msra.mxu0 0.0
    %6071 = vmatprep.subr.mxu0 0.0
    %6072 = vmatpush1.msra.mxu0 0.0
    %6073 = vmatprep.subr.mxu0 0.0
    %6074 = vmatpush1.msra.mxu0 0.0
    %6075 = vmatprep.mubr.f32.mxu0 0.0
    %6076 = vmatmul.mubr.f32.gmra.mrb[0].mxu0 %v5886
    %v6077 = vpop.f32.mrb[0].mxu0
    %v6078 = vadd.f32 0.0, %v6077
    %v6079 = vpop.f32.mrb[0].mxu0
    %6080 = vdwg.mxu0
    %v6081 = vadd.f32 %v5889, %v6007
    %v6082 = vmul.f32 %v6081, 0.5
    %v6083 = vtanh.pop %v6082
    %v6084 = vmul.f32 %v6083, 0.5
    %v6085 = vadd.f32 %v6084, 0.5
    %v6086 = vadd.f32 %v5890, %v6009
    %v6087 = vmul.f32 %v6086, 0.5
    %v6088 = vtanh.pop %v6087
    %v6089 = vmul.f32 %v6088, 0.5
    %v6090 = vadd.f32 %v6089, 0.5
    %v6091 = vadd.f32 %v6078, %v4410
    %v6092 = vmul.f32 %v6085, %v6091
    %v6093 = vadd.f32 %v5891, %v6092
    %v6094 = vtanh.pop %v6093
    %v6095 = vsub.f32 %v5886, %v6094
    %v6096 = vmul.f32 %v6090, %v6095
    %v6097 = vadd.f32 %v6094, %v6096
    %s6098 = scalar_lea.vmem %s5, 56
    %6099 = vst [vmem:[%s6098] sm:$0xff] %v6097
    // Predicated region
    $region30: #{forward.1} parent=1 // pred_check
      _
    $region31: #{forward.1} parent=1 // pred_check_branch
      %6101 = sbr.rel (0) target = $region33
    $region32: #{forward.1} parent=1 // pred_region
      _
    $region33: #{forward.1} parent=1 // pred_fallthru
      _
    // Predicated region
    $region34: #{forward.1} parent=1 // pred_check
      _
    $region35: #{forward.1} parent=1 // pred_check_branch
      %6103 = sbr.rel (0) target = $region37
    $region36: #{forward.1} parent=1 // pred_region
      _
    $region37: #{forward.1} parent=1 // pred_fallthru
      _
    %6104 = vsyncpa [#allocation5], 1
    %6105 = vsyncpa [#allocation7], 1

</llo_original>
